<compile_context>
chip_gen: v7x
topology: tpu7x:2x2x1
jax: 0.10.0
libtpu: 0.0.40
codegen_flags: <defaults>
</compile_context>

<pallas_src>
import functools

import jax
import jax.numpy as jnp
from jax.experimental import pallas as pl
from jax.experimental.pallas import tpu as pltpu


# ----------------------------------------------------------------------------
# Fused kernel
# ----------------------------------------------------------------------------
def _conv_taps(a_ref, w_ref, *, K, S, A, M):
    """K*K accumulated per-tap dots: (Cout, Cin) @ (Cin, M) -> (Cout, M) f32."""
    p = K // 2
    cout = w_ref.shape[1]
    acc = jnp.zeros((cout, M), jnp.float32)
    t = 0
    for kh in range(K):
        for kw in range(K):
            off = A + (kh - p) * S + (kw - p)
            sl = a_ref[:, off:off + M]                     # (Cin, M), bf16
            acc = acc + jnp.dot(w_ref[t], sl,
                                preferred_element_type=jnp.float32)
            t += 1
    return acc


def _srnet_kernel(x_ref, mask_ref, w1_ref, b1_ref, w2_ref, b2_ref,
                  w3_ref, b3_ref, w4_ref, b4_ref, o_ref,
                  a1_ref, a2_ref, a3_ref, *, H, W, S, A, M):
    """One image per grid step.

    x_ref   : (1, 1, L) f32  flattened pad-2 input canvas
    mask_ref: (1, M)   f32   1.0 at real output columns, 0.0 at wide-garbage
    w2/3/4  : (9, Cout, Cin) bf16 per-tap matrices;  w1: (64, 25) f32
    b*      : (Cout, 1) f32
    o_ref   : (1, r*r, M) f32  channel-major wide conv4 output (lane-dense)
    a1/a2/a3: (C, L) bf16 VMEM activation canvases (zero halo)
    """
    f32 = jnp.float32

    def store_act(a_ref_, y):
        # ReLU + zero the wide-garbage columns (they land on halo positions),
        # then write: only the two border strips need explicit zeroing.
        c, l = a_ref_.shape
        dt = a_ref_.dtype
        y = jnp.maximum(y, 0.0) * mask_ref[...]
        a_ref_[:, :A] = jnp.zeros((c, A), dt)
        a_ref_[:, A + M:] = jnp.zeros((c, l - A - M), dt)
        a_ref_[:, A:A + M] = y.astype(dt)

    # ---- conv1: 5x5, 1 -> 64, ReLU.  25 f32 VPU rank-1 updates. ----
    acc1 = jnp.zeros((64, M), f32)
    t = 0
    for kh in range(5):
        for kw in range(5):
            off = A + (kh - 2) * S + (kw - 2)
            acc1 = acc1 + w1_ref[:, t:t + 1] * x_ref[0, :, off:off + M]
            t += 1
    store_act(a1_ref, acc1 + b1_ref[...])

    # ---- conv2: 3x3, 64 -> 64, ReLU.  9 accumulated bf16 MXU dots. ----
    y2 = _conv_taps(a1_ref, w2_ref, K=3, S=S, A=A, M=M) + b2_ref[...]
    store_act(a2_ref, y2)

    # ---- conv3: 3x3, 64 -> 32, ReLU. ----
    y3 = _conv_taps(a2_ref, w3_ref, K=3, S=S, A=A, M=M) + b3_ref[...]
    store_act(a3_ref, y3)

    # ---- conv4: 3x3, 32 -> r*r, no ReLU.  Lane-dense channel-major store. --
    y4 = _conv_taps(a3_ref, w4_ref, K=3, S=S, A=A, M=M) + b4_ref[...]
    o_ref[0] = y4.astype(o_ref.dtype)


# ----------------------------------------------------------------------------
# Parameter init (deterministic, mirrors the PyTorch module's __init__)
# ----------------------------------------------------------------------------
def _orthogonal_oihw(key, shape, gain=1.0):
    """torch.nn.init.orthogonal_ analogue for conv weight (O, I, KH, KW)."""
    out_c, in_c, kh, kw = shape
    rows, cols = out_c, in_c * kh * kw
    flat = (rows, cols) if rows >= cols else (cols, rows)
    a = jax.random.normal(key, flat, jnp.float32)
    q, r = jnp.linalg.qr(a)
    q = q * jnp.sign(jnp.diag(r))[None, :]
    if rows < cols:
        q = q.T
    return (gain * q).reshape(out_c, in_c, kh, kw)


def _conv_bias(key, in_c, kh, kw, out_c):
    fan_in = in_c * kh * kw
    bound = 1.0 / jnp.sqrt(jnp.float32(fan_in))
    return jax.random.uniform(key, (out_c,), jnp.float32, -bound, bound)


def init_params(upscale_factor, key):
    ks = jax.random.split(key, 8)
    relu_gain = float(jnp.sqrt(2.0))  # init.calculate_gain('relu')
    return {
        "w1": _orthogonal_oihw(ks[0], (64, 1, 5, 5), relu_gain),
        "b1": _conv_bias(ks[1], 1, 5, 5, 64),
        "w2": _orthogonal_oihw(ks[2], (64, 64, 3, 3), relu_gain),
        "b2": _conv_bias(ks[3], 64, 3, 3, 64),
        "w3": _orthogonal_oihw(ks[4], (32, 64, 3, 3), relu_gain),
        "b3": _conv_bias(ks[5], 64, 3, 3, 32),
        "w4": _orthogonal_oihw(ks[6], (upscale_factor ** 2, 32, 3, 3), 1.0),
        "b4": _conv_bias(ks[7], 32, 3, 3, upscale_factor ** 2),
    }


def pack_params(params, mxu_dtype=jnp.bfloat16):
    """One-time weight packing into the kernel's channel-major layout.

    conv1: (64, 25) f32 (VPU path stays f32 -- v5e VPU has no bf16).
    conv2..4: (KH*KW, Cout, Cin) bf16 per-tap matrices for the MXU.
    biases: (Cout, 1) f32 columns (broadcast over the lane/spatial axis).
    """
    def taps(w_oihw):
        o, i, kh, kw = w_oihw.shape
        return jnp.transpose(w_oihw, (2, 3, 0, 1)).reshape(kh * kw, o, i)

    return {
        "w1": params["w1"].reshape(64, 25).astype(jnp.float32),
        "b1": params["b1"].reshape(-1, 1).astype(jnp.float32),
        "w2": taps(params["w2"]).astype(mxu_dtype),          # (9, 64, 64)
        "b2": params["b2"].reshape(-1, 1).astype(jnp.float32),
        "w3": taps(params["w3"]).astype(mxu_dtype),          # (9, 32, 64)
        "b3": params["b3"].reshape(-1, 1).astype(jnp.float32),
        "w4": taps(params["w4"]).astype(mxu_dtype),          # (9, r*r, 32)
        "b4": params["b4"].reshape(-1, 1).astype(jnp.float32),
    }


# ----------------------------------------------------------------------------
# Forward pass (matches SuperResolutionNet.forward, NCHW in / NCHW out)
# ----------------------------------------------------------------------------
def super_resolution_forward(packed, x_nchw, upscale_factor):
    N, C, H, W = x_nchw.shape
    assert C == 1
    r = upscale_factor
    r2 = r * r

    S = W + 4                  # canvas row stride (room for conv1's pad-2 halo)
    A = 2 * S + 2              # canvas index of valid pixel (0, 0)
    M = H * S                  # wide output block length per image
    L = (H + 5) * S            # canvas length (extra zero row for tap overreach)

    # Input canvas: pad-2 the single-channel image, flatten, append zero row.
    x = x_nchw[:, 0, :, :].astype(jnp.float32)                 # (N, H, W)
    x = jnp.pad(x, ((0, 0), (2, 2), (2, 2)))                   # (N, H+4, S)
    x = x.reshape(N, 1, (H + 4) * S)
    x = jnp.pad(x, ((0, 0), (0, 0), (0, L - (H + 4) * S)))     # (N, 1, L)

    # Mask of real output columns inside a wide H*S block: (q mod S) < W.
    cols = jnp.arange(M, dtype=jnp.int32) % S
    mask = (cols < W).astype(jnp.float32).reshape(1, M)

    kernel = functools.partial(_srnet_kernel, H=H, W=W, S=S, A=A, M=M)

    def _const_spec(a):
        nd = a.ndim
        return pl.BlockSpec(a.shape, lambda n, _nd=nd: (0,) * _nd)

    weights = [packed["w1"], packed["b1"], packed["w2"], packed["b2"],
               packed["w3"], packed["b3"], packed["w4"], packed["b4"]]
    act_dt = packed["w2"].dtype   # bf16 activations halve VMEM / slice traffic

    out_wide = pl.pallas_call(
        kernel,
        out_shape=jax.ShapeDtypeStruct((N, r2, M), jnp.float32),
        grid_spec=pltpu.PrefetchScalarGridSpec(
            num_scalar_prefetch=0,
            grid=(N,),
            in_specs=[pl.BlockSpec((1, 1, L), lambda n: (n, 0, 0)),
                      _const_spec(mask)]
                     + [_const_spec(a) for a in weights],
            out_specs=pl.BlockSpec((1, r2, M), lambda n: (n, 0, 0)),
            scratch_shapes=[
                pltpu.VMEM((64, L), act_dt),      # a1 canvas
                pltpu.VMEM((64, L), act_dt),      # a2 canvas
                pltpu.VMEM((32, L), act_dt),      # a3 canvas
            ],
        ),
        compiler_params=pltpu.CompilerParams(
            dimension_semantics=("parallel",),    # batch across TensorCores
        ),
    )(x, mask, *weights)

    # Strip the wide garbage columns; PixelShuffle permute is pure layout.
    out = out_wide.reshape(N, r2, H, S)[:, :, :, :W]           # (N, r2, H, W)
    out = out.reshape(N, r, r, H, W)
    out = jnp.transpose(out, (0, 3, 1, 4, 2))                  # (N, H, r, W, r)
    return out.reshape(N, 1, H * r, W * r)


# ----------------------------------------------------------------------------
# Pure-JAX reference (lax conv, f32) for correctness checking
# ----------------------------------------------------------------------------
def _ref_conv(x_nchw, w_oihw, b, pad, relu):
    y = jax.lax.conv_general_dilated(
        x_nchw, w_oihw, window_strides=(1, 1),
        padding=((pad, pad), (pad, pad)),
        dimension_numbers=("NCHW", "OIHW", "NCHW"))
    y = y + b[None, :, None, None]
    return jnp.maximum(y, 0.0) if relu else y


def super_resolution_ref(params, x_nchw, upscale_factor):
    x = _ref_conv(x_nchw, params["w1"], params["b1"], 2, True)
    x = _ref_conv(x, params["w2"], params["b2"], 1, True)
    x = _ref_conv(x, params["w3"], params["b3"], 1, True)
    x = _ref_conv(x, params["w4"], params["b4"], 1, False)
    N, C, H, W = x.shape
    r = upscale_factor
    x = x.reshape(N, 1, r, r, H, W)
    x = jnp.transpose(x, (0, 1, 4, 2, 5, 3))
    return x.reshape(N, 1, H * r, W * r)


if __name__ == "__main__":
    upscale_factor = 3
    key = jax.random.PRNGKey(0)
    k_param, k_input = jax.random.split(key)

    params = init_params(upscale_factor, k_param)
    packed = pack_params(params)                       # pack once (bf16 MXU weights)
    x = jax.random.normal(k_input, (2, 1, 16, 16), jnp.float32)   # NCHW

    fwd = jax.jit(functools.partial(super_resolution_forward,
                                    upscale_factor=upscale_factor))
    out = jax.block_until_ready(fwd(packed, x))
    assert out.shape == (2, 1, 48, 48), out.shape

    ref = jax.block_until_ready(super_resolution_ref(params, x, upscale_factor))
    # bf16 MXU operands / bf16 activations with f32 accumulation vs f32 ref:
    # loosened tolerance (observed error ~1e-2 scale, structural bugs are O(1)).
    err = float(jnp.max(jnp.abs(out - ref)))
    assert err < 5e-2, err

    print("KERNEL_OK")
</pallas_src>

<mosaic_0001>
module attributes {stable_mosaic.version = 11 : i64} {
  func.func @_srnet_kernel(%arg0: i32, %arg1: memref<1x1x420xf32, #tpu.memory_space<vmem>>, %arg2: memref<1x320xf32, #tpu.memory_space<vmem>>, %arg3: memref<64x25xf32, #tpu.memory_space<vmem>>, %arg4: memref<64x1xf32, #tpu.memory_space<vmem>>, %arg5: memref<9x64x64xbf16, #tpu.memory_space<vmem>>, %arg6: memref<64x1xf32, #tpu.memory_space<vmem>>, %arg7: memref<9x32x64xbf16, #tpu.memory_space<vmem>>, %arg8: memref<32x1xf32, #tpu.memory_space<vmem>>, %arg9: memref<9x9x32xbf16, #tpu.memory_space<vmem>>, %arg10: memref<9x1xf32, #tpu.memory_space<vmem>>, %arg11: memref<1x9x320xf32, #tpu.memory_space<vmem>>, %arg12: memref<64x420xbf16, #tpu.memory_space<vmem>>, %arg13: memref<64x420xbf16, #tpu.memory_space<vmem>>, %arg14: memref<32x420xbf16, #tpu.memory_space<vmem>>) attributes {dimension_semantics = [#tpu.dimension_semantics<parallel>], iteration_bounds = array<i64: 2>, scalar_prefetch = 0 : i64, scratch_operands = 3 : i64, tpu.core_type = #tpu.core_type<tc>, window_params = [{transform_indices = @transform_0, window_bounds = array<i64: 1, 1, 420>}, {pipeline_mode = #tpu.pipeline_mode<synchronous>, transform_indices = @transform_1, window_bounds = array<i64: 1, 320>}, {pipeline_mode = #tpu.pipeline_mode<synchronous>, transform_indices = @transform_2, window_bounds = array<i64: 64, 25>}, {pipeline_mode = #tpu.pipeline_mode<synchronous>, transform_indices = @transform_3, window_bounds = array<i64: 64, 1>}, {pipeline_mode = #tpu.pipeline_mode<synchronous>, transform_indices = @transform_4, window_bounds = array<i64: 9, 64, 64>}, {pipeline_mode = #tpu.pipeline_mode<synchronous>, transform_indices = @transform_5, window_bounds = array<i64: 64, 1>}, {pipeline_mode = #tpu.pipeline_mode<synchronous>, transform_indices = @transform_6, window_bounds = array<i64: 9, 32, 64>}, {pipeline_mode = #tpu.pipeline_mode<synchronous>, transform_indices = @transform_7, window_bounds = array<i64: 32, 1>}, {pipeline_mode = #tpu.pipeline_mode<synchronous>, transform_indices = @transform_8, window_bounds = array<i64: 9, 9, 32>}, {pipeline_mode = #tpu.pipeline_mode<synchronous>, transform_indices = @transform_9, window_bounds = array<i64: 9, 1>}, {transform_indices = @transform_10, window_bounds = array<i64: 1, 9, 320>}]} {
    %cst = arith.constant 0.000000e+00 : f32
    %0 = vector.broadcast %cst : f32 to vector<64x320xf32>
    %c0 = arith.constant 0 : index
    %c0_0 = arith.constant 0 : index
    %1 = vector.load %arg3[%c0, %c0_0] : memref<64x25xf32, #tpu.memory_space<vmem>>, vector<64x1xf32>
    %c0_1 = arith.constant 0 : index
    %c0_2 = arith.constant 0 : index
    %c0_3 = arith.constant 0 : index
    %2 = vector.load %arg1[%c0_1, %c0_2, %c0_3] : memref<1x1x420xf32, #tpu.memory_space<vmem>>, vector<1x1x320xf32>
    %3 = vector.shape_cast %2 : vector<1x1x320xf32> to vector<1x320xf32>
    %4 = vector.broadcast %1 : vector<64x1xf32> to vector<64x320xf32>
    %5 = vector.broadcast %3 : vector<1x320xf32> to vector<64x320xf32>
    %6 = arith.mulf %4, %5 : vector<64x320xf32>
    %7 = arith.addf %0, %6 : vector<64x320xf32>
    %c0_4 = arith.constant 0 : index
    %c1 = arith.constant 1 : index
    %8 = vector.load %arg3[%c0_4, %c1] : memref<64x25xf32, #tpu.memory_space<vmem>>, vector<64x1xf32>
    %c0_5 = arith.constant 0 : index
    %c0_6 = arith.constant 0 : index
    %c1_7 = arith.constant 1 : index
    %9 = vector.load %arg1[%c0_5, %c0_6, %c1_7] : memref<1x1x420xf32, #tpu.memory_space<vmem>>, vector<1x1x320xf32>
    %10 = vector.shape_cast %9 : vector<1x1x320xf32> to vector<1x320xf32>
    %11 = vector.broadcast %8 : vector<64x1xf32> to vector<64x320xf32>
    %12 = vector.broadcast %10 : vector<1x320xf32> to vector<64x320xf32>
    %13 = arith.mulf %11, %12 : vector<64x320xf32>
    %14 = arith.addf %7, %13 : vector<64x320xf32>
    %c0_8 = arith.constant 0 : index
    %c2 = arith.constant 2 : index
    %15 = vector.load %arg3[%c0_8, %c2] : memref<64x25xf32, #tpu.memory_space<vmem>>, vector<64x1xf32>
    %c0_9 = arith.constant 0 : index
    %c0_10 = arith.constant 0 : index
    %c2_11 = arith.constant 2 : index
    %16 = vector.load %arg1[%c0_9, %c0_10, %c2_11] : memref<1x1x420xf32, #tpu.memory_space<vmem>>, vector<1x1x320xf32>
    %17 = vector.shape_cast %16 : vector<1x1x320xf32> to vector<1x320xf32>
    %18 = vector.broadcast %15 : vector<64x1xf32> to vector<64x320xf32>
    %19 = vector.broadcast %17 : vector<1x320xf32> to vector<64x320xf32>
    %20 = arith.mulf %18, %19 : vector<64x320xf32>
    %21 = arith.addf %14, %20 : vector<64x320xf32>
    %c0_12 = arith.constant 0 : index
    %c3 = arith.constant 3 : index
    %22 = vector.load %arg3[%c0_12, %c3] : memref<64x25xf32, #tpu.memory_space<vmem>>, vector<64x1xf32>
    %c0_13 = arith.constant 0 : index
    %c0_14 = arith.constant 0 : index
    %c3_15 = arith.constant 3 : index
    %23 = vector.load %arg1[%c0_13, %c0_14, %c3_15] : memref<1x1x420xf32, #tpu.memory_space<vmem>>, vector<1x1x320xf32>
    %24 = vector.shape_cast %23 : vector<1x1x320xf32> to vector<1x320xf32>
    %25 = vector.broadcast %22 : vector<64x1xf32> to vector<64x320xf32>
    %26 = vector.broadcast %24 : vector<1x320xf32> to vector<64x320xf32>
    %27 = arith.mulf %25, %26 : vector<64x320xf32>
    %28 = arith.addf %21, %27 : vector<64x320xf32>
    %c0_16 = arith.constant 0 : index
    %c4 = arith.constant 4 : index
    %29 = vector.load %arg3[%c0_16, %c4] : memref<64x25xf32, #tpu.memory_space<vmem>>, vector<64x1xf32>
    %c0_17 = arith.constant 0 : index
    %c0_18 = arith.constant 0 : index
    %c4_19 = arith.constant 4 : index
    %30 = vector.load %arg1[%c0_17, %c0_18, %c4_19] : memref<1x1x420xf32, #tpu.memory_space<vmem>>, vector<1x1x320xf32>
    %31 = vector.shape_cast %30 : vector<1x1x320xf32> to vector<1x320xf32>
    %32 = vector.broadcast %29 : vector<64x1xf32> to vector<64x320xf32>
    %33 = vector.broadcast %31 : vector<1x320xf32> to vector<64x320xf32>
    %34 = arith.mulf %32, %33 : vector<64x320xf32>
    %35 = arith.addf %28, %34 : vector<64x320xf32>
    %c0_20 = arith.constant 0 : index
    %c5 = arith.constant 5 : index
    %36 = vector.load %arg3[%c0_20, %c5] : memref<64x25xf32, #tpu.memory_space<vmem>>, vector<64x1xf32>
    %c0_21 = arith.constant 0 : index
    %c0_22 = arith.constant 0 : index
    %c20 = arith.constant 20 : index
    %37 = vector.load %arg1[%c0_21, %c0_22, %c20] : memref<1x1x420xf32, #tpu.memory_space<vmem>>, vector<1x1x320xf32>
    %38 = vector.shape_cast %37 : vector<1x1x320xf32> to vector<1x320xf32>
    %39 = vector.broadcast %36 : vector<64x1xf32> to vector<64x320xf32>
    %40 = vector.broadcast %38 : vector<1x320xf32> to vector<64x320xf32>
    %41 = arith.mulf %39, %40 : vector<64x320xf32>
    %42 = arith.addf %35, %41 : vector<64x320xf32>
    %c0_23 = arith.constant 0 : index
    %c6 = arith.constant 6 : index
    %43 = vector.load %arg3[%c0_23, %c6] : memref<64x25xf32, #tpu.memory_space<vmem>>, vector<64x1xf32>
    %c0_24 = arith.constant 0 : index
    %c0_25 = arith.constant 0 : index
    %c21 = arith.constant 21 : index
    %44 = vector.load %arg1[%c0_24, %c0_25, %c21] : memref<1x1x420xf32, #tpu.memory_space<vmem>>, vector<1x1x320xf32>
    %45 = vector.shape_cast %44 : vector<1x1x320xf32> to vector<1x320xf32>
    %46 = vector.broadcast %43 : vector<64x1xf32> to vector<64x320xf32>
    %47 = vector.broadcast %45 : vector<1x320xf32> to vector<64x320xf32>
    %48 = arith.mulf %46, %47 : vector<64x320xf32>
    %49 = arith.addf %42, %48 : vector<64x320xf32>
    %c0_26 = arith.constant 0 : index
    %c7 = arith.constant 7 : index
    %50 = vector.load %arg3[%c0_26, %c7] : memref<64x25xf32, #tpu.memory_space<vmem>>, vector<64x1xf32>
    %c0_27 = arith.constant 0 : index
    %c0_28 = arith.constant 0 : index
    %c22 = arith.constant 22 : index
    %51 = vector.load %arg1[%c0_27, %c0_28, %c22] : memref<1x1x420xf32, #tpu.memory_space<vmem>>, vector<1x1x320xf32>
    %52 = vector.shape_cast %51 : vector<1x1x320xf32> to vector<1x320xf32>
    %53 = vector.broadcast %50 : vector<64x1xf32> to vector<64x320xf32>
    %54 = vector.broadcast %52 : vector<1x320xf32> to vector<64x320xf32>
    %55 = arith.mulf %53, %54 : vector<64x320xf32>
    %56 = arith.addf %49, %55 : vector<64x320xf32>
    %c0_29 = arith.constant 0 : index
    %c8 = arith.constant 8 : index
    %57 = vector.load %arg3[%c0_29, %c8] : memref<64x25xf32, #tpu.memory_space<vmem>>, vector<64x1xf32>
    %c0_30 = arith.constant 0 : index
    %c0_31 = arith.constant 0 : index
    %c23 = arith.constant 23 : index
    %58 = vector.load %arg1[%c0_30, %c0_31, %c23] : memref<1x1x420xf32, #tpu.memory_space<vmem>>, vector<1x1x320xf32>
    %59 = vector.shape_cast %58 : vector<1x1x320xf32> to vector<1x320xf32>
    %60 = vector.broadcast %57 : vector<64x1xf32> to vector<64x320xf32>
    %61 = vector.broadcast %59 : vector<1x320xf32> to vector<64x320xf32>
    %62 = arith.mulf %60, %61 : vector<64x320xf32>
    %63 = arith.addf %56, %62 : vector<64x320xf32>
    %c0_32 = arith.constant 0 : index
    %c9 = arith.constant 9 : index
    %64 = vector.load %arg3[%c0_32, %c9] : memref<64x25xf32, #tpu.memory_space<vmem>>, vector<64x1xf32>
    %c0_33 = arith.constant 0 : index
    %c0_34 = arith.constant 0 : index
    %c24 = arith.constant 24 : index
    %65 = vector.load %arg1[%c0_33, %c0_34, %c24] : memref<1x1x420xf32, #tpu.memory_space<vmem>>, vector<1x1x320xf32>
    %66 = vector.shape_cast %65 : vector<1x1x320xf32> to vector<1x320xf32>
    %67 = vector.broadcast %64 : vector<64x1xf32> to vector<64x320xf32>
    %68 = vector.broadcast %66 : vector<1x320xf32> to vector<64x320xf32>
    %69 = arith.mulf %67, %68 : vector<64x320xf32>
    %70 = arith.addf %63, %69 : vector<64x320xf32>
    %c0_35 = arith.constant 0 : index
    %c10 = arith.constant 10 : index
    %71 = vector.load %arg3[%c0_35, %c10] : memref<64x25xf32, #tpu.memory_space<vmem>>, vector<64x1xf32>
    %c0_36 = arith.constant 0 : index
    %c0_37 = arith.constant 0 : index
    %c40 = arith.constant 40 : index
    %72 = vector.load %arg1[%c0_36, %c0_37, %c40] : memref<1x1x420xf32, #tpu.memory_space<vmem>>, vector<1x1x320xf32>
    %73 = vector.shape_cast %72 : vector<1x1x320xf32> to vector<1x320xf32>
    %74 = vector.broadcast %71 : vector<64x1xf32> to vector<64x320xf32>
    %75 = vector.broadcast %73 : vector<1x320xf32> to vector<64x320xf32>
    %76 = arith.mulf %74, %75 : vector<64x320xf32>
    %77 = arith.addf %70, %76 : vector<64x320xf32>
    %c0_38 = arith.constant 0 : index
    %c11 = arith.constant 11 : index
    %78 = vector.load %arg3[%c0_38, %c11] : memref<64x25xf32, #tpu.memory_space<vmem>>, vector<64x1xf32>
    %c0_39 = arith.constant 0 : index
    %c0_40 = arith.constant 0 : index
    %c41 = arith.constant 41 : index
    %79 = vector.load %arg1[%c0_39, %c0_40, %c41] : memref<1x1x420xf32, #tpu.memory_space<vmem>>, vector<1x1x320xf32>
    %80 = vector.shape_cast %79 : vector<1x1x320xf32> to vector<1x320xf32>
    %81 = vector.broadcast %78 : vector<64x1xf32> to vector<64x320xf32>
    %82 = vector.broadcast %80 : vector<1x320xf32> to vector<64x320xf32>
    %83 = arith.mulf %81, %82 : vector<64x320xf32>
    %84 = arith.addf %77, %83 : vector<64x320xf32>
    %c0_41 = arith.constant 0 : index
    %c12 = arith.constant 12 : index
    %85 = vector.load %arg3[%c0_41, %c12] : memref<64x25xf32, #tpu.memory_space<vmem>>, vector<64x1xf32>
    %c0_42 = arith.constant 0 : index
    %c0_43 = arith.constant 0 : index
    %c42 = arith.constant 42 : index
    %86 = vector.load %arg1[%c0_42, %c0_43, %c42] : memref<1x1x420xf32, #tpu.memory_space<vmem>>, vector<1x1x320xf32>
    %87 = vector.shape_cast %86 : vector<1x1x320xf32> to vector<1x320xf32>
    %88 = vector.broadcast %85 : vector<64x1xf32> to vector<64x320xf32>
    %89 = vector.broadcast %87 : vector<1x320xf32> to vector<64x320xf32>
    %90 = arith.mulf %88, %89 : vector<64x320xf32>
    %91 = arith.addf %84, %90 : vector<64x320xf32>
    %c0_44 = arith.constant 0 : index
    %c13 = arith.constant 13 : index
    %92 = vector.load %arg3[%c0_44, %c13] : memref<64x25xf32, #tpu.memory_space<vmem>>, vector<64x1xf32>
    %c0_45 = arith.constant 0 : index
    %c0_46 = arith.constant 0 : index
    %c43 = arith.constant 43 : index
    %93 = vector.load %arg1[%c0_45, %c0_46, %c43] : memref<1x1x420xf32, #tpu.memory_space<vmem>>, vector<1x1x320xf32>
    %94 = vector.shape_cast %93 : vector<1x1x320xf32> to vector<1x320xf32>
    %95 = vector.broadcast %92 : vector<64x1xf32> to vector<64x320xf32>
    %96 = vector.broadcast %94 : vector<1x320xf32> to vector<64x320xf32>
    %97 = arith.mulf %95, %96 : vector<64x320xf32>
    %98 = arith.addf %91, %97 : vector<64x320xf32>
    %c0_47 = arith.constant 0 : index
    %c14 = arith.constant 14 : index
    %99 = vector.load %arg3[%c0_47, %c14] : memref<64x25xf32, #tpu.memory_space<vmem>>, vector<64x1xf32>
    %c0_48 = arith.constant 0 : index
    %c0_49 = arith.constant 0 : index
    %c44 = arith.constant 44 : index
    %100 = vector.load %arg1[%c0_48, %c0_49, %c44] : memref<1x1x420xf32, #tpu.memory_space<vmem>>, vector<1x1x320xf32>
    %101 = vector.shape_cast %100 : vector<1x1x320xf32> to vector<1x320xf32>
    %102 = vector.broadcast %99 : vector<64x1xf32> to vector<64x320xf32>
    %103 = vector.broadcast %101 : vector<1x320xf32> to vector<64x320xf32>
    %104 = arith.mulf %102, %103 : vector<64x320xf32>
    %105 = arith.addf %98, %104 : vector<64x320xf32>
    %c0_50 = arith.constant 0 : index
    %c15 = arith.constant 15 : index
    %106 = vector.load %arg3[%c0_50, %c15] : memref<64x25xf32, #tpu.memory_space<vmem>>, vector<64x1xf32>
    %c0_51 = arith.constant 0 : index
    %c0_52 = arith.constant 0 : index
    %c60 = arith.constant 60 : index
    %107 = vector.load %arg1[%c0_51, %c0_52, %c60] : memref<1x1x420xf32, #tpu.memory_space<vmem>>, vector<1x1x320xf32>
    %108 = vector.shape_cast %107 : vector<1x1x320xf32> to vector<1x320xf32>
    %109 = vector.broadcast %106 : vector<64x1xf32> to vector<64x320xf32>
    %110 = vector.broadcast %108 : vector<1x320xf32> to vector<64x320xf32>
    %111 = arith.mulf %109, %110 : vector<64x320xf32>
    %112 = arith.addf %105, %111 : vector<64x320xf32>
    %c0_53 = arith.constant 0 : index
    %c16 = arith.constant 16 : index
    %113 = vector.load %arg3[%c0_53, %c16] : memref<64x25xf32, #tpu.memory_space<vmem>>, vector<64x1xf32>
    %c0_54 = arith.constant 0 : index
    %c0_55 = arith.constant 0 : index
    %c61 = arith.constant 61 : index
    %114 = vector.load %arg1[%c0_54, %c0_55, %c61] : memref<1x1x420xf32, #tpu.memory_space<vmem>>, vector<1x1x320xf32>
    %115 = vector.shape_cast %114 : vector<1x1x320xf32> to vector<1x320xf32>
    %116 = vector.broadcast %113 : vector<64x1xf32> to vector<64x320xf32>
    %117 = vector.broadcast %115 : vector<1x320xf32> to vector<64x320xf32>
    %118 = arith.mulf %116, %117 : vector<64x320xf32>
    %119 = arith.addf %112, %118 : vector<64x320xf32>
    %c0_56 = arith.constant 0 : index
    %c17 = arith.constant 17 : index
    %120 = vector.load %arg3[%c0_56, %c17] : memref<64x25xf32, #tpu.memory_space<vmem>>, vector<64x1xf32>
    %c0_57 = arith.constant 0 : index
    %c0_58 = arith.constant 0 : index
    %c62 = arith.constant 62 : index
    %121 = vector.load %arg1[%c0_57, %c0_58, %c62] : memref<1x1x420xf32, #tpu.memory_space<vmem>>, vector<1x1x320xf32>
    %122 = vector.shape_cast %121 : vector<1x1x320xf32> to vector<1x320xf32>
    %123 = vector.broadcast %120 : vector<64x1xf32> to vector<64x320xf32>
    %124 = vector.broadcast %122 : vector<1x320xf32> to vector<64x320xf32>
    %125 = arith.mulf %123, %124 : vector<64x320xf32>
    %126 = arith.addf %119, %125 : vector<64x320xf32>
    %c0_59 = arith.constant 0 : index
    %c18 = arith.constant 18 : index
    %127 = vector.load %arg3[%c0_59, %c18] : memref<64x25xf32, #tpu.memory_space<vmem>>, vector<64x1xf32>
    %c0_60 = arith.constant 0 : index
    %c0_61 = arith.constant 0 : index
    %c63 = arith.constant 63 : index
    %128 = vector.load %arg1[%c0_60, %c0_61, %c63] : memref<1x1x420xf32, #tpu.memory_space<vmem>>, vector<1x1x320xf32>
    %129 = vector.shape_cast %128 : vector<1x1x320xf32> to vector<1x320xf32>
    %130 = vector.broadcast %127 : vector<64x1xf32> to vector<64x320xf32>
    %131 = vector.broadcast %129 : vector<1x320xf32> to vector<64x320xf32>
    %132 = arith.mulf %130, %131 : vector<64x320xf32>
    %133 = arith.addf %126, %132 : vector<64x320xf32>
    %c0_62 = arith.constant 0 : index
    %c19 = arith.constant 19 : index
    %134 = vector.load %arg3[%c0_62, %c19] : memref<64x25xf32, #tpu.memory_space<vmem>>, vector<64x1xf32>
    %c0_63 = arith.constant 0 : index
    %c0_64 = arith.constant 0 : index
    %c64 = arith.constant 64 : index
    %135 = vector.load %arg1[%c0_63, %c0_64, %c64] : memref<1x1x420xf32, #tpu.memory_space<vmem>>, vector<1x1x320xf32>
    %136 = vector.shape_cast %135 : vector<1x1x320xf32> to vector<1x320xf32>
    %137 = vector.broadcast %134 : vector<64x1xf32> to vector<64x320xf32>
    %138 = vector.broadcast %136 : vector<1x320xf32> to vector<64x320xf32>
    %139 = arith.mulf %137, %138 : vector<64x320xf32>
    %140 = arith.addf %133, %139 : vector<64x320xf32>
    %c0_65 = arith.constant 0 : index
    %c20_66 = arith.constant 20 : index
    %141 = vector.load %arg3[%c0_65, %c20_66] : memref<64x25xf32, #tpu.memory_space<vmem>>, vector<64x1xf32>
    %c0_67 = arith.constant 0 : index
    %c0_68 = arith.constant 0 : index
    %c80 = arith.constant 80 : index
    %142 = vector.load %arg1[%c0_67, %c0_68, %c80] : memref<1x1x420xf32, #tpu.memory_space<vmem>>, vector<1x1x320xf32>
    %143 = vector.shape_cast %142 : vector<1x1x320xf32> to vector<1x320xf32>
    %144 = vector.broadcast %141 : vector<64x1xf32> to vector<64x320xf32>
    %145 = vector.broadcast %143 : vector<1x320xf32> to vector<64x320xf32>
    %146 = arith.mulf %144, %145 : vector<64x320xf32>
    %147 = arith.addf %140, %146 : vector<64x320xf32>
    %c0_69 = arith.constant 0 : index
    %c21_70 = arith.constant 21 : index
    %148 = vector.load %arg3[%c0_69, %c21_70] : memref<64x25xf32, #tpu.memory_space<vmem>>, vector<64x1xf32>
    %c0_71 = arith.constant 0 : index
    %c0_72 = arith.constant 0 : index
    %c81 = arith.constant 81 : index
    %149 = vector.load %arg1[%c0_71, %c0_72, %c81] : memref<1x1x420xf32, #tpu.memory_space<vmem>>, vector<1x1x320xf32>
    %150 = vector.shape_cast %149 : vector<1x1x320xf32> to vector<1x320xf32>
    %151 = vector.broadcast %148 : vector<64x1xf32> to vector<64x320xf32>
    %152 = vector.broadcast %150 : vector<1x320xf32> to vector<64x320xf32>
    %153 = arith.mulf %151, %152 : vector<64x320xf32>
    %154 = arith.addf %147, %153 : vector<64x320xf32>
    %c0_73 = arith.constant 0 : index
    %c22_74 = arith.constant 22 : index
    %155 = vector.load %arg3[%c0_73, %c22_74] : memref<64x25xf32, #tpu.memory_space<vmem>>, vector<64x1xf32>
    %c0_75 = arith.constant 0 : index
    %c0_76 = arith.constant 0 : index
    %c82 = arith.constant 82 : index
    %156 = vector.load %arg1[%c0_75, %c0_76, %c82] : memref<1x1x420xf32, #tpu.memory_space<vmem>>, vector<1x1x320xf32>
    %157 = vector.shape_cast %156 : vector<1x1x320xf32> to vector<1x320xf32>
    %158 = vector.broadcast %155 : vector<64x1xf32> to vector<64x320xf32>
    %159 = vector.broadcast %157 : vector<1x320xf32> to vector<64x320xf32>
    %160 = arith.mulf %158, %159 : vector<64x320xf32>
    %161 = arith.addf %154, %160 : vector<64x320xf32>
    %c0_77 = arith.constant 0 : index
    %c23_78 = arith.constant 23 : index
    %162 = vector.load %arg3[%c0_77, %c23_78] : memref<64x25xf32, #tpu.memory_space<vmem>>, vector<64x1xf32>
    %c0_79 = arith.constant 0 : index
    %c0_80 = arith.constant 0 : index
    %c83 = arith.constant 83 : index
    %163 = vector.load %arg1[%c0_79, %c0_80, %c83] : memref<1x1x420xf32, #tpu.memory_space<vmem>>, vector<1x1x320xf32>
    %164 = vector.shape_cast %163 : vector<1x1x320xf32> to vector<1x320xf32>
    %165 = vector.broadcast %162 : vector<64x1xf32> to vector<64x320xf32>
    %166 = vector.broadcast %164 : vector<1x320xf32> to vector<64x320xf32>
    %167 = arith.mulf %165, %166 : vector<64x320xf32>
    %168 = arith.addf %161, %167 : vector<64x320xf32>
    %c0_81 = arith.constant 0 : index
    %c24_82 = arith.constant 24 : index
    %169 = vector.load %arg3[%c0_81, %c24_82] : memref<64x25xf32, #tpu.memory_space<vmem>>, vector<64x1xf32>
    %c0_83 = arith.constant 0 : index
    %c0_84 = arith.constant 0 : index
    %c84 = arith.constant 84 : index
    %170 = vector.load %arg1[%c0_83, %c0_84, %c84] : memref<1x1x420xf32, #tpu.memory_space<vmem>>, vector<1x1x320xf32>
    %171 = vector.shape_cast %170 : vector<1x1x320xf32> to vector<1x320xf32>
    %172 = vector.broadcast %169 : vector<64x1xf32> to vector<64x320xf32>
    %173 = vector.broadcast %171 : vector<1x320xf32> to vector<64x320xf32>
    %174 = arith.mulf %172, %173 : vector<64x320xf32>
    %175 = arith.addf %168, %174 : vector<64x320xf32>
    %c0_85 = arith.constant 0 : index
    %c0_86 = arith.constant 0 : index
    %176 = vector.load %arg4[%c0_85, %c0_86] : memref<64x1xf32, #tpu.memory_space<vmem>>, vector<64x1xf32>
    %177 = vector.broadcast %176 : vector<64x1xf32> to vector<64x320xf32>
    %178 = arith.addf %175, %177 : vector<64x320xf32>
    %cst_87 = arith.constant 0.000000e+00 : f32
    %179 = vector.broadcast %cst_87 : f32 to vector<64x320xf32>
    %180 = arith.maximumf %178, %179 : vector<64x320xf32>
    %c0_88 = arith.constant 0 : index
    %c0_89 = arith.constant 0 : index
    %181 = vector.load %arg2[%c0_88, %c0_89] : memref<1x320xf32, #tpu.memory_space<vmem>>, vector<1x320xf32>
    %182 = vector.broadcast %181 : vector<1x320xf32> to vector<64x320xf32>
    %183 = arith.mulf %180, %182 : vector<64x320xf32>
    %cst_90 = arith.constant 0.000000e+00 : bf16
    %184 = vector.broadcast %cst_90 : bf16 to vector<64x42xbf16>
    %c0_91 = arith.constant 0 : index
    %c0_92 = arith.constant 0 : index
    %185 = vector.load %arg12[%c0_91, %c0_92] : memref<64x420xbf16, #tpu.memory_space<vmem>>, vector<64x42xbf16>
    tpu.vector_store %arg12[%c0_91, %c0_92], %184 {strides = array<i32>} : memref<64x420xbf16, #tpu.memory_space<vmem>>, vector<64x42xbf16>,
    %cst_93 = arith.constant 0.000000e+00 : bf16
    %186 = vector.broadcast %cst_93 : bf16 to vector<64x58xbf16>
    %c0_94 = arith.constant 0 : index
    %c362 = arith.constant 362 : index
    %187 = vector.load %arg12[%c0_94, %c362] : memref<64x420xbf16, #tpu.memory_space<vmem>>, vector<64x58xbf16>
    tpu.vector_store %arg12[%c0_94, %c362], %186 {strides = array<i32>} : memref<64x420xbf16, #tpu.memory_space<vmem>>, vector<64x58xbf16>,
    %188 = arith.truncf %183 : vector<64x320xf32> to vector<64x320xbf16>
    %c0_95 = arith.constant 0 : index
    %c42_96 = arith.constant 42 : index
    %189 = vector.load %arg12[%c0_95, %c42_96] : memref<64x420xbf16, #tpu.memory_space<vmem>>, vector<64x320xbf16>
    tpu.vector_store %arg12[%c0_95, %c42_96], %188 {strides = array<i32>} : memref<64x420xbf16, #tpu.memory_space<vmem>>, vector<64x320xbf16>,
    %cst_97 = arith.constant 0.000000e+00 : f32
    %190 = vector.broadcast %cst_97 : f32 to vector<64x320xf32>
    %c0_98 = arith.constant 0 : index
    %c21_99 = arith.constant 21 : index
    %191 = vector.load %arg12[%c0_98, %c21_99] : memref<64x420xbf16, #tpu.memory_space<vmem>>, vector<64x320xbf16>
    %c0_100 = arith.constant 0 : index
    %c0_101 = arith.constant 0 : index
    %c0_102 = arith.constant 0 : index
    %192 = vector.load %arg5[%c0_100, %c0_101, %c0_102] : memref<9x64x64xbf16, #tpu.memory_space<vmem>>, vector<1x64x64xbf16>
    %193 = vector.shape_cast %192 : vector<1x64x64xbf16> to vector<64x64xbf16>
    %cst_103 = arith.constant dense<0.000000e+00> : vector<64x320xf32>
    %194 = tpu.matmul %193, %191, %cst_103 {dimension_numbers = #tpu.dot_dimension_numbers<[1], [0], [0], [1], [0, 0, 1, 1], [], []>} : vector<64x64xbf16>, vector<64x320xbf16>, vector<64x320xf32> -> vector<64x320xf32>
    %195 = arith.addf %190, %194 : vector<64x320xf32>
    %c0_104 = arith.constant 0 : index
    %c22_105 = arith.constant 22 : index
    %196 = vector.load %arg12[%c0_104, %c22_105] : memref<64x420xbf16, #tpu.memory_space<vmem>>, vector<64x320xbf16>
    %c1_106 = arith.constant 1 : index
    %c0_107 = arith.constant 0 : index
    %c0_108 = arith.constant 0 : index
    %197 = vector.load %arg5[%c1_106, %c0_107, %c0_108] : memref<9x64x64xbf16, #tpu.memory_space<vmem>>, vector<1x64x64xbf16>
    %198 = vector.shape_cast %197 : vector<1x64x64xbf16> to vector<64x64xbf16>
    %cst_109 = arith.constant dense<0.000000e+00> : vector<64x320xf32>
    %199 = tpu.matmul %198, %196, %cst_109 {dimension_numbers = #tpu.dot_dimension_numbers<[1], [0], [0], [1], [0, 0, 1, 1], [], []>} : vector<64x64xbf16>, vector<64x320xbf16>, vector<64x320xf32> -> vector<64x320xf32>
    %200 = arith.addf %195, %199 : vector<64x320xf32>
    %c0_110 = arith.constant 0 : index
    %c23_111 = arith.constant 23 : index
    %201 = vector.load %arg12[%c0_110, %c23_111] : memref<64x420xbf16, #tpu.memory_space<vmem>>, vector<64x320xbf16>
    %c2_112 = arith.constant 2 : index
    %c0_113 = arith.constant 0 : index
    %c0_114 = arith.constant 0 : index
    %202 = vector.load %arg5[%c2_112, %c0_113, %c0_114] : memref<9x64x64xbf16, #tpu.memory_space<vmem>>, vector<1x64x64xbf16>
    %203 = vector.shape_cast %202 : vector<1x64x64xbf16> to vector<64x64xbf16>
    %cst_115 = arith.constant dense<0.000000e+00> : vector<64x320xf32>
    %204 = tpu.matmul %203, %201, %cst_115 {dimension_numbers = #tpu.dot_dimension_numbers<[1], [0], [0], [1], [0, 0, 1, 1], [], []>} : vector<64x64xbf16>, vector<64x320xbf16>, vector<64x320xf32> -> vector<64x320xf32>
    %205 = arith.addf %200, %204 : vector<64x320xf32>
    %c0_116 = arith.constant 0 : index
    %c41_117 = arith.constant 41 : index
    %206 = vector.load %arg12[%c0_116, %c41_117] : memref<64x420xbf16, #tpu.memory_space<vmem>>, vector<64x320xbf16>
    %c3_118 = arith.constant 3 : index
    %c0_119 = arith.constant 0 : index
    %c0_120 = arith.constant 0 : index
    %207 = vector.load %arg5[%c3_118, %c0_119, %c0_120] : memref<9x64x64xbf16, #tpu.memory_space<vmem>>, vector<1x64x64xbf16>
    %208 = vector.shape_cast %207 : vector<1x64x64xbf16> to vector<64x64xbf16>
    %cst_121 = arith.constant dense<0.000000e+00> : vector<64x320xf32>
    %209 = tpu.matmul %208, %206, %cst_121 {dimension_numbers = #tpu.dot_dimension_numbers<[1], [0], [0], [1], [0, 0, 1, 1], [], []>} : vector<64x64xbf16>, vector<64x320xbf16>, vector<64x320xf32> -> vector<64x320xf32>
    %210 = arith.addf %205, %209 : vector<64x320xf32>
    %c0_122 = arith.constant 0 : index
    %c42_123 = arith.constant 42 : index
    %211 = vector.load %arg12[%c0_122, %c42_123] : memref<64x420xbf16, #tpu.memory_space<vmem>>, vector<64x320xbf16>
    %c4_124 = arith.constant 4 : index
    %c0_125 = arith.constant 0 : index
    %c0_126 = arith.constant 0 : index
    %212 = vector.load %arg5[%c4_124, %c0_125, %c0_126] : memref<9x64x64xbf16, #tpu.memory_space<vmem>>, vector<1x64x64xbf16>
    %213 = vector.shape_cast %212 : vector<1x64x64xbf16> to vector<64x64xbf16>
    %cst_127 = arith.constant dense<0.000000e+00> : vector<64x320xf32>
    %214 = tpu.matmul %213, %211, %cst_127 {dimension_numbers = #tpu.dot_dimension_numbers<[1], [0], [0], [1], [0, 0, 1, 1], [], []>} : vector<64x64xbf16>, vector<64x320xbf16>, vector<64x320xf32> -> vector<64x320xf32>
    %215 = arith.addf %210, %214 : vector<64x320xf32>
    %c0_128 = arith.constant 0 : index
    %c43_129 = arith.constant 43 : index
    %216 = vector.load %arg12[%c0_128, %c43_129] : memref<64x420xbf16, #tpu.memory_space<vmem>>, vector<64x320xbf16>
    %c5_130 = arith.constant 5 : index
    %c0_131 = arith.constant 0 : index
    %c0_132 = arith.constant 0 : index
    %217 = vector.load %arg5[%c5_130, %c0_131, %c0_132] : memref<9x64x64xbf16, #tpu.memory_space<vmem>>, vector<1x64x64xbf16>
    %218 = vector.shape_cast %217 : vector<1x64x64xbf16> to vector<64x64xbf16>
    %cst_133 = arith.constant dense<0.000000e+00> : vector<64x320xf32>
    %219 = tpu.matmul %218, %216, %cst_133 {dimension_numbers = #tpu.dot_dimension_numbers<[1], [0], [0], [1], [0, 0, 1, 1], [], []>} : vector<64x64xbf16>, vector<64x320xbf16>, vector<64x320xf32> -> vector<64x320xf32>
    %220 = arith.addf %215, %219 : vector<64x320xf32>
    %c0_134 = arith.constant 0 : index
    %c61_135 = arith.constant 61 : index
    %221 = vector.load %arg12[%c0_134, %c61_135] : memref<64x420xbf16, #tpu.memory_space<vmem>>, vector<64x320xbf16>
    %c6_136 = arith.constant 6 : index
    %c0_137 = arith.constant 0 : index
    %c0_138 = arith.constant 0 : index
    %222 = vector.load %arg5[%c6_136, %c0_137, %c0_138] : memref<9x64x64xbf16, #tpu.memory_space<vmem>>, vector<1x64x64xbf16>
    %223 = vector.shape_cast %222 : vector<1x64x64xbf16> to vector<64x64xbf16>
    %cst_139 = arith.constant dense<0.000000e+00> : vector<64x320xf32>
    %224 = tpu.matmul %223, %221, %cst_139 {dimension_numbers = #tpu.dot_dimension_numbers<[1], [0], [0], [1], [0, 0, 1, 1], [], []>} : vector<64x64xbf16>, vector<64x320xbf16>, vector<64x320xf32> -> vector<64x320xf32>
    %225 = arith.addf %220, %224 : vector<64x320xf32>
    %c0_140 = arith.constant 0 : index
    %c62_141 = arith.constant 62 : index
    %226 = vector.load %arg12[%c0_140, %c62_141] : memref<64x420xbf16, #tpu.memory_space<vmem>>, vector<64x320xbf16>
    %c7_142 = arith.constant 7 : index
    %c0_143 = arith.constant 0 : index
    %c0_144 = arith.constant 0 : index
    %227 = vector.load %arg5[%c7_142, %c0_143, %c0_144] : memref<9x64x64xbf16, #tpu.memory_space<vmem>>, vector<1x64x64xbf16>
    %228 = vector.shape_cast %227 : vector<1x64x64xbf16> to vector<64x64xbf16>
    %cst_145 = arith.constant dense<0.000000e+00> : vector<64x320xf32>
    %229 = tpu.matmul %228, %226, %cst_145 {dimension_numbers = #tpu.dot_dimension_numbers<[1], [0], [0], [1], [0, 0, 1, 1], [], []>} : vector<64x64xbf16>, vector<64x320xbf16>, vector<64x320xf32> -> vector<64x320xf32>
    %230 = arith.addf %225, %229 : vector<64x320xf32>
    %c0_146 = arith.constant 0 : index
    %c63_147 = arith.constant 63 : index
    %231 = vector.load %arg12[%c0_146, %c63_147] : memref<64x420xbf16, #tpu.memory_space<vmem>>, vector<64x320xbf16>
    %c8_148 = arith.constant 8 : index
    %c0_149 = arith.constant 0 : index
    %c0_150 = arith.constant 0 : index
    %232 = vector.load %arg5[%c8_148, %c0_149, %c0_150] : memref<9x64x64xbf16, #tpu.memory_space<vmem>>, vector<1x64x64xbf16>
    %233 = vector.shape_cast %232 : vector<1x64x64xbf16> to vector<64x64xbf16>
    %cst_151 = arith.constant dense<0.000000e+00> : vector<64x320xf32>
    %234 = tpu.matmul %233, %231, %cst_151 {dimension_numbers = #tpu.dot_dimension_numbers<[1], [0], [0], [1], [0, 0, 1, 1], [], []>} : vector<64x64xbf16>, vector<64x320xbf16>, vector<64x320xf32> -> vector<64x320xf32>
    %235 = arith.addf %230, %234 : vector<64x320xf32>
    %c0_152 = arith.constant 0 : index
    %c0_153 = arith.constant 0 : index
    %236 = vector.load %arg6[%c0_152, %c0_153] : memref<64x1xf32, #tpu.memory_space<vmem>>, vector<64x1xf32>
    %237 = vector.broadcast %236 : vector<64x1xf32> to vector<64x320xf32>
    %238 = arith.addf %235, %237 : vector<64x320xf32>
    %cst_154 = arith.constant 0.000000e+00 : f32
    %239 = vector.broadcast %cst_154 : f32 to vector<64x320xf32>
    %240 = arith.maximumf %238, %239 : vector<64x320xf32>
    %c0_155 = arith.constant 0 : index
    %c0_156 = arith.constant 0 : index
    %241 = vector.load %arg2[%c0_155, %c0_156] : memref<1x320xf32, #tpu.memory_space<vmem>>, vector<1x320xf32>
    %242 = vector.broadcast %241 : vector<1x320xf32> to vector<64x320xf32>
    %243 = arith.mulf %240, %242 : vector<64x320xf32>
    %cst_157 = arith.constant 0.000000e+00 : bf16
    %244 = vector.broadcast %cst_157 : bf16 to vector<64x42xbf16>
    %c0_158 = arith.constant 0 : index
    %c0_159 = arith.constant 0 : index
    %245 = vector.load %arg13[%c0_158, %c0_159] : memref<64x420xbf16, #tpu.memory_space<vmem>>, vector<64x42xbf16>
    tpu.vector_store %arg13[%c0_158, %c0_159], %244 {strides = array<i32>} : memref<64x420xbf16, #tpu.memory_space<vmem>>, vector<64x42xbf16>,
    %cst_160 = arith.constant 0.000000e+00 : bf16
    %246 = vector.broadcast %cst_160 : bf16 to vector<64x58xbf16>
    %c0_161 = arith.constant 0 : index
    %c362_162 = arith.constant 362 : index
    %247 = vector.load %arg13[%c0_161, %c362_162] : memref<64x420xbf16, #tpu.memory_space<vmem>>, vector<64x58xbf16>
    tpu.vector_store %arg13[%c0_161, %c362_162], %246 {strides = array<i32>} : memref<64x420xbf16, #tpu.memory_space<vmem>>, vector<64x58xbf16>,
    %248 = arith.truncf %243 : vector<64x320xf32> to vector<64x320xbf16>
    %c0_163 = arith.constant 0 : index
    %c42_164 = arith.constant 42 : index
    %249 = vector.load %arg13[%c0_163, %c42_164] : memref<64x420xbf16, #tpu.memory_space<vmem>>, vector<64x320xbf16>
    tpu.vector_store %arg13[%c0_163, %c42_164], %248 {strides = array<i32>} : memref<64x420xbf16, #tpu.memory_space<vmem>>, vector<64x320xbf16>,
    %cst_165 = arith.constant 0.000000e+00 : f32
    %250 = vector.broadcast %cst_165 : f32 to vector<32x320xf32>
    %c0_166 = arith.constant 0 : index
    %c21_167 = arith.constant 21 : index
    %251 = vector.load %arg13[%c0_166, %c21_167] : memref<64x420xbf16, #tpu.memory_space<vmem>>, vector<64x320xbf16>
    %c0_168 = arith.constant 0 : index
    %c0_169 = arith.constant 0 : index
    %c0_170 = arith.constant 0 : index
    %252 = vector.load %arg7[%c0_168, %c0_169, %c0_170] : memref<9x32x64xbf16, #tpu.memory_space<vmem>>, vector<1x32x64xbf16>
    %253 = vector.shape_cast %252 : vector<1x32x64xbf16> to vector<32x64xbf16>
    %cst_171 = arith.constant dense<0.000000e+00> : vector<32x320xf32>
    %254 = tpu.matmul %253, %251, %cst_171 {dimension_numbers = #tpu.dot_dimension_numbers<[1], [0], [0], [1], [0, 0, 1, 1], [], []>} : vector<32x64xbf16>, vector<64x320xbf16>, vector<32x320xf32> -> vector<32x320xf32>
    %255 = arith.addf %250, %254 : vector<32x320xf32>
    %c0_172 = arith.constant 0 : index
    %c22_173 = arith.constant 22 : index
    %256 = vector.load %arg13[%c0_172, %c22_173] : memref<64x420xbf16, #tpu.memory_space<vmem>>, vector<64x320xbf16>
    %c1_174 = arith.constant 1 : index
    %c0_175 = arith.constant 0 : index
    %c0_176 = arith.constant 0 : index
    %257 = vector.load %arg7[%c1_174, %c0_175, %c0_176] : memref<9x32x64xbf16, #tpu.memory_space<vmem>>, vector<1x32x64xbf16>
    %258 = vector.shape_cast %257 : vector<1x32x64xbf16> to vector<32x64xbf16>
    %cst_177 = arith.constant dense<0.000000e+00> : vector<32x320xf32>
    %259 = tpu.matmul %258, %256, %cst_177 {dimension_numbers = #tpu.dot_dimension_numbers<[1], [0], [0], [1], [0, 0, 1, 1], [], []>} : vector<32x64xbf16>, vector<64x320xbf16>, vector<32x320xf32> -> vector<32x320xf32>
    %260 = arith.addf %255, %259 : vector<32x320xf32>
    %c0_178 = arith.constant 0 : index
    %c23_179 = arith.constant 23 : index
    %261 = vector.load %arg13[%c0_178, %c23_179] : memref<64x420xbf16, #tpu.memory_space<vmem>>, vector<64x320xbf16>
    %c2_180 = arith.constant 2 : index
    %c0_181 = arith.constant 0 : index
    %c0_182 = arith.constant 0 : index
    %262 = vector.load %arg7[%c2_180, %c0_181, %c0_182] : memref<9x32x64xbf16, #tpu.memory_space<vmem>>, vector<1x32x64xbf16>
    %263 = vector.shape_cast %262 : vector<1x32x64xbf16> to vector<32x64xbf16>
    %cst_183 = arith.constant dense<0.000000e+00> : vector<32x320xf32>
    %264 = tpu.matmul %263, %261, %cst_183 {dimension_numbers = #tpu.dot_dimension_numbers<[1], [0], [0], [1], [0, 0, 1, 1], [], []>} : vector<32x64xbf16>, vector<64x320xbf16>, vector<32x320xf32> -> vector<32x320xf32>
    %265 = arith.addf %260, %264 : vector<32x320xf32>
    %c0_184 = arith.constant 0 : index
    %c41_185 = arith.constant 41 : index
    %266 = vector.load %arg13[%c0_184, %c41_185] : memref<64x420xbf16, #tpu.memory_space<vmem>>, vector<64x320xbf16>
    %c3_186 = arith.constant 3 : index
    %c0_187 = arith.constant 0 : index
    %c0_188 = arith.constant 0 : index
    %267 = vector.load %arg7[%c3_186, %c0_187, %c0_188] : memref<9x32x64xbf16, #tpu.memory_space<vmem>>, vector<1x32x64xbf16>
    %268 = vector.shape_cast %267 : vector<1x32x64xbf16> to vector<32x64xbf16>
    %cst_189 = arith.constant dense<0.000000e+00> : vector<32x320xf32>
    %269 = tpu.matmul %268, %266, %cst_189 {dimension_numbers = #tpu.dot_dimension_numbers<[1], [0], [0], [1], [0, 0, 1, 1], [], []>} : vector<32x64xbf16>, vector<64x320xbf16>, vector<32x320xf32> -> vector<32x320xf32>
    %270 = arith.addf %265, %269 : vector<32x320xf32>
    %c0_190 = arith.constant 0 : index
    %c42_191 = arith.constant 42 : index
    %271 = vector.load %arg13[%c0_190, %c42_191] : memref<64x420xbf16, #tpu.memory_space<vmem>>, vector<64x320xbf16>
    %c4_192 = arith.constant 4 : index
    %c0_193 = arith.constant 0 : index
    %c0_194 = arith.constant 0 : index
    %272 = vector.load %arg7[%c4_192, %c0_193, %c0_194] : memref<9x32x64xbf16, #tpu.memory_space<vmem>>, vector<1x32x64xbf16>
    %273 = vector.shape_cast %272 : vector<1x32x64xbf16> to vector<32x64xbf16>
    %cst_195 = arith.constant dense<0.000000e+00> : vector<32x320xf32>
    %274 = tpu.matmul %273, %271, %cst_195 {dimension_numbers = #tpu.dot_dimension_numbers<[1], [0], [0], [1], [0, 0, 1, 1], [], []>} : vector<32x64xbf16>, vector<64x320xbf16>, vector<32x320xf32> -> vector<32x320xf32>
    %275 = arith.addf %270, %274 : vector<32x320xf32>
    %c0_196 = arith.constant 0 : index
    %c43_197 = arith.constant 43 : index
    %276 = vector.load %arg13[%c0_196, %c43_197] : memref<64x420xbf16, #tpu.memory_space<vmem>>, vector<64x320xbf16>
    %c5_198 = arith.constant 5 : index
    %c0_199 = arith.constant 0 : index
    %c0_200 = arith.constant 0 : index
    %277 = vector.load %arg7[%c5_198, %c0_199, %c0_200] : memref<9x32x64xbf16, #tpu.memory_space<vmem>>, vector<1x32x64xbf16>
    %278 = vector.shape_cast %277 : vector<1x32x64xbf16> to vector<32x64xbf16>
    %cst_201 = arith.constant dense<0.000000e+00> : vector<32x320xf32>
    %279 = tpu.matmul %278, %276, %cst_201 {dimension_numbers = #tpu.dot_dimension_numbers<[1], [0], [0], [1], [0, 0, 1, 1], [], []>} : vector<32x64xbf16>, vector<64x320xbf16>, vector<32x320xf32> -> vector<32x320xf32>
    %280 = arith.addf %275, %279 : vector<32x320xf32>
    %c0_202 = arith.constant 0 : index
    %c61_203 = arith.constant 61 : index
    %281 = vector.load %arg13[%c0_202, %c61_203] : memref<64x420xbf16, #tpu.memory_space<vmem>>, vector<64x320xbf16>
    %c6_204 = arith.constant 6 : index
    %c0_205 = arith.constant 0 : index
    %c0_206 = arith.constant 0 : index
    %282 = vector.load %arg7[%c6_204, %c0_205, %c0_206] : memref<9x32x64xbf16, #tpu.memory_space<vmem>>, vector<1x32x64xbf16>
    %283 = vector.shape_cast %282 : vector<1x32x64xbf16> to vector<32x64xbf16>
    %cst_207 = arith.constant dense<0.000000e+00> : vector<32x320xf32>
    %284 = tpu.matmul %283, %281, %cst_207 {dimension_numbers = #tpu.dot_dimension_numbers<[1], [0], [0], [1], [0, 0, 1, 1], [], []>} : vector<32x64xbf16>, vector<64x320xbf16>, vector<32x320xf32> -> vector<32x320xf32>
    %285 = arith.addf %280, %284 : vector<32x320xf32>
    %c0_208 = arith.constant 0 : index
    %c62_209 = arith.constant 62 : index
    %286 = vector.load %arg13[%c0_208, %c62_209] : memref<64x420xbf16, #tpu.memory_space<vmem>>, vector<64x320xbf16>
    %c7_210 = arith.constant 7 : index
    %c0_211 = arith.constant 0 : index
    %c0_212 = arith.constant 0 : index
    %287 = vector.load %arg7[%c7_210, %c0_211, %c0_212] : memref<9x32x64xbf16, #tpu.memory_space<vmem>>, vector<1x32x64xbf16>
    %288 = vector.shape_cast %287 : vector<1x32x64xbf16> to vector<32x64xbf16>
    %cst_213 = arith.constant dense<0.000000e+00> : vector<32x320xf32>
    %289 = tpu.matmul %288, %286, %cst_213 {dimension_numbers = #tpu.dot_dimension_numbers<[1], [0], [0], [1], [0, 0, 1, 1], [], []>} : vector<32x64xbf16>, vector<64x320xbf16>, vector<32x320xf32> -> vector<32x320xf32>
    %290 = arith.addf %285, %289 : vector<32x320xf32>
    %c0_214 = arith.constant 0 : index
    %c63_215 = arith.constant 63 : index
    %291 = vector.load %arg13[%c0_214, %c63_215] : memref<64x420xbf16, #tpu.memory_space<vmem>>, vector<64x320xbf16>
    %c8_216 = arith.constant 8 : index
    %c0_217 = arith.constant 0 : index
    %c0_218 = arith.constant 0 : index
    %292 = vector.load %arg7[%c8_216, %c0_217, %c0_218] : memref<9x32x64xbf16, #tpu.memory_space<vmem>>, vector<1x32x64xbf16>
    %293 = vector.shape_cast %292 : vector<1x32x64xbf16> to vector<32x64xbf16>
    %cst_219 = arith.constant dense<0.000000e+00> : vector<32x320xf32>
    %294 = tpu.matmul %293, %291, %cst_219 {dimension_numbers = #tpu.dot_dimension_numbers<[1], [0], [0], [1], [0, 0, 1, 1], [], []>} : vector<32x64xbf16>, vector<64x320xbf16>, vector<32x320xf32> -> vector<32x320xf32>
    %295 = arith.addf %290, %294 : vector<32x320xf32>
    %c0_220 = arith.constant 0 : index
    %c0_221 = arith.constant 0 : index
    %296 = vector.load %arg8[%c0_220, %c0_221] : memref<32x1xf32, #tpu.memory_space<vmem>>, vector<32x1xf32>
    %297 = vector.broadcast %296 : vector<32x1xf32> to vector<32x320xf32>
    %298 = arith.addf %295, %297 : vector<32x320xf32>
    %cst_222 = arith.constant 0.000000e+00 : f32
    %299 = vector.broadcast %cst_222 : f32 to vector<32x320xf32>
    %300 = arith.maximumf %298, %299 : vector<32x320xf32>
    %c0_223 = arith.constant 0 : index
    %c0_224 = arith.constant 0 : index
    %301 = vector.load %arg2[%c0_223, %c0_224] : memref<1x320xf32, #tpu.memory_space<vmem>>, vector<1x320xf32>
    %302 = vector.broadcast %301 : vector<1x320xf32> to vector<32x320xf32>
    %303 = arith.mulf %300, %302 : vector<32x320xf32>
    %cst_225 = arith.constant 0.000000e+00 : bf16
    %304 = vector.broadcast %cst_225 : bf16 to vector<32x42xbf16>
    %c0_226 = arith.constant 0 : index
    %c0_227 = arith.constant 0 : index
    %305 = vector.load %arg14[%c0_226, %c0_227] : memref<32x420xbf16, #tpu.memory_space<vmem>>, vector<32x42xbf16>
    tpu.vector_store %arg14[%c0_226, %c0_227], %304 {strides = array<i32>} : memref<32x420xbf16, #tpu.memory_space<vmem>>, vector<32x42xbf16>,
    %cst_228 = arith.constant 0.000000e+00 : bf16
    %306 = vector.broadcast %cst_228 : bf16 to vector<32x58xbf16>
    %c0_229 = arith.constant 0 : index
    %c362_230 = arith.constant 362 : index
    %307 = vector.load %arg14[%c0_229, %c362_230] : memref<32x420xbf16, #tpu.memory_space<vmem>>, vector<32x58xbf16>
    tpu.vector_store %arg14[%c0_229, %c362_230], %306 {strides = array<i32>} : memref<32x420xbf16, #tpu.memory_space<vmem>>, vector<32x58xbf16>,
    %308 = arith.truncf %303 : vector<32x320xf32> to vector<32x320xbf16>
    %c0_231 = arith.constant 0 : index
    %c42_232 = arith.constant 42 : index
    %309 = vector.load %arg14[%c0_231, %c42_232] : memref<32x420xbf16, #tpu.memory_space<vmem>>, vector<32x320xbf16>
    tpu.vector_store %arg14[%c0_231, %c42_232], %308 {strides = array<i32>} : memref<32x420xbf16, #tpu.memory_space<vmem>>, vector<32x320xbf16>,
    %cst_233 = arith.constant 0.000000e+00 : f32
    %310 = vector.broadcast %cst_233 : f32 to vector<9x320xf32>
    %c0_234 = arith.constant 0 : index
    %c21_235 = arith.constant 21 : index
    %311 = vector.load %arg14[%c0_234, %c21_235] : memref<32x420xbf16, #tpu.memory_space<vmem>>, vector<32x320xbf16>
    %c0_236 = arith.constant 0 : index
    %c0_237 = arith.constant 0 : index
    %c0_238 = arith.constant 0 : index
    %312 = vector.load %arg9[%c0_236, %c0_237, %c0_238] : memref<9x9x32xbf16, #tpu.memory_space<vmem>>, vector<1x9x32xbf16>
    %313 = vector.shape_cast %312 : vector<1x9x32xbf16> to vector<9x32xbf16>
    %cst_239 = arith.constant dense<0.000000e+00> : vector<9x320xf32>
    %314 = tpu.matmul %313, %311, %cst_239 {dimension_numbers = #tpu.dot_dimension_numbers<[1], [0], [0], [1], [0, 0, 1, 1], [], []>} : vector<9x32xbf16>, vector<32x320xbf16>, vector<9x320xf32> -> vector<9x320xf32>
    %315 = arith.addf %310, %314 : vector<9x320xf32>
    %c0_240 = arith.constant 0 : index
    %c22_241 = arith.constant 22 : index
    %316 = vector.load %arg14[%c0_240, %c22_241] : memref<32x420xbf16, #tpu.memory_space<vmem>>, vector<32x320xbf16>
    %c1_242 = arith.constant 1 : index
    %c0_243 = arith.constant 0 : index
    %c0_244 = arith.constant 0 : index
    %317 = vector.load %arg9[%c1_242, %c0_243, %c0_244] : memref<9x9x32xbf16, #tpu.memory_space<vmem>>, vector<1x9x32xbf16>
    %318 = vector.shape_cast %317 : vector<1x9x32xbf16> to vector<9x32xbf16>
    %cst_245 = arith.constant dense<0.000000e+00> : vector<9x320xf32>
    %319 = tpu.matmul %318, %316, %cst_245 {dimension_numbers = #tpu.dot_dimension_numbers<[1], [0], [0], [1], [0, 0, 1, 1], [], []>} : vector<9x32xbf16>, vector<32x320xbf16>, vector<9x320xf32> -> vector<9x320xf32>
    %320 = arith.addf %315, %319 : vector<9x320xf32>
    %c0_246 = arith.constant 0 : index
    %c23_247 = arith.constant 23 : index
    %321 = vector.load %arg14[%c0_246, %c23_247] : memref<32x420xbf16, #tpu.memory_space<vmem>>, vector<32x320xbf16>
    %c2_248 = arith.constant 2 : index
    %c0_249 = arith.constant 0 : index
    %c0_250 = arith.constant 0 : index
    %322 = vector.load %arg9[%c2_248, %c0_249, %c0_250] : memref<9x9x32xbf16, #tpu.memory_space<vmem>>, vector<1x9x32xbf16>
    %323 = vector.shape_cast %322 : vector<1x9x32xbf16> to vector<9x32xbf16>
    %cst_251 = arith.constant dense<0.000000e+00> : vector<9x320xf32>
    %324 = tpu.matmul %323, %321, %cst_251 {dimension_numbers = #tpu.dot_dimension_numbers<[1], [0], [0], [1], [0, 0, 1, 1], [], []>} : vector<9x32xbf16>, vector<32x320xbf16>, vector<9x320xf32> -> vector<9x320xf32>
    %325 = arith.addf %320, %324 : vector<9x320xf32>
    %c0_252 = arith.constant 0 : index
    %c41_253 = arith.constant 41 : index
    %326 = vector.load %arg14[%c0_252, %c41_253] : memref<32x420xbf16, #tpu.memory_space<vmem>>, vector<32x320xbf16>
    %c3_254 = arith.constant 3 : index
    %c0_255 = arith.constant 0 : index
    %c0_256 = arith.constant 0 : index
    %327 = vector.load %arg9[%c3_254, %c0_255, %c0_256] : memref<9x9x32xbf16, #tpu.memory_space<vmem>>, vector<1x9x32xbf16>
    %328 = vector.shape_cast %327 : vector<1x9x32xbf16> to vector<9x32xbf16>
    %cst_257 = arith.constant dense<0.000000e+00> : vector<9x320xf32>
    %329 = tpu.matmul %328, %326, %cst_257 {dimension_numbers = #tpu.dot_dimension_numbers<[1], [0], [0], [1], [0, 0, 1, 1], [], []>} : vector<9x32xbf16>, vector<32x320xbf16>, vector<9x320xf32> -> vector<9x320xf32>
    %330 = arith.addf %325, %329 : vector<9x320xf32>
    %c0_258 = arith.constant 0 : index
    %c42_259 = arith.constant 42 : index
    %331 = vector.load %arg14[%c0_258, %c42_259] : memref<32x420xbf16, #tpu.memory_space<vmem>>, vector<32x320xbf16>
    %c4_260 = arith.constant 4 : index
    %c0_261 = arith.constant 0 : index
    %c0_262 = arith.constant 0 : index
    %332 = vector.load %arg9[%c4_260, %c0_261, %c0_262] : memref<9x9x32xbf16, #tpu.memory_space<vmem>>, vector<1x9x32xbf16>
    %333 = vector.shape_cast %332 : vector<1x9x32xbf16> to vector<9x32xbf16>
    %cst_263 = arith.constant dense<0.000000e+00> : vector<9x320xf32>
    %334 = tpu.matmul %333, %331, %cst_263 {dimension_numbers = #tpu.dot_dimension_numbers<[1], [0], [0], [1], [0, 0, 1, 1], [], []>} : vector<9x32xbf16>, vector<32x320xbf16>, vector<9x320xf32> -> vector<9x320xf32>
    %335 = arith.addf %330, %334 : vector<9x320xf32>
    %c0_264 = arith.constant 0 : index
    %c43_265 = arith.constant 43 : index
    %336 = vector.load %arg14[%c0_264, %c43_265] : memref<32x420xbf16, #tpu.memory_space<vmem>>, vector<32x320xbf16>
    %c5_266 = arith.constant 5 : index
    %c0_267 = arith.constant 0 : index
    %c0_268 = arith.constant 0 : index
    %337 = vector.load %arg9[%c5_266, %c0_267, %c0_268] : memref<9x9x32xbf16, #tpu.memory_space<vmem>>, vector<1x9x32xbf16>
    %338 = vector.shape_cast %337 : vector<1x9x32xbf16> to vector<9x32xbf16>
    %cst_269 = arith.constant dense<0.000000e+00> : vector<9x320xf32>
    %339 = tpu.matmul %338, %336, %cst_269 {dimension_numbers = #tpu.dot_dimension_numbers<[1], [0], [0], [1], [0, 0, 1, 1], [], []>} : vector<9x32xbf16>, vector<32x320xbf16>, vector<9x320xf32> -> vector<9x320xf32>
    %340 = arith.addf %335, %339 : vector<9x320xf32>
    %c0_270 = arith.constant 0 : index
    %c61_271 = arith.constant 61 : index
    %341 = vector.load %arg14[%c0_270, %c61_271] : memref<32x420xbf16, #tpu.memory_space<vmem>>, vector<32x320xbf16>
    %c6_272 = arith.constant 6 : index
    %c0_273 = arith.constant 0 : index
    %c0_274 = arith.constant 0 : index
    %342 = vector.load %arg9[%c6_272, %c0_273, %c0_274] : memref<9x9x32xbf16, #tpu.memory_space<vmem>>, vector<1x9x32xbf16>
    %343 = vector.shape_cast %342 : vector<1x9x32xbf16> to vector<9x32xbf16>
    %cst_275 = arith.constant dense<0.000000e+00> : vector<9x320xf32>
    %344 = tpu.matmul %343, %341, %cst_275 {dimension_numbers = #tpu.dot_dimension_numbers<[1], [0], [0], [1], [0, 0, 1, 1], [], []>} : vector<9x32xbf16>, vector<32x320xbf16>, vector<9x320xf32> -> vector<9x320xf32>
    %345 = arith.addf %340, %344 : vector<9x320xf32>
    %c0_276 = arith.constant 0 : index
    %c62_277 = arith.constant 62 : index
    %346 = vector.load %arg14[%c0_276, %c62_277] : memref<32x420xbf16, #tpu.memory_space<vmem>>, vector<32x320xbf16>
    %c7_278 = arith.constant 7 : index
    %c0_279 = arith.constant 0 : index
    %c0_280 = arith.constant 0 : index
    %347 = vector.load %arg9[%c7_278, %c0_279, %c0_280] : memref<9x9x32xbf16, #tpu.memory_space<vmem>>, vector<1x9x32xbf16>
    %348 = vector.shape_cast %347 : vector<1x9x32xbf16> to vector<9x32xbf16>
    %cst_281 = arith.constant dense<0.000000e+00> : vector<9x320xf32>
    %349 = tpu.matmul %348, %346, %cst_281 {dimension_numbers = #tpu.dot_dimension_numbers<[1], [0], [0], [1], [0, 0, 1, 1], [], []>} : vector<9x32xbf16>, vector<32x320xbf16>, vector<9x320xf32> -> vector<9x320xf32>
    %350 = arith.addf %345, %349 : vector<9x320xf32>
    %c0_282 = arith.constant 0 : index
    %c63_283 = arith.constant 63 : index
    %351 = vector.load %arg14[%c0_282, %c63_283] : memref<32x420xbf16, #tpu.memory_space<vmem>>, vector<32x320xbf16>
    %c8_284 = arith.constant 8 : index
    %c0_285 = arith.constant 0 : index
    %c0_286 = arith.constant 0 : index
    %352 = vector.load %arg9[%c8_284, %c0_285, %c0_286] : memref<9x9x32xbf16, #tpu.memory_space<vmem>>, vector<1x9x32xbf16>
    %353 = vector.shape_cast %352 : vector<1x9x32xbf16> to vector<9x32xbf16>
    %cst_287 = arith.constant dense<0.000000e+00> : vector<9x320xf32>
    %354 = tpu.matmul %353, %351, %cst_287 {dimension_numbers = #tpu.dot_dimension_numbers<[1], [0], [0], [1], [0, 0, 1, 1], [], []>} : vector<9x32xbf16>, vector<32x320xbf16>, vector<9x320xf32> -> vector<9x320xf32>
    %355 = arith.addf %350, %354 : vector<9x320xf32>
    %c0_288 = arith.constant 0 : index
    %c0_289 = arith.constant 0 : index
    %356 = vector.load %arg10[%c0_288, %c0_289] : memref<9x1xf32, #tpu.memory_space<vmem>>, vector<9x1xf32>
    %357 = vector.broadcast %356 : vector<9x1xf32> to vector<9x320xf32>
    %358 = arith.addf %355, %357 : vector<9x320xf32>
    %c0_290 = arith.constant 0 : index
    %c0_291 = arith.constant 0 : index
    %c0_292 = arith.constant 0 : index
    %359 = vector.load %arg11[%c0_290, %c0_291, %c0_292] : memref<1x9x320xf32, #tpu.memory_space<vmem>>, vector<1x9x320xf32>
    %360 = vector.shape_cast %359 : vector<1x9x320xf32> to vector<9x320xf32>
    %361 = vector.shape_cast %358 : vector<9x320xf32> to vector<1x9x320xf32>
    tpu.vector_store %arg11[%c0_290, %c0_291, %c0_292], %361 {strides = array<i32>} : memref<1x9x320xf32, #tpu.memory_space<vmem>>, vector<1x9x320xf32>,
    return
  }
  func.func @transform_0(%arg0: i32) -> (i32, i32, i32) {
    %c0_i32 = arith.constant 0 : i32
    %c0_i32_0 = arith.constant 0 : i32
    %c0_i32_1 = arith.constant 0 : i32
    return %arg0, %c0_i32, %c0_i32_0 : i32, i32, i32
  }
  func.func @transform_1(%arg0: i32) -> (i32, i32) {
    %c0_i32 = arith.constant 0 : i32
    %c0_i32_0 = arith.constant 0 : i32
    %c0_i32_1 = arith.constant 0 : i32
    return %c0_i32, %c0_i32_0 : i32, i32
  }
  func.func @transform_2(%arg0: i32) -> (i32, i32) {
    %c0_i32 = arith.constant 0 : i32
    %c0_i32_0 = arith.constant 0 : i32
    %c0_i32_1 = arith.constant 0 : i32
    return %c0_i32, %c0_i32_0 : i32, i32
  }
  func.func @transform_3(%arg0: i32) -> (i32, i32) {
    %c0_i32 = arith.constant 0 : i32
    %c0_i32_0 = arith.constant 0 : i32
    %c0_i32_1 = arith.constant 0 : i32
    return %c0_i32, %c0_i32_0 : i32, i32
  }
  func.func @transform_4(%arg0: i32) -> (i32, i32, i32) {
    %c0_i32 = arith.constant 0 : i32
    %c0_i32_0 = arith.constant 0 : i32
    %c0_i32_1 = arith.constant 0 : i32
    %c0_i32_2 = arith.constant 0 : i32
    return %c0_i32, %c0_i32_0, %c0_i32_1 : i32, i32, i32
  }
  func.func @transform_5(%arg0: i32) -> (i32, i32) {
    %c0_i32 = arith.constant 0 : i32
    %c0_i32_0 = arith.constant 0 : i32
    %c0_i32_1 = arith.constant 0 : i32
    return %c0_i32, %c0_i32_0 : i32, i32
  }
  func.func @transform_6(%arg0: i32) -> (i32, i32, i32) {
    %c0_i32 = arith.constant 0 : i32
    %c0_i32_0 = arith.constant 0 : i32
    %c0_i32_1 = arith.constant 0 : i32
    %c0_i32_2 = arith.constant 0 : i32
    return %c0_i32, %c0_i32_0, %c0_i32_1 : i32, i32, i32
  }
  func.func @transform_7(%arg0: i32) -> (i32, i32) {
    %c0_i32 = arith.constant 0 : i32
    %c0_i32_0 = arith.constant 0 : i32
    %c0_i32_1 = arith.constant 0 : i32
    return %c0_i32, %c0_i32_0 : i32, i32
  }
  func.func @transform_8(%arg0: i32) -> (i32, i32, i32) {
    %c0_i32 = arith.constant 0 : i32
    %c0_i32_0 = arith.constant 0 : i32
    %c0_i32_1 = arith.constant 0 : i32
    %c0_i32_2 = arith.constant 0 : i32
    return %c0_i32, %c0_i32_0, %c0_i32_1 : i32, i32, i32
  }
  func.func @transform_9(%arg0: i32) -> (i32, i32) {
    %c0_i32 = arith.constant 0 : i32
    %c0_i32_0 = arith.constant 0 : i32
    %c0_i32_1 = arith.constant 0 : i32
    return %c0_i32, %c0_i32_0 : i32, i32
  }
  func.func @transform_10(%arg0: i32) -> (i32, i32, i32) {
    %c0_i32 = arith.constant 0 : i32
    %c0_i32_0 = arith.constant 0 : i32
    %c0_i32_1 = arith.constant 0 : i32
    return %arg0, %c0_i32, %c0_i32_0 : i32, i32, i32
  }
}

</mosaic_0001>

<llo_original>
// kernel: super_resolution_forward.1
$region0: #{super_resolution_forward.1}
  #allocation0 [shape = 'u32[]', space=smem, size = 0x4, offset = 0x4, fixed_abs, tag = 'smem constant byte address 0x4 - core index']
  #allocation1 [shape = 'u32[144,128]{1,0:T(1,128)}', space=vmem, size = 0x12000, scoped, tag = 'internal scratch']
  #allocation2 [shape = 'bf16[64,420]{1,0:T(16,128)(2,1)}', space=vmem, size = 0x10000, scoped, tag = 'scratch operand']
  #allocation3 [shape = 'bf16[64,420]{1,0:T(16,128)(2,1)}', space=vmem, size = 0x10000, scoped, tag = 'scratch operand']
  #allocation4 [shape = 'bf16[32,420]{1,0:T(16,128)(2,1)}', space=vmem, size = 0x8000, scoped, tag = 'scratch operand']
  %s0 = inlined_call_operand.vmem [shape: f32[2,1,420], index: 0, kind: input, shape index: {}]
  %s1 = inlined_call_operand.vmem [shape: f32[1,320], index: 1, kind: input, shape index: {}]
  %s2 = inlined_call_operand.vmem [shape: f32[64,25], index: 2, kind: input, shape index: {}]
  %s3 = inlined_call_operand.vmem [shape: f32[64,1], index: 3, kind: input, shape index: {}]
  %s4 = inlined_call_operand.vmem [shape: bf16[9,64,64], index: 4, kind: input, shape index: {}]
  %s5 = inlined_call_operand.vmem [shape: f32[64,1], index: 5, kind: input, shape index: {}]
  %s6 = inlined_call_operand.vmem [shape: bf16[9,32,64], index: 6, kind: input, shape index: {}]
  %s7 = inlined_call_operand.vmem [shape: f32[32,1], index: 7, kind: input, shape index: {}]
  %s8 = inlined_call_operand.hbm [shape: bf16[9,9,32], index: 8, kind: input, shape index: {}]
  %s9 = inlined_call_operand.vmem [shape: f32[9,1], index: 9, kind: input, shape index: {}]
  %s10 = inlined_call_operand.vmem [shape: f32[2,9,320], index: 10, kind: output, shape index: {}]
  %s11 = sld [smem:[#allocation0]]
  $region77: #{super_resolution_forward.1} parent=0
    _
  %s13 = ssub.s32 1, %s11
  %s14 = scalar_select 0, %s13, %s11
  $region1: #{super_resolution_forward.1} parent=0
    #allocation5 [shape = 'u8[36864]{0}', space=vmem, size = 0x9000, scoped, tag = 'input window, operand 8, single buffered']
    #allocation6 [shape = 's32[2]{0}', space=sflag, size = 0x8, scoped, tag = 'scoped memory for super_resolution_forward.1']
    %15 = vsyncpa [#allocation6], 0
    loop: start=0, step=1, limit=4
    $region2: #{super_resolution_forward.1} parent=1 // loop_pre_header
      _
    $region3: #{super_resolution_forward.1} parent=1 // loop_header
      %s17 = sphi 0, %s21
      %p18 = scmp.ge.s32.totalorder %s17, 4
      %s27 = sphi 0, %s29
      %s30 = sphi 0, %s27
      %s31 = sphi 0, %s30
      %s47 = sphi 0, %s31
      %s51 = sphi 0, %s51
      %s53 = sphi 0, %s51
      %s54 = sphi 0, %s53
      %s68 = sphi 0, %s54
      %s72 = sphi 0, %s72
      %s74 = sphi 0, %s72
      %s75 = sphi 0, %s74
      %s89 = sphi 0, %s75
      %s93 = sphi 0, %s93
      %s95 = sphi 0, %s93
      %s96 = sphi 0, %s95
      %s110 = sphi 0, %s96
      %s114 = sphi 0, %s114
      %s116 = sphi 0, %s114
      %s117 = sphi 0, %s116
      %s131 = sphi 0, %s117
      %s135 = sphi 0, %s135
      %s137 = sphi 0, %s135
      %s138 = sphi 0, %s137
      %s152 = sphi 0, %s138
      %s156 = sphi 0, %s156
      %s158 = sphi 0, %s156
      %s159 = sphi 0, %s158
      %s173 = sphi 0, %s159
      %s177 = sphi 0, %s177
      %s179 = sphi 0, %s177
      %s180 = sphi 0, %s179
      %s194 = sphi 0, %s180
      %s198 = sphi 0, %s198
      %s200 = sphi 0, %s198
      %s201 = sphi 0, %s200
      %s215 = sphi 0, %s201
      %s219 = sphi 0, %s219
      %s221 = sphi 0, %s219
      %s222 = sphi 0, %s221
      %s236 = sphi 0, %s222
      %s242 = sphi 0, %s244
      %s245 = sphi 0, %s242
      %s246 = sphi 0, %s245
      %s262 = sphi 0, %s246
    $region4: #{super_resolution_forward.1} parent=1 // loop_header_branch
      %20 = sbr.rel (%p18) target = $region8
    $region5: #{super_resolution_forward.1} parent=1 // loop_body
      %s22 = ssub.s32 %s17, 1
      %s23 = ssub.s32 %s17, 2
      %s24 = sadd.s32 %s17, 1
      %s25 = ssub.s32 %s17, %s24
      %p26 = scmp.eq.s32.totalorder %s25, 0
      %s28 = sadd.s32 %s27, 1
      %s29 = scalar_select %p26, %s27, %s28
      %p32 = pneg %p26
      %p33 = scmp.eq.s32.totalorder %s17, 1
      %p34 = por %p32, %p33
      %p35 = scmp.ne.s32.totalorder %s27, %s30
      %p36 = scmp.eq.s32.totalorder %s17, 0
      %p37 = por %p35, %p36
      %p38 = scmp.ne.s32.totalorder %s27, %s30
      %p39 = scmp.eq.s32.totalorder %s22, 1
      %p40 = por %p38, %p39
      %p41 = scmp.ne.s32.totalorder %s30, %s31
      %p42 = scmp.eq.s32.totalorder %s22, 0
      %p43 = por %p41, %p42
      %p44 = scmp.ne.s32.totalorder %s30, %s31
      %p45 = scmp.eq.s32.totalorder %s23, 1
      %p46 = por %p44, %p45
      %p48 = scmp.ne.s32.totalorder %s31, %s47
      %p49 = scmp.eq.s32.totalorder %s23, 0
      %p50 = por %p48, %p49
      %s52 = sadd.s32 %s51, 1
      %p55 = scmp.eq.s32.totalorder %s17, 1
      %p56 = scmp.ne.s32.totalorder %s51, %s53
      %p57 = scmp.eq.s32.totalorder %s17, 0
      %p58 = por %p56, %p57
      %p59 = scmp.ne.s32.totalorder %s51, %s53
      %p60 = scmp.eq.s32.totalorder %s22, 1
      %p61 = por %p59, %p60
      %p62 = scmp.ne.s32.totalorder %s53, %s54
      %p63 = scmp.eq.s32.totalorder %s22, 0
      %p64 = por %p62, %p63
      %p65 = scmp.ne.s32.totalorder %s53, %s54
      %p66 = scmp.eq.s32.totalorder %s23, 1
      %p67 = por %p65, %p66
      %p69 = scmp.ne.s32.totalorder %s54, %s68
      %p70 = scmp.eq.s32.totalorder %s23, 0
      %p71 = por %p69, %p70
      %s73 = sadd.s32 %s72, 1
      %p76 = scmp.eq.s32.totalorder %s17, 1
      %p77 = scmp.ne.s32.totalorder %s72, %s74
      %p78 = scmp.eq.s32.totalorder %s17, 0
      %p79 = por %p77, %p78
      %p80 = scmp.ne.s32.totalorder %s72, %s74
      %p81 = scmp.eq.s32.totalorder %s22, 1
      %p82 = por %p80, %p81
      %p83 = scmp.ne.s32.totalorder %s74, %s75
      %p84 = scmp.eq.s32.totalorder %s22, 0
      %p85 = por %p83, %p84
      %p86 = scmp.ne.s32.totalorder %s74, %s75
      %p87 = scmp.eq.s32.totalorder %s23, 1
      %p88 = por %p86, %p87
      %p90 = scmp.ne.s32.totalorder %s75, %s89
      %p91 = scmp.eq.s32.totalorder %s23, 0
      %p92 = por %p90, %p91
      %s94 = sadd.s32 %s93, 1
      %p97 = scmp.eq.s32.totalorder %s17, 1
      %p98 = scmp.ne.s32.totalorder %s93, %s95
      %p99 = scmp.eq.s32.totalorder %s17, 0
      %p100 = por %p98, %p99
      %p101 = scmp.ne.s32.totalorder %s93, %s95
      %p102 = scmp.eq.s32.totalorder %s22, 1
      %p103 = por %p101, %p102
      %p104 = scmp.ne.s32.totalorder %s95, %s96
      %p105 = scmp.eq.s32.totalorder %s22, 0
      %p106 = por %p104, %p105
      %p107 = scmp.ne.s32.totalorder %s95, %s96
      %p108 = scmp.eq.s32.totalorder %s23, 1
      %p109 = por %p107, %p108
      %p111 = scmp.ne.s32.totalorder %s96, %s110
      %p112 = scmp.eq.s32.totalorder %s23, 0
      %p113 = por %p111, %p112
      %s115 = sadd.s32 %s114, 1
      %p118 = scmp.eq.s32.totalorder %s17, 1
      %p119 = scmp.ne.s32.totalorder %s114, %s116
      %p120 = scmp.eq.s32.totalorder %s17, 0
      %p121 = por %p119, %p120
      %p122 = scmp.ne.s32.totalorder %s114, %s116
      %p123 = scmp.eq.s32.totalorder %s22, 1
      %p124 = por %p122, %p123
      %p125 = scmp.ne.s32.totalorder %s116, %s117
      %p126 = scmp.eq.s32.totalorder %s22, 0
      %p127 = por %p125, %p126
      %p128 = scmp.ne.s32.totalorder %s116, %s117
      %p129 = scmp.eq.s32.totalorder %s23, 1
      %p130 = por %p128, %p129
      %p132 = scmp.ne.s32.totalorder %s117, %s131
      %p133 = scmp.eq.s32.totalorder %s23, 0
      %p134 = por %p132, %p133
      %s136 = sadd.s32 %s135, 1
      %p139 = scmp.eq.s32.totalorder %s17, 1
      %p140 = scmp.ne.s32.totalorder %s135, %s137
      %p141 = scmp.eq.s32.totalorder %s17, 0
      %p142 = por %p140, %p141
      %p143 = scmp.ne.s32.totalorder %s135, %s137
      %p144 = scmp.eq.s32.totalorder %s22, 1
      %p145 = por %p143, %p144
      %p146 = scmp.ne.s32.totalorder %s137, %s138
      %p147 = scmp.eq.s32.totalorder %s22, 0
      %p148 = por %p146, %p147
      %p149 = scmp.ne.s32.totalorder %s137, %s138
      %p150 = scmp.eq.s32.totalorder %s23, 1
      %p151 = por %p149, %p150
      %p153 = scmp.ne.s32.totalorder %s138, %s152
      %p154 = scmp.eq.s32.totalorder %s23, 0
      %p155 = por %p153, %p154
      %s157 = sadd.s32 %s156, 1
      %p160 = scmp.eq.s32.totalorder %s17, 1
      %p161 = scmp.ne.s32.totalorder %s156, %s158
      %p162 = scmp.eq.s32.totalorder %s17, 0
      %p163 = por %p161, %p162
      %p164 = scmp.ne.s32.totalorder %s156, %s158
      %p165 = scmp.eq.s32.totalorder %s22, 1
      %p166 = por %p164, %p165
      %p167 = scmp.ne.s32.totalorder %s158, %s159
      %p168 = scmp.eq.s32.totalorder %s22, 0
      %p169 = por %p167, %p168
      %p170 = scmp.ne.s32.totalorder %s158, %s159
      %p171 = scmp.eq.s32.totalorder %s23, 1
      %p172 = por %p170, %p171
      %p174 = scmp.ne.s32.totalorder %s159, %s173
      %p175 = scmp.eq.s32.totalorder %s23, 0
      %p176 = por %p174, %p175
      %s178 = sadd.s32 %s177, 1
      %p181 = scmp.eq.s32.totalorder %s17, 1
      %p182 = scmp.ne.s32.totalorder %s177, %s179
      %p183 = scmp.eq.s32.totalorder %s17, 0
      %p184 = por %p182, %p183
      %p185 = scmp.ne.s32.totalorder %s177, %s179
      %p186 = scmp.eq.s32.totalorder %s22, 1
      %p187 = por %p185, %p186
      %p188 = scmp.ne.s32.totalorder %s179, %s180
      %p189 = scmp.eq.s32.totalorder %s22, 0
      %p190 = por %p188, %p189
      %p191 = scmp.ne.s32.totalorder %s179, %s180
      %p192 = scmp.eq.s32.totalorder %s23, 1
      %p193 = por %p191, %p192
      %p195 = scmp.ne.s32.totalorder %s180, %s194
      %p196 = scmp.eq.s32.totalorder %s23, 0
      %p197 = por %p195, %p196
      %s199 = sadd.s32 %s198, 1
      %p202 = scmp.eq.s32.totalorder %s17, 1
      %p203 = scmp.ne.s32.totalorder %s198, %s200
      %p204 = scmp.eq.s32.totalorder %s17, 0
      %p205 = por %p203, %p204
      %p206 = scmp.ne.s32.totalorder %s198, %s200
      %p207 = scmp.eq.s32.totalorder %s22, 1
      %p208 = por %p206, %p207
      %p209 = scmp.ne.s32.totalorder %s200, %s201
      %p210 = scmp.eq.s32.totalorder %s22, 0
      %p211 = por %p209, %p210
      %p212 = scmp.ne.s32.totalorder %s200, %s201
      %p213 = scmp.eq.s32.totalorder %s23, 1
      %p214 = por %p212, %p213
      %p216 = scmp.ne.s32.totalorder %s201, %s215
      %p217 = scmp.eq.s32.totalorder %s23, 0
      %p218 = por %p216, %p217
      %s220 = sadd.s32 %s219, 1
      %p223 = scmp.eq.s32.totalorder %s17, 1
      %p224 = scmp.ne.s32.totalorder %s219, %s221
      %p225 = scmp.eq.s32.totalorder %s17, 0
      %p226 = por %p224, %p225
      %p227 = scmp.ne.s32.totalorder %s219, %s221
      %p228 = scmp.eq.s32.totalorder %s22, 1
      %p229 = por %p227, %p228
      %p230 = scmp.ne.s32.totalorder %s221, %s222
      %p231 = scmp.eq.s32.totalorder %s22, 0
      %p232 = por %p230, %p231
      %p233 = scmp.ne.s32.totalorder %s221, %s222
      %p234 = scmp.eq.s32.totalorder %s23, 1
      %p235 = por %p233, %p234
      %p237 = scmp.ne.s32.totalorder %s222, %s236
      %p238 = scmp.eq.s32.totalorder %s23, 0
      %p239 = por %p237, %p238
      %s240 = ssub.s32 %s17, %s24
      %p241 = scmp.eq.s32.totalorder %s240, 0
      %s243 = sadd.s32 %s242, 1
      %s244 = scalar_select %p241, %s242, %s243
      %p247 = pneg %p241
      %p248 = scmp.eq.s32.totalorder %s17, 1
      %p249 = por %p247, %p248
      %p250 = scmp.ne.s32.totalorder %s242, %s245
      %p251 = scmp.eq.s32.totalorder %s17, 0
      %p252 = por %p250, %p251
      %p253 = scmp.ne.s32.totalorder %s242, %s245
      %p254 = scmp.eq.s32.totalorder %s22, 1
      %p255 = por %p253, %p254
      %p256 = scmp.ne.s32.totalorder %s245, %s246
      %p257 = scmp.eq.s32.totalorder %s22, 0
      %p258 = por %p256, %p257
      %p259 = scmp.ne.s32.totalorder %s245, %s246
      %p260 = scmp.eq.s32.totalorder %s23, 1
      %p261 = por %p259, %p260
      %p263 = scmp.ne.s32.totalorder %s246, %s262
      %p264 = scmp.eq.s32.totalorder %s23, 0
      %p265 = por %p263, %p264
      %p266 = scmp.le.s32.totalorder 1, %s17
      %p267 = scmp.lt.s32.totalorder %s17, 3
      %p268 = pnand %p266, %p267
      %p269 = pneg %p268
      // Predicated region
      $region9: #{super_resolution_forward.1} parent=5 // pred_check
        _
      $region10: #{super_resolution_forward.1} parent=5 // pred_check_branch
        %271 = sbr.rel (%p268) target = $region12
      $region11: #{super_resolution_forward.1} parent=5 // pred_region
        %s272 = ssub.s32 %s17, 1
        // Predicated region
        $region13: #{super_resolution_forward.1} parent=11 // pred_check
          %p273 = pneg %p64
        $region14: #{super_resolution_forward.1} parent=11 // pred_check_branch
          %275 = sbr.rel (%p273) target = $region16
        $region15: #{super_resolution_forward.1} parent=11 // pred_region
          _
        $region16: #{super_resolution_forward.1} parent=11 // pred_fallthru
          _
        // Predicated region
        $region17: #{super_resolution_forward.1} parent=11 // pred_check
          %p276 = pneg %p85
        $region18: #{super_resolution_forward.1} parent=11 // pred_check_branch
          %278 = sbr.rel (%p276) target = $region20
        $region19: #{super_resolution_forward.1} parent=11 // pred_region
          _
        $region20: #{super_resolution_forward.1} parent=11 // pred_fallthru
          _
        // Predicated region
        $region21: #{super_resolution_forward.1} parent=11 // pred_check
          %p279 = pneg %p106
        $region22: #{super_resolution_forward.1} parent=11 // pred_check_branch
          %281 = sbr.rel (%p279) target = $region24
        $region23: #{super_resolution_forward.1} parent=11 // pred_region
          _
        $region24: #{super_resolution_forward.1} parent=11 // pred_fallthru
          _
        // Predicated region
        $region25: #{super_resolution_forward.1} parent=11 // pred_check
          %p282 = pneg %p127
        $region26: #{super_resolution_forward.1} parent=11 // pred_check_branch
          %284 = sbr.rel (%p282) target = $region28
        $region27: #{super_resolution_forward.1} parent=11 // pred_region
          _
        $region28: #{super_resolution_forward.1} parent=11 // pred_fallthru
          _
        // Predicated region
        $region29: #{super_resolution_forward.1} parent=11 // pred_check
          %p285 = pneg %p148
        $region30: #{super_resolution_forward.1} parent=11 // pred_check_branch
          %287 = sbr.rel (%p285) target = $region32
        $region31: #{super_resolution_forward.1} parent=11 // pred_region
          _
        $region32: #{super_resolution_forward.1} parent=11 // pred_fallthru
          _
        // Predicated region
        $region33: #{super_resolution_forward.1} parent=11 // pred_check
          %p288 = pneg %p169
        $region34: #{super_resolution_forward.1} parent=11 // pred_check_branch
          %290 = sbr.rel (%p288) target = $region36
        $region35: #{super_resolution_forward.1} parent=11 // pred_region
          _
        $region36: #{super_resolution_forward.1} parent=11 // pred_fallthru
          _
        // Predicated region
        $region37: #{super_resolution_forward.1} parent=11 // pred_check
          %p291 = pneg %p190
        $region38: #{super_resolution_forward.1} parent=11 // pred_check_branch
          %293 = sbr.rel (%p291) target = $region40
        $region39: #{super_resolution_forward.1} parent=11 // pred_region
          _
        $region40: #{super_resolution_forward.1} parent=11 // pred_fallthru
          _
        // Predicated region
        $region41: #{super_resolution_forward.1} parent=11 // pred_check
          %p294 = pneg %p211
        $region42: #{super_resolution_forward.1} parent=11 // pred_check_branch
          %296 = sbr.rel (%p294) target = $region44
        $region43: #{super_resolution_forward.1} parent=11 // pred_region
          %s298 = ssub.s32 1152, 1152
          %299 = vsyncadd [#allocation6], %s298
          %s300 = sshll.u32 [#allocation5], 4
          %s301 = int_to_ptr.vmem [resolvable:$true] %s300
          %306 = dma.hbm_to_vmem [thread:$0]  %s8, 1152, %s301, [#allocation6], 64, 64, 4
        $region44: #{super_resolution_forward.1} parent=11 // pred_fallthru
          _
        // Predicated region
        $region45: #{super_resolution_forward.1} parent=11 // pred_check
          %p307 = pneg %p232
        $region46: #{super_resolution_forward.1} parent=11 // pred_check_branch
          %309 = sbr.rel (%p307) target = $region48
        $region47: #{super_resolution_forward.1} parent=11 // pred_region
          _
        $region48: #{super_resolution_forward.1} parent=11 // pred_fallthru
          _
      $region12: #{super_resolution_forward.1} parent=5 // pred_fallthru
        _
      %p310 = scmp.lt.s32.totalorder %s17, 2
      // Predicated region
      $region49: #{super_resolution_forward.1} parent=5 // pred_check
        %p311 = pneg %p310
      $region50: #{super_resolution_forward.1} parent=5 // pred_check_branch
        %313 = sbr.rel (%p311) target = $region52
      $region51: #{super_resolution_forward.1} parent=5 // pred_region
        // Predicated region
        $region53: #{super_resolution_forward.1} parent=51 // pred_check
          %p314 = pneg %p37
        $region54: #{super_resolution_forward.1} parent=51 // pred_check_branch
          %316 = sbr.rel (%p314) target = $region56
        $region55: #{super_resolution_forward.1} parent=51 // pred_region
          %p317 = scmp.lt.s32.totalorder %s17, 1
          %s318 = scalar_select %p317, %s17, 1
          %s319 = smul.addr %s318, 4
          %s320 = scalar_lea.vmem %s0, %s319
        $region56: #{super_resolution_forward.1} parent=51 // pred_fallthru
          _
      $region52: #{super_resolution_forward.1} parent=5 // pred_fallthru
        _
      %p321 = scmp.le.s32.totalorder 1, %s17
      %p322 = scmp.lt.s32.totalorder %s17, 3
      %p323 = pnand %p321, %p322
      %p324 = pneg %p323
      // Predicated region
      $region57: #{super_resolution_forward.1} parent=5 // pred_check
        _
      $region58: #{super_resolution_forward.1} parent=5 // pred_check_branch
        %326 = sbr.rel (%p323) target = $region60
      $region59: #{super_resolution_forward.1} parent=5 // pred_region
        %s327 = ssub.s32 %s17, 1
        // Predicated region
        $region61: #{super_resolution_forward.1} parent=59 // pred_check
          %p328 = pneg %p211
        $region62: #{super_resolution_forward.1} parent=59 // pred_check_branch
          %330 = sbr.rel (%p328) target = $region64
        $region63: #{super_resolution_forward.1} parent=59 // pred_region
          %331 = dma.done [#allocation6], 1152
        $region64: #{super_resolution_forward.1} parent=59 // pred_fallthru
          _
        %p332 = scmp.lt.s32.totalorder %s22, 1
        %s333 = scalar_select %p332, %s22, 1
        %s334 = smul.addr %s333, 4
        %s335 = scalar_lea.vmem %s0, %s334
        %p336 = pneg %p43
        %p337 = pneg %p40
        %p338 = pneg %p64
        %p339 = pneg %p61
        %p340 = pneg %p85
        %p341 = pneg %p82
        %p342 = pneg %p106
        %p343 = pneg %p103
        %p344 = pneg %p127
        %p345 = pneg %p124
        %p346 = pneg %p148
        %p347 = pneg %p145
        %p348 = pneg %p169
        %p349 = pneg %p166
        %p350 = pneg %p190
        %p351 = pneg %p187
        %p352 = pneg %p211
        %p353 = pneg %p208
        %p354 = pneg %p232
        %p355 = pneg %p229
        %p356 = pneg %p258
        %p357 = pneg %p255
        %p358 = scmp.lt.s32.totalorder %s22, 1
        %s359 = scalar_select %p358, %s22, 1
        %s360 = smul.addr %s359, 6
        %s361 = smul.addr %s360, 8
        %s362 = scalar_lea.vmem %s10, %s361
        %p363 = scmp.lt.s32.totalorder %s22, 1
        %s364 = scalar_select %p363, %s22, 1
        %s365 = smul.addr %s364, 4
        %s366 = scalar_lea.vmem %s0, %s365
        %p367 = scmp.lt.s32.totalorder %s22, 1
        %s368 = scalar_select %p367, %s22, 1
        %s369 = smul.addr %s368, 6
        %s370 = smul.addr %s369, 8
        %s371 = scalar_lea.vmem %s10, %s370
        %v373 = vld [vmem:[%s2] sm:$0xff]
        %v374 = vld [vmem:[%s2 + $0x8] sm:$0xff]
        %v375 = vld [vmem:[%s2 + $0x10] sm:$0xff]
        %v376 = vld [vmem:[%s2 + $0x18] sm:$0xff]
        %v377 = vld [vmem:[%s2 + $0x20] sm:$0xff]
        %v378 = vld [vmem:[%s2 + $0x28] sm:$0xff]
        %v379 = vld [vmem:[%s2 + $0x30] sm:$0xff]
        %v380 = vld [vmem:[%s2 + $0x38] sm:$0xff]
        %v381 = vld [vmem:[%s366] sm:$0x7]
        %383 = vset.pattern.permute.xlu0 0
        %384 = vperm.xlu0 %383, %v373
        %v385 = vpop.permute.xlu0 %384
        %388 = vset.pattern.permute.xlu0 0
        %389 = vperm.xlu0 %388, %v374
        %v390 = vpop.permute.xlu0 %389
        %393 = vset.pattern.permute.xlu0 0
        %394 = vperm.xlu0 %393, %v375
        %v395 = vpop.permute.xlu0 %394
        %398 = vset.pattern.permute.xlu0 0
        %399 = vperm.xlu0 %398, %v376
        %v400 = vpop.permute.xlu0 %399
        %403 = vset.pattern.permute.xlu0 0
        %404 = vperm.xlu0 %403, %v377
        %v405 = vpop.permute.xlu0 %404
        %408 = vset.pattern.permute.xlu0 0
        %409 = vperm.xlu0 %408, %v378
        %v410 = vpop.permute.xlu0 %409
        %413 = vset.pattern.permute.xlu0 0
        %414 = vperm.xlu0 %413, %v379
        %v415 = vpop.permute.xlu0 %414
        %418 = vset.pattern.permute.xlu0 0
        %419 = vperm.xlu0 %418, %v380
        %v420 = vpop.permute.xlu0 %419
        %v423 = vlaneseq
        %v424 = vshrl.u32 %v423, 7
        %v425 = vsub.s32 0, %v424
        %v426 = vrot.slane %v381, %v425
        %v427 = vlaneseq
        %v428 = vshrl.u32 %v427, 7
        %v429 = vsub.s32 1, %v428
        %v430 = vrot.slane %v381, %v429
        %v431 = vlaneseq
        %v432 = vshrl.u32 %v431, 7
        %v433 = vsub.s32 2, %v432
        %v434 = vrot.slane %v381, %v433
        %v438 = vmul.f32 %v385, %v426
        %v439 = vmul.f32 %v385, %v430
        %v440 = vmul.f32 %v385, %v434
        %v441 = vmul.f32 %v390, %v426
        %v442 = vmul.f32 %v390, %v430
        %v443 = vmul.f32 %v390, %v434
        %v444 = vmul.f32 %v395, %v426
        %v445 = vmul.f32 %v395, %v430
        %v446 = vmul.f32 %v395, %v434
        %v447 = vmul.f32 %v400, %v426
        %v448 = vmul.f32 %v400, %v430
        %v449 = vmul.f32 %v400, %v434
        %v450 = vmul.f32 %v405, %v426
        %v451 = vmul.f32 %v405, %v430
        %v452 = vmul.f32 %v405, %v434
        %v453 = vmul.f32 %v410, %v426
        %v454 = vmul.f32 %v410, %v430
        %v455 = vmul.f32 %v410, %v434
        %v456 = vmul.f32 %v415, %v426
        %v457 = vmul.f32 %v415, %v430
        %v458 = vmul.f32 %v415, %v434
        %v459 = vmul.f32 %v420, %v426
        %v460 = vmul.f32 %v420, %v430
        %v461 = vmul.f32 %v420, %v434
        %v462 = vadd.f32 %v438, 0.0
        %v463 = vadd.f32 %v439, 0.0
        %v464 = vadd.f32 %v440, 0.0
        %v465 = vadd.f32 %v441, 0.0
        %v466 = vadd.f32 %v442, 0.0
        %v467 = vadd.f32 %v443, 0.0
        %v468 = vadd.f32 %v444, 0.0
        %v469 = vadd.f32 %v445, 0.0
        %v470 = vadd.f32 %v446, 0.0
        %v471 = vadd.f32 %v447, 0.0
        %v472 = vadd.f32 %v448, 0.0
        %v473 = vadd.f32 %v449, 0.0
        %v474 = vadd.f32 %v450, 0.0
        %v475 = vadd.f32 %v451, 0.0
        %v476 = vadd.f32 %v452, 0.0
        %v477 = vadd.f32 %v453, 0.0
        %v478 = vadd.f32 %v454, 0.0
        %v479 = vadd.f32 %v455, 0.0
        %v480 = vadd.f32 %v456, 0.0
        %v481 = vadd.f32 %v457, 0.0
        %v482 = vadd.f32 %v458, 0.0
        %v483 = vadd.f32 %v459, 0.0
        %v484 = vadd.f32 %v460, 0.0
        %v485 = vadd.f32 %v461, 0.0
        %486 = vset.pattern.permute.xlu0 1
        %487 = vperm.xlu0 %486, %v373
        %v488 = vpop.permute.xlu0 %487
        %490 = vset.pattern.permute.xlu0 1
        %491 = vperm.xlu0 %490, %v374
        %v492 = vpop.permute.xlu0 %491
        %494 = vset.pattern.permute.xlu0 1
        %495 = vperm.xlu0 %494, %v375
        %v496 = vpop.permute.xlu0 %495
        %498 = vset.pattern.permute.xlu0 1
        %499 = vperm.xlu0 %498, %v376
        %v500 = vpop.permute.xlu0 %499
        %502 = vset.pattern.permute.xlu0 1
        %503 = vperm.xlu0 %502, %v377
        %v504 = vpop.permute.xlu0 %503
        %506 = vset.pattern.permute.xlu0 1
        %507 = vperm.xlu0 %506, %v378
        %v508 = vpop.permute.xlu0 %507
        %510 = vset.pattern.permute.xlu0 1
        %511 = vperm.xlu0 %510, %v379
        %v512 = vpop.permute.xlu0 %511
        %514 = vset.pattern.permute.xlu0 1
        %515 = vperm.xlu0 %514, %v380
        %v516 = vpop.permute.xlu0 %515
        %v518 = vmul.f32 %v488, %v426
        %v519 = vmul.f32 %v488, %v430
        %v520 = vmul.f32 %v488, %v434
        %v521 = vmul.f32 %v492, %v426
        %v522 = vmul.f32 %v492, %v430
        %v523 = vmul.f32 %v492, %v434
        %v524 = vmul.f32 %v496, %v426
        %v525 = vmul.f32 %v496, %v430
        %v526 = vmul.f32 %v496, %v434
        %v527 = vmul.f32 %v500, %v426
        %v528 = vmul.f32 %v500, %v430
        %v529 = vmul.f32 %v500, %v434
        %v530 = vmul.f32 %v504, %v426
        %v531 = vmul.f32 %v504, %v430
        %v532 = vmul.f32 %v504, %v434
        %v533 = vmul.f32 %v508, %v426
        %v534 = vmul.f32 %v508, %v430
        %v535 = vmul.f32 %v508, %v434
        %v536 = vmul.f32 %v512, %v426
        %v537 = vmul.f32 %v512, %v430
        %v538 = vmul.f32 %v512, %v434
        %v539 = vmul.f32 %v516, %v426
        %v540 = vmul.f32 %v516, %v430
        %v541 = vmul.f32 %v516, %v434
        %566 = vrot.lane.b32.xlu0 %v518, 127
        %v567 = vpop.permute.xlu0 %566
        %568 = vrot.lane.b32.xlu0 %v519, 127
        %v569 = vpop.permute.xlu0 %568
        %570 = vrot.lane.b32.xlu0 %v520, 127
        %v571 = vpop.permute.xlu0 %570
        %572 = vrot.lane.b32.xlu0 %v521, 127
        %v573 = vpop.permute.xlu0 %572
        %574 = vrot.lane.b32.xlu0 %v522, 127
        %v575 = vpop.permute.xlu0 %574
        %576 = vrot.lane.b32.xlu0 %v523, 127
        %v577 = vpop.permute.xlu0 %576
        %578 = vrot.lane.b32.xlu0 %v524, 127
        %v579 = vpop.permute.xlu0 %578
        %580 = vrot.lane.b32.xlu0 %v525, 127
        %v581 = vpop.permute.xlu0 %580
        %582 = vrot.lane.b32.xlu0 %v526, 127
        %v583 = vpop.permute.xlu0 %582
        %584 = vrot.lane.b32.xlu0 %v527, 127
        %v585 = vpop.permute.xlu0 %584
        %586 = vrot.lane.b32.xlu0 %v528, 127
        %v587 = vpop.permute.xlu0 %586
        %588 = vrot.lane.b32.xlu0 %v529, 127
        %v589 = vpop.permute.xlu0 %588
        %590 = vrot.lane.b32.xlu0 %v530, 127
        %v591 = vpop.permute.xlu0 %590
        %592 = vrot.lane.b32.xlu0 %v531, 127
        %v593 = vpop.permute.xlu0 %592
        %594 = vrot.lane.b32.xlu0 %v532, 127
        %v595 = vpop.permute.xlu0 %594
        %596 = vrot.lane.b32.xlu0 %v533, 127
        %v597 = vpop.permute.xlu0 %596
        %598 = vrot.lane.b32.xlu0 %v534, 127
        %v599 = vpop.permute.xlu0 %598
        %600 = vrot.lane.b32.xlu0 %v535, 127
        %v601 = vpop.permute.xlu0 %600
        %602 = vrot.lane.b32.xlu0 %v536, 127
        %v603 = vpop.permute.xlu0 %602
        %604 = vrot.lane.b32.xlu0 %v537, 127
        %v605 = vpop.permute.xlu0 %604
        %606 = vrot.lane.b32.xlu0 %v538, 127
        %v607 = vpop.permute.xlu0 %606
        %608 = vrot.lane.b32.xlu0 %v539, 127
        %v609 = vpop.permute.xlu0 %608
        %610 = vrot.lane.b32.xlu0 %v540, 127
        %v611 = vpop.permute.xlu0 %610
        %612 = vrot.lane.b32.xlu0 %v541, 127
        %v613 = vpop.permute.xlu0 %612
        %vm614 = vcmask 1039360
        %v615 = vsel %vm614, %v567, %v569
        %v616 = vsel %vm614, %v569, %v571
        %v617 = vsel %vm614, %v573, %v575
        %v618 = vsel %vm614, %v575, %v577
        %v619 = vsel %vm614, %v579, %v581
        %v620 = vsel %vm614, %v581, %v583
        %v621 = vsel %vm614, %v585, %v587
        %v622 = vsel %vm614, %v587, %v589
        %v623 = vsel %vm614, %v591, %v593
        %v624 = vsel %vm614, %v593, %v595
        %v625 = vsel %vm614, %v597, %v599
        %v626 = vsel %vm614, %v599, %v601
        %v627 = vsel %vm614, %v603, %v605
        %v628 = vsel %vm614, %v605, %v607
        %v629 = vsel %vm614, %v609, %v611
        %v630 = vsel %vm614, %v611, %v613
        %v655 = vadd.f32 %v462, %v615
        %v656 = vadd.f32 %v463, %v616
        %v657 = vadd.f32 %v464, %v571
        %v658 = vadd.f32 %v465, %v617
        %v659 = vadd.f32 %v466, %v618
        %v660 = vadd.f32 %v467, %v577
        %v661 = vadd.f32 %v468, %v619
        %v662 = vadd.f32 %v469, %v620
        %v663 = vadd.f32 %v470, %v583
        %v664 = vadd.f32 %v471, %v621
        %v665 = vadd.f32 %v472, %v622
        %v666 = vadd.f32 %v473, %v589
        %v667 = vadd.f32 %v474, %v623
        %v668 = vadd.f32 %v475, %v624
        %v669 = vadd.f32 %v476, %v595
        %v670 = vadd.f32 %v477, %v625
        %v671 = vadd.f32 %v478, %v626
        %v672 = vadd.f32 %v479, %v601
        %v673 = vadd.f32 %v480, %v627
        %v674 = vadd.f32 %v481, %v628
        %v675 = vadd.f32 %v482, %v607
        %v676 = vadd.f32 %v483, %v629
        %v677 = vadd.f32 %v484, %v630
        %v678 = vadd.f32 %v485, %v613
        %679 = vset.pattern.permute.xlu0 2
        %680 = vperm.xlu0 %679, %v373
        %v681 = vpop.permute.xlu0 %680
        %683 = vset.pattern.permute.xlu0 2
        %684 = vperm.xlu0 %683, %v374
        %v685 = vpop.permute.xlu0 %684
        %687 = vset.pattern.permute.xlu0 2
        %688 = vperm.xlu0 %687, %v375
        %v689 = vpop.permute.xlu0 %688
        %691 = vset.pattern.permute.xlu0 2
        %692 = vperm.xlu0 %691, %v376
        %v693 = vpop.permute.xlu0 %692
        %695 = vset.pattern.permute.xlu0 2
        %696 = vperm.xlu0 %695, %v377
        %v697 = vpop.permute.xlu0 %696
        %699 = vset.pattern.permute.xlu0 2
        %700 = vperm.xlu0 %699, %v378
        %v701 = vpop.permute.xlu0 %700
        %703 = vset.pattern.permute.xlu0 2
        %704 = vperm.xlu0 %703, %v379
        %v705 = vpop.permute.xlu0 %704
        %707 = vset.pattern.permute.xlu0 2
        %708 = vperm.xlu0 %707, %v380
        %v709 = vpop.permute.xlu0 %708
        %v711 = vmul.f32 %v681, %v426
        %v712 = vmul.f32 %v681, %v430
        %v713 = vmul.f32 %v681, %v434
        %v714 = vmul.f32 %v685, %v426
        %v715 = vmul.f32 %v685, %v430
        %v716 = vmul.f32 %v685, %v434
        %v717 = vmul.f32 %v689, %v426
        %v718 = vmul.f32 %v689, %v430
        %v719 = vmul.f32 %v689, %v434
        %v720 = vmul.f32 %v693, %v426
        %v721 = vmul.f32 %v693, %v430
        %v722 = vmul.f32 %v693, %v434
        %v723 = vmul.f32 %v697, %v426
        %v724 = vmul.f32 %v697, %v430
        %v725 = vmul.f32 %v697, %v434
        %v726 = vmul.f32 %v701, %v426
        %v727 = vmul.f32 %v701, %v430
        %v728 = vmul.f32 %v701, %v434
        %v729 = vmul.f32 %v705, %v426
        %v730 = vmul.f32 %v705, %v430
        %v731 = vmul.f32 %v705, %v434
        %v732 = vmul.f32 %v709, %v426
        %v733 = vmul.f32 %v709, %v430
        %v734 = vmul.f32 %v709, %v434
        %759 = vrot.lane.b32.xlu0 %v711, 126
        %v760 = vpop.permute.xlu0 %759
        %761 = vrot.lane.b32.xlu0 %v712, 126
        %v762 = vpop.permute.xlu0 %761
        %763 = vrot.lane.b32.xlu0 %v713, 126
        %v764 = vpop.permute.xlu0 %763
        %765 = vrot.lane.b32.xlu0 %v714, 126
        %v766 = vpop.permute.xlu0 %765
        %767 = vrot.lane.b32.xlu0 %v715, 126
        %v768 = vpop.permute.xlu0 %767
        %769 = vrot.lane.b32.xlu0 %v716, 126
        %v770 = vpop.permute.xlu0 %769
        %771 = vrot.lane.b32.xlu0 %v717, 126
        %v772 = vpop.permute.xlu0 %771
        %773 = vrot.lane.b32.xlu0 %v718, 126
        %v774 = vpop.permute.xlu0 %773
        %775 = vrot.lane.b32.xlu0 %v719, 126
        %v776 = vpop.permute.xlu0 %775
        %777 = vrot.lane.b32.xlu0 %v720, 126
        %v778 = vpop.permute.xlu0 %777
        %779 = vrot.lane.b32.xlu0 %v721, 126
        %v780 = vpop.permute.xlu0 %779
        %781 = vrot.lane.b32.xlu0 %v722, 126
        %v782 = vpop.permute.xlu0 %781
        %783 = vrot.lane.b32.xlu0 %v723, 126
        %v784 = vpop.permute.xlu0 %783
        %785 = vrot.lane.b32.xlu0 %v724, 126
        %v786 = vpop.permute.xlu0 %785
        %787 = vrot.lane.b32.xlu0 %v725, 126
        %v788 = vpop.permute.xlu0 %787
        %789 = vrot.lane.b32.xlu0 %v726, 126
        %v790 = vpop.permute.xlu0 %789
        %791 = vrot.lane.b32.xlu0 %v727, 126
        %v792 = vpop.permute.xlu0 %791
        %793 = vrot.lane.b32.xlu0 %v728, 126
        %v794 = vpop.permute.xlu0 %793
        %795 = vrot.lane.b32.xlu0 %v729, 126
        %v796 = vpop.permute.xlu0 %795
        %797 = vrot.lane.b32.xlu0 %v730, 126
        %v798 = vpop.permute.xlu0 %797
        %799 = vrot.lane.b32.xlu0 %v731, 126
        %v800 = vpop.permute.xlu0 %799
        %801 = vrot.lane.b32.xlu0 %v732, 126
        %v802 = vpop.permute.xlu0 %801
        %803 = vrot.lane.b32.xlu0 %v733, 126
        %v804 = vpop.permute.xlu0 %803
        %805 = vrot.lane.b32.xlu0 %v734, 126
        %v806 = vpop.permute.xlu0 %805
        %vm807 = vcmask 1031168
        %v808 = vsel %vm807, %v760, %v762
        %v809 = vsel %vm807, %v762, %v764
        %v810 = vsel %vm807, %v766, %v768
        %v811 = vsel %vm807, %v768, %v770
        %v812 = vsel %vm807, %v772, %v774
        %v813 = vsel %vm807, %v774, %v776
        %v814 = vsel %vm807, %v778, %v780
        %v815 = vsel %vm807, %v780, %v782
        %v816 = vsel %vm807, %v784, %v786
        %v817 = vsel %vm807, %v786, %v788
        %v818 = vsel %vm807, %v790, %v792
        %v819 = vsel %vm807, %v792, %v794
        %v820 = vsel %vm807, %v796, %v798
        %v821 = vsel %vm807, %v798, %v800
        %v822 = vsel %vm807, %v802, %v804
        %v823 = vsel %vm807, %v804, %v806
        %v848 = vadd.f32 %v655, %v808
        %v849 = vadd.f32 %v656, %v809
        %v850 = vadd.f32 %v657, %v764
        %v851 = vadd.f32 %v658, %v810
        %v852 = vadd.f32 %v659, %v811
        %v853 = vadd.f32 %v660, %v770
        %v854 = vadd.f32 %v661, %v812
        %v855 = vadd.f32 %v662, %v813
        %v856 = vadd.f32 %v663, %v776
        %v857 = vadd.f32 %v664, %v814
        %v858 = vadd.f32 %v665, %v815
        %v859 = vadd.f32 %v666, %v782
        %v860 = vadd.f32 %v667, %v816
        %v861 = vadd.f32 %v668, %v817
        %v862 = vadd.f32 %v669, %v788
        %v863 = vadd.f32 %v670, %v818
        %v864 = vadd.f32 %v671, %v819
        %v865 = vadd.f32 %v672, %v794
        %v866 = vadd.f32 %v673, %v820
        %v867 = vadd.f32 %v674, %v821
        %v868 = vadd.f32 %v675, %v800
        %v869 = vadd.f32 %v676, %v822
        %v870 = vadd.f32 %v677, %v823
        %v871 = vadd.f32 %v678, %v806
        %872 = vset.pattern.permute.xlu0 3
        %873 = vperm.xlu0 %872, %v373
        %v874 = vpop.permute.xlu0 %873
        %876 = vset.pattern.permute.xlu0 3
        %877 = vperm.xlu0 %876, %v374
        %v878 = vpop.permute.xlu0 %877
        %880 = vset.pattern.permute.xlu0 3
        %881 = vperm.xlu0 %880, %v375
        %v882 = vpop.permute.xlu0 %881
        %884 = vset.pattern.permute.xlu0 3
        %885 = vperm.xlu0 %884, %v376
        %v886 = vpop.permute.xlu0 %885
        %888 = vset.pattern.permute.xlu0 3
        %889 = vperm.xlu0 %888, %v377
        %v890 = vpop.permute.xlu0 %889
        %892 = vset.pattern.permute.xlu0 3
        %893 = vperm.xlu0 %892, %v378
        %v894 = vpop.permute.xlu0 %893
        %896 = vset.pattern.permute.xlu0 3
        %897 = vperm.xlu0 %896, %v379
        %v898 = vpop.permute.xlu0 %897
        %900 = vset.pattern.permute.xlu0 3
        %901 = vperm.xlu0 %900, %v380
        %v902 = vpop.permute.xlu0 %901
        %v904 = vmul.f32 %v874, %v426
        %v905 = vmul.f32 %v874, %v430
        %v906 = vmul.f32 %v874, %v434
        %v907 = vmul.f32 %v878, %v426
        %v908 = vmul.f32 %v878, %v430
        %v909 = vmul.f32 %v878, %v434
        %v910 = vmul.f32 %v882, %v426
        %v911 = vmul.f32 %v882, %v430
        %v912 = vmul.f32 %v882, %v434
        %v913 = vmul.f32 %v886, %v426
        %v914 = vmul.f32 %v886, %v430
        %v915 = vmul.f32 %v886, %v434
        %v916 = vmul.f32 %v890, %v426
        %v917 = vmul.f32 %v890, %v430
        %v918 = vmul.f32 %v890, %v434
        %v919 = vmul.f32 %v894, %v426
        %v920 = vmul.f32 %v894, %v430
        %v921 = vmul.f32 %v894, %v434
        %v922 = vmul.f32 %v898, %v426
        %v923 = vmul.f32 %v898, %v430
        %v924 = vmul.f32 %v898, %v434
        %v925 = vmul.f32 %v902, %v426
        %v926 = vmul.f32 %v902, %v430
        %v927 = vmul.f32 %v902, %v434
        %952 = vrot.lane.b32.xlu0 %v904, 125
        %v953 = vpop.permute.xlu0 %952
        %954 = vrot.lane.b32.xlu0 %v905, 125
        %v955 = vpop.permute.xlu0 %954
        %956 = vrot.lane.b32.xlu0 %v906, 125
        %v957 = vpop.permute.xlu0 %956
        %958 = vrot.lane.b32.xlu0 %v907, 125
        %v959 = vpop.permute.xlu0 %958
        %960 = vrot.lane.b32.xlu0 %v908, 125
        %v961 = vpop.permute.xlu0 %960
        %962 = vrot.lane.b32.xlu0 %v909, 125
        %v963 = vpop.permute.xlu0 %962
        %964 = vrot.lane.b32.xlu0 %v910, 125
        %v965 = vpop.permute.xlu0 %964
        %966 = vrot.lane.b32.xlu0 %v911, 125
        %v967 = vpop.permute.xlu0 %966
        %968 = vrot.lane.b32.xlu0 %v912, 125
        %v969 = vpop.permute.xlu0 %968
        %970 = vrot.lane.b32.xlu0 %v913, 125
        %v971 = vpop.permute.xlu0 %970
        %972 = vrot.lane.b32.xlu0 %v914, 125
        %v973 = vpop.permute.xlu0 %972
        %974 = vrot.lane.b32.xlu0 %v915, 125
        %v975 = vpop.permute.xlu0 %974
        %976 = vrot.lane.b32.xlu0 %v916, 125
        %v977 = vpop.permute.xlu0 %976
        %978 = vrot.lane.b32.xlu0 %v917, 125
        %v979 = vpop.permute.xlu0 %978
        %980 = vrot.lane.b32.xlu0 %v918, 125
        %v981 = vpop.permute.xlu0 %980
        %982 = vrot.lane.b32.xlu0 %v919, 125
        %v983 = vpop.permute.xlu0 %982
        %984 = vrot.lane.b32.xlu0 %v920, 125
        %v985 = vpop.permute.xlu0 %984
        %986 = vrot.lane.b32.xlu0 %v921, 125
        %v987 = vpop.permute.xlu0 %986
        %988 = vrot.lane.b32.xlu0 %v922, 125
        %v989 = vpop.permute.xlu0 %988
        %990 = vrot.lane.b32.xlu0 %v923, 125
        %v991 = vpop.permute.xlu0 %990
        %992 = vrot.lane.b32.xlu0 %v924, 125
        %v993 = vpop.permute.xlu0 %992
        %994 = vrot.lane.b32.xlu0 %v925, 125
        %v995 = vpop.permute.xlu0 %994
        %996 = vrot.lane.b32.xlu0 %v926, 125
        %v997 = vpop.permute.xlu0 %996
        %998 = vrot.lane.b32.xlu0 %v927, 125
        %v999 = vpop.permute.xlu0 %998
        %vm1000 = vcmask 1022976
        %v1001 = vsel %vm1000, %v953, %v955
        %v1002 = vsel %vm1000, %v955, %v957
        %v1003 = vsel %vm1000, %v959, %v961
        %v1004 = vsel %vm1000, %v961, %v963
        %v1005 = vsel %vm1000, %v965, %v967
        %v1006 = vsel %vm1000, %v967, %v969
        %v1007 = vsel %vm1000, %v971, %v973
        %v1008 = vsel %vm1000, %v973, %v975
        %v1009 = vsel %vm1000, %v977, %v979
        %v1010 = vsel %vm1000, %v979, %v981
        %v1011 = vsel %vm1000, %v983, %v985
        %v1012 = vsel %vm1000, %v985, %v987
        %v1013 = vsel %vm1000, %v989, %v991
        %v1014 = vsel %vm1000, %v991, %v993
        %v1015 = vsel %vm1000, %v995, %v997
        %v1016 = vsel %vm1000, %v997, %v999
        %v1041 = vadd.f32 %v848, %v1001
        %v1042 = vadd.f32 %v849, %v1002
        %v1043 = vadd.f32 %v850, %v957
        %v1044 = vadd.f32 %v851, %v1003
        %v1045 = vadd.f32 %v852, %v1004
        %v1046 = vadd.f32 %v853, %v963
        %v1047 = vadd.f32 %v854, %v1005
        %v1048 = vadd.f32 %v855, %v1006
        %v1049 = vadd.f32 %v856, %v969
        %v1050 = vadd.f32 %v857, %v1007
        %v1051 = vadd.f32 %v858, %v1008
        %v1052 = vadd.f32 %v859, %v975
        %v1053 = vadd.f32 %v860, %v1009
        %v1054 = vadd.f32 %v861, %v1010
        %v1055 = vadd.f32 %v862, %v981
        %v1056 = vadd.f32 %v863, %v1011
        %v1057 = vadd.f32 %v864, %v1012
        %v1058 = vadd.f32 %v865, %v987
        %v1059 = vadd.f32 %v866, %v1013
        %v1060 = vadd.f32 %v867, %v1014
        %v1061 = vadd.f32 %v868, %v993
        %v1062 = vadd.f32 %v869, %v1015
        %v1063 = vadd.f32 %v870, %v1016
        %v1064 = vadd.f32 %v871, %v999
        %1065 = vset.pattern.permute.xlu0 4
        %1066 = vperm.xlu0 %1065, %v373
        %v1067 = vpop.permute.xlu0 %1066
        %1069 = vset.pattern.permute.xlu0 4
        %1070 = vperm.xlu0 %1069, %v374
        %v1071 = vpop.permute.xlu0 %1070
        %1073 = vset.pattern.permute.xlu0 4
        %1074 = vperm.xlu0 %1073, %v375
        %v1075 = vpop.permute.xlu0 %1074
        %1077 = vset.pattern.permute.xlu0 4
        %1078 = vperm.xlu0 %1077, %v376
        %v1079 = vpop.permute.xlu0 %1078
        %1081 = vset.pattern.permute.xlu0 4
        %1082 = vperm.xlu0 %1081, %v377
        %v1083 = vpop.permute.xlu0 %1082
        %1085 = vset.pattern.permute.xlu0 4
        %1086 = vperm.xlu0 %1085, %v378
        %v1087 = vpop.permute.xlu0 %1086
        %1089 = vset.pattern.permute.xlu0 4
        %1090 = vperm.xlu0 %1089, %v379
        %v1091 = vpop.permute.xlu0 %1090
        %1093 = vset.pattern.permute.xlu0 4
        %1094 = vperm.xlu0 %1093, %v380
        %v1095 = vpop.permute.xlu0 %1094
        %v1097 = vmul.f32 %v1067, %v426
        %v1098 = vmul.f32 %v1067, %v430
        %v1099 = vmul.f32 %v1067, %v434
        %v1100 = vmul.f32 %v1071, %v426
        %v1101 = vmul.f32 %v1071, %v430
        %v1102 = vmul.f32 %v1071, %v434
        %v1103 = vmul.f32 %v1075, %v426
        %v1104 = vmul.f32 %v1075, %v430
        %v1105 = vmul.f32 %v1075, %v434
        %v1106 = vmul.f32 %v1079, %v426
        %v1107 = vmul.f32 %v1079, %v430
        %v1108 = vmul.f32 %v1079, %v434
        %v1109 = vmul.f32 %v1083, %v426
        %v1110 = vmul.f32 %v1083, %v430
        %v1111 = vmul.f32 %v1083, %v434
        %v1112 = vmul.f32 %v1087, %v426
        %v1113 = vmul.f32 %v1087, %v430
        %v1114 = vmul.f32 %v1087, %v434
        %v1115 = vmul.f32 %v1091, %v426
        %v1116 = vmul.f32 %v1091, %v430
        %v1117 = vmul.f32 %v1091, %v434
        %v1118 = vmul.f32 %v1095, %v426
        %v1119 = vmul.f32 %v1095, %v430
        %v1120 = vmul.f32 %v1095, %v434
        %1145 = vrot.lane.b32.xlu0 %v1097, 124
        %v1146 = vpop.permute.xlu0 %1145
        %1147 = vrot.lane.b32.xlu0 %v1098, 124
        %v1148 = vpop.permute.xlu0 %1147
        %1149 = vrot.lane.b32.xlu0 %v1099, 124
        %v1150 = vpop.permute.xlu0 %1149
        %1151 = vrot.lane.b32.xlu0 %v1100, 124
        %v1152 = vpop.permute.xlu0 %1151
        %1153 = vrot.lane.b32.xlu0 %v1101, 124
        %v1154 = vpop.permute.xlu0 %1153
        %1155 = vrot.lane.b32.xlu0 %v1102, 124
        %v1156 = vpop.permute.xlu0 %1155
        %1157 = vrot.lane.b32.xlu0 %v1103, 124
        %v1158 = vpop.permute.xlu0 %1157
        %1159 = vrot.lane.b32.xlu0 %v1104, 124
        %v1160 = vpop.permute.xlu0 %1159
        %1161 = vrot.lane.b32.xlu0 %v1105, 124
        %v1162 = vpop.permute.xlu0 %1161
        %1163 = vrot.lane.b32.xlu0 %v1106, 124
        %v1164 = vpop.permute.xlu0 %1163
        %1165 = vrot.lane.b32.xlu0 %v1107, 124
        %v1166 = vpop.permute.xlu0 %1165
        %1167 = vrot.lane.b32.xlu0 %v1108, 124
        %v1168 = vpop.permute.xlu0 %1167
        %1169 = vrot.lane.b32.xlu0 %v1109, 124
        %v1170 = vpop.permute.xlu0 %1169
        %1171 = vrot.lane.b32.xlu0 %v1110, 124
        %v1172 = vpop.permute.xlu0 %1171
        %1173 = vrot.lane.b32.xlu0 %v1111, 124
        %v1174 = vpop.permute.xlu0 %1173
        %1175 = vrot.lane.b32.xlu0 %v1112, 124
        %v1176 = vpop.permute.xlu0 %1175
        %1177 = vrot.lane.b32.xlu0 %v1113, 124
        %v1178 = vpop.permute.xlu0 %1177
        %1179 = vrot.lane.b32.xlu0 %v1114, 124
        %v1180 = vpop.permute.xlu0 %1179
        %1181 = vrot.lane.b32.xlu0 %v1115, 124
        %v1182 = vpop.permute.xlu0 %1181
        %1183 = vrot.lane.b32.xlu0 %v1116, 124
        %v1184 = vpop.permute.xlu0 %1183
        %1185 = vrot.lane.b32.xlu0 %v1117, 124
        %v1186 = vpop.permute.xlu0 %1185
        %1187 = vrot.lane.b32.xlu0 %v1118, 124
        %v1188 = vpop.permute.xlu0 %1187
        %1189 = vrot.lane.b32.xlu0 %v1119, 124
        %v1190 = vpop.permute.xlu0 %1189
        %1191 = vrot.lane.b32.xlu0 %v1120, 124
        %v1192 = vpop.permute.xlu0 %1191
        %vm1193 = vcmask 1014784
        %v1194 = vsel %vm1193, %v1146, %v1148
        %v1195 = vsel %vm1193, %v1148, %v1150
        %v1196 = vsel %vm1193, %v1152, %v1154
        %v1197 = vsel %vm1193, %v1154, %v1156
        %v1198 = vsel %vm1193, %v1158, %v1160
        %v1199 = vsel %vm1193, %v1160, %v1162
        %v1200 = vsel %vm1193, %v1164, %v1166
        %v1201 = vsel %vm1193, %v1166, %v1168
        %v1202 = vsel %vm1193, %v1170, %v1172
        %v1203 = vsel %vm1193, %v1172, %v1174
        %v1204 = vsel %vm1193, %v1176, %v1178
        %v1205 = vsel %vm1193, %v1178, %v1180
        %v1206 = vsel %vm1193, %v1182, %v1184
        %v1207 = vsel %vm1193, %v1184, %v1186
        %v1208 = vsel %vm1193, %v1188, %v1190
        %v1209 = vsel %vm1193, %v1190, %v1192
        %v1234 = vadd.f32 %v1041, %v1194
        %v1235 = vadd.f32 %v1042, %v1195
        %v1236 = vadd.f32 %v1043, %v1150
        %v1237 = vadd.f32 %v1044, %v1196
        %v1238 = vadd.f32 %v1045, %v1197
        %v1239 = vadd.f32 %v1046, %v1156
        %v1240 = vadd.f32 %v1047, %v1198
        %v1241 = vadd.f32 %v1048, %v1199
        %v1242 = vadd.f32 %v1049, %v1162
        %v1243 = vadd.f32 %v1050, %v1200
        %v1244 = vadd.f32 %v1051, %v1201
        %v1245 = vadd.f32 %v1052, %v1168
        %v1246 = vadd.f32 %v1053, %v1202
        %v1247 = vadd.f32 %v1054, %v1203
        %v1248 = vadd.f32 %v1055, %v1174
        %v1249 = vadd.f32 %v1056, %v1204
        %v1250 = vadd.f32 %v1057, %v1205
        %v1251 = vadd.f32 %v1058, %v1180
        %v1252 = vadd.f32 %v1059, %v1206
        %v1253 = vadd.f32 %v1060, %v1207
        %v1254 = vadd.f32 %v1061, %v1186
        %v1255 = vadd.f32 %v1062, %v1208
        %v1256 = vadd.f32 %v1063, %v1209
        %v1257 = vadd.f32 %v1064, %v1192
        %1258 = vset.pattern.permute.xlu0 5
        %1259 = vperm.xlu0 %1258, %v373
        %v1260 = vpop.permute.xlu0 %1259
        %1262 = vset.pattern.permute.xlu0 5
        %1263 = vperm.xlu0 %1262, %v374
        %v1264 = vpop.permute.xlu0 %1263
        %1266 = vset.pattern.permute.xlu0 5
        %1267 = vperm.xlu0 %1266, %v375
        %v1268 = vpop.permute.xlu0 %1267
        %1270 = vset.pattern.permute.xlu0 5
        %1271 = vperm.xlu0 %1270, %v376
        %v1272 = vpop.permute.xlu0 %1271
        %1274 = vset.pattern.permute.xlu0 5
        %1275 = vperm.xlu0 %1274, %v377
        %v1276 = vpop.permute.xlu0 %1275
        %1278 = vset.pattern.permute.xlu0 5
        %1279 = vperm.xlu0 %1278, %v378
        %v1280 = vpop.permute.xlu0 %1279
        %1282 = vset.pattern.permute.xlu0 5
        %1283 = vperm.xlu0 %1282, %v379
        %v1284 = vpop.permute.xlu0 %1283
        %1286 = vset.pattern.permute.xlu0 5
        %1287 = vperm.xlu0 %1286, %v380
        %v1288 = vpop.permute.xlu0 %1287
        %v1290 = vmul.f32 %v1260, %v426
        %v1291 = vmul.f32 %v1260, %v430
        %v1292 = vmul.f32 %v1260, %v434
        %v1293 = vmul.f32 %v1264, %v426
        %v1294 = vmul.f32 %v1264, %v430
        %v1295 = vmul.f32 %v1264, %v434
        %v1296 = vmul.f32 %v1268, %v426
        %v1297 = vmul.f32 %v1268, %v430
        %v1298 = vmul.f32 %v1268, %v434
        %v1299 = vmul.f32 %v1272, %v426
        %v1300 = vmul.f32 %v1272, %v430
        %v1301 = vmul.f32 %v1272, %v434
        %v1302 = vmul.f32 %v1276, %v426
        %v1303 = vmul.f32 %v1276, %v430
        %v1304 = vmul.f32 %v1276, %v434
        %v1305 = vmul.f32 %v1280, %v426
        %v1306 = vmul.f32 %v1280, %v430
        %v1307 = vmul.f32 %v1280, %v434
        %v1308 = vmul.f32 %v1284, %v426
        %v1309 = vmul.f32 %v1284, %v430
        %v1310 = vmul.f32 %v1284, %v434
        %v1311 = vmul.f32 %v1288, %v426
        %v1312 = vmul.f32 %v1288, %v430
        %v1313 = vmul.f32 %v1288, %v434
        %1338 = vrot.lane.b32.xlu0 %v1290, 108
        %v1339 = vpop.permute.xlu0 %1338
        %1340 = vrot.lane.b32.xlu0 %v1291, 108
        %v1341 = vpop.permute.xlu0 %1340
        %1342 = vrot.lane.b32.xlu0 %v1292, 108
        %v1343 = vpop.permute.xlu0 %1342
        %1344 = vrot.lane.b32.xlu0 %v1293, 108
        %v1345 = vpop.permute.xlu0 %1344
        %1346 = vrot.lane.b32.xlu0 %v1294, 108
        %v1347 = vpop.permute.xlu0 %1346
        %1348 = vrot.lane.b32.xlu0 %v1295, 108
        %v1349 = vpop.permute.xlu0 %1348
        %1350 = vrot.lane.b32.xlu0 %v1296, 108
        %v1351 = vpop.permute.xlu0 %1350
        %1352 = vrot.lane.b32.xlu0 %v1297, 108
        %v1353 = vpop.permute.xlu0 %1352
        %1354 = vrot.lane.b32.xlu0 %v1298, 108
        %v1355 = vpop.permute.xlu0 %1354
        %1356 = vrot.lane.b32.xlu0 %v1299, 108
        %v1357 = vpop.permute.xlu0 %1356
        %1358 = vrot.lane.b32.xlu0 %v1300, 108
        %v1359 = vpop.permute.xlu0 %1358
        %1360 = vrot.lane.b32.xlu0 %v1301, 108
        %v1361 = vpop.permute.xlu0 %1360
        %1362 = vrot.lane.b32.xlu0 %v1302, 108
        %v1363 = vpop.permute.xlu0 %1362
        %1364 = vrot.lane.b32.xlu0 %v1303, 108
        %v1365 = vpop.permute.xlu0 %1364
        %1366 = vrot.lane.b32.xlu0 %v1304, 108
        %v1367 = vpop.permute.xlu0 %1366
        %1368 = vrot.lane.b32.xlu0 %v1305, 108
        %v1369 = vpop.permute.xlu0 %1368
        %1370 = vrot.lane.b32.xlu0 %v1306, 108
        %v1371 = vpop.permute.xlu0 %1370
        %1372 = vrot.lane.b32.xlu0 %v1307, 108
        %v1373 = vpop.permute.xlu0 %1372
        %1374 = vrot.lane.b32.xlu0 %v1308, 108
        %v1375 = vpop.permute.xlu0 %1374
        %1376 = vrot.lane.b32.xlu0 %v1309, 108
        %v1377 = vpop.permute.xlu0 %1376
        %1378 = vrot.lane.b32.xlu0 %v1310, 108
        %v1379 = vpop.permute.xlu0 %1378
        %1380 = vrot.lane.b32.xlu0 %v1311, 108
        %v1381 = vpop.permute.xlu0 %1380
        %1382 = vrot.lane.b32.xlu0 %v1312, 108
        %v1383 = vpop.permute.xlu0 %1382
        %1384 = vrot.lane.b32.xlu0 %v1313, 108
        %v1385 = vpop.permute.xlu0 %1384
        %vm1386 = vcmask 883712
        %v1387 = vsel %vm1386, %v1339, %v1341
        %v1388 = vsel %vm1386, %v1341, %v1343
        %v1389 = vsel %vm1386, %v1345, %v1347
        %v1390 = vsel %vm1386, %v1347, %v1349
        %v1391 = vsel %vm1386, %v1351, %v1353
        %v1392 = vsel %vm1386, %v1353, %v1355
        %v1393 = vsel %vm1386, %v1357, %v1359
        %v1394 = vsel %vm1386, %v1359, %v1361
        %v1395 = vsel %vm1386, %v1363, %v1365
        %v1396 = vsel %vm1386, %v1365, %v1367
        %v1397 = vsel %vm1386, %v1369, %v1371
        %v1398 = vsel %vm1386, %v1371, %v1373
        %v1399 = vsel %vm1386, %v1375, %v1377
        %v1400 = vsel %vm1386, %v1377, %v1379
        %v1401 = vsel %vm1386, %v1381, %v1383
        %v1402 = vsel %vm1386, %v1383, %v1385
        %v1427 = vadd.f32 %v1234, %v1387
        %v1428 = vadd.f32 %v1235, %v1388
        %v1429 = vadd.f32 %v1236, %v1343
        %v1430 = vadd.f32 %v1237, %v1389
        %v1431 = vadd.f32 %v1238, %v1390
        %v1432 = vadd.f32 %v1239, %v1349
        %v1433 = vadd.f32 %v1240, %v1391
        %v1434 = vadd.f32 %v1241, %v1392
        %v1435 = vadd.f32 %v1242, %v1355
        %v1436 = vadd.f32 %v1243, %v1393
        %v1437 = vadd.f32 %v1244, %v1394
        %v1438 = vadd.f32 %v1245, %v1361
        %v1439 = vadd.f32 %v1246, %v1395
        %v1440 = vadd.f32 %v1247, %v1396
        %v1441 = vadd.f32 %v1248, %v1367
        %v1442 = vadd.f32 %v1249, %v1397
        %v1443 = vadd.f32 %v1250, %v1398
        %v1444 = vadd.f32 %v1251, %v1373
        %v1445 = vadd.f32 %v1252, %v1399
        %v1446 = vadd.f32 %v1253, %v1400
        %v1447 = vadd.f32 %v1254, %v1379
        %v1448 = vadd.f32 %v1255, %v1401
        %v1449 = vadd.f32 %v1256, %v1402
        %v1450 = vadd.f32 %v1257, %v1385
        %1451 = vset.pattern.permute.xlu0 6
        %1452 = vperm.xlu0 %1451, %v373
        %v1453 = vpop.permute.xlu0 %1452
        %1455 = vset.pattern.permute.xlu0 6
        %1456 = vperm.xlu0 %1455, %v374
        %v1457 = vpop.permute.xlu0 %1456
        %1459 = vset.pattern.permute.xlu0 6
        %1460 = vperm.xlu0 %1459, %v375
        %v1461 = vpop.permute.xlu0 %1460
        %1463 = vset.pattern.permute.xlu0 6
        %1464 = vperm.xlu0 %1463, %v376
        %v1465 = vpop.permute.xlu0 %1464
        %1467 = vset.pattern.permute.xlu0 6
        %1468 = vperm.xlu0 %1467, %v377
        %v1469 = vpop.permute.xlu0 %1468
        %1471 = vset.pattern.permute.xlu0 6
        %1472 = vperm.xlu0 %1471, %v378
        %v1473 = vpop.permute.xlu0 %1472
        %1475 = vset.pattern.permute.xlu0 6
        %1476 = vperm.xlu0 %1475, %v379
        %v1477 = vpop.permute.xlu0 %1476
        %1479 = vset.pattern.permute.xlu0 6
        %1480 = vperm.xlu0 %1479, %v380
        %v1481 = vpop.permute.xlu0 %1480
        %v1483 = vmul.f32 %v1453, %v426
        %v1484 = vmul.f32 %v1453, %v430
        %v1485 = vmul.f32 %v1453, %v434
        %v1486 = vmul.f32 %v1457, %v426
        %v1487 = vmul.f32 %v1457, %v430
        %v1488 = vmul.f32 %v1457, %v434
        %v1489 = vmul.f32 %v1461, %v426
        %v1490 = vmul.f32 %v1461, %v430
        %v1491 = vmul.f32 %v1461, %v434
        %v1492 = vmul.f32 %v1465, %v426
        %v1493 = vmul.f32 %v1465, %v430
        %v1494 = vmul.f32 %v1465, %v434
        %v1495 = vmul.f32 %v1469, %v426
        %v1496 = vmul.f32 %v1469, %v430
        %v1497 = vmul.f32 %v1469, %v434
        %v1498 = vmul.f32 %v1473, %v426
        %v1499 = vmul.f32 %v1473, %v430
        %v1500 = vmul.f32 %v1473, %v434
        %v1501 = vmul.f32 %v1477, %v426
        %v1502 = vmul.f32 %v1477, %v430
        %v1503 = vmul.f32 %v1477, %v434
        %v1504 = vmul.f32 %v1481, %v426
        %v1505 = vmul.f32 %v1481, %v430
        %v1506 = vmul.f32 %v1481, %v434
        %1531 = vrot.lane.b32.xlu0 %v1483, 107
        %v1532 = vpop.permute.xlu0 %1531
        %1533 = vrot.lane.b32.xlu0 %v1484, 107
        %v1534 = vpop.permute.xlu0 %1533
        %1535 = vrot.lane.b32.xlu0 %v1485, 107
        %v1536 = vpop.permute.xlu0 %1535
        %1537 = vrot.lane.b32.xlu0 %v1486, 107
        %v1538 = vpop.permute.xlu0 %1537
        %1539 = vrot.lane.b32.xlu0 %v1487, 107
        %v1540 = vpop.permute.xlu0 %1539
        %1541 = vrot.lane.b32.xlu0 %v1488, 107
        %v1542 = vpop.permute.xlu0 %1541
        %1543 = vrot.lane.b32.xlu0 %v1489, 107
        %v1544 = vpop.permute.xlu0 %1543
        %1545 = vrot.lane.b32.xlu0 %v1490, 107
        %v1546 = vpop.permute.xlu0 %1545
        %1547 = vrot.lane.b32.xlu0 %v1491, 107
        %v1548 = vpop.permute.xlu0 %1547
        %1549 = vrot.lane.b32.xlu0 %v1492, 107
        %v1550 = vpop.permute.xlu0 %1549
        %1551 = vrot.lane.b32.xlu0 %v1493, 107
        %v1552 = vpop.permute.xlu0 %1551
        %1553 = vrot.lane.b32.xlu0 %v1494, 107
        %v1554 = vpop.permute.xlu0 %1553
        %1555 = vrot.lane.b32.xlu0 %v1495, 107
        %v1556 = vpop.permute.xlu0 %1555
        %1557 = vrot.lane.b32.xlu0 %v1496, 107
        %v1558 = vpop.permute.xlu0 %1557
        %1559 = vrot.lane.b32.xlu0 %v1497, 107
        %v1560 = vpop.permute.xlu0 %1559
        %1561 = vrot.lane.b32.xlu0 %v1498, 107
        %v1562 = vpop.permute.xlu0 %1561
        %1563 = vrot.lane.b32.xlu0 %v1499, 107
        %v1564 = vpop.permute.xlu0 %1563
        %1565 = vrot.lane.b32.xlu0 %v1500, 107
        %v1566 = vpop.permute.xlu0 %1565
        %1567 = vrot.lane.b32.xlu0 %v1501, 107
        %v1568 = vpop.permute.xlu0 %1567
        %1569 = vrot.lane.b32.xlu0 %v1502, 107
        %v1570 = vpop.permute.xlu0 %1569
        %1571 = vrot.lane.b32.xlu0 %v1503, 107
        %v1572 = vpop.permute.xlu0 %1571
        %1573 = vrot.lane.b32.xlu0 %v1504, 107
        %v1574 = vpop.permute.xlu0 %1573
        %1575 = vrot.lane.b32.xlu0 %v1505, 107
        %v1576 = vpop.permute.xlu0 %1575
        %1577 = vrot.lane.b32.xlu0 %v1506, 107
        %v1578 = vpop.permute.xlu0 %1577
        %vm1579 = vcmask 875520
        %v1580 = vsel %vm1579, %v1532, %v1534
        %v1581 = vsel %vm1579, %v1534, %v1536
        %v1582 = vsel %vm1579, %v1538, %v1540
        %v1583 = vsel %vm1579, %v1540, %v1542
        %v1584 = vsel %vm1579, %v1544, %v1546
        %v1585 = vsel %vm1579, %v1546, %v1548
        %v1586 = vsel %vm1579, %v1550, %v1552
        %v1587 = vsel %vm1579, %v1552, %v1554
        %v1588 = vsel %vm1579, %v1556, %v1558
        %v1589 = vsel %vm1579, %v1558, %v1560
        %v1590 = vsel %vm1579, %v1562, %v1564
        %v1591 = vsel %vm1579, %v1564, %v1566
        %v1592 = vsel %vm1579, %v1568, %v1570
        %v1593 = vsel %vm1579, %v1570, %v1572
        %v1594 = vsel %vm1579, %v1574, %v1576
        %v1595 = vsel %vm1579, %v1576, %v1578
        %v1620 = vadd.f32 %v1427, %v1580
        %v1621 = vadd.f32 %v1428, %v1581
        %v1622 = vadd.f32 %v1429, %v1536
        %v1623 = vadd.f32 %v1430, %v1582
        %v1624 = vadd.f32 %v1431, %v1583
        %v1625 = vadd.f32 %v1432, %v1542
        %v1626 = vadd.f32 %v1433, %v1584
        %v1627 = vadd.f32 %v1434, %v1585
        %v1628 = vadd.f32 %v1435, %v1548
        %v1629 = vadd.f32 %v1436, %v1586
        %v1630 = vadd.f32 %v1437, %v1587
        %v1631 = vadd.f32 %v1438, %v1554
        %v1632 = vadd.f32 %v1439, %v1588
        %v1633 = vadd.f32 %v1440, %v1589
        %v1634 = vadd.f32 %v1441, %v1560
        %v1635 = vadd.f32 %v1442, %v1590
        %v1636 = vadd.f32 %v1443, %v1591
        %v1637 = vadd.f32 %v1444, %v1566
        %v1638 = vadd.f32 %v1445, %v1592
        %v1639 = vadd.f32 %v1446, %v1593
        %v1640 = vadd.f32 %v1447, %v1572
        %v1641 = vadd.f32 %v1448, %v1594
        %v1642 = vadd.f32 %v1449, %v1595
        %v1643 = vadd.f32 %v1450, %v1578
        %1644 = vset.pattern.permute.xlu0 7
        %1645 = vperm.xlu0 %1644, %v373
        %v1646 = vpop.permute.xlu0 %1645
        %1648 = vset.pattern.permute.xlu0 7
        %1649 = vperm.xlu0 %1648, %v374
        %v1650 = vpop.permute.xlu0 %1649
        %1652 = vset.pattern.permute.xlu0 7
        %1653 = vperm.xlu0 %1652, %v375
        %v1654 = vpop.permute.xlu0 %1653
        %1656 = vset.pattern.permute.xlu0 7
        %1657 = vperm.xlu0 %1656, %v376
        %v1658 = vpop.permute.xlu0 %1657
        %1660 = vset.pattern.permute.xlu0 7
        %1661 = vperm.xlu0 %1660, %v377
        %v1662 = vpop.permute.xlu0 %1661
        %1664 = vset.pattern.permute.xlu0 7
        %1665 = vperm.xlu0 %1664, %v378
        %v1666 = vpop.permute.xlu0 %1665
        %1668 = vset.pattern.permute.xlu0 7
        %1669 = vperm.xlu0 %1668, %v379
        %v1670 = vpop.permute.xlu0 %1669
        %1672 = vset.pattern.permute.xlu0 7
        %1673 = vperm.xlu0 %1672, %v380
        %v1674 = vpop.permute.xlu0 %1673
        %v1676 = vmul.f32 %v1646, %v426
        %v1677 = vmul.f32 %v1646, %v430
        %v1678 = vmul.f32 %v1646, %v434
        %v1679 = vmul.f32 %v1650, %v426
        %v1680 = vmul.f32 %v1650, %v430
        %v1681 = vmul.f32 %v1650, %v434
        %v1682 = vmul.f32 %v1654, %v426
        %v1683 = vmul.f32 %v1654, %v430
        %v1684 = vmul.f32 %v1654, %v434
        %v1685 = vmul.f32 %v1658, %v426
        %v1686 = vmul.f32 %v1658, %v430
        %v1687 = vmul.f32 %v1658, %v434
        %v1688 = vmul.f32 %v1662, %v426
        %v1689 = vmul.f32 %v1662, %v430
        %v1690 = vmul.f32 %v1662, %v434
        %v1691 = vmul.f32 %v1666, %v426
        %v1692 = vmul.f32 %v1666, %v430
        %v1693 = vmul.f32 %v1666, %v434
        %v1694 = vmul.f32 %v1670, %v426
        %v1695 = vmul.f32 %v1670, %v430
        %v1696 = vmul.f32 %v1670, %v434
        %v1697 = vmul.f32 %v1674, %v426
        %v1698 = vmul.f32 %v1674, %v430
        %v1699 = vmul.f32 %v1674, %v434
        %1724 = vrot.lane.b32.xlu0 %v1676, 106
        %v1725 = vpop.permute.xlu0 %1724
        %1726 = vrot.lane.b32.xlu0 %v1677, 106
        %v1727 = vpop.permute.xlu0 %1726
        %1728 = vrot.lane.b32.xlu0 %v1678, 106
        %v1729 = vpop.permute.xlu0 %1728
        %1730 = vrot.lane.b32.xlu0 %v1679, 106
        %v1731 = vpop.permute.xlu0 %1730
        %1732 = vrot.lane.b32.xlu0 %v1680, 106
        %v1733 = vpop.permute.xlu0 %1732
        %1734 = vrot.lane.b32.xlu0 %v1681, 106
        %v1735 = vpop.permute.xlu0 %1734
        %1736 = vrot.lane.b32.xlu0 %v1682, 106
        %v1737 = vpop.permute.xlu0 %1736
        %1738 = vrot.lane.b32.xlu0 %v1683, 106
        %v1739 = vpop.permute.xlu0 %1738
        %1740 = vrot.lane.b32.xlu0 %v1684, 106
        %v1741 = vpop.permute.xlu0 %1740
        %1742 = vrot.lane.b32.xlu0 %v1685, 106
        %v1743 = vpop.permute.xlu0 %1742
        %1744 = vrot.lane.b32.xlu0 %v1686, 106
        %v1745 = vpop.permute.xlu0 %1744
        %1746 = vrot.lane.b32.xlu0 %v1687, 106
        %v1747 = vpop.permute.xlu0 %1746
        %1748 = vrot.lane.b32.xlu0 %v1688, 106
        %v1749 = vpop.permute.xlu0 %1748
        %1750 = vrot.lane.b32.xlu0 %v1689, 106
        %v1751 = vpop.permute.xlu0 %1750
        %1752 = vrot.lane.b32.xlu0 %v1690, 106
        %v1753 = vpop.permute.xlu0 %1752
        %1754 = vrot.lane.b32.xlu0 %v1691, 106
        %v1755 = vpop.permute.xlu0 %1754
        %1756 = vrot.lane.b32.xlu0 %v1692, 106
        %v1757 = vpop.permute.xlu0 %1756
        %1758 = vrot.lane.b32.xlu0 %v1693, 106
        %v1759 = vpop.permute.xlu0 %1758
        %1760 = vrot.lane.b32.xlu0 %v1694, 106
        %v1761 = vpop.permute.xlu0 %1760
        %1762 = vrot.lane.b32.xlu0 %v1695, 106
        %v1763 = vpop.permute.xlu0 %1762
        %1764 = vrot.lane.b32.xlu0 %v1696, 106
        %v1765 = vpop.permute.xlu0 %1764
        %1766 = vrot.lane.b32.xlu0 %v1697, 106
        %v1767 = vpop.permute.xlu0 %1766
        %1768 = vrot.lane.b32.xlu0 %v1698, 106
        %v1769 = vpop.permute.xlu0 %1768
        %1770 = vrot.lane.b32.xlu0 %v1699, 106
        %v1771 = vpop.permute.xlu0 %1770
        %vm1772 = vcmask 867328
        %v1773 = vsel %vm1772, %v1725, %v1727
        %v1774 = vsel %vm1772, %v1727, %v1729
        %v1775 = vsel %vm1772, %v1731, %v1733
        %v1776 = vsel %vm1772, %v1733, %v1735
        %v1777 = vsel %vm1772, %v1737, %v1739
        %v1778 = vsel %vm1772, %v1739, %v1741
        %v1779 = vsel %vm1772, %v1743, %v1745
        %v1780 = vsel %vm1772, %v1745, %v1747
        %v1781 = vsel %vm1772, %v1749, %v1751
        %v1782 = vsel %vm1772, %v1751, %v1753
        %v1783 = vsel %vm1772, %v1755, %v1757
        %v1784 = vsel %vm1772, %v1757, %v1759
        %v1785 = vsel %vm1772, %v1761, %v1763
        %v1786 = vsel %vm1772, %v1763, %v1765
        %v1787 = vsel %vm1772, %v1767, %v1769
        %v1788 = vsel %vm1772, %v1769, %v1771
        %v1813 = vadd.f32 %v1620, %v1773
        %v1814 = vadd.f32 %v1621, %v1774
        %v1815 = vadd.f32 %v1622, %v1729
        %v1816 = vadd.f32 %v1623, %v1775
        %v1817 = vadd.f32 %v1624, %v1776
        %v1818 = vadd.f32 %v1625, %v1735
        %v1819 = vadd.f32 %v1626, %v1777
        %v1820 = vadd.f32 %v1627, %v1778
        %v1821 = vadd.f32 %v1628, %v1741
        %v1822 = vadd.f32 %v1629, %v1779
        %v1823 = vadd.f32 %v1630, %v1780
        %v1824 = vadd.f32 %v1631, %v1747
        %v1825 = vadd.f32 %v1632, %v1781
        %v1826 = vadd.f32 %v1633, %v1782
        %v1827 = vadd.f32 %v1634, %v1753
        %v1828 = vadd.f32 %v1635, %v1783
        %v1829 = vadd.f32 %v1636, %v1784
        %v1830 = vadd.f32 %v1637, %v1759
        %v1831 = vadd.f32 %v1638, %v1785
        %v1832 = vadd.f32 %v1639, %v1786
        %v1833 = vadd.f32 %v1640, %v1765
        %v1834 = vadd.f32 %v1641, %v1787
        %v1835 = vadd.f32 %v1642, %v1788
        %v1836 = vadd.f32 %v1643, %v1771
        %1837 = vset.pattern.permute.xlu0 8
        %1838 = vperm.xlu0 %1837, %v373
        %v1839 = vpop.permute.xlu0 %1838
        %1841 = vset.pattern.permute.xlu0 8
        %1842 = vperm.xlu0 %1841, %v374
        %v1843 = vpop.permute.xlu0 %1842
        %1845 = vset.pattern.permute.xlu0 8
        %1846 = vperm.xlu0 %1845, %v375
        %v1847 = vpop.permute.xlu0 %1846
        %1849 = vset.pattern.permute.xlu0 8
        %1850 = vperm.xlu0 %1849, %v376
        %v1851 = vpop.permute.xlu0 %1850
        %1853 = vset.pattern.permute.xlu0 8
        %1854 = vperm.xlu0 %1853, %v377
        %v1855 = vpop.permute.xlu0 %1854
        %1857 = vset.pattern.permute.xlu0 8
        %1858 = vperm.xlu0 %1857, %v378
        %v1859 = vpop.permute.xlu0 %1858
        %1861 = vset.pattern.permute.xlu0 8
        %1862 = vperm.xlu0 %1861, %v379
        %v1863 = vpop.permute.xlu0 %1862
        %1865 = vset.pattern.permute.xlu0 8
        %1866 = vperm.xlu0 %1865, %v380
        %v1867 = vpop.permute.xlu0 %1866
        %v1869 = vmul.f32 %v1839, %v426
        %v1870 = vmul.f32 %v1839, %v430
        %v1871 = vmul.f32 %v1839, %v434
        %v1872 = vmul.f32 %v1843, %v426
        %v1873 = vmul.f32 %v1843, %v430
        %v1874 = vmul.f32 %v1843, %v434
        %v1875 = vmul.f32 %v1847, %v426
        %v1876 = vmul.f32 %v1847, %v430
        %v1877 = vmul.f32 %v1847, %v434
        %v1878 = vmul.f32 %v1851, %v426
        %v1879 = vmul.f32 %v1851, %v430
        %v1880 = vmul.f32 %v1851, %v434
        %v1881 = vmul.f32 %v1855, %v426
        %v1882 = vmul.f32 %v1855, %v430
        %v1883 = vmul.f32 %v1855, %v434
        %v1884 = vmul.f32 %v1859, %v426
        %v1885 = vmul.f32 %v1859, %v430
        %v1886 = vmul.f32 %v1859, %v434
        %v1887 = vmul.f32 %v1863, %v426
        %v1888 = vmul.f32 %v1863, %v430
        %v1889 = vmul.f32 %v1863, %v434
        %v1890 = vmul.f32 %v1867, %v426
        %v1891 = vmul.f32 %v1867, %v430
        %v1892 = vmul.f32 %v1867, %v434
        %1917 = vrot.lane.b32.xlu0 %v1869, 105
        %v1918 = vpop.permute.xlu0 %1917
        %1919 = vrot.lane.b32.xlu0 %v1870, 105
        %v1920 = vpop.permute.xlu0 %1919
        %1921 = vrot.lane.b32.xlu0 %v1871, 105
        %v1922 = vpop.permute.xlu0 %1921
        %1923 = vrot.lane.b32.xlu0 %v1872, 105
        %v1924 = vpop.permute.xlu0 %1923
        %1925 = vrot.lane.b32.xlu0 %v1873, 105
        %v1926 = vpop.permute.xlu0 %1925
        %1927 = vrot.lane.b32.xlu0 %v1874, 105
        %v1928 = vpop.permute.xlu0 %1927
        %1929 = vrot.lane.b32.xlu0 %v1875, 105
        %v1930 = vpop.permute.xlu0 %1929
        %1931 = vrot.lane.b32.xlu0 %v1876, 105
        %v1932 = vpop.permute.xlu0 %1931
        %1933 = vrot.lane.b32.xlu0 %v1877, 105
        %v1934 = vpop.permute.xlu0 %1933
        %1935 = vrot.lane.b32.xlu0 %v1878, 105
        %v1936 = vpop.permute.xlu0 %1935
        %1937 = vrot.lane.b32.xlu0 %v1879, 105
        %v1938 = vpop.permute.xlu0 %1937
        %1939 = vrot.lane.b32.xlu0 %v1880, 105
        %v1940 = vpop.permute.xlu0 %1939
        %1941 = vrot.lane.b32.xlu0 %v1881, 105
        %v1942 = vpop.permute.xlu0 %1941
        %1943 = vrot.lane.b32.xlu0 %v1882, 105
        %v1944 = vpop.permute.xlu0 %1943
        %1945 = vrot.lane.b32.xlu0 %v1883, 105
        %v1946 = vpop.permute.xlu0 %1945
        %1947 = vrot.lane.b32.xlu0 %v1884, 105
        %v1948 = vpop.permute.xlu0 %1947
        %1949 = vrot.lane.b32.xlu0 %v1885, 105
        %v1950 = vpop.permute.xlu0 %1949
        %1951 = vrot.lane.b32.xlu0 %v1886, 105
        %v1952 = vpop.permute.xlu0 %1951
        %1953 = vrot.lane.b32.xlu0 %v1887, 105
        %v1954 = vpop.permute.xlu0 %1953
        %1955 = vrot.lane.b32.xlu0 %v1888, 105
        %v1956 = vpop.permute.xlu0 %1955
        %1957 = vrot.lane.b32.xlu0 %v1889, 105
        %v1958 = vpop.permute.xlu0 %1957
        %1959 = vrot.lane.b32.xlu0 %v1890, 105
        %v1960 = vpop.permute.xlu0 %1959
        %1961 = vrot.lane.b32.xlu0 %v1891, 105
        %v1962 = vpop.permute.xlu0 %1961
        %1963 = vrot.lane.b32.xlu0 %v1892, 105
        %v1964 = vpop.permute.xlu0 %1963
        %vm1965 = vcmask 859136
        %v1966 = vsel %vm1965, %v1918, %v1920
        %v1967 = vsel %vm1965, %v1920, %v1922
        %v1968 = vsel %vm1965, %v1924, %v1926
        %v1969 = vsel %vm1965, %v1926, %v1928
        %v1970 = vsel %vm1965, %v1930, %v1932
        %v1971 = vsel %vm1965, %v1932, %v1934
        %v1972 = vsel %vm1965, %v1936, %v1938
        %v1973 = vsel %vm1965, %v1938, %v1940
        %v1974 = vsel %vm1965, %v1942, %v1944
        %v1975 = vsel %vm1965, %v1944, %v1946
        %v1976 = vsel %vm1965, %v1948, %v1950
        %v1977 = vsel %vm1965, %v1950, %v1952
        %v1978 = vsel %vm1965, %v1954, %v1956
        %v1979 = vsel %vm1965, %v1956, %v1958
        %v1980 = vsel %vm1965, %v1960, %v1962
        %v1981 = vsel %vm1965, %v1962, %v1964
        %v2006 = vadd.f32 %v1813, %v1966
        %v2007 = vadd.f32 %v1814, %v1967
        %v2008 = vadd.f32 %v1815, %v1922
        %v2009 = vadd.f32 %v1816, %v1968
        %v2010 = vadd.f32 %v1817, %v1969
        %v2011 = vadd.f32 %v1818, %v1928
        %v2012 = vadd.f32 %v1819, %v1970
        %v2013 = vadd.f32 %v1820, %v1971
        %v2014 = vadd.f32 %v1821, %v1934
        %v2015 = vadd.f32 %v1822, %v1972
        %v2016 = vadd.f32 %v1823, %v1973
        %v2017 = vadd.f32 %v1824, %v1940
        %v2018 = vadd.f32 %v1825, %v1974
        %v2019 = vadd.f32 %v1826, %v1975
        %v2020 = vadd.f32 %v1827, %v1946
        %v2021 = vadd.f32 %v1828, %v1976
        %v2022 = vadd.f32 %v1829, %v1977
        %v2023 = vadd.f32 %v1830, %v1952
        %v2024 = vadd.f32 %v1831, %v1978
        %v2025 = vadd.f32 %v1832, %v1979
        %v2026 = vadd.f32 %v1833, %v1958
        %v2027 = vadd.f32 %v1834, %v1980
        %v2028 = vadd.f32 %v1835, %v1981
        %v2029 = vadd.f32 %v1836, %v1964
        %2030 = vset.pattern.permute.xlu0 9
        %2031 = vperm.xlu0 %2030, %v373
        %v2032 = vpop.permute.xlu0 %2031
        %2034 = vset.pattern.permute.xlu0 9
        %2035 = vperm.xlu0 %2034, %v374
        %v2036 = vpop.permute.xlu0 %2035
        %2038 = vset.pattern.permute.xlu0 9
        %2039 = vperm.xlu0 %2038, %v375
        %v2040 = vpop.permute.xlu0 %2039
        %2042 = vset.pattern.permute.xlu0 9
        %2043 = vperm.xlu0 %2042, %v376
        %v2044 = vpop.permute.xlu0 %2043
        %2046 = vset.pattern.permute.xlu0 9
        %2047 = vperm.xlu0 %2046, %v377
        %v2048 = vpop.permute.xlu0 %2047
        %2050 = vset.pattern.permute.xlu0 9
        %2051 = vperm.xlu0 %2050, %v378
        %v2052 = vpop.permute.xlu0 %2051
        %2054 = vset.pattern.permute.xlu0 9
        %2055 = vperm.xlu0 %2054, %v379
        %v2056 = vpop.permute.xlu0 %2055
        %2058 = vset.pattern.permute.xlu0 9
        %2059 = vperm.xlu0 %2058, %v380
        %v2060 = vpop.permute.xlu0 %2059
        %v2062 = vmul.f32 %v2032, %v426
        %v2063 = vmul.f32 %v2032, %v430
        %v2064 = vmul.f32 %v2032, %v434
        %v2065 = vmul.f32 %v2036, %v426
        %v2066 = vmul.f32 %v2036, %v430
        %v2067 = vmul.f32 %v2036, %v434
        %v2068 = vmul.f32 %v2040, %v426
        %v2069 = vmul.f32 %v2040, %v430
        %v2070 = vmul.f32 %v2040, %v434
        %v2071 = vmul.f32 %v2044, %v426
        %v2072 = vmul.f32 %v2044, %v430
        %v2073 = vmul.f32 %v2044, %v434
        %v2074 = vmul.f32 %v2048, %v426
        %v2075 = vmul.f32 %v2048, %v430
        %v2076 = vmul.f32 %v2048, %v434
        %v2077 = vmul.f32 %v2052, %v426
        %v2078 = vmul.f32 %v2052, %v430
        %v2079 = vmul.f32 %v2052, %v434
        %v2080 = vmul.f32 %v2056, %v426
        %v2081 = vmul.f32 %v2056, %v430
        %v2082 = vmul.f32 %v2056, %v434
        %v2083 = vmul.f32 %v2060, %v426
        %v2084 = vmul.f32 %v2060, %v430
        %v2085 = vmul.f32 %v2060, %v434
        %2110 = vrot.lane.b32.xlu0 %v2062, 104
        %v2111 = vpop.permute.xlu0 %2110
        %2112 = vrot.lane.b32.xlu0 %v2063, 104
        %v2113 = vpop.permute.xlu0 %2112
        %2114 = vrot.lane.b32.xlu0 %v2064, 104
        %v2115 = vpop.permute.xlu0 %2114
        %2116 = vrot.lane.b32.xlu0 %v2065, 104
        %v2117 = vpop.permute.xlu0 %2116
        %2118 = vrot.lane.b32.xlu0 %v2066, 104
        %v2119 = vpop.permute.xlu0 %2118
        %2120 = vrot.lane.b32.xlu0 %v2067, 104
        %v2121 = vpop.permute.xlu0 %2120
        %2122 = vrot.lane.b32.xlu0 %v2068, 104
        %v2123 = vpop.permute.xlu0 %2122
        %2124 = vrot.lane.b32.xlu0 %v2069, 104
        %v2125 = vpop.permute.xlu0 %2124
        %2126 = vrot.lane.b32.xlu0 %v2070, 104
        %v2127 = vpop.permute.xlu0 %2126
        %2128 = vrot.lane.b32.xlu0 %v2071, 104
        %v2129 = vpop.permute.xlu0 %2128
        %2130 = vrot.lane.b32.xlu0 %v2072, 104
        %v2131 = vpop.permute.xlu0 %2130
        %2132 = vrot.lane.b32.xlu0 %v2073, 104
        %v2133 = vpop.permute.xlu0 %2132
        %2134 = vrot.lane.b32.xlu0 %v2074, 104
        %v2135 = vpop.permute.xlu0 %2134
        %2136 = vrot.lane.b32.xlu0 %v2075, 104
        %v2137 = vpop.permute.xlu0 %2136
        %2138 = vrot.lane.b32.xlu0 %v2076, 104
        %v2139 = vpop.permute.xlu0 %2138
        %2140 = vrot.lane.b32.xlu0 %v2077, 104
        %v2141 = vpop.permute.xlu0 %2140
        %2142 = vrot.lane.b32.xlu0 %v2078, 104
        %v2143 = vpop.permute.xlu0 %2142
        %2144 = vrot.lane.b32.xlu0 %v2079, 104
        %v2145 = vpop.permute.xlu0 %2144
        %2146 = vrot.lane.b32.xlu0 %v2080, 104
        %v2147 = vpop.permute.xlu0 %2146
        %2148 = vrot.lane.b32.xlu0 %v2081, 104
        %v2149 = vpop.permute.xlu0 %2148
        %2150 = vrot.lane.b32.xlu0 %v2082, 104
        %v2151 = vpop.permute.xlu0 %2150
        %2152 = vrot.lane.b32.xlu0 %v2083, 104
        %v2153 = vpop.permute.xlu0 %2152
        %2154 = vrot.lane.b32.xlu0 %v2084, 104
        %v2155 = vpop.permute.xlu0 %2154
        %2156 = vrot.lane.b32.xlu0 %v2085, 104
        %v2157 = vpop.permute.xlu0 %2156
        %vm2158 = vcmask 850944
        %v2159 = vsel %vm2158, %v2111, %v2113
        %v2160 = vsel %vm2158, %v2113, %v2115
        %v2161 = vsel %vm2158, %v2117, %v2119
        %v2162 = vsel %vm2158, %v2119, %v2121
        %v2163 = vsel %vm2158, %v2123, %v2125
        %v2164 = vsel %vm2158, %v2125, %v2127
        %v2165 = vsel %vm2158, %v2129, %v2131
        %v2166 = vsel %vm2158, %v2131, %v2133
        %v2167 = vsel %vm2158, %v2135, %v2137
        %v2168 = vsel %vm2158, %v2137, %v2139
        %v2169 = vsel %vm2158, %v2141, %v2143
        %v2170 = vsel %vm2158, %v2143, %v2145
        %v2171 = vsel %vm2158, %v2147, %v2149
        %v2172 = vsel %vm2158, %v2149, %v2151
        %v2173 = vsel %vm2158, %v2153, %v2155
        %v2174 = vsel %vm2158, %v2155, %v2157
        %v2199 = vadd.f32 %v2006, %v2159
        %v2200 = vadd.f32 %v2007, %v2160
        %v2201 = vadd.f32 %v2008, %v2115
        %v2202 = vadd.f32 %v2009, %v2161
        %v2203 = vadd.f32 %v2010, %v2162
        %v2204 = vadd.f32 %v2011, %v2121
        %v2205 = vadd.f32 %v2012, %v2163
        %v2206 = vadd.f32 %v2013, %v2164
        %v2207 = vadd.f32 %v2014, %v2127
        %v2208 = vadd.f32 %v2015, %v2165
        %v2209 = vadd.f32 %v2016, %v2166
        %v2210 = vadd.f32 %v2017, %v2133
        %v2211 = vadd.f32 %v2018, %v2167
        %v2212 = vadd.f32 %v2019, %v2168
        %v2213 = vadd.f32 %v2020, %v2139
        %v2214 = vadd.f32 %v2021, %v2169
        %v2215 = vadd.f32 %v2022, %v2170
        %v2216 = vadd.f32 %v2023, %v2145
        %v2217 = vadd.f32 %v2024, %v2171
        %v2218 = vadd.f32 %v2025, %v2172
        %v2219 = vadd.f32 %v2026, %v2151
        %v2220 = vadd.f32 %v2027, %v2173
        %v2221 = vadd.f32 %v2028, %v2174
        %v2222 = vadd.f32 %v2029, %v2157
        %2223 = vset.pattern.permute.xlu0 10
        %2224 = vperm.xlu0 %2223, %v373
        %v2225 = vpop.permute.xlu0 %2224
        %2227 = vset.pattern.permute.xlu0 10
        %2228 = vperm.xlu0 %2227, %v374
        %v2229 = vpop.permute.xlu0 %2228
        %2231 = vset.pattern.permute.xlu0 10
        %2232 = vperm.xlu0 %2231, %v375
        %v2233 = vpop.permute.xlu0 %2232
        %2235 = vset.pattern.permute.xlu0 10
        %2236 = vperm.xlu0 %2235, %v376
        %v2237 = vpop.permute.xlu0 %2236
        %2239 = vset.pattern.permute.xlu0 10
        %2240 = vperm.xlu0 %2239, %v377
        %v2241 = vpop.permute.xlu0 %2240
        %2243 = vset.pattern.permute.xlu0 10
        %2244 = vperm.xlu0 %2243, %v378
        %v2245 = vpop.permute.xlu0 %2244
        %2247 = vset.pattern.permute.xlu0 10
        %2248 = vperm.xlu0 %2247, %v379
        %v2249 = vpop.permute.xlu0 %2248
        %2251 = vset.pattern.permute.xlu0 10
        %2252 = vperm.xlu0 %2251, %v380
        %v2253 = vpop.permute.xlu0 %2252
        %v2255 = vmul.f32 %v2225, %v426
        %v2256 = vmul.f32 %v2225, %v430
        %v2257 = vmul.f32 %v2225, %v434
        %v2258 = vmul.f32 %v2229, %v426
        %v2259 = vmul.f32 %v2229, %v430
        %v2260 = vmul.f32 %v2229, %v434
        %v2261 = vmul.f32 %v2233, %v426
        %v2262 = vmul.f32 %v2233, %v430
        %v2263 = vmul.f32 %v2233, %v434
        %v2264 = vmul.f32 %v2237, %v426
        %v2265 = vmul.f32 %v2237, %v430
        %v2266 = vmul.f32 %v2237, %v434
        %v2267 = vmul.f32 %v2241, %v426
        %v2268 = vmul.f32 %v2241, %v430
        %v2269 = vmul.f32 %v2241, %v434
        %v2270 = vmul.f32 %v2245, %v426
        %v2271 = vmul.f32 %v2245, %v430
        %v2272 = vmul.f32 %v2245, %v434
        %v2273 = vmul.f32 %v2249, %v426
        %v2274 = vmul.f32 %v2249, %v430
        %v2275 = vmul.f32 %v2249, %v434
        %v2276 = vmul.f32 %v2253, %v426
        %v2277 = vmul.f32 %v2253, %v430
        %v2278 = vmul.f32 %v2253, %v434
        %2303 = vrot.lane.b32.xlu0 %v2255, 88
        %v2304 = vpop.permute.xlu0 %2303
        %2305 = vrot.lane.b32.xlu0 %v2256, 88
        %v2306 = vpop.permute.xlu0 %2305
        %2307 = vrot.lane.b32.xlu0 %v2257, 88
        %v2308 = vpop.permute.xlu0 %2307
        %2309 = vrot.lane.b32.xlu0 %v2258, 88
        %v2310 = vpop.permute.xlu0 %2309
        %2311 = vrot.lane.b32.xlu0 %v2259, 88
        %v2312 = vpop.permute.xlu0 %2311
        %2313 = vrot.lane.b32.xlu0 %v2260, 88
        %v2314 = vpop.permute.xlu0 %2313
        %2315 = vrot.lane.b32.xlu0 %v2261, 88
        %v2316 = vpop.permute.xlu0 %2315
        %2317 = vrot.lane.b32.xlu0 %v2262, 88
        %v2318 = vpop.permute.xlu0 %2317
        %2319 = vrot.lane.b32.xlu0 %v2263, 88
        %v2320 = vpop.permute.xlu0 %2319
        %2321 = vrot.lane.b32.xlu0 %v2264, 88
        %v2322 = vpop.permute.xlu0 %2321
        %2323 = vrot.lane.b32.xlu0 %v2265, 88
        %v2324 = vpop.permute.xlu0 %2323
        %2325 = vrot.lane.b32.xlu0 %v2266, 88
        %v2326 = vpop.permute.xlu0 %2325
        %2327 = vrot.lane.b32.xlu0 %v2267, 88
        %v2328 = vpop.permute.xlu0 %2327
        %2329 = vrot.lane.b32.xlu0 %v2268, 88
        %v2330 = vpop.permute.xlu0 %2329
        %2331 = vrot.lane.b32.xlu0 %v2269, 88
        %v2332 = vpop.permute.xlu0 %2331
        %2333 = vrot.lane.b32.xlu0 %v2270, 88
        %v2334 = vpop.permute.xlu0 %2333
        %2335 = vrot.lane.b32.xlu0 %v2271, 88
        %v2336 = vpop.permute.xlu0 %2335
        %2337 = vrot.lane.b32.xlu0 %v2272, 88
        %v2338 = vpop.permute.xlu0 %2337
        %2339 = vrot.lane.b32.xlu0 %v2273, 88
        %v2340 = vpop.permute.xlu0 %2339
        %2341 = vrot.lane.b32.xlu0 %v2274, 88
        %v2342 = vpop.permute.xlu0 %2341
        %2343 = vrot.lane.b32.xlu0 %v2275, 88
        %v2344 = vpop.permute.xlu0 %2343
        %2345 = vrot.lane.b32.xlu0 %v2276, 88
        %v2346 = vpop.permute.xlu0 %2345
        %2347 = vrot.lane.b32.xlu0 %v2277, 88
        %v2348 = vpop.permute.xlu0 %2347
        %2349 = vrot.lane.b32.xlu0 %v2278, 88
        %v2350 = vpop.permute.xlu0 %2349
        %vm2351 = vcmask 719872
        %v2352 = vsel %vm2351, %v2304, %v2306
        %v2353 = vsel %vm2351, %v2306, %v2308
        %v2354 = vsel %vm2351, %v2310, %v2312
        %v2355 = vsel %vm2351, %v2312, %v2314
        %v2356 = vsel %vm2351, %v2316, %v2318
        %v2357 = vsel %vm2351, %v2318, %v2320
        %v2358 = vsel %vm2351, %v2322, %v2324
        %v2359 = vsel %vm2351, %v2324, %v2326
        %v2360 = vsel %vm2351, %v2328, %v2330
        %v2361 = vsel %vm2351, %v2330, %v2332
        %v2362 = vsel %vm2351, %v2334, %v2336
        %v2363 = vsel %vm2351, %v2336, %v2338
        %v2364 = vsel %vm2351, %v2340, %v2342
        %v2365 = vsel %vm2351, %v2342, %v2344
        %v2366 = vsel %vm2351, %v2346, %v2348
        %v2367 = vsel %vm2351, %v2348, %v2350
        %v2392 = vadd.f32 %v2199, %v2352
        %v2393 = vadd.f32 %v2200, %v2353
        %v2394 = vadd.f32 %v2201, %v2308
        %v2395 = vadd.f32 %v2202, %v2354
        %v2396 = vadd.f32 %v2203, %v2355
        %v2397 = vadd.f32 %v2204, %v2314
        %v2398 = vadd.f32 %v2205, %v2356
        %v2399 = vadd.f32 %v2206, %v2357
        %v2400 = vadd.f32 %v2207, %v2320
        %v2401 = vadd.f32 %v2208, %v2358
        %v2402 = vadd.f32 %v2209, %v2359
        %v2403 = vadd.f32 %v2210, %v2326
        %v2404 = vadd.f32 %v2211, %v2360
        %v2405 = vadd.f32 %v2212, %v2361
        %v2406 = vadd.f32 %v2213, %v2332
        %v2407 = vadd.f32 %v2214, %v2362
        %v2408 = vadd.f32 %v2215, %v2363
        %v2409 = vadd.f32 %v2216, %v2338
        %v2410 = vadd.f32 %v2217, %v2364
        %v2411 = vadd.f32 %v2218, %v2365
        %v2412 = vadd.f32 %v2219, %v2344
        %v2413 = vadd.f32 %v2220, %v2366
        %v2414 = vadd.f32 %v2221, %v2367
        %v2415 = vadd.f32 %v2222, %v2350
        %2416 = vset.pattern.permute.xlu0 11
        %2417 = vperm.xlu0 %2416, %v373
        %v2418 = vpop.permute.xlu0 %2417
        %2420 = vset.pattern.permute.xlu0 11
        %2421 = vperm.xlu0 %2420, %v374
        %v2422 = vpop.permute.xlu0 %2421
        %2424 = vset.pattern.permute.xlu0 11
        %2425 = vperm.xlu0 %2424, %v375
        %v2426 = vpop.permute.xlu0 %2425
        %2428 = vset.pattern.permute.xlu0 11
        %2429 = vperm.xlu0 %2428, %v376
        %v2430 = vpop.permute.xlu0 %2429
        %2432 = vset.pattern.permute.xlu0 11
        %2433 = vperm.xlu0 %2432, %v377
        %v2434 = vpop.permute.xlu0 %2433
        %2436 = vset.pattern.permute.xlu0 11
        %2437 = vperm.xlu0 %2436, %v378
        %v2438 = vpop.permute.xlu0 %2437
        %2440 = vset.pattern.permute.xlu0 11
        %2441 = vperm.xlu0 %2440, %v379
        %v2442 = vpop.permute.xlu0 %2441
        %2444 = vset.pattern.permute.xlu0 11
        %2445 = vperm.xlu0 %2444, %v380
        %v2446 = vpop.permute.xlu0 %2445
        %v2448 = vmul.f32 %v2418, %v426
        %v2449 = vmul.f32 %v2418, %v430
        %v2450 = vmul.f32 %v2418, %v434
        %v2451 = vmul.f32 %v2422, %v426
        %v2452 = vmul.f32 %v2422, %v430
        %v2453 = vmul.f32 %v2422, %v434
        %v2454 = vmul.f32 %v2426, %v426
        %v2455 = vmul.f32 %v2426, %v430
        %v2456 = vmul.f32 %v2426, %v434
        %v2457 = vmul.f32 %v2430, %v426
        %v2458 = vmul.f32 %v2430, %v430
        %v2459 = vmul.f32 %v2430, %v434
        %v2460 = vmul.f32 %v2434, %v426
        %v2461 = vmul.f32 %v2434, %v430
        %v2462 = vmul.f32 %v2434, %v434
        %v2463 = vmul.f32 %v2438, %v426
        %v2464 = vmul.f32 %v2438, %v430
        %v2465 = vmul.f32 %v2438, %v434
        %v2466 = vmul.f32 %v2442, %v426
        %v2467 = vmul.f32 %v2442, %v430
        %v2468 = vmul.f32 %v2442, %v434
        %v2469 = vmul.f32 %v2446, %v426
        %v2470 = vmul.f32 %v2446, %v430
        %v2471 = vmul.f32 %v2446, %v434
        %2496 = vrot.lane.b32.xlu0 %v2448, 87
        %v2497 = vpop.permute.xlu0 %2496
        %2498 = vrot.lane.b32.xlu0 %v2449, 87
        %v2499 = vpop.permute.xlu0 %2498
        %2500 = vrot.lane.b32.xlu0 %v2450, 87
        %v2501 = vpop.permute.xlu0 %2500
        %2502 = vrot.lane.b32.xlu0 %v2451, 87
        %v2503 = vpop.permute.xlu0 %2502
        %2504 = vrot.lane.b32.xlu0 %v2452, 87
        %v2505 = vpop.permute.xlu0 %2504
        %2506 = vrot.lane.b32.xlu0 %v2453, 87
        %v2507 = vpop.permute.xlu0 %2506
        %2508 = vrot.lane.b32.xlu0 %v2454, 87
        %v2509 = vpop.permute.xlu0 %2508
        %2510 = vrot.lane.b32.xlu0 %v2455, 87
        %v2511 = vpop.permute.xlu0 %2510
        %2512 = vrot.lane.b32.xlu0 %v2456, 87
        %v2513 = vpop.permute.xlu0 %2512
        %2514 = vrot.lane.b32.xlu0 %v2457, 87
        %v2515 = vpop.permute.xlu0 %2514
        %2516 = vrot.lane.b32.xlu0 %v2458, 87
        %v2517 = vpop.permute.xlu0 %2516
        %2518 = vrot.lane.b32.xlu0 %v2459, 87
        %v2519 = vpop.permute.xlu0 %2518
        %2520 = vrot.lane.b32.xlu0 %v2460, 87
        %v2521 = vpop.permute.xlu0 %2520
        %2522 = vrot.lane.b32.xlu0 %v2461, 87
        %v2523 = vpop.permute.xlu0 %2522
        %2524 = vrot.lane.b32.xlu0 %v2462, 87
        %v2525 = vpop.permute.xlu0 %2524
        %2526 = vrot.lane.b32.xlu0 %v2463, 87
        %v2527 = vpop.permute.xlu0 %2526
        %2528 = vrot.lane.b32.xlu0 %v2464, 87
        %v2529 = vpop.permute.xlu0 %2528
        %2530 = vrot.lane.b32.xlu0 %v2465, 87
        %v2531 = vpop.permute.xlu0 %2530
        %2532 = vrot.lane.b32.xlu0 %v2466, 87
        %v2533 = vpop.permute.xlu0 %2532
        %2534 = vrot.lane.b32.xlu0 %v2467, 87
        %v2535 = vpop.permute.xlu0 %2534
        %2536 = vrot.lane.b32.xlu0 %v2468, 87
        %v2537 = vpop.permute.xlu0 %2536
        %2538 = vrot.lane.b32.xlu0 %v2469, 87
        %v2539 = vpop.permute.xlu0 %2538
        %2540 = vrot.lane.b32.xlu0 %v2470, 87
        %v2541 = vpop.permute.xlu0 %2540
        %2542 = vrot.lane.b32.xlu0 %v2471, 87
        %v2543 = vpop.permute.xlu0 %2542
        %vm2544 = vcmask 711680
        %v2545 = vsel %vm2544, %v2497, %v2499
        %v2546 = vsel %vm2544, %v2499, %v2501
        %v2547 = vsel %vm2544, %v2503, %v2505
        %v2548 = vsel %vm2544, %v2505, %v2507
        %v2549 = vsel %vm2544, %v2509, %v2511
        %v2550 = vsel %vm2544, %v2511, %v2513
        %v2551 = vsel %vm2544, %v2515, %v2517
        %v2552 = vsel %vm2544, %v2517, %v2519
        %v2553 = vsel %vm2544, %v2521, %v2523
        %v2554 = vsel %vm2544, %v2523, %v2525
        %v2555 = vsel %vm2544, %v2527, %v2529
        %v2556 = vsel %vm2544, %v2529, %v2531
        %v2557 = vsel %vm2544, %v2533, %v2535
        %v2558 = vsel %vm2544, %v2535, %v2537
        %v2559 = vsel %vm2544, %v2539, %v2541
        %v2560 = vsel %vm2544, %v2541, %v2543
        %v2585 = vadd.f32 %v2392, %v2545
        %v2586 = vadd.f32 %v2393, %v2546
        %v2587 = vadd.f32 %v2394, %v2501
        %v2588 = vadd.f32 %v2395, %v2547
        %v2589 = vadd.f32 %v2396, %v2548
        %v2590 = vadd.f32 %v2397, %v2507
        %v2591 = vadd.f32 %v2398, %v2549
        %v2592 = vadd.f32 %v2399, %v2550
        %v2593 = vadd.f32 %v2400, %v2513
        %v2594 = vadd.f32 %v2401, %v2551
        %v2595 = vadd.f32 %v2402, %v2552
        %v2596 = vadd.f32 %v2403, %v2519
        %v2597 = vadd.f32 %v2404, %v2553
        %v2598 = vadd.f32 %v2405, %v2554
        %v2599 = vadd.f32 %v2406, %v2525
        %v2600 = vadd.f32 %v2407, %v2555
        %v2601 = vadd.f32 %v2408, %v2556
        %v2602 = vadd.f32 %v2409, %v2531
        %v2603 = vadd.f32 %v2410, %v2557
        %v2604 = vadd.f32 %v2411, %v2558
        %v2605 = vadd.f32 %v2412, %v2537
        %v2606 = vadd.f32 %v2413, %v2559
        %v2607 = vadd.f32 %v2414, %v2560
        %v2608 = vadd.f32 %v2415, %v2543
        %2609 = vset.pattern.permute.xlu0 12
        %2610 = vperm.xlu0 %2609, %v373
        %v2611 = vpop.permute.xlu0 %2610
        %2613 = vset.pattern.permute.xlu0 12
        %2614 = vperm.xlu0 %2613, %v374
        %v2615 = vpop.permute.xlu0 %2614
        %2617 = vset.pattern.permute.xlu0 12
        %2618 = vperm.xlu0 %2617, %v375
        %v2619 = vpop.permute.xlu0 %2618
        %2621 = vset.pattern.permute.xlu0 12
        %2622 = vperm.xlu0 %2621, %v376
        %v2623 = vpop.permute.xlu0 %2622
        %2625 = vset.pattern.permute.xlu0 12
        %2626 = vperm.xlu0 %2625, %v377
        %v2627 = vpop.permute.xlu0 %2626
        %2629 = vset.pattern.permute.xlu0 12
        %2630 = vperm.xlu0 %2629, %v378
        %v2631 = vpop.permute.xlu0 %2630
        %2633 = vset.pattern.permute.xlu0 12
        %2634 = vperm.xlu0 %2633, %v379
        %v2635 = vpop.permute.xlu0 %2634
        %2637 = vset.pattern.permute.xlu0 12
        %2638 = vperm.xlu0 %2637, %v380
        %v2639 = vpop.permute.xlu0 %2638
        %v2641 = vmul.f32 %v2611, %v426
        %v2642 = vmul.f32 %v2611, %v430
        %v2643 = vmul.f32 %v2611, %v434
        %v2644 = vmul.f32 %v2615, %v426
        %v2645 = vmul.f32 %v2615, %v430
        %v2646 = vmul.f32 %v2615, %v434
        %v2647 = vmul.f32 %v2619, %v426
        %v2648 = vmul.f32 %v2619, %v430
        %v2649 = vmul.f32 %v2619, %v434
        %v2650 = vmul.f32 %v2623, %v426
        %v2651 = vmul.f32 %v2623, %v430
        %v2652 = vmul.f32 %v2623, %v434
        %v2653 = vmul.f32 %v2627, %v426
        %v2654 = vmul.f32 %v2627, %v430
        %v2655 = vmul.f32 %v2627, %v434
        %v2656 = vmul.f32 %v2631, %v426
        %v2657 = vmul.f32 %v2631, %v430
        %v2658 = vmul.f32 %v2631, %v434
        %v2659 = vmul.f32 %v2635, %v426
        %v2660 = vmul.f32 %v2635, %v430
        %v2661 = vmul.f32 %v2635, %v434
        %v2662 = vmul.f32 %v2639, %v426
        %v2663 = vmul.f32 %v2639, %v430
        %v2664 = vmul.f32 %v2639, %v434
        %2689 = vrot.lane.b32.xlu0 %v2641, 86
        %v2690 = vpop.permute.xlu0 %2689
        %2691 = vrot.lane.b32.xlu0 %v2642, 86
        %v2692 = vpop.permute.xlu0 %2691
        %2693 = vrot.lane.b32.xlu0 %v2643, 86
        %v2694 = vpop.permute.xlu0 %2693
        %2695 = vrot.lane.b32.xlu0 %v2644, 86
        %v2696 = vpop.permute.xlu0 %2695
        %2697 = vrot.lane.b32.xlu0 %v2645, 86
        %v2698 = vpop.permute.xlu0 %2697
        %2699 = vrot.lane.b32.xlu0 %v2646, 86
        %v2700 = vpop.permute.xlu0 %2699
        %2701 = vrot.lane.b32.xlu0 %v2647, 86
        %v2702 = vpop.permute.xlu0 %2701
        %2703 = vrot.lane.b32.xlu0 %v2648, 86
        %v2704 = vpop.permute.xlu0 %2703
        %2705 = vrot.lane.b32.xlu0 %v2649, 86
        %v2706 = vpop.permute.xlu0 %2705
        %2707 = vrot.lane.b32.xlu0 %v2650, 86
        %v2708 = vpop.permute.xlu0 %2707
        %2709 = vrot.lane.b32.xlu0 %v2651, 86
        %v2710 = vpop.permute.xlu0 %2709
        %2711 = vrot.lane.b32.xlu0 %v2652, 86
        %v2712 = vpop.permute.xlu0 %2711
        %2713 = vrot.lane.b32.xlu0 %v2653, 86
        %v2714 = vpop.permute.xlu0 %2713
        %2715 = vrot.lane.b32.xlu0 %v2654, 86
        %v2716 = vpop.permute.xlu0 %2715
        %2717 = vrot.lane.b32.xlu0 %v2655, 86
        %v2718 = vpop.permute.xlu0 %2717
        %2719 = vrot.lane.b32.xlu0 %v2656, 86
        %v2720 = vpop.permute.xlu0 %2719
        %2721 = vrot.lane.b32.xlu0 %v2657, 86
        %v2722 = vpop.permute.xlu0 %2721
        %2723 = vrot.lane.b32.xlu0 %v2658, 86
        %v2724 = vpop.permute.xlu0 %2723
        %2725 = vrot.lane.b32.xlu0 %v2659, 86
        %v2726 = vpop.permute.xlu0 %2725
        %2727 = vrot.lane.b32.xlu0 %v2660, 86
        %v2728 = vpop.permute.xlu0 %2727
        %2729 = vrot.lane.b32.xlu0 %v2661, 86
        %v2730 = vpop.permute.xlu0 %2729
        %2731 = vrot.lane.b32.xlu0 %v2662, 86
        %v2732 = vpop.permute.xlu0 %2731
        %2733 = vrot.lane.b32.xlu0 %v2663, 86
        %v2734 = vpop.permute.xlu0 %2733
        %2735 = vrot.lane.b32.xlu0 %v2664, 86
        %v2736 = vpop.permute.xlu0 %2735
        %vm2737 = vcmask 703488
        %v2738 = vsel %vm2737, %v2690, %v2692
        %v2739 = vsel %vm2737, %v2692, %v2694
        %v2740 = vsel %vm2737, %v2696, %v2698
        %v2741 = vsel %vm2737, %v2698, %v2700
        %v2742 = vsel %vm2737, %v2702, %v2704
        %v2743 = vsel %vm2737, %v2704, %v2706
        %v2744 = vsel %vm2737, %v2708, %v2710
        %v2745 = vsel %vm2737, %v2710, %v2712
        %v2746 = vsel %vm2737, %v2714, %v2716
        %v2747 = vsel %vm2737, %v2716, %v2718
        %v2748 = vsel %vm2737, %v2720, %v2722
        %v2749 = vsel %vm2737, %v2722, %v2724
        %v2750 = vsel %vm2737, %v2726, %v2728
        %v2751 = vsel %vm2737, %v2728, %v2730
        %v2752 = vsel %vm2737, %v2732, %v2734
        %v2753 = vsel %vm2737, %v2734, %v2736
        %v2778 = vadd.f32 %v2585, %v2738
        %v2779 = vadd.f32 %v2586, %v2739
        %v2780 = vadd.f32 %v2587, %v2694
        %v2781 = vadd.f32 %v2588, %v2740
        %v2782 = vadd.f32 %v2589, %v2741
        %v2783 = vadd.f32 %v2590, %v2700
        %v2784 = vadd.f32 %v2591, %v2742
        %v2785 = vadd.f32 %v2592, %v2743
        %v2786 = vadd.f32 %v2593, %v2706
        %v2787 = vadd.f32 %v2594, %v2744
        %v2788 = vadd.f32 %v2595, %v2745
        %v2789 = vadd.f32 %v2596, %v2712
        %v2790 = vadd.f32 %v2597, %v2746
        %v2791 = vadd.f32 %v2598, %v2747
        %v2792 = vadd.f32 %v2599, %v2718
        %v2793 = vadd.f32 %v2600, %v2748
        %v2794 = vadd.f32 %v2601, %v2749
        %v2795 = vadd.f32 %v2602, %v2724
        %v2796 = vadd.f32 %v2603, %v2750
        %v2797 = vadd.f32 %v2604, %v2751
        %v2798 = vadd.f32 %v2605, %v2730
        %v2799 = vadd.f32 %v2606, %v2752
        %v2800 = vadd.f32 %v2607, %v2753
        %v2801 = vadd.f32 %v2608, %v2736
        %2802 = vset.pattern.permute.xlu0 13
        %2803 = vperm.xlu0 %2802, %v373
        %v2804 = vpop.permute.xlu0 %2803
        %2806 = vset.pattern.permute.xlu0 13
        %2807 = vperm.xlu0 %2806, %v374
        %v2808 = vpop.permute.xlu0 %2807
        %2810 = vset.pattern.permute.xlu0 13
        %2811 = vperm.xlu0 %2810, %v375
        %v2812 = vpop.permute.xlu0 %2811
        %2814 = vset.pattern.permute.xlu0 13
        %2815 = vperm.xlu0 %2814, %v376
        %v2816 = vpop.permute.xlu0 %2815
        %2818 = vset.pattern.permute.xlu0 13
        %2819 = vperm.xlu0 %2818, %v377
        %v2820 = vpop.permute.xlu0 %2819
        %2822 = vset.pattern.permute.xlu0 13
        %2823 = vperm.xlu0 %2822, %v378
        %v2824 = vpop.permute.xlu0 %2823
        %2826 = vset.pattern.permute.xlu0 13
        %2827 = vperm.xlu0 %2826, %v379
        %v2828 = vpop.permute.xlu0 %2827
        %2830 = vset.pattern.permute.xlu0 13
        %2831 = vperm.xlu0 %2830, %v380
        %v2832 = vpop.permute.xlu0 %2831
        %v2834 = vmul.f32 %v2804, %v426
        %v2835 = vmul.f32 %v2804, %v430
        %v2836 = vmul.f32 %v2804, %v434
        %v2837 = vmul.f32 %v2808, %v426
        %v2838 = vmul.f32 %v2808, %v430
        %v2839 = vmul.f32 %v2808, %v434
        %v2840 = vmul.f32 %v2812, %v426
        %v2841 = vmul.f32 %v2812, %v430
        %v2842 = vmul.f32 %v2812, %v434
        %v2843 = vmul.f32 %v2816, %v426
        %v2844 = vmul.f32 %v2816, %v430
        %v2845 = vmul.f32 %v2816, %v434
        %v2846 = vmul.f32 %v2820, %v426
        %v2847 = vmul.f32 %v2820, %v430
        %v2848 = vmul.f32 %v2820, %v434
        %v2849 = vmul.f32 %v2824, %v426
        %v2850 = vmul.f32 %v2824, %v430
        %v2851 = vmul.f32 %v2824, %v434
        %v2852 = vmul.f32 %v2828, %v426
        %v2853 = vmul.f32 %v2828, %v430
        %v2854 = vmul.f32 %v2828, %v434
        %v2855 = vmul.f32 %v2832, %v426
        %v2856 = vmul.f32 %v2832, %v430
        %v2857 = vmul.f32 %v2832, %v434
        %2882 = vrot.lane.b32.xlu0 %v2834, 85
        %v2883 = vpop.permute.xlu0 %2882
        %2884 = vrot.lane.b32.xlu0 %v2835, 85
        %v2885 = vpop.permute.xlu0 %2884
        %2886 = vrot.lane.b32.xlu0 %v2836, 85
        %v2887 = vpop.permute.xlu0 %2886
        %2888 = vrot.lane.b32.xlu0 %v2837, 85
        %v2889 = vpop.permute.xlu0 %2888
        %2890 = vrot.lane.b32.xlu0 %v2838, 85
        %v2891 = vpop.permute.xlu0 %2890
        %2892 = vrot.lane.b32.xlu0 %v2839, 85
        %v2893 = vpop.permute.xlu0 %2892
        %2894 = vrot.lane.b32.xlu0 %v2840, 85
        %v2895 = vpop.permute.xlu0 %2894
        %2896 = vrot.lane.b32.xlu0 %v2841, 85
        %v2897 = vpop.permute.xlu0 %2896
        %2898 = vrot.lane.b32.xlu0 %v2842, 85
        %v2899 = vpop.permute.xlu0 %2898
        %2900 = vrot.lane.b32.xlu0 %v2843, 85
        %v2901 = vpop.permute.xlu0 %2900
        %2902 = vrot.lane.b32.xlu0 %v2844, 85
        %v2903 = vpop.permute.xlu0 %2902
        %2904 = vrot.lane.b32.xlu0 %v2845, 85
        %v2905 = vpop.permute.xlu0 %2904
        %2906 = vrot.lane.b32.xlu0 %v2846, 85
        %v2907 = vpop.permute.xlu0 %2906
        %2908 = vrot.lane.b32.xlu0 %v2847, 85
        %v2909 = vpop.permute.xlu0 %2908
        %2910 = vrot.lane.b32.xlu0 %v2848, 85
        %v2911 = vpop.permute.xlu0 %2910
        %2912 = vrot.lane.b32.xlu0 %v2849, 85
        %v2913 = vpop.permute.xlu0 %2912
        %2914 = vrot.lane.b32.xlu0 %v2850, 85
        %v2915 = vpop.permute.xlu0 %2914
        %2916 = vrot.lane.b32.xlu0 %v2851, 85
        %v2917 = vpop.permute.xlu0 %2916
        %2918 = vrot.lane.b32.xlu0 %v2852, 85
        %v2919 = vpop.permute.xlu0 %2918
        %2920 = vrot.lane.b32.xlu0 %v2853, 85
        %v2921 = vpop.permute.xlu0 %2920
        %2922 = vrot.lane.b32.xlu0 %v2854, 85
        %v2923 = vpop.permute.xlu0 %2922
        %2924 = vrot.lane.b32.xlu0 %v2855, 85
        %v2925 = vpop.permute.xlu0 %2924
        %2926 = vrot.lane.b32.xlu0 %v2856, 85
        %v2927 = vpop.permute.xlu0 %2926
        %2928 = vrot.lane.b32.xlu0 %v2857, 85
        %v2929 = vpop.permute.xlu0 %2928
        %vm2930 = vcmask 695296
        %v2931 = vsel %vm2930, %v2883, %v2885
        %v2932 = vsel %vm2930, %v2885, %v2887
        %v2933 = vsel %vm2930, %v2889, %v2891
        %v2934 = vsel %vm2930, %v2891, %v2893
        %v2935 = vsel %vm2930, %v2895, %v2897
        %v2936 = vsel %vm2930, %v2897, %v2899
        %v2937 = vsel %vm2930, %v2901, %v2903
        %v2938 = vsel %vm2930, %v2903, %v2905
        %v2939 = vsel %vm2930, %v2907, %v2909
        %v2940 = vsel %vm2930, %v2909, %v2911
        %v2941 = vsel %vm2930, %v2913, %v2915
        %v2942 = vsel %vm2930, %v2915, %v2917
        %v2943 = vsel %vm2930, %v2919, %v2921
        %v2944 = vsel %vm2930, %v2921, %v2923
        %v2945 = vsel %vm2930, %v2925, %v2927
        %v2946 = vsel %vm2930, %v2927, %v2929
        %v2971 = vadd.f32 %v2778, %v2931
        %v2972 = vadd.f32 %v2779, %v2932
        %v2973 = vadd.f32 %v2780, %v2887
        %v2974 = vadd.f32 %v2781, %v2933
        %v2975 = vadd.f32 %v2782, %v2934
        %v2976 = vadd.f32 %v2783, %v2893
        %v2977 = vadd.f32 %v2784, %v2935
        %v2978 = vadd.f32 %v2785, %v2936
        %v2979 = vadd.f32 %v2786, %v2899
        %v2980 = vadd.f32 %v2787, %v2937
        %v2981 = vadd.f32 %v2788, %v2938
        %v2982 = vadd.f32 %v2789, %v2905
        %v2983 = vadd.f32 %v2790, %v2939
        %v2984 = vadd.f32 %v2791, %v2940
        %v2985 = vadd.f32 %v2792, %v2911
        %v2986 = vadd.f32 %v2793, %v2941
        %v2987 = vadd.f32 %v2794, %v2942
        %v2988 = vadd.f32 %v2795, %v2917
        %v2989 = vadd.f32 %v2796, %v2943
        %v2990 = vadd.f32 %v2797, %v2944
        %v2991 = vadd.f32 %v2798, %v2923
        %v2992 = vadd.f32 %v2799, %v2945
        %v2993 = vadd.f32 %v2800, %v2946
        %v2994 = vadd.f32 %v2801, %v2929
        %2995 = vset.pattern.permute.xlu0 14
        %2996 = vperm.xlu0 %2995, %v373
        %v2997 = vpop.permute.xlu0 %2996
        %2999 = vset.pattern.permute.xlu0 14
        %3000 = vperm.xlu0 %2999, %v374
        %v3001 = vpop.permute.xlu0 %3000
        %3003 = vset.pattern.permute.xlu0 14
        %3004 = vperm.xlu0 %3003, %v375
        %v3005 = vpop.permute.xlu0 %3004
        %3007 = vset.pattern.permute.xlu0 14
        %3008 = vperm.xlu0 %3007, %v376
        %v3009 = vpop.permute.xlu0 %3008
        %3011 = vset.pattern.permute.xlu0 14
        %3012 = vperm.xlu0 %3011, %v377
        %v3013 = vpop.permute.xlu0 %3012
        %3015 = vset.pattern.permute.xlu0 14
        %3016 = vperm.xlu0 %3015, %v378
        %v3017 = vpop.permute.xlu0 %3016
        %3019 = vset.pattern.permute.xlu0 14
        %3020 = vperm.xlu0 %3019, %v379
        %v3021 = vpop.permute.xlu0 %3020
        %3023 = vset.pattern.permute.xlu0 14
        %3024 = vperm.xlu0 %3023, %v380
        %v3025 = vpop.permute.xlu0 %3024
        %v3027 = vmul.f32 %v2997, %v426
        %v3028 = vmul.f32 %v2997, %v430
        %v3029 = vmul.f32 %v2997, %v434
        %v3030 = vmul.f32 %v3001, %v426
        %v3031 = vmul.f32 %v3001, %v430
        %v3032 = vmul.f32 %v3001, %v434
        %v3033 = vmul.f32 %v3005, %v426
        %v3034 = vmul.f32 %v3005, %v430
        %v3035 = vmul.f32 %v3005, %v434
        %v3036 = vmul.f32 %v3009, %v426
        %v3037 = vmul.f32 %v3009, %v430
        %v3038 = vmul.f32 %v3009, %v434
        %v3039 = vmul.f32 %v3013, %v426
        %v3040 = vmul.f32 %v3013, %v430
        %v3041 = vmul.f32 %v3013, %v434
        %v3042 = vmul.f32 %v3017, %v426
        %v3043 = vmul.f32 %v3017, %v430
        %v3044 = vmul.f32 %v3017, %v434
        %v3045 = vmul.f32 %v3021, %v426
        %v3046 = vmul.f32 %v3021, %v430
        %v3047 = vmul.f32 %v3021, %v434
        %v3048 = vmul.f32 %v3025, %v426
        %v3049 = vmul.f32 %v3025, %v430
        %v3050 = vmul.f32 %v3025, %v434
        %3075 = vrot.lane.b32.xlu0 %v3027, 84
        %v3076 = vpop.permute.xlu0 %3075
        %3077 = vrot.lane.b32.xlu0 %v3028, 84
        %v3078 = vpop.permute.xlu0 %3077
        %3079 = vrot.lane.b32.xlu0 %v3029, 84
        %v3080 = vpop.permute.xlu0 %3079
        %3081 = vrot.lane.b32.xlu0 %v3030, 84
        %v3082 = vpop.permute.xlu0 %3081
        %3083 = vrot.lane.b32.xlu0 %v3031, 84
        %v3084 = vpop.permute.xlu0 %3083
        %3085 = vrot.lane.b32.xlu0 %v3032, 84
        %v3086 = vpop.permute.xlu0 %3085
        %3087 = vrot.lane.b32.xlu0 %v3033, 84
        %v3088 = vpop.permute.xlu0 %3087
        %3089 = vrot.lane.b32.xlu0 %v3034, 84
        %v3090 = vpop.permute.xlu0 %3089
        %3091 = vrot.lane.b32.xlu0 %v3035, 84
        %v3092 = vpop.permute.xlu0 %3091
        %3093 = vrot.lane.b32.xlu0 %v3036, 84
        %v3094 = vpop.permute.xlu0 %3093
        %3095 = vrot.lane.b32.xlu0 %v3037, 84
        %v3096 = vpop.permute.xlu0 %3095
        %3097 = vrot.lane.b32.xlu0 %v3038, 84
        %v3098 = vpop.permute.xlu0 %3097
        %3099 = vrot.lane.b32.xlu0 %v3039, 84
        %v3100 = vpop.permute.xlu0 %3099
        %3101 = vrot.lane.b32.xlu0 %v3040, 84
        %v3102 = vpop.permute.xlu0 %3101
        %3103 = vrot.lane.b32.xlu0 %v3041, 84
        %v3104 = vpop.permute.xlu0 %3103
        %3105 = vrot.lane.b32.xlu0 %v3042, 84
        %v3106 = vpop.permute.xlu0 %3105
        %3107 = vrot.lane.b32.xlu0 %v3043, 84
        %v3108 = vpop.permute.xlu0 %3107
        %3109 = vrot.lane.b32.xlu0 %v3044, 84
        %v3110 = vpop.permute.xlu0 %3109
        %3111 = vrot.lane.b32.xlu0 %v3045, 84
        %v3112 = vpop.permute.xlu0 %3111
        %3113 = vrot.lane.b32.xlu0 %v3046, 84
        %v3114 = vpop.permute.xlu0 %3113
        %3115 = vrot.lane.b32.xlu0 %v3047, 84
        %v3116 = vpop.permute.xlu0 %3115
        %3117 = vrot.lane.b32.xlu0 %v3048, 84
        %v3118 = vpop.permute.xlu0 %3117
        %3119 = vrot.lane.b32.xlu0 %v3049, 84
        %v3120 = vpop.permute.xlu0 %3119
        %3121 = vrot.lane.b32.xlu0 %v3050, 84
        %v3122 = vpop.permute.xlu0 %3121
        %vm3123 = vcmask 687104
        %v3124 = vsel %vm3123, %v3076, %v3078
        %v3125 = vsel %vm3123, %v3078, %v3080
        %v3126 = vsel %vm3123, %v3082, %v3084
        %v3127 = vsel %vm3123, %v3084, %v3086
        %v3128 = vsel %vm3123, %v3088, %v3090
        %v3129 = vsel %vm3123, %v3090, %v3092
        %v3130 = vsel %vm3123, %v3094, %v3096
        %v3131 = vsel %vm3123, %v3096, %v3098
        %v3132 = vsel %vm3123, %v3100, %v3102
        %v3133 = vsel %vm3123, %v3102, %v3104
        %v3134 = vsel %vm3123, %v3106, %v3108
        %v3135 = vsel %vm3123, %v3108, %v3110
        %v3136 = vsel %vm3123, %v3112, %v3114
        %v3137 = vsel %vm3123, %v3114, %v3116
        %v3138 = vsel %vm3123, %v3118, %v3120
        %v3139 = vsel %vm3123, %v3120, %v3122
        %v3164 = vadd.f32 %v2971, %v3124
        %v3165 = vadd.f32 %v2972, %v3125
        %v3166 = vadd.f32 %v2973, %v3080
        %v3167 = vadd.f32 %v2974, %v3126
        %v3168 = vadd.f32 %v2975, %v3127
        %v3169 = vadd.f32 %v2976, %v3086
        %v3170 = vadd.f32 %v2977, %v3128
        %v3171 = vadd.f32 %v2978, %v3129
        %v3172 = vadd.f32 %v2979, %v3092
        %v3173 = vadd.f32 %v2980, %v3130
        %v3174 = vadd.f32 %v2981, %v3131
        %v3175 = vadd.f32 %v2982, %v3098
        %v3176 = vadd.f32 %v2983, %v3132
        %v3177 = vadd.f32 %v2984, %v3133
        %v3178 = vadd.f32 %v2985, %v3104
        %v3179 = vadd.f32 %v2986, %v3134
        %v3180 = vadd.f32 %v2987, %v3135
        %v3181 = vadd.f32 %v2988, %v3110
        %v3182 = vadd.f32 %v2989, %v3136
        %v3183 = vadd.f32 %v2990, %v3137
        %v3184 = vadd.f32 %v2991, %v3116
        %v3185 = vadd.f32 %v2992, %v3138
        %v3186 = vadd.f32 %v2993, %v3139
        %v3187 = vadd.f32 %v2994, %v3122
        %3188 = vset.pattern.permute.xlu0 15
        %3189 = vperm.xlu0 %3188, %v373
        %v3190 = vpop.permute.xlu0 %3189
        %3192 = vset.pattern.permute.xlu0 15
        %3193 = vperm.xlu0 %3192, %v374
        %v3194 = vpop.permute.xlu0 %3193
        %3196 = vset.pattern.permute.xlu0 15
        %3197 = vperm.xlu0 %3196, %v375
        %v3198 = vpop.permute.xlu0 %3197
        %3200 = vset.pattern.permute.xlu0 15
        %3201 = vperm.xlu0 %3200, %v376
        %v3202 = vpop.permute.xlu0 %3201
        %3204 = vset.pattern.permute.xlu0 15
        %3205 = vperm.xlu0 %3204, %v377
        %v3206 = vpop.permute.xlu0 %3205
        %3208 = vset.pattern.permute.xlu0 15
        %3209 = vperm.xlu0 %3208, %v378
        %v3210 = vpop.permute.xlu0 %3209
        %3212 = vset.pattern.permute.xlu0 15
        %3213 = vperm.xlu0 %3212, %v379
        %v3214 = vpop.permute.xlu0 %3213
        %3216 = vset.pattern.permute.xlu0 15
        %3217 = vperm.xlu0 %3216, %v380
        %v3218 = vpop.permute.xlu0 %3217
        %v3220 = vmul.f32 %v3190, %v426
        %v3221 = vmul.f32 %v3190, %v430
        %v3222 = vmul.f32 %v3190, %v434
        %v3223 = vmul.f32 %v3194, %v426
        %v3224 = vmul.f32 %v3194, %v430
        %v3225 = vmul.f32 %v3194, %v434
        %v3226 = vmul.f32 %v3198, %v426
        %v3227 = vmul.f32 %v3198, %v430
        %v3228 = vmul.f32 %v3198, %v434
        %v3229 = vmul.f32 %v3202, %v426
        %v3230 = vmul.f32 %v3202, %v430
        %v3231 = vmul.f32 %v3202, %v434
        %v3232 = vmul.f32 %v3206, %v426
        %v3233 = vmul.f32 %v3206, %v430
        %v3234 = vmul.f32 %v3206, %v434
        %v3235 = vmul.f32 %v3210, %v426
        %v3236 = vmul.f32 %v3210, %v430
        %v3237 = vmul.f32 %v3210, %v434
        %v3238 = vmul.f32 %v3214, %v426
        %v3239 = vmul.f32 %v3214, %v430
        %v3240 = vmul.f32 %v3214, %v434
        %v3241 = vmul.f32 %v3218, %v426
        %v3242 = vmul.f32 %v3218, %v430
        %v3243 = vmul.f32 %v3218, %v434
        %3268 = vrot.lane.b32.xlu0 %v3220, 68
        %v3269 = vpop.permute.xlu0 %3268
        %3270 = vrot.lane.b32.xlu0 %v3221, 68
        %v3271 = vpop.permute.xlu0 %3270
        %3272 = vrot.lane.b32.xlu0 %v3222, 68
        %v3273 = vpop.permute.xlu0 %3272
        %3274 = vrot.lane.b32.xlu0 %v3223, 68
        %v3275 = vpop.permute.xlu0 %3274
        %3276 = vrot.lane.b32.xlu0 %v3224, 68
        %v3277 = vpop.permute.xlu0 %3276
        %3278 = vrot.lane.b32.xlu0 %v3225, 68
        %v3279 = vpop.permute.xlu0 %3278
        %3280 = vrot.lane.b32.xlu0 %v3226, 68
        %v3281 = vpop.permute.xlu0 %3280
        %3282 = vrot.lane.b32.xlu0 %v3227, 68
        %v3283 = vpop.permute.xlu0 %3282
        %3284 = vrot.lane.b32.xlu0 %v3228, 68
        %v3285 = vpop.permute.xlu0 %3284
        %3286 = vrot.lane.b32.xlu0 %v3229, 68
        %v3287 = vpop.permute.xlu0 %3286
        %3288 = vrot.lane.b32.xlu0 %v3230, 68
        %v3289 = vpop.permute.xlu0 %3288
        %3290 = vrot.lane.b32.xlu0 %v3231, 68
        %v3291 = vpop.permute.xlu0 %3290
        %3292 = vrot.lane.b32.xlu0 %v3232, 68
        %v3293 = vpop.permute.xlu0 %3292
        %3294 = vrot.lane.b32.xlu0 %v3233, 68
        %v3295 = vpop.permute.xlu0 %3294
        %3296 = vrot.lane.b32.xlu0 %v3234, 68
        %v3297 = vpop.permute.xlu0 %3296
        %3298 = vrot.lane.b32.xlu0 %v3235, 68
        %v3299 = vpop.permute.xlu0 %3298
        %3300 = vrot.lane.b32.xlu0 %v3236, 68
        %v3301 = vpop.permute.xlu0 %3300
        %3302 = vrot.lane.b32.xlu0 %v3237, 68
        %v3303 = vpop.permute.xlu0 %3302
        %3304 = vrot.lane.b32.xlu0 %v3238, 68
        %v3305 = vpop.permute.xlu0 %3304
        %3306 = vrot.lane.b32.xlu0 %v3239, 68
        %v3307 = vpop.permute.xlu0 %3306
        %3308 = vrot.lane.b32.xlu0 %v3240, 68
        %v3309 = vpop.permute.xlu0 %3308
        %3310 = vrot.lane.b32.xlu0 %v3241, 68
        %v3311 = vpop.permute.xlu0 %3310
        %3312 = vrot.lane.b32.xlu0 %v3242, 68
        %v3313 = vpop.permute.xlu0 %3312
        %3314 = vrot.lane.b32.xlu0 %v3243, 68
        %v3315 = vpop.permute.xlu0 %3314
        %vm3316 = vcmask 556032
        %v3317 = vsel %vm3316, %v3269, %v3271
        %v3318 = vsel %vm3316, %v3271, %v3273
        %v3319 = vsel %vm3316, %v3275, %v3277
        %v3320 = vsel %vm3316, %v3277, %v3279
        %v3321 = vsel %vm3316, %v3281, %v3283
        %v3322 = vsel %vm3316, %v3283, %v3285
        %v3323 = vsel %vm3316, %v3287, %v3289
        %v3324 = vsel %vm3316, %v3289, %v3291
        %v3325 = vsel %vm3316, %v3293, %v3295
        %v3326 = vsel %vm3316, %v3295, %v3297
        %v3327 = vsel %vm3316, %v3299, %v3301
        %v3328 = vsel %vm3316, %v3301, %v3303
        %v3329 = vsel %vm3316, %v3305, %v3307
        %v3330 = vsel %vm3316, %v3307, %v3309
        %v3331 = vsel %vm3316, %v3311, %v3313
        %v3332 = vsel %vm3316, %v3313, %v3315
        %v3357 = vadd.f32 %v3164, %v3317
        %v3358 = vadd.f32 %v3165, %v3318
        %v3359 = vadd.f32 %v3166, %v3273
        %v3360 = vadd.f32 %v3167, %v3319
        %v3361 = vadd.f32 %v3168, %v3320
        %v3362 = vadd.f32 %v3169, %v3279
        %v3363 = vadd.f32 %v3170, %v3321
        %v3364 = vadd.f32 %v3171, %v3322
        %v3365 = vadd.f32 %v3172, %v3285
        %v3366 = vadd.f32 %v3173, %v3323
        %v3367 = vadd.f32 %v3174, %v3324
        %v3368 = vadd.f32 %v3175, %v3291
        %v3369 = vadd.f32 %v3176, %v3325
        %v3370 = vadd.f32 %v3177, %v3326
        %v3371 = vadd.f32 %v3178, %v3297
        %v3372 = vadd.f32 %v3179, %v3327
        %v3373 = vadd.f32 %v3180, %v3328
        %v3374 = vadd.f32 %v3181, %v3303
        %v3375 = vadd.f32 %v3182, %v3329
        %v3376 = vadd.f32 %v3183, %v3330
        %v3377 = vadd.f32 %v3184, %v3309
        %v3378 = vadd.f32 %v3185, %v3331
        %v3379 = vadd.f32 %v3186, %v3332
        %v3380 = vadd.f32 %v3187, %v3315
        %3381 = vset.pattern.permute.xlu0 16
        %3382 = vperm.xlu0 %3381, %v373
        %v3383 = vpop.permute.xlu0 %3382
        %3385 = vset.pattern.permute.xlu0 16
        %3386 = vperm.xlu0 %3385, %v374
        %v3387 = vpop.permute.xlu0 %3386
        %3389 = vset.pattern.permute.xlu0 16
        %3390 = vperm.xlu0 %3389, %v375
        %v3391 = vpop.permute.xlu0 %3390
        %3393 = vset.pattern.permute.xlu0 16
        %3394 = vperm.xlu0 %3393, %v376
        %v3395 = vpop.permute.xlu0 %3394
        %3397 = vset.pattern.permute.xlu0 16
        %3398 = vperm.xlu0 %3397, %v377
        %v3399 = vpop.permute.xlu0 %3398
        %3401 = vset.pattern.permute.xlu0 16
        %3402 = vperm.xlu0 %3401, %v378
        %v3403 = vpop.permute.xlu0 %3402
        %3405 = vset.pattern.permute.xlu0 16
        %3406 = vperm.xlu0 %3405, %v379
        %v3407 = vpop.permute.xlu0 %3406
        %3409 = vset.pattern.permute.xlu0 16
        %3410 = vperm.xlu0 %3409, %v380
        %v3411 = vpop.permute.xlu0 %3410
        %v3413 = vmul.f32 %v3383, %v426
        %v3414 = vmul.f32 %v3383, %v430
        %v3415 = vmul.f32 %v3383, %v434
        %v3416 = vmul.f32 %v3387, %v426
        %v3417 = vmul.f32 %v3387, %v430
        %v3418 = vmul.f32 %v3387, %v434
        %v3419 = vmul.f32 %v3391, %v426
        %v3420 = vmul.f32 %v3391, %v430
        %v3421 = vmul.f32 %v3391, %v434
        %v3422 = vmul.f32 %v3395, %v426
        %v3423 = vmul.f32 %v3395, %v430
        %v3424 = vmul.f32 %v3395, %v434
        %v3425 = vmul.f32 %v3399, %v426
        %v3426 = vmul.f32 %v3399, %v430
        %v3427 = vmul.f32 %v3399, %v434
        %v3428 = vmul.f32 %v3403, %v426
        %v3429 = vmul.f32 %v3403, %v430
        %v3430 = vmul.f32 %v3403, %v434
        %v3431 = vmul.f32 %v3407, %v426
        %v3432 = vmul.f32 %v3407, %v430
        %v3433 = vmul.f32 %v3407, %v434
        %v3434 = vmul.f32 %v3411, %v426
        %v3435 = vmul.f32 %v3411, %v430
        %v3436 = vmul.f32 %v3411, %v434
        %3461 = vrot.lane.b32.xlu0 %v3413, 67
        %v3462 = vpop.permute.xlu0 %3461
        %3463 = vrot.lane.b32.xlu0 %v3414, 67
        %v3464 = vpop.permute.xlu0 %3463
        %3465 = vrot.lane.b32.xlu0 %v3415, 67
        %v3466 = vpop.permute.xlu0 %3465
        %3467 = vrot.lane.b32.xlu0 %v3416, 67
        %v3468 = vpop.permute.xlu0 %3467
        %3469 = vrot.lane.b32.xlu0 %v3417, 67
        %v3470 = vpop.permute.xlu0 %3469
        %3471 = vrot.lane.b32.xlu0 %v3418, 67
        %v3472 = vpop.permute.xlu0 %3471
        %3473 = vrot.lane.b32.xlu0 %v3419, 67
        %v3474 = vpop.permute.xlu0 %3473
        %3475 = vrot.lane.b32.xlu0 %v3420, 67
        %v3476 = vpop.permute.xlu0 %3475
        %3477 = vrot.lane.b32.xlu0 %v3421, 67
        %v3478 = vpop.permute.xlu0 %3477
        %3479 = vrot.lane.b32.xlu0 %v3422, 67
        %v3480 = vpop.permute.xlu0 %3479
        %3481 = vrot.lane.b32.xlu0 %v3423, 67
        %v3482 = vpop.permute.xlu0 %3481
        %3483 = vrot.lane.b32.xlu0 %v3424, 67
        %v3484 = vpop.permute.xlu0 %3483
        %3485 = vrot.lane.b32.xlu0 %v3425, 67
        %v3486 = vpop.permute.xlu0 %3485
        %3487 = vrot.lane.b32.xlu0 %v3426, 67
        %v3488 = vpop.permute.xlu0 %3487
        %3489 = vrot.lane.b32.xlu0 %v3427, 67
        %v3490 = vpop.permute.xlu0 %3489
        %3491 = vrot.lane.b32.xlu0 %v3428, 67
        %v3492 = vpop.permute.xlu0 %3491
        %3493 = vrot.lane.b32.xlu0 %v3429, 67
        %v3494 = vpop.permute.xlu0 %3493
        %3495 = vrot.lane.b32.xlu0 %v3430, 67
        %v3496 = vpop.permute.xlu0 %3495
        %3497 = vrot.lane.b32.xlu0 %v3431, 67
        %v3498 = vpop.permute.xlu0 %3497
        %3499 = vrot.lane.b32.xlu0 %v3432, 67
        %v3500 = vpop.permute.xlu0 %3499
        %3501 = vrot.lane.b32.xlu0 %v3433, 67
        %v3502 = vpop.permute.xlu0 %3501
        %3503 = vrot.lane.b32.xlu0 %v3434, 67
        %v3504 = vpop.permute.xlu0 %3503
        %3505 = vrot.lane.b32.xlu0 %v3435, 67
        %v3506 = vpop.permute.xlu0 %3505
        %3507 = vrot.lane.b32.xlu0 %v3436, 67
        %v3508 = vpop.permute.xlu0 %3507
        %vm3509 = vcmask 547840
        %v3510 = vsel %vm3509, %v3462, %v3464
        %v3511 = vsel %vm3509, %v3464, %v3466
        %v3512 = vsel %vm3509, %v3468, %v3470
        %v3513 = vsel %vm3509, %v3470, %v3472
        %v3514 = vsel %vm3509, %v3474, %v3476
        %v3515 = vsel %vm3509, %v3476, %v3478
        %v3516 = vsel %vm3509, %v3480, %v3482
        %v3517 = vsel %vm3509, %v3482, %v3484
        %v3518 = vsel %vm3509, %v3486, %v3488
        %v3519 = vsel %vm3509, %v3488, %v3490
        %v3520 = vsel %vm3509, %v3492, %v3494
        %v3521 = vsel %vm3509, %v3494, %v3496
        %v3522 = vsel %vm3509, %v3498, %v3500
        %v3523 = vsel %vm3509, %v3500, %v3502
        %v3524 = vsel %vm3509, %v3504, %v3506
        %v3525 = vsel %vm3509, %v3506, %v3508
        %v3550 = vadd.f32 %v3357, %v3510
        %v3551 = vadd.f32 %v3358, %v3511
        %v3552 = vadd.f32 %v3359, %v3466
        %v3553 = vadd.f32 %v3360, %v3512
        %v3554 = vadd.f32 %v3361, %v3513
        %v3555 = vadd.f32 %v3362, %v3472
        %v3556 = vadd.f32 %v3363, %v3514
        %v3557 = vadd.f32 %v3364, %v3515
        %v3558 = vadd.f32 %v3365, %v3478
        %v3559 = vadd.f32 %v3366, %v3516
        %v3560 = vadd.f32 %v3367, %v3517
        %v3561 = vadd.f32 %v3368, %v3484
        %v3562 = vadd.f32 %v3369, %v3518
        %v3563 = vadd.f32 %v3370, %v3519
        %v3564 = vadd.f32 %v3371, %v3490
        %v3565 = vadd.f32 %v3372, %v3520
        %v3566 = vadd.f32 %v3373, %v3521
        %v3567 = vadd.f32 %v3374, %v3496
        %v3568 = vadd.f32 %v3375, %v3522
        %v3569 = vadd.f32 %v3376, %v3523
        %v3570 = vadd.f32 %v3377, %v3502
        %v3571 = vadd.f32 %v3378, %v3524
        %v3572 = vadd.f32 %v3379, %v3525
        %v3573 = vadd.f32 %v3380, %v3508
        %3574 = vset.pattern.permute.xlu0 17
        %3575 = vperm.xlu0 %3574, %v373
        %v3576 = vpop.permute.xlu0 %3575
        %3578 = vset.pattern.permute.xlu0 17
        %3579 = vperm.xlu0 %3578, %v374
        %v3580 = vpop.permute.xlu0 %3579
        %3582 = vset.pattern.permute.xlu0 17
        %3583 = vperm.xlu0 %3582, %v375
        %v3584 = vpop.permute.xlu0 %3583
        %3586 = vset.pattern.permute.xlu0 17
        %3587 = vperm.xlu0 %3586, %v376
        %v3588 = vpop.permute.xlu0 %3587
        %3590 = vset.pattern.permute.xlu0 17
        %3591 = vperm.xlu0 %3590, %v377
        %v3592 = vpop.permute.xlu0 %3591
        %3594 = vset.pattern.permute.xlu0 17
        %3595 = vperm.xlu0 %3594, %v378
        %v3596 = vpop.permute.xlu0 %3595
        %3598 = vset.pattern.permute.xlu0 17
        %3599 = vperm.xlu0 %3598, %v379
        %v3600 = vpop.permute.xlu0 %3599
        %3602 = vset.pattern.permute.xlu0 17
        %3603 = vperm.xlu0 %3602, %v380
        %v3604 = vpop.permute.xlu0 %3603
        %v3606 = vmul.f32 %v3576, %v426
        %v3607 = vmul.f32 %v3576, %v430
        %v3608 = vmul.f32 %v3576, %v434
        %v3609 = vmul.f32 %v3580, %v426
        %v3610 = vmul.f32 %v3580, %v430
        %v3611 = vmul.f32 %v3580, %v434
        %v3612 = vmul.f32 %v3584, %v426
        %v3613 = vmul.f32 %v3584, %v430
        %v3614 = vmul.f32 %v3584, %v434
        %v3615 = vmul.f32 %v3588, %v426
        %v3616 = vmul.f32 %v3588, %v430
        %v3617 = vmul.f32 %v3588, %v434
        %v3618 = vmul.f32 %v3592, %v426
        %v3619 = vmul.f32 %v3592, %v430
        %v3620 = vmul.f32 %v3592, %v434
        %v3621 = vmul.f32 %v3596, %v426
        %v3622 = vmul.f32 %v3596, %v430
        %v3623 = vmul.f32 %v3596, %v434
        %v3624 = vmul.f32 %v3600, %v426
        %v3625 = vmul.f32 %v3600, %v430
        %v3626 = vmul.f32 %v3600, %v434
        %v3627 = vmul.f32 %v3604, %v426
        %v3628 = vmul.f32 %v3604, %v430
        %v3629 = vmul.f32 %v3604, %v434
        %3654 = vrot.lane.b32.xlu0 %v3606, 66
        %v3655 = vpop.permute.xlu0 %3654
        %3656 = vrot.lane.b32.xlu0 %v3607, 66
        %v3657 = vpop.permute.xlu0 %3656
        %3658 = vrot.lane.b32.xlu0 %v3608, 66
        %v3659 = vpop.permute.xlu0 %3658
        %3660 = vrot.lane.b32.xlu0 %v3609, 66
        %v3661 = vpop.permute.xlu0 %3660
        %3662 = vrot.lane.b32.xlu0 %v3610, 66
        %v3663 = vpop.permute.xlu0 %3662
        %3664 = vrot.lane.b32.xlu0 %v3611, 66
        %v3665 = vpop.permute.xlu0 %3664
        %3666 = vrot.lane.b32.xlu0 %v3612, 66
        %v3667 = vpop.permute.xlu0 %3666
        %3668 = vrot.lane.b32.xlu0 %v3613, 66
        %v3669 = vpop.permute.xlu0 %3668
        %3670 = vrot.lane.b32.xlu0 %v3614, 66
        %v3671 = vpop.permute.xlu0 %3670
        %3672 = vrot.lane.b32.xlu0 %v3615, 66
        %v3673 = vpop.permute.xlu0 %3672
        %3674 = vrot.lane.b32.xlu0 %v3616, 66
        %v3675 = vpop.permute.xlu0 %3674
        %3676 = vrot.lane.b32.xlu0 %v3617, 66
        %v3677 = vpop.permute.xlu0 %3676
        %3678 = vrot.lane.b32.xlu0 %v3618, 66
        %v3679 = vpop.permute.xlu0 %3678
        %3680 = vrot.lane.b32.xlu0 %v3619, 66
        %v3681 = vpop.permute.xlu0 %3680
        %3682 = vrot.lane.b32.xlu0 %v3620, 66
        %v3683 = vpop.permute.xlu0 %3682
        %3684 = vrot.lane.b32.xlu0 %v3621, 66
        %v3685 = vpop.permute.xlu0 %3684
        %3686 = vrot.lane.b32.xlu0 %v3622, 66
        %v3687 = vpop.permute.xlu0 %3686
        %3688 = vrot.lane.b32.xlu0 %v3623, 66
        %v3689 = vpop.permute.xlu0 %3688
        %3690 = vrot.lane.b32.xlu0 %v3624, 66
        %v3691 = vpop.permute.xlu0 %3690
        %3692 = vrot.lane.b32.xlu0 %v3625, 66
        %v3693 = vpop.permute.xlu0 %3692
        %3694 = vrot.lane.b32.xlu0 %v3626, 66
        %v3695 = vpop.permute.xlu0 %3694
        %3696 = vrot.lane.b32.xlu0 %v3627, 66
        %v3697 = vpop.permute.xlu0 %3696
        %3698 = vrot.lane.b32.xlu0 %v3628, 66
        %v3699 = vpop.permute.xlu0 %3698
        %3700 = vrot.lane.b32.xlu0 %v3629, 66
        %v3701 = vpop.permute.xlu0 %3700
        %vm3702 = vcmask 539648
        %v3703 = vsel %vm3702, %v3655, %v3657
        %v3704 = vsel %vm3702, %v3657, %v3659
        %v3705 = vsel %vm3702, %v3661, %v3663
        %v3706 = vsel %vm3702, %v3663, %v3665
        %v3707 = vsel %vm3702, %v3667, %v3669
        %v3708 = vsel %vm3702, %v3669, %v3671
        %v3709 = vsel %vm3702, %v3673, %v3675
        %v3710 = vsel %vm3702, %v3675, %v3677
        %v3711 = vsel %vm3702, %v3679, %v3681
        %v3712 = vsel %vm3702, %v3681, %v3683
        %v3713 = vsel %vm3702, %v3685, %v3687
        %v3714 = vsel %vm3702, %v3687, %v3689
        %v3715 = vsel %vm3702, %v3691, %v3693
        %v3716 = vsel %vm3702, %v3693, %v3695
        %v3717 = vsel %vm3702, %v3697, %v3699
        %v3718 = vsel %vm3702, %v3699, %v3701
        %v3743 = vadd.f32 %v3550, %v3703
        %v3744 = vadd.f32 %v3551, %v3704
        %v3745 = vadd.f32 %v3552, %v3659
        %v3746 = vadd.f32 %v3553, %v3705
        %v3747 = vadd.f32 %v3554, %v3706
        %v3748 = vadd.f32 %v3555, %v3665
        %v3749 = vadd.f32 %v3556, %v3707
        %v3750 = vadd.f32 %v3557, %v3708
        %v3751 = vadd.f32 %v3558, %v3671
        %v3752 = vadd.f32 %v3559, %v3709
        %v3753 = vadd.f32 %v3560, %v3710
        %v3754 = vadd.f32 %v3561, %v3677
        %v3755 = vadd.f32 %v3562, %v3711
        %v3756 = vadd.f32 %v3563, %v3712
        %v3757 = vadd.f32 %v3564, %v3683
        %v3758 = vadd.f32 %v3565, %v3713
        %v3759 = vadd.f32 %v3566, %v3714
        %v3760 = vadd.f32 %v3567, %v3689
        %v3761 = vadd.f32 %v3568, %v3715
        %v3762 = vadd.f32 %v3569, %v3716
        %v3763 = vadd.f32 %v3570, %v3695
        %v3764 = vadd.f32 %v3571, %v3717
        %v3765 = vadd.f32 %v3572, %v3718
        %v3766 = vadd.f32 %v3573, %v3701
        %3767 = vset.pattern.permute.xlu0 18
        %3768 = vperm.xlu0 %3767, %v373
        %v3769 = vpop.permute.xlu0 %3768
        %3771 = vset.pattern.permute.xlu0 18
        %3772 = vperm.xlu0 %3771, %v374
        %v3773 = vpop.permute.xlu0 %3772
        %3775 = vset.pattern.permute.xlu0 18
        %3776 = vperm.xlu0 %3775, %v375
        %v3777 = vpop.permute.xlu0 %3776
        %3779 = vset.pattern.permute.xlu0 18
        %3780 = vperm.xlu0 %3779, %v376
        %v3781 = vpop.permute.xlu0 %3780
        %3783 = vset.pattern.permute.xlu0 18
        %3784 = vperm.xlu0 %3783, %v377
        %v3785 = vpop.permute.xlu0 %3784
        %3787 = vset.pattern.permute.xlu0 18
        %3788 = vperm.xlu0 %3787, %v378
        %v3789 = vpop.permute.xlu0 %3788
        %3791 = vset.pattern.permute.xlu0 18
        %3792 = vperm.xlu0 %3791, %v379
        %v3793 = vpop.permute.xlu0 %3792
        %3795 = vset.pattern.permute.xlu0 18
        %3796 = vperm.xlu0 %3795, %v380
        %v3797 = vpop.permute.xlu0 %3796
        %v3799 = vmul.f32 %v3769, %v426
        %v3800 = vmul.f32 %v3769, %v430
        %v3801 = vmul.f32 %v3769, %v434
        %v3802 = vmul.f32 %v3773, %v426
        %v3803 = vmul.f32 %v3773, %v430
        %v3804 = vmul.f32 %v3773, %v434
        %v3805 = vmul.f32 %v3777, %v426
        %v3806 = vmul.f32 %v3777, %v430
        %v3807 = vmul.f32 %v3777, %v434
        %v3808 = vmul.f32 %v3781, %v426
        %v3809 = vmul.f32 %v3781, %v430
        %v3810 = vmul.f32 %v3781, %v434
        %v3811 = vmul.f32 %v3785, %v426
        %v3812 = vmul.f32 %v3785, %v430
        %v3813 = vmul.f32 %v3785, %v434
        %v3814 = vmul.f32 %v3789, %v426
        %v3815 = vmul.f32 %v3789, %v430
        %v3816 = vmul.f32 %v3789, %v434
        %v3817 = vmul.f32 %v3793, %v426
        %v3818 = vmul.f32 %v3793, %v430
        %v3819 = vmul.f32 %v3793, %v434
        %v3820 = vmul.f32 %v3797, %v426
        %v3821 = vmul.f32 %v3797, %v430
        %v3822 = vmul.f32 %v3797, %v434
        %3847 = vrot.lane.b32.xlu0 %v3799, 65
        %v3848 = vpop.permute.xlu0 %3847
        %3849 = vrot.lane.b32.xlu0 %v3800, 65
        %v3850 = vpop.permute.xlu0 %3849
        %3851 = vrot.lane.b32.xlu0 %v3801, 65
        %v3852 = vpop.permute.xlu0 %3851
        %3853 = vrot.lane.b32.xlu0 %v3802, 65
        %v3854 = vpop.permute.xlu0 %3853
        %3855 = vrot.lane.b32.xlu0 %v3803, 65
        %v3856 = vpop.permute.xlu0 %3855
        %3857 = vrot.lane.b32.xlu0 %v3804, 65
        %v3858 = vpop.permute.xlu0 %3857
        %3859 = vrot.lane.b32.xlu0 %v3805, 65
        %v3860 = vpop.permute.xlu0 %3859
        %3861 = vrot.lane.b32.xlu0 %v3806, 65
        %v3862 = vpop.permute.xlu0 %3861
        %3863 = vrot.lane.b32.xlu0 %v3807, 65
        %v3864 = vpop.permute.xlu0 %3863
        %3865 = vrot.lane.b32.xlu0 %v3808, 65
        %v3866 = vpop.permute.xlu0 %3865
        %3867 = vrot.lane.b32.xlu0 %v3809, 65
        %v3868 = vpop.permute.xlu0 %3867
        %3869 = vrot.lane.b32.xlu0 %v3810, 65
        %v3870 = vpop.permute.xlu0 %3869
        %3871 = vrot.lane.b32.xlu0 %v3811, 65
        %v3872 = vpop.permute.xlu0 %3871
        %3873 = vrot.lane.b32.xlu0 %v3812, 65
        %v3874 = vpop.permute.xlu0 %3873
        %3875 = vrot.lane.b32.xlu0 %v3813, 65
        %v3876 = vpop.permute.xlu0 %3875
        %3877 = vrot.lane.b32.xlu0 %v3814, 65
        %v3878 = vpop.permute.xlu0 %3877
        %3879 = vrot.lane.b32.xlu0 %v3815, 65
        %v3880 = vpop.permute.xlu0 %3879
        %3881 = vrot.lane.b32.xlu0 %v3816, 65
        %v3882 = vpop.permute.xlu0 %3881
        %3883 = vrot.lane.b32.xlu0 %v3817, 65
        %v3884 = vpop.permute.xlu0 %3883
        %3885 = vrot.lane.b32.xlu0 %v3818, 65
        %v3886 = vpop.permute.xlu0 %3885
        %3887 = vrot.lane.b32.xlu0 %v3819, 65
        %v3888 = vpop.permute.xlu0 %3887
        %3889 = vrot.lane.b32.xlu0 %v3820, 65
        %v3890 = vpop.permute.xlu0 %3889
        %3891 = vrot.lane.b32.xlu0 %v3821, 65
        %v3892 = vpop.permute.xlu0 %3891
        %3893 = vrot.lane.b32.xlu0 %v3822, 65
        %v3894 = vpop.permute.xlu0 %3893
        %vm3895 = vcmask 531456
        %v3896 = vsel %vm3895, %v3848, %v3850
        %v3897 = vsel %vm3895, %v3850, %v3852
        %v3898 = vsel %vm3895, %v3854, %v3856
        %v3899 = vsel %vm3895, %v3856, %v3858
        %v3900 = vsel %vm3895, %v3860, %v3862
        %v3901 = vsel %vm3895, %v3862, %v3864
        %v3902 = vsel %vm3895, %v3866, %v3868
        %v3903 = vsel %vm3895, %v3868, %v3870
        %v3904 = vsel %vm3895, %v3872, %v3874
        %v3905 = vsel %vm3895, %v3874, %v3876
        %v3906 = vsel %vm3895, %v3878, %v3880
        %v3907 = vsel %vm3895, %v3880, %v3882
        %v3908 = vsel %vm3895, %v3884, %v3886
        %v3909 = vsel %vm3895, %v3886, %v3888
        %v3910 = vsel %vm3895, %v3890, %v3892
        %v3911 = vsel %vm3895, %v3892, %v3894
        %v3936 = vadd.f32 %v3743, %v3896
        %v3937 = vadd.f32 %v3744, %v3897
        %v3938 = vadd.f32 %v3745, %v3852
        %v3939 = vadd.f32 %v3746, %v3898
        %v3940 = vadd.f32 %v3747, %v3899
        %v3941 = vadd.f32 %v3748, %v3858
        %v3942 = vadd.f32 %v3749, %v3900
        %v3943 = vadd.f32 %v3750, %v3901
        %v3944 = vadd.f32 %v3751, %v3864
        %v3945 = vadd.f32 %v3752, %v3902
        %v3946 = vadd.f32 %v3753, %v3903
        %v3947 = vadd.f32 %v3754, %v3870
        %v3948 = vadd.f32 %v3755, %v3904
        %v3949 = vadd.f32 %v3756, %v3905
        %v3950 = vadd.f32 %v3757, %v3876
        %v3951 = vadd.f32 %v3758, %v3906
        %v3952 = vadd.f32 %v3759, %v3907
        %v3953 = vadd.f32 %v3760, %v3882
        %v3954 = vadd.f32 %v3761, %v3908
        %v3955 = vadd.f32 %v3762, %v3909
        %v3956 = vadd.f32 %v3763, %v3888
        %v3957 = vadd.f32 %v3764, %v3910
        %v3958 = vadd.f32 %v3765, %v3911
        %v3959 = vadd.f32 %v3766, %v3894
        %3960 = vset.pattern.permute.xlu0 19
        %3961 = vperm.xlu0 %3960, %v373
        %v3962 = vpop.permute.xlu0 %3961
        %3964 = vset.pattern.permute.xlu0 19
        %3965 = vperm.xlu0 %3964, %v374
        %v3966 = vpop.permute.xlu0 %3965
        %3968 = vset.pattern.permute.xlu0 19
        %3969 = vperm.xlu0 %3968, %v375
        %v3970 = vpop.permute.xlu0 %3969
        %3972 = vset.pattern.permute.xlu0 19
        %3973 = vperm.xlu0 %3972, %v376
        %v3974 = vpop.permute.xlu0 %3973
        %3976 = vset.pattern.permute.xlu0 19
        %3977 = vperm.xlu0 %3976, %v377
        %v3978 = vpop.permute.xlu0 %3977
        %3980 = vset.pattern.permute.xlu0 19
        %3981 = vperm.xlu0 %3980, %v378
        %v3982 = vpop.permute.xlu0 %3981
        %3984 = vset.pattern.permute.xlu0 19
        %3985 = vperm.xlu0 %3984, %v379
        %v3986 = vpop.permute.xlu0 %3985
        %3988 = vset.pattern.permute.xlu0 19
        %3989 = vperm.xlu0 %3988, %v380
        %v3990 = vpop.permute.xlu0 %3989
        %v3992 = vmul.f32 %v3962, %v426
        %v3993 = vmul.f32 %v3962, %v430
        %v3994 = vmul.f32 %v3962, %v434
        %v3995 = vmul.f32 %v3966, %v426
        %v3996 = vmul.f32 %v3966, %v430
        %v3997 = vmul.f32 %v3966, %v434
        %v3998 = vmul.f32 %v3970, %v426
        %v3999 = vmul.f32 %v3970, %v430
        %v4000 = vmul.f32 %v3970, %v434
        %v4001 = vmul.f32 %v3974, %v426
        %v4002 = vmul.f32 %v3974, %v430
        %v4003 = vmul.f32 %v3974, %v434
        %v4004 = vmul.f32 %v3978, %v426
        %v4005 = vmul.f32 %v3978, %v430
        %v4006 = vmul.f32 %v3978, %v434
        %v4007 = vmul.f32 %v3982, %v426
        %v4008 = vmul.f32 %v3982, %v430
        %v4009 = vmul.f32 %v3982, %v434
        %v4010 = vmul.f32 %v3986, %v426
        %v4011 = vmul.f32 %v3986, %v430
        %v4012 = vmul.f32 %v3986, %v434
        %v4013 = vmul.f32 %v3990, %v426
        %v4014 = vmul.f32 %v3990, %v430
        %v4015 = vmul.f32 %v3990, %v434
        %4040 = vrot.lane.b32.xlu0 %v3992, 64
        %v4041 = vpop.permute.xlu0 %4040
        %4042 = vrot.lane.b32.xlu0 %v3993, 64
        %v4043 = vpop.permute.xlu0 %4042
        %4044 = vrot.lane.b32.xlu0 %v3994, 64
        %v4045 = vpop.permute.xlu0 %4044
        %4046 = vrot.lane.b32.xlu0 %v3995, 64
        %v4047 = vpop.permute.xlu0 %4046
        %4048 = vrot.lane.b32.xlu0 %v3996, 64
        %v4049 = vpop.permute.xlu0 %4048
        %4050 = vrot.lane.b32.xlu0 %v3997, 64
        %v4051 = vpop.permute.xlu0 %4050
        %4052 = vrot.lane.b32.xlu0 %v3998, 64
        %v4053 = vpop.permute.xlu0 %4052
        %4054 = vrot.lane.b32.xlu0 %v3999, 64
        %v4055 = vpop.permute.xlu0 %4054
        %4056 = vrot.lane.b32.xlu0 %v4000, 64
        %v4057 = vpop.permute.xlu0 %4056
        %4058 = vrot.lane.b32.xlu0 %v4001, 64
        %v4059 = vpop.permute.xlu0 %4058
        %4060 = vrot.lane.b32.xlu0 %v4002, 64
        %v4061 = vpop.permute.xlu0 %4060
        %4062 = vrot.lane.b32.xlu0 %v4003, 64
        %v4063 = vpop.permute.xlu0 %4062
        %4064 = vrot.lane.b32.xlu0 %v4004, 64
        %v4065 = vpop.permute.xlu0 %4064
        %4066 = vrot.lane.b32.xlu0 %v4005, 64
        %v4067 = vpop.permute.xlu0 %4066
        %4068 = vrot.lane.b32.xlu0 %v4006, 64
        %v4069 = vpop.permute.xlu0 %4068
        %4070 = vrot.lane.b32.xlu0 %v4007, 64
        %v4071 = vpop.permute.xlu0 %4070
        %4072 = vrot.lane.b32.xlu0 %v4008, 64
        %v4073 = vpop.permute.xlu0 %4072
        %4074 = vrot.lane.b32.xlu0 %v4009, 64
        %v4075 = vpop.permute.xlu0 %4074
        %4076 = vrot.lane.b32.xlu0 %v4010, 64
        %v4077 = vpop.permute.xlu0 %4076
        %4078 = vrot.lane.b32.xlu0 %v4011, 64
        %v4079 = vpop.permute.xlu0 %4078
        %4080 = vrot.lane.b32.xlu0 %v4012, 64
        %v4081 = vpop.permute.xlu0 %4080
        %4082 = vrot.lane.b32.xlu0 %v4013, 64
        %v4083 = vpop.permute.xlu0 %4082
        %4084 = vrot.lane.b32.xlu0 %v4014, 64
        %v4085 = vpop.permute.xlu0 %4084
        %4086 = vrot.lane.b32.xlu0 %v4015, 64
        %v4087 = vpop.permute.xlu0 %4086
        %vm4088 = vcmask 523264
        %v4089 = vsel %vm4088, %v4041, %v4043
        %v4090 = vsel %vm4088, %v4043, %v4045
        %v4091 = vsel %vm4088, %v4047, %v4049
        %v4092 = vsel %vm4088, %v4049, %v4051
        %v4093 = vsel %vm4088, %v4053, %v4055
        %v4094 = vsel %vm4088, %v4055, %v4057
        %v4095 = vsel %vm4088, %v4059, %v4061
        %v4096 = vsel %vm4088, %v4061, %v4063
        %v4097 = vsel %vm4088, %v4065, %v4067
        %v4098 = vsel %vm4088, %v4067, %v4069
        %v4099 = vsel %vm4088, %v4071, %v4073
        %v4100 = vsel %vm4088, %v4073, %v4075
        %v4101 = vsel %vm4088, %v4077, %v4079
        %v4102 = vsel %vm4088, %v4079, %v4081
        %v4103 = vsel %vm4088, %v4083, %v4085
        %v4104 = vsel %vm4088, %v4085, %v4087
        %v4129 = vadd.f32 %v3936, %v4089
        %v4130 = vadd.f32 %v3937, %v4090
        %v4131 = vadd.f32 %v3938, %v4045
        %v4132 = vadd.f32 %v3939, %v4091
        %v4133 = vadd.f32 %v3940, %v4092
        %v4134 = vadd.f32 %v3941, %v4051
        %v4135 = vadd.f32 %v3942, %v4093
        %v4136 = vadd.f32 %v3943, %v4094
        %v4137 = vadd.f32 %v3944, %v4057
        %v4138 = vadd.f32 %v3945, %v4095
        %v4139 = vadd.f32 %v3946, %v4096
        %v4140 = vadd.f32 %v3947, %v4063
        %v4141 = vadd.f32 %v3948, %v4097
        %v4142 = vadd.f32 %v3949, %v4098
        %v4143 = vadd.f32 %v3950, %v4069
        %v4144 = vadd.f32 %v3951, %v4099
        %v4145 = vadd.f32 %v3952, %v4100
        %v4146 = vadd.f32 %v3953, %v4075
        %v4147 = vadd.f32 %v3954, %v4101
        %v4148 = vadd.f32 %v3955, %v4102
        %v4149 = vadd.f32 %v3956, %v4081
        %v4150 = vadd.f32 %v3957, %v4103
        %v4151 = vadd.f32 %v3958, %v4104
        %v4152 = vadd.f32 %v3959, %v4087
        %v4153 = vld [vmem:[%s366] sm:$0xf]
        %4154 = vset.pattern.permute.xlu0 20
        %4155 = vperm.xlu0 %4154, %v373
        %v4156 = vpop.permute.xlu0 %4155
        %4158 = vset.pattern.permute.xlu0 20
        %4159 = vperm.xlu0 %4158, %v374
        %v4160 = vpop.permute.xlu0 %4159
        %4162 = vset.pattern.permute.xlu0 20
        %4163 = vperm.xlu0 %4162, %v375
        %v4164 = vpop.permute.xlu0 %4163
        %4166 = vset.pattern.permute.xlu0 20
        %4167 = vperm.xlu0 %4166, %v376
        %v4168 = vpop.permute.xlu0 %4167
        %4170 = vset.pattern.permute.xlu0 20
        %4171 = vperm.xlu0 %4170, %v377
        %v4172 = vpop.permute.xlu0 %4171
        %4174 = vset.pattern.permute.xlu0 20
        %4175 = vperm.xlu0 %4174, %v378
        %v4176 = vpop.permute.xlu0 %4175
        %4178 = vset.pattern.permute.xlu0 20
        %4179 = vperm.xlu0 %4178, %v379
        %v4180 = vpop.permute.xlu0 %4179
        %4182 = vset.pattern.permute.xlu0 20
        %4183 = vperm.xlu0 %4182, %v380
        %v4184 = vpop.permute.xlu0 %4183
        %v4187 = vlaneseq
        %v4188 = vshrl.u32 %v4187, 7
        %v4189 = vsub.s32 0, %v4188
        %v4190 = vrot.slane %v4153, %v4189
        %v4191 = vlaneseq
        %v4192 = vshrl.u32 %v4191, 7
        %v4193 = vsub.s32 1, %v4192
        %v4194 = vrot.slane %v4153, %v4193
        %v4195 = vlaneseq
        %v4196 = vshrl.u32 %v4195, 7
        %v4197 = vsub.s32 2, %v4196
        %v4198 = vrot.slane %v4153, %v4197
        %v4199 = vlaneseq
        %v4200 = vshrl.u32 %v4199, 7
        %v4201 = vsub.s32 3, %v4200
        %v4202 = vrot.slane %v4153, %v4201
        %v4207 = vmul.f32 %v4156, %v4190
        %v4208 = vmul.f32 %v4156, %v4194
        %v4209 = vmul.f32 %v4156, %v4198
        %v4210 = vmul.f32 %v4156, %v4202
        %v4211 = vmul.f32 %v4160, %v4190
        %v4212 = vmul.f32 %v4160, %v4194
        %v4213 = vmul.f32 %v4160, %v4198
        %v4214 = vmul.f32 %v4160, %v4202
        %v4215 = vmul.f32 %v4164, %v4190
        %v4216 = vmul.f32 %v4164, %v4194
        %v4217 = vmul.f32 %v4164, %v4198
        %v4218 = vmul.f32 %v4164, %v4202
        %v4219 = vmul.f32 %v4168, %v4190
        %v4220 = vmul.f32 %v4168, %v4194
        %v4221 = vmul.f32 %v4168, %v4198
        %v4222 = vmul.f32 %v4168, %v4202
        %v4223 = vmul.f32 %v4172, %v4190
        %v4224 = vmul.f32 %v4172, %v4194
        %v4225 = vmul.f32 %v4172, %v4198
        %v4226 = vmul.f32 %v4172, %v4202
        %v4227 = vmul.f32 %v4176, %v4190
        %v4228 = vmul.f32 %v4176, %v4194
        %v4229 = vmul.f32 %v4176, %v4198
        %v4230 = vmul.f32 %v4176, %v4202
        %v4231 = vmul.f32 %v4180, %v4190
        %v4232 = vmul.f32 %v4180, %v4194
        %v4233 = vmul.f32 %v4180, %v4198
        %v4234 = vmul.f32 %v4180, %v4202
        %v4235 = vmul.f32 %v4184, %v4190
        %v4236 = vmul.f32 %v4184, %v4194
        %v4237 = vmul.f32 %v4184, %v4198
        %v4238 = vmul.f32 %v4184, %v4202
        %4271 = vrot.lane.b32.xlu0 %v4207, 48
        %v4272 = vpop.permute.xlu0 %4271
        %4273 = vrot.lane.b32.xlu0 %v4208, 48
        %v4274 = vpop.permute.xlu0 %4273
        %4275 = vrot.lane.b32.xlu0 %v4209, 48
        %v4276 = vpop.permute.xlu0 %4275
        %4277 = vrot.lane.b32.xlu0 %v4210, 48
        %v4278 = vpop.permute.xlu0 %4277
        %4279 = vrot.lane.b32.xlu0 %v4211, 48
        %v4280 = vpop.permute.xlu0 %4279
        %4281 = vrot.lane.b32.xlu0 %v4212, 48
        %v4282 = vpop.permute.xlu0 %4281
        %4283 = vrot.lane.b32.xlu0 %v4213, 48
        %v4284 = vpop.permute.xlu0 %4283
        %4285 = vrot.lane.b32.xlu0 %v4214, 48
        %v4286 = vpop.permute.xlu0 %4285
        %4287 = vrot.lane.b32.xlu0 %v4215, 48
        %v4288 = vpop.permute.xlu0 %4287
        %4289 = vrot.lane.b32.xlu0 %v4216, 48
        %v4290 = vpop.permute.xlu0 %4289
        %4291 = vrot.lane.b32.xlu0 %v4217, 48
        %v4292 = vpop.permute.xlu0 %4291
        %4293 = vrot.lane.b32.xlu0 %v4218, 48
        %v4294 = vpop.permute.xlu0 %4293
        %4295 = vrot.lane.b32.xlu0 %v4219, 48
        %v4296 = vpop.permute.xlu0 %4295
        %4297 = vrot.lane.b32.xlu0 %v4220, 48
        %v4298 = vpop.permute.xlu0 %4297
        %4299 = vrot.lane.b32.xlu0 %v4221, 48
        %v4300 = vpop.permute.xlu0 %4299
        %4301 = vrot.lane.b32.xlu0 %v4222, 48
        %v4302 = vpop.permute.xlu0 %4301
        %4303 = vrot.lane.b32.xlu0 %v4223, 48
        %v4304 = vpop.permute.xlu0 %4303
        %4305 = vrot.lane.b32.xlu0 %v4224, 48
        %v4306 = vpop.permute.xlu0 %4305
        %4307 = vrot.lane.b32.xlu0 %v4225, 48
        %v4308 = vpop.permute.xlu0 %4307
        %4309 = vrot.lane.b32.xlu0 %v4226, 48
        %v4310 = vpop.permute.xlu0 %4309
        %4311 = vrot.lane.b32.xlu0 %v4227, 48
        %v4312 = vpop.permute.xlu0 %4311
        %4313 = vrot.lane.b32.xlu0 %v4228, 48
        %v4314 = vpop.permute.xlu0 %4313
        %4315 = vrot.lane.b32.xlu0 %v4229, 48
        %v4316 = vpop.permute.xlu0 %4315
        %4317 = vrot.lane.b32.xlu0 %v4230, 48
        %v4318 = vpop.permute.xlu0 %4317
        %4319 = vrot.lane.b32.xlu0 %v4231, 48
        %v4320 = vpop.permute.xlu0 %4319
        %4321 = vrot.lane.b32.xlu0 %v4232, 48
        %v4322 = vpop.permute.xlu0 %4321
        %4323 = vrot.lane.b32.xlu0 %v4233, 48
        %v4324 = vpop.permute.xlu0 %4323
        %4325 = vrot.lane.b32.xlu0 %v4234, 48
        %v4326 = vpop.permute.xlu0 %4325
        %4327 = vrot.lane.b32.xlu0 %v4235, 48
        %v4328 = vpop.permute.xlu0 %4327
        %4329 = vrot.lane.b32.xlu0 %v4236, 48
        %v4330 = vpop.permute.xlu0 %4329
        %4331 = vrot.lane.b32.xlu0 %v4237, 48
        %v4332 = vpop.permute.xlu0 %4331
        %4333 = vrot.lane.b32.xlu0 %v4238, 48
        %v4334 = vpop.permute.xlu0 %4333
        %vm4335 = vcmask 392192
        %v4336 = vsel %vm4335, %v4272, %v4274
        %v4337 = vsel %vm4335, %v4274, %v4276
        %v4338 = vsel %vm4335, %v4276, %v4278
        %v4339 = vsel %vm4335, %v4280, %v4282
        %v4340 = vsel %vm4335, %v4282, %v4284
        %v4341 = vsel %vm4335, %v4284, %v4286
        %v4342 = vsel %vm4335, %v4288, %v4290
        %v4343 = vsel %vm4335, %v4290, %v4292
        %v4344 = vsel %vm4335, %v4292, %v4294
        %v4345 = vsel %vm4335, %v4296, %v4298
        %v4346 = vsel %vm4335, %v4298, %v4300
        %v4347 = vsel %vm4335, %v4300, %v4302
        %v4348 = vsel %vm4335, %v4304, %v4306
        %v4349 = vsel %vm4335, %v4306, %v4308
        %v4350 = vsel %vm4335, %v4308, %v4310
        %v4351 = vsel %vm4335, %v4312, %v4314
        %v4352 = vsel %vm4335, %v4314, %v4316
        %v4353 = vsel %vm4335, %v4316, %v4318
        %v4354 = vsel %vm4335, %v4320, %v4322
        %v4355 = vsel %vm4335, %v4322, %v4324
        %v4356 = vsel %vm4335, %v4324, %v4326
        %v4357 = vsel %vm4335, %v4328, %v4330
        %v4358 = vsel %vm4335, %v4330, %v4332
        %v4359 = vsel %vm4335, %v4332, %v4334
        %v4384 = vadd.f32 %v4129, %v4336
        %v4385 = vadd.f32 %v4130, %v4337
        %v4386 = vadd.f32 %v4131, %v4338
        %v4387 = vadd.f32 %v4132, %v4339
        %v4388 = vadd.f32 %v4133, %v4340
        %v4389 = vadd.f32 %v4134, %v4341
        %v4390 = vadd.f32 %v4135, %v4342
        %v4391 = vadd.f32 %v4136, %v4343
        %v4392 = vadd.f32 %v4137, %v4344
        %v4393 = vadd.f32 %v4138, %v4345
        %v4394 = vadd.f32 %v4139, %v4346
        %v4395 = vadd.f32 %v4140, %v4347
        %v4396 = vadd.f32 %v4141, %v4348
        %v4397 = vadd.f32 %v4142, %v4349
        %v4398 = vadd.f32 %v4143, %v4350
        %v4399 = vadd.f32 %v4144, %v4351
        %v4400 = vadd.f32 %v4145, %v4352
        %v4401 = vadd.f32 %v4146, %v4353
        %v4402 = vadd.f32 %v4147, %v4354
        %v4403 = vadd.f32 %v4148, %v4355
        %v4404 = vadd.f32 %v4149, %v4356
        %v4405 = vadd.f32 %v4150, %v4357
        %v4406 = vadd.f32 %v4151, %v4358
        %v4407 = vadd.f32 %v4152, %v4359
        %4408 = vset.pattern.permute.xlu0 21
        %4409 = vperm.xlu0 %4408, %v373
        %v4410 = vpop.permute.xlu0 %4409
        %4412 = vset.pattern.permute.xlu0 21
        %4413 = vperm.xlu0 %4412, %v374
        %v4414 = vpop.permute.xlu0 %4413
        %4416 = vset.pattern.permute.xlu0 21
        %4417 = vperm.xlu0 %4416, %v375
        %v4418 = vpop.permute.xlu0 %4417
        %4420 = vset.pattern.permute.xlu0 21
        %4421 = vperm.xlu0 %4420, %v376
        %v4422 = vpop.permute.xlu0 %4421
        %4424 = vset.pattern.permute.xlu0 21
        %4425 = vperm.xlu0 %4424, %v377
        %v4426 = vpop.permute.xlu0 %4425
        %4428 = vset.pattern.permute.xlu0 21
        %4429 = vperm.xlu0 %4428, %v378
        %v4430 = vpop.permute.xlu0 %4429
        %4432 = vset.pattern.permute.xlu0 21
        %4433 = vperm.xlu0 %4432, %v379
        %v4434 = vpop.permute.xlu0 %4433
        %4436 = vset.pattern.permute.xlu0 21
        %4437 = vperm.xlu0 %4436, %v380
        %v4438 = vpop.permute.xlu0 %4437
        %v4440 = vmul.f32 %v4410, %v4190
        %v4441 = vmul.f32 %v4410, %v4194
        %v4442 = vmul.f32 %v4410, %v4198
        %v4443 = vmul.f32 %v4410, %v4202
        %v4444 = vmul.f32 %v4414, %v4190
        %v4445 = vmul.f32 %v4414, %v4194
        %v4446 = vmul.f32 %v4414, %v4198
        %v4447 = vmul.f32 %v4414, %v4202
        %v4448 = vmul.f32 %v4418, %v4190
        %v4449 = vmul.f32 %v4418, %v4194
        %v4450 = vmul.f32 %v4418, %v4198
        %v4451 = vmul.f32 %v4418, %v4202
        %v4452 = vmul.f32 %v4422, %v4190
        %v4453 = vmul.f32 %v4422, %v4194
        %v4454 = vmul.f32 %v4422, %v4198
        %v4455 = vmul.f32 %v4422, %v4202
        %v4456 = vmul.f32 %v4426, %v4190
        %v4457 = vmul.f32 %v4426, %v4194
        %v4458 = vmul.f32 %v4426, %v4198
        %v4459 = vmul.f32 %v4426, %v4202
        %v4460 = vmul.f32 %v4430, %v4190
        %v4461 = vmul.f32 %v4430, %v4194
        %v4462 = vmul.f32 %v4430, %v4198
        %v4463 = vmul.f32 %v4430, %v4202
        %v4464 = vmul.f32 %v4434, %v4190
        %v4465 = vmul.f32 %v4434, %v4194
        %v4466 = vmul.f32 %v4434, %v4198
        %v4467 = vmul.f32 %v4434, %v4202
        %v4468 = vmul.f32 %v4438, %v4190
        %v4469 = vmul.f32 %v4438, %v4194
        %v4470 = vmul.f32 %v4438, %v4198
        %v4471 = vmul.f32 %v4438, %v4202
        %4504 = vrot.lane.b32.xlu0 %v4440, 47
        %v4505 = vpop.permute.xlu0 %4504
        %4506 = vrot.lane.b32.xlu0 %v4441, 47
        %v4507 = vpop.permute.xlu0 %4506
        %4508 = vrot.lane.b32.xlu0 %v4442, 47
        %v4509 = vpop.permute.xlu0 %4508
        %4510 = vrot.lane.b32.xlu0 %v4443, 47
        %v4511 = vpop.permute.xlu0 %4510
        %4512 = vrot.lane.b32.xlu0 %v4444, 47
        %v4513 = vpop.permute.xlu0 %4512
        %4514 = vrot.lane.b32.xlu0 %v4445, 47
        %v4515 = vpop.permute.xlu0 %4514
        %4516 = vrot.lane.b32.xlu0 %v4446, 47
        %v4517 = vpop.permute.xlu0 %4516
        %4518 = vrot.lane.b32.xlu0 %v4447, 47
        %v4519 = vpop.permute.xlu0 %4518
        %4520 = vrot.lane.b32.xlu0 %v4448, 47
        %v4521 = vpop.permute.xlu0 %4520
        %4522 = vrot.lane.b32.xlu0 %v4449, 47
        %v4523 = vpop.permute.xlu0 %4522
        %4524 = vrot.lane.b32.xlu0 %v4450, 47
        %v4525 = vpop.permute.xlu0 %4524
        %4526 = vrot.lane.b32.xlu0 %v4451, 47
        %v4527 = vpop.permute.xlu0 %4526
        %4528 = vrot.lane.b32.xlu0 %v4452, 47
        %v4529 = vpop.permute.xlu0 %4528
        %4530 = vrot.lane.b32.xlu0 %v4453, 47
        %v4531 = vpop.permute.xlu0 %4530
        %4532 = vrot.lane.b32.xlu0 %v4454, 47
        %v4533 = vpop.permute.xlu0 %4532
        %4534 = vrot.lane.b32.xlu0 %v4455, 47
        %v4535 = vpop.permute.xlu0 %4534
        %4536 = vrot.lane.b32.xlu0 %v4456, 47
        %v4537 = vpop.permute.xlu0 %4536
        %4538 = vrot.lane.b32.xlu0 %v4457, 47
        %v4539 = vpop.permute.xlu0 %4538
        %4540 = vrot.lane.b32.xlu0 %v4458, 47
        %v4541 = vpop.permute.xlu0 %4540
        %4542 = vrot.lane.b32.xlu0 %v4459, 47
        %v4543 = vpop.permute.xlu0 %4542
        %4544 = vrot.lane.b32.xlu0 %v4460, 47
        %v4545 = vpop.permute.xlu0 %4544
        %4546 = vrot.lane.b32.xlu0 %v4461, 47
        %v4547 = vpop.permute.xlu0 %4546
        %4548 = vrot.lane.b32.xlu0 %v4462, 47
        %v4549 = vpop.permute.xlu0 %4548
        %4550 = vrot.lane.b32.xlu0 %v4463, 47
        %v4551 = vpop.permute.xlu0 %4550
        %4552 = vrot.lane.b32.xlu0 %v4464, 47
        %v4553 = vpop.permute.xlu0 %4552
        %4554 = vrot.lane.b32.xlu0 %v4465, 47
        %v4555 = vpop.permute.xlu0 %4554
        %4556 = vrot.lane.b32.xlu0 %v4466, 47
        %v4557 = vpop.permute.xlu0 %4556
        %4558 = vrot.lane.b32.xlu0 %v4467, 47
        %v4559 = vpop.permute.xlu0 %4558
        %4560 = vrot.lane.b32.xlu0 %v4468, 47
        %v4561 = vpop.permute.xlu0 %4560
        %4562 = vrot.lane.b32.xlu0 %v4469, 47
        %v4563 = vpop.permute.xlu0 %4562
        %4564 = vrot.lane.b32.xlu0 %v4470, 47
        %v4565 = vpop.permute.xlu0 %4564
        %4566 = vrot.lane.b32.xlu0 %v4471, 47
        %v4567 = vpop.permute.xlu0 %4566
        %vm4568 = vcmask 384000
        %v4569 = vsel %vm4568, %v4505, %v4507
        %v4570 = vsel %vm4568, %v4507, %v4509
        %v4571 = vsel %vm4568, %v4509, %v4511
        %v4572 = vsel %vm4568, %v4513, %v4515
        %v4573 = vsel %vm4568, %v4515, %v4517
        %v4574 = vsel %vm4568, %v4517, %v4519
        %v4575 = vsel %vm4568, %v4521, %v4523
        %v4576 = vsel %vm4568, %v4523, %v4525
        %v4577 = vsel %vm4568, %v4525, %v4527
        %v4578 = vsel %vm4568, %v4529, %v4531
        %v4579 = vsel %vm4568, %v4531, %v4533
        %v4580 = vsel %vm4568, %v4533, %v4535
        %v4581 = vsel %vm4568, %v4537, %v4539
        %v4582 = vsel %vm4568, %v4539, %v4541
        %v4583 = vsel %vm4568, %v4541, %v4543
        %v4584 = vsel %vm4568, %v4545, %v4547
        %v4585 = vsel %vm4568, %v4547, %v4549
        %v4586 = vsel %vm4568, %v4549, %v4551
        %v4587 = vsel %vm4568, %v4553, %v4555
        %v4588 = vsel %vm4568, %v4555, %v4557
        %v4589 = vsel %vm4568, %v4557, %v4559
        %v4590 = vsel %vm4568, %v4561, %v4563
        %v4591 = vsel %vm4568, %v4563, %v4565
        %v4592 = vsel %vm4568, %v4565, %v4567
        %v4617 = vadd.f32 %v4384, %v4569
        %v4618 = vadd.f32 %v4385, %v4570
        %v4619 = vadd.f32 %v4386, %v4571
        %v4620 = vadd.f32 %v4387, %v4572
        %v4621 = vadd.f32 %v4388, %v4573
        %v4622 = vadd.f32 %v4389, %v4574
        %v4623 = vadd.f32 %v4390, %v4575
        %v4624 = vadd.f32 %v4391, %v4576
        %v4625 = vadd.f32 %v4392, %v4577
        %v4626 = vadd.f32 %v4393, %v4578
        %v4627 = vadd.f32 %v4394, %v4579
        %v4628 = vadd.f32 %v4395, %v4580
        %v4629 = vadd.f32 %v4396, %v4581
        %v4630 = vadd.f32 %v4397, %v4582
        %v4631 = vadd.f32 %v4398, %v4583
        %v4632 = vadd.f32 %v4399, %v4584
        %v4633 = vadd.f32 %v4400, %v4585
        %v4634 = vadd.f32 %v4401, %v4586
        %v4635 = vadd.f32 %v4402, %v4587
        %v4636 = vadd.f32 %v4403, %v4588
        %v4637 = vadd.f32 %v4404, %v4589
        %v4638 = vadd.f32 %v4405, %v4590
        %v4639 = vadd.f32 %v4406, %v4591
        %v4640 = vadd.f32 %v4407, %v4592
        %4641 = vset.pattern.permute.xlu0 22
        %4642 = vperm.xlu0 %4641, %v373
        %v4643 = vpop.permute.xlu0 %4642
        %4645 = vset.pattern.permute.xlu0 22
        %4646 = vperm.xlu0 %4645, %v374
        %v4647 = vpop.permute.xlu0 %4646
        %4649 = vset.pattern.permute.xlu0 22
        %4650 = vperm.xlu0 %4649, %v375
        %v4651 = vpop.permute.xlu0 %4650
        %4653 = vset.pattern.permute.xlu0 22
        %4654 = vperm.xlu0 %4653, %v376
        %v4655 = vpop.permute.xlu0 %4654
        %4657 = vset.pattern.permute.xlu0 22
        %4658 = vperm.xlu0 %4657, %v377
        %v4659 = vpop.permute.xlu0 %4658
        %4661 = vset.pattern.permute.xlu0 22
        %4662 = vperm.xlu0 %4661, %v378
        %v4663 = vpop.permute.xlu0 %4662
        %4665 = vset.pattern.permute.xlu0 22
        %4666 = vperm.xlu0 %4665, %v379
        %v4667 = vpop.permute.xlu0 %4666
        %4669 = vset.pattern.permute.xlu0 22
        %4670 = vperm.xlu0 %4669, %v380
        %v4671 = vpop.permute.xlu0 %4670
        %v4673 = vmul.f32 %v4643, %v4190
        %v4674 = vmul.f32 %v4643, %v4194
        %v4675 = vmul.f32 %v4643, %v4198
        %v4676 = vmul.f32 %v4643, %v4202
        %v4677 = vmul.f32 %v4647, %v4190
        %v4678 = vmul.f32 %v4647, %v4194
        %v4679 = vmul.f32 %v4647, %v4198
        %v4680 = vmul.f32 %v4647, %v4202
        %v4681 = vmul.f32 %v4651, %v4190
        %v4682 = vmul.f32 %v4651, %v4194
        %v4683 = vmul.f32 %v4651, %v4198
        %v4684 = vmul.f32 %v4651, %v4202
        %v4685 = vmul.f32 %v4655, %v4190
        %v4686 = vmul.f32 %v4655, %v4194
        %v4687 = vmul.f32 %v4655, %v4198
        %v4688 = vmul.f32 %v4655, %v4202
        %v4689 = vmul.f32 %v4659, %v4190
        %v4690 = vmul.f32 %v4659, %v4194
        %v4691 = vmul.f32 %v4659, %v4198
        %v4692 = vmul.f32 %v4659, %v4202
        %v4693 = vmul.f32 %v4663, %v4190
        %v4694 = vmul.f32 %v4663, %v4194
        %v4695 = vmul.f32 %v4663, %v4198
        %v4696 = vmul.f32 %v4663, %v4202
        %v4697 = vmul.f32 %v4667, %v4190
        %v4698 = vmul.f32 %v4667, %v4194
        %v4699 = vmul.f32 %v4667, %v4198
        %v4700 = vmul.f32 %v4667, %v4202
        %v4701 = vmul.f32 %v4671, %v4190
        %v4702 = vmul.f32 %v4671, %v4194
        %v4703 = vmul.f32 %v4671, %v4198
        %v4704 = vmul.f32 %v4671, %v4202
        %4737 = vrot.lane.b32.xlu0 %v4673, 46
        %v4738 = vpop.permute.xlu0 %4737
        %4739 = vrot.lane.b32.xlu0 %v4674, 46
        %v4740 = vpop.permute.xlu0 %4739
        %4741 = vrot.lane.b32.xlu0 %v4675, 46
        %v4742 = vpop.permute.xlu0 %4741
        %4743 = vrot.lane.b32.xlu0 %v4676, 46
        %v4744 = vpop.permute.xlu0 %4743
        %4745 = vrot.lane.b32.xlu0 %v4677, 46
        %v4746 = vpop.permute.xlu0 %4745
        %4747 = vrot.lane.b32.xlu0 %v4678, 46
        %v4748 = vpop.permute.xlu0 %4747
        %4749 = vrot.lane.b32.xlu0 %v4679, 46
        %v4750 = vpop.permute.xlu0 %4749
        %4751 = vrot.lane.b32.xlu0 %v4680, 46
        %v4752 = vpop.permute.xlu0 %4751
        %4753 = vrot.lane.b32.xlu0 %v4681, 46
        %v4754 = vpop.permute.xlu0 %4753
        %4755 = vrot.lane.b32.xlu0 %v4682, 46
        %v4756 = vpop.permute.xlu0 %4755
        %4757 = vrot.lane.b32.xlu0 %v4683, 46
        %v4758 = vpop.permute.xlu0 %4757
        %4759 = vrot.lane.b32.xlu0 %v4684, 46
        %v4760 = vpop.permute.xlu0 %4759
        %4761 = vrot.lane.b32.xlu0 %v4685, 46
        %v4762 = vpop.permute.xlu0 %4761
        %4763 = vrot.lane.b32.xlu0 %v4686, 46
        %v4764 = vpop.permute.xlu0 %4763
        %4765 = vrot.lane.b32.xlu0 %v4687, 46
        %v4766 = vpop.permute.xlu0 %4765
        %4767 = vrot.lane.b32.xlu0 %v4688, 46
        %v4768 = vpop.permute.xlu0 %4767
        %4769 = vrot.lane.b32.xlu0 %v4689, 46
        %v4770 = vpop.permute.xlu0 %4769
        %4771 = vrot.lane.b32.xlu0 %v4690, 46
        %v4772 = vpop.permute.xlu0 %4771
        %4773 = vrot.lane.b32.xlu0 %v4691, 46
        %v4774 = vpop.permute.xlu0 %4773
        %4775 = vrot.lane.b32.xlu0 %v4692, 46
        %v4776 = vpop.permute.xlu0 %4775
        %4777 = vrot.lane.b32.xlu0 %v4693, 46
        %v4778 = vpop.permute.xlu0 %4777
        %4779 = vrot.lane.b32.xlu0 %v4694, 46
        %v4780 = vpop.permute.xlu0 %4779
        %4781 = vrot.lane.b32.xlu0 %v4695, 46
        %v4782 = vpop.permute.xlu0 %4781
        %4783 = vrot.lane.b32.xlu0 %v4696, 46
        %v4784 = vpop.permute.xlu0 %4783
        %4785 = vrot.lane.b32.xlu0 %v4697, 46
        %v4786 = vpop.permute.xlu0 %4785
        %4787 = vrot.lane.b32.xlu0 %v4698, 46
        %v4788 = vpop.permute.xlu0 %4787
        %4789 = vrot.lane.b32.xlu0 %v4699, 46
        %v4790 = vpop.permute.xlu0 %4789
        %4791 = vrot.lane.b32.xlu0 %v4700, 46
        %v4792 = vpop.permute.xlu0 %4791
        %4793 = vrot.lane.b32.xlu0 %v4701, 46
        %v4794 = vpop.permute.xlu0 %4793
        %4795 = vrot.lane.b32.xlu0 %v4702, 46
        %v4796 = vpop.permute.xlu0 %4795
        %4797 = vrot.lane.b32.xlu0 %v4703, 46
        %v4798 = vpop.permute.xlu0 %4797
        %4799 = vrot.lane.b32.xlu0 %v4704, 46
        %v4800 = vpop.permute.xlu0 %4799
        %vm4801 = vcmask 375808
        %v4802 = vsel %vm4801, %v4738, %v4740
        %v4803 = vsel %vm4801, %v4740, %v4742
        %v4804 = vsel %vm4801, %v4742, %v4744
        %v4805 = vsel %vm4801, %v4746, %v4748
        %v4806 = vsel %vm4801, %v4748, %v4750
        %v4807 = vsel %vm4801, %v4750, %v4752
        %v4808 = vsel %vm4801, %v4754, %v4756
        %v4809 = vsel %vm4801, %v4756, %v4758
        %v4810 = vsel %vm4801, %v4758, %v4760
        %v4811 = vsel %vm4801, %v4762, %v4764
        %v4812 = vsel %vm4801, %v4764, %v4766
        %v4813 = vsel %vm4801, %v4766, %v4768
        %v4814 = vsel %vm4801, %v4770, %v4772
        %v4815 = vsel %vm4801, %v4772, %v4774
        %v4816 = vsel %vm4801, %v4774, %v4776
        %v4817 = vsel %vm4801, %v4778, %v4780
        %v4818 = vsel %vm4801, %v4780, %v4782
        %v4819 = vsel %vm4801, %v4782, %v4784
        %v4820 = vsel %vm4801, %v4786, %v4788
        %v4821 = vsel %vm4801, %v4788, %v4790
        %v4822 = vsel %vm4801, %v4790, %v4792
        %v4823 = vsel %vm4801, %v4794, %v4796
        %v4824 = vsel %vm4801, %v4796, %v4798
        %v4825 = vsel %vm4801, %v4798, %v4800
        %v4850 = vadd.f32 %v4617, %v4802
        %v4851 = vadd.f32 %v4618, %v4803
        %v4852 = vadd.f32 %v4619, %v4804
        %v4853 = vadd.f32 %v4620, %v4805
        %v4854 = vadd.f32 %v4621, %v4806
        %v4855 = vadd.f32 %v4622, %v4807
        %v4856 = vadd.f32 %v4623, %v4808
        %v4857 = vadd.f32 %v4624, %v4809
        %v4858 = vadd.f32 %v4625, %v4810
        %v4859 = vadd.f32 %v4626, %v4811
        %v4860 = vadd.f32 %v4627, %v4812
        %v4861 = vadd.f32 %v4628, %v4813
        %v4862 = vadd.f32 %v4629, %v4814
        %v4863 = vadd.f32 %v4630, %v4815
        %v4864 = vadd.f32 %v4631, %v4816
        %v4865 = vadd.f32 %v4632, %v4817
        %v4866 = vadd.f32 %v4633, %v4818
        %v4867 = vadd.f32 %v4634, %v4819
        %v4868 = vadd.f32 %v4635, %v4820
        %v4869 = vadd.f32 %v4636, %v4821
        %v4870 = vadd.f32 %v4637, %v4822
        %v4871 = vadd.f32 %v4638, %v4823
        %v4872 = vadd.f32 %v4639, %v4824
        %v4873 = vadd.f32 %v4640, %v4825
        %4874 = vset.pattern.permute.xlu0 23
        %4875 = vperm.xlu0 %4874, %v373
        %v4876 = vpop.permute.xlu0 %4875
        %4878 = vset.pattern.permute.xlu0 23
        %4879 = vperm.xlu0 %4878, %v374
        %v4880 = vpop.permute.xlu0 %4879
        %4882 = vset.pattern.permute.xlu0 23
        %4883 = vperm.xlu0 %4882, %v375
        %v4884 = vpop.permute.xlu0 %4883
        %4886 = vset.pattern.permute.xlu0 23
        %4887 = vperm.xlu0 %4886, %v376
        %v4888 = vpop.permute.xlu0 %4887
        %4890 = vset.pattern.permute.xlu0 23
        %4891 = vperm.xlu0 %4890, %v377
        %v4892 = vpop.permute.xlu0 %4891
        %4894 = vset.pattern.permute.xlu0 23
        %4895 = vperm.xlu0 %4894, %v378
        %v4896 = vpop.permute.xlu0 %4895
        %4898 = vset.pattern.permute.xlu0 23
        %4899 = vperm.xlu0 %4898, %v379
        %v4900 = vpop.permute.xlu0 %4899
        %4902 = vset.pattern.permute.xlu0 23
        %4903 = vperm.xlu0 %4902, %v380
        %v4904 = vpop.permute.xlu0 %4903
        %v4906 = vmul.f32 %v4876, %v4190
        %v4907 = vmul.f32 %v4876, %v4194
        %v4908 = vmul.f32 %v4876, %v4198
        %v4909 = vmul.f32 %v4876, %v4202
        %v4910 = vmul.f32 %v4880, %v4190
        %v4911 = vmul.f32 %v4880, %v4194
        %v4912 = vmul.f32 %v4880, %v4198
        %v4913 = vmul.f32 %v4880, %v4202
        %v4914 = vmul.f32 %v4884, %v4190
        %v4915 = vmul.f32 %v4884, %v4194
        %v4916 = vmul.f32 %v4884, %v4198
        %v4917 = vmul.f32 %v4884, %v4202
        %v4918 = vmul.f32 %v4888, %v4190
        %v4919 = vmul.f32 %v4888, %v4194
        %v4920 = vmul.f32 %v4888, %v4198
        %v4921 = vmul.f32 %v4888, %v4202
        %v4922 = vmul.f32 %v4892, %v4190
        %v4923 = vmul.f32 %v4892, %v4194
        %v4924 = vmul.f32 %v4892, %v4198
        %v4925 = vmul.f32 %v4892, %v4202
        %v4926 = vmul.f32 %v4896, %v4190
        %v4927 = vmul.f32 %v4896, %v4194
        %v4928 = vmul.f32 %v4896, %v4198
        %v4929 = vmul.f32 %v4896, %v4202
        %v4930 = vmul.f32 %v4900, %v4190
        %v4931 = vmul.f32 %v4900, %v4194
        %v4932 = vmul.f32 %v4900, %v4198
        %v4933 = vmul.f32 %v4900, %v4202
        %v4934 = vmul.f32 %v4904, %v4190
        %v4935 = vmul.f32 %v4904, %v4194
        %v4936 = vmul.f32 %v4904, %v4198
        %v4937 = vmul.f32 %v4904, %v4202
        %4970 = vrot.lane.b32.xlu0 %v4906, 45
        %v4971 = vpop.permute.xlu0 %4970
        %4972 = vrot.lane.b32.xlu0 %v4907, 45
        %v4973 = vpop.permute.xlu0 %4972
        %4974 = vrot.lane.b32.xlu0 %v4908, 45
        %v4975 = vpop.permute.xlu0 %4974
        %4976 = vrot.lane.b32.xlu0 %v4909, 45
        %v4977 = vpop.permute.xlu0 %4976
        %4978 = vrot.lane.b32.xlu0 %v4910, 45
        %v4979 = vpop.permute.xlu0 %4978
        %4980 = vrot.lane.b32.xlu0 %v4911, 45
        %v4981 = vpop.permute.xlu0 %4980
        %4982 = vrot.lane.b32.xlu0 %v4912, 45
        %v4983 = vpop.permute.xlu0 %4982
        %4984 = vrot.lane.b32.xlu0 %v4913, 45
        %v4985 = vpop.permute.xlu0 %4984
        %4986 = vrot.lane.b32.xlu0 %v4914, 45
        %v4987 = vpop.permute.xlu0 %4986
        %4988 = vrot.lane.b32.xlu0 %v4915, 45
        %v4989 = vpop.permute.xlu0 %4988
        %4990 = vrot.lane.b32.xlu0 %v4916, 45
        %v4991 = vpop.permute.xlu0 %4990
        %4992 = vrot.lane.b32.xlu0 %v4917, 45
        %v4993 = vpop.permute.xlu0 %4992
        %4994 = vrot.lane.b32.xlu0 %v4918, 45
        %v4995 = vpop.permute.xlu0 %4994
        %4996 = vrot.lane.b32.xlu0 %v4919, 45
        %v4997 = vpop.permute.xlu0 %4996
        %4998 = vrot.lane.b32.xlu0 %v4920, 45
        %v4999 = vpop.permute.xlu0 %4998
        %5000 = vrot.lane.b32.xlu0 %v4921, 45
        %v5001 = vpop.permute.xlu0 %5000
        %5002 = vrot.lane.b32.xlu0 %v4922, 45
        %v5003 = vpop.permute.xlu0 %5002
        %5004 = vrot.lane.b32.xlu0 %v4923, 45
        %v5005 = vpop.permute.xlu0 %5004
        %5006 = vrot.lane.b32.xlu0 %v4924, 45
        %v5007 = vpop.permute.xlu0 %5006
        %5008 = vrot.lane.b32.xlu0 %v4925, 45
        %v5009 = vpop.permute.xlu0 %5008
        %5010 = vrot.lane.b32.xlu0 %v4926, 45
        %v5011 = vpop.permute.xlu0 %5010
        %5012 = vrot.lane.b32.xlu0 %v4927, 45
        %v5013 = vpop.permute.xlu0 %5012
        %5014 = vrot.lane.b32.xlu0 %v4928, 45
        %v5015 = vpop.permute.xlu0 %5014
        %5016 = vrot.lane.b32.xlu0 %v4929, 45
        %v5017 = vpop.permute.xlu0 %5016
        %5018 = vrot.lane.b32.xlu0 %v4930, 45
        %v5019 = vpop.permute.xlu0 %5018
        %5020 = vrot.lane.b32.xlu0 %v4931, 45
        %v5021 = vpop.permute.xlu0 %5020
        %5022 = vrot.lane.b32.xlu0 %v4932, 45
        %v5023 = vpop.permute.xlu0 %5022
        %5024 = vrot.lane.b32.xlu0 %v4933, 45
        %v5025 = vpop.permute.xlu0 %5024
        %5026 = vrot.lane.b32.xlu0 %v4934, 45
        %v5027 = vpop.permute.xlu0 %5026
        %5028 = vrot.lane.b32.xlu0 %v4935, 45
        %v5029 = vpop.permute.xlu0 %5028
        %5030 = vrot.lane.b32.xlu0 %v4936, 45
        %v5031 = vpop.permute.xlu0 %5030
        %5032 = vrot.lane.b32.xlu0 %v4937, 45
        %v5033 = vpop.permute.xlu0 %5032
        %vm5034 = vcmask 367616
        %v5035 = vsel %vm5034, %v4971, %v4973
        %v5036 = vsel %vm5034, %v4973, %v4975
        %v5037 = vsel %vm5034, %v4975, %v4977
        %v5038 = vsel %vm5034, %v4979, %v4981
        %v5039 = vsel %vm5034, %v4981, %v4983
        %v5040 = vsel %vm5034, %v4983, %v4985
        %v5041 = vsel %vm5034, %v4987, %v4989
        %v5042 = vsel %vm5034, %v4989, %v4991
        %v5043 = vsel %vm5034, %v4991, %v4993
        %v5044 = vsel %vm5034, %v4995, %v4997
        %v5045 = vsel %vm5034, %v4997, %v4999
        %v5046 = vsel %vm5034, %v4999, %v5001
        %v5047 = vsel %vm5034, %v5003, %v5005
        %v5048 = vsel %vm5034, %v5005, %v5007
        %v5049 = vsel %vm5034, %v5007, %v5009
        %v5050 = vsel %vm5034, %v5011, %v5013
        %v5051 = vsel %vm5034, %v5013, %v5015
        %v5052 = vsel %vm5034, %v5015, %v5017
        %v5053 = vsel %vm5034, %v5019, %v5021
        %v5054 = vsel %vm5034, %v5021, %v5023
        %v5055 = vsel %vm5034, %v5023, %v5025
        %v5056 = vsel %vm5034, %v5027, %v5029
        %v5057 = vsel %vm5034, %v5029, %v5031
        %v5058 = vsel %vm5034, %v5031, %v5033
        %v5083 = vadd.f32 %v4850, %v5035
        %v5084 = vadd.f32 %v4851, %v5036
        %v5085 = vadd.f32 %v4852, %v5037
        %v5086 = vadd.f32 %v4853, %v5038
        %v5087 = vadd.f32 %v4854, %v5039
        %v5088 = vadd.f32 %v4855, %v5040
        %v5089 = vadd.f32 %v4856, %v5041
        %v5090 = vadd.f32 %v4857, %v5042
        %v5091 = vadd.f32 %v4858, %v5043
        %v5092 = vadd.f32 %v4859, %v5044
        %v5093 = vadd.f32 %v4860, %v5045
        %v5094 = vadd.f32 %v4861, %v5046
        %v5095 = vadd.f32 %v4862, %v5047
        %v5096 = vadd.f32 %v4863, %v5048
        %v5097 = vadd.f32 %v4864, %v5049
        %v5098 = vadd.f32 %v4865, %v5050
        %v5099 = vadd.f32 %v4866, %v5051
        %v5100 = vadd.f32 %v4867, %v5052
        %v5101 = vadd.f32 %v4868, %v5053
        %v5102 = vadd.f32 %v4869, %v5054
        %v5103 = vadd.f32 %v4870, %v5055
        %v5104 = vadd.f32 %v4871, %v5056
        %v5105 = vadd.f32 %v4872, %v5057
        %v5106 = vadd.f32 %v4873, %v5058
        %5107 = vset.pattern.permute.xlu0 24
        %5108 = vperm.xlu0 %5107, %v373
        %v5109 = vpop.permute.xlu0 %5108
        %5111 = vset.pattern.permute.xlu0 24
        %5112 = vperm.xlu0 %5111, %v374
        %v5113 = vpop.permute.xlu0 %5112
        %5115 = vset.pattern.permute.xlu0 24
        %5116 = vperm.xlu0 %5115, %v375
        %v5117 = vpop.permute.xlu0 %5116
        %5119 = vset.pattern.permute.xlu0 24
        %5120 = vperm.xlu0 %5119, %v376
        %v5121 = vpop.permute.xlu0 %5120
        %5123 = vset.pattern.permute.xlu0 24
        %5124 = vperm.xlu0 %5123, %v377
        %v5125 = vpop.permute.xlu0 %5124
        %5127 = vset.pattern.permute.xlu0 24
        %5128 = vperm.xlu0 %5127, %v378
        %v5129 = vpop.permute.xlu0 %5128
        %5131 = vset.pattern.permute.xlu0 24
        %5132 = vperm.xlu0 %5131, %v379
        %v5133 = vpop.permute.xlu0 %5132
        %5135 = vset.pattern.permute.xlu0 24
        %5136 = vperm.xlu0 %5135, %v380
        %v5137 = vpop.permute.xlu0 %5136
        %v5139 = vmul.f32 %v5109, %v4190
        %v5140 = vmul.f32 %v5109, %v4194
        %v5141 = vmul.f32 %v5109, %v4198
        %v5142 = vmul.f32 %v5109, %v4202
        %v5143 = vmul.f32 %v5113, %v4190
        %v5144 = vmul.f32 %v5113, %v4194
        %v5145 = vmul.f32 %v5113, %v4198
        %v5146 = vmul.f32 %v5113, %v4202
        %v5147 = vmul.f32 %v5117, %v4190
        %v5148 = vmul.f32 %v5117, %v4194
        %v5149 = vmul.f32 %v5117, %v4198
        %v5150 = vmul.f32 %v5117, %v4202
        %v5151 = vmul.f32 %v5121, %v4190
        %v5152 = vmul.f32 %v5121, %v4194
        %v5153 = vmul.f32 %v5121, %v4198
        %v5154 = vmul.f32 %v5121, %v4202
        %v5155 = vmul.f32 %v5125, %v4190
        %v5156 = vmul.f32 %v5125, %v4194
        %v5157 = vmul.f32 %v5125, %v4198
        %v5158 = vmul.f32 %v5125, %v4202
        %v5159 = vmul.f32 %v5129, %v4190
        %v5160 = vmul.f32 %v5129, %v4194
        %v5161 = vmul.f32 %v5129, %v4198
        %v5162 = vmul.f32 %v5129, %v4202
        %v5163 = vmul.f32 %v5133, %v4190
        %v5164 = vmul.f32 %v5133, %v4194
        %v5165 = vmul.f32 %v5133, %v4198
        %v5166 = vmul.f32 %v5133, %v4202
        %v5167 = vmul.f32 %v5137, %v4190
        %v5168 = vmul.f32 %v5137, %v4194
        %v5169 = vmul.f32 %v5137, %v4198
        %v5170 = vmul.f32 %v5137, %v4202
        %5203 = vrot.lane.b32.xlu0 %v5139, 44
        %v5204 = vpop.permute.xlu0 %5203
        %5205 = vrot.lane.b32.xlu0 %v5140, 44
        %v5206 = vpop.permute.xlu0 %5205
        %5207 = vrot.lane.b32.xlu0 %v5141, 44
        %v5208 = vpop.permute.xlu0 %5207
        %5209 = vrot.lane.b32.xlu0 %v5142, 44
        %v5210 = vpop.permute.xlu0 %5209
        %5211 = vrot.lane.b32.xlu0 %v5143, 44
        %v5212 = vpop.permute.xlu0 %5211
        %5213 = vrot.lane.b32.xlu0 %v5144, 44
        %v5214 = vpop.permute.xlu0 %5213
        %5215 = vrot.lane.b32.xlu0 %v5145, 44
        %v5216 = vpop.permute.xlu0 %5215
        %5217 = vrot.lane.b32.xlu0 %v5146, 44
        %v5218 = vpop.permute.xlu0 %5217
        %5219 = vrot.lane.b32.xlu0 %v5147, 44
        %v5220 = vpop.permute.xlu0 %5219
        %5221 = vrot.lane.b32.xlu0 %v5148, 44
        %v5222 = vpop.permute.xlu0 %5221
        %5223 = vrot.lane.b32.xlu0 %v5149, 44
        %v5224 = vpop.permute.xlu0 %5223
        %5225 = vrot.lane.b32.xlu0 %v5150, 44
        %v5226 = vpop.permute.xlu0 %5225
        %5227 = vrot.lane.b32.xlu0 %v5151, 44
        %v5228 = vpop.permute.xlu0 %5227
        %5229 = vrot.lane.b32.xlu0 %v5152, 44
        %v5230 = vpop.permute.xlu0 %5229
        %5231 = vrot.lane.b32.xlu0 %v5153, 44
        %v5232 = vpop.permute.xlu0 %5231
        %5233 = vrot.lane.b32.xlu0 %v5154, 44
        %v5234 = vpop.permute.xlu0 %5233
        %5235 = vrot.lane.b32.xlu0 %v5155, 44
        %v5236 = vpop.permute.xlu0 %5235
        %5237 = vrot.lane.b32.xlu0 %v5156, 44
        %v5238 = vpop.permute.xlu0 %5237
        %5239 = vrot.lane.b32.xlu0 %v5157, 44
        %v5240 = vpop.permute.xlu0 %5239
        %5241 = vrot.lane.b32.xlu0 %v5158, 44
        %v5242 = vpop.permute.xlu0 %5241
        %5243 = vrot.lane.b32.xlu0 %v5159, 44
        %v5244 = vpop.permute.xlu0 %5243
        %5245 = vrot.lane.b32.xlu0 %v5160, 44
        %v5246 = vpop.permute.xlu0 %5245
        %5247 = vrot.lane.b32.xlu0 %v5161, 44
        %v5248 = vpop.permute.xlu0 %5247
        %5249 = vrot.lane.b32.xlu0 %v5162, 44
        %v5250 = vpop.permute.xlu0 %5249
        %5251 = vrot.lane.b32.xlu0 %v5163, 44
        %v5252 = vpop.permute.xlu0 %5251
        %5253 = vrot.lane.b32.xlu0 %v5164, 44
        %v5254 = vpop.permute.xlu0 %5253
        %5255 = vrot.lane.b32.xlu0 %v5165, 44
        %v5256 = vpop.permute.xlu0 %5255
        %5257 = vrot.lane.b32.xlu0 %v5166, 44
        %v5258 = vpop.permute.xlu0 %5257
        %5259 = vrot.lane.b32.xlu0 %v5167, 44
        %v5260 = vpop.permute.xlu0 %5259
        %5261 = vrot.lane.b32.xlu0 %v5168, 44
        %v5262 = vpop.permute.xlu0 %5261
        %5263 = vrot.lane.b32.xlu0 %v5169, 44
        %v5264 = vpop.permute.xlu0 %5263
        %5265 = vrot.lane.b32.xlu0 %v5170, 44
        %v5266 = vpop.permute.xlu0 %5265
        %vm5267 = vcmask 359424
        %v5268 = vsel %vm5267, %v5204, %v5206
        %v5269 = vsel %vm5267, %v5206, %v5208
        %v5270 = vsel %vm5267, %v5208, %v5210
        %v5271 = vsel %vm5267, %v5212, %v5214
        %v5272 = vsel %vm5267, %v5214, %v5216
        %v5273 = vsel %vm5267, %v5216, %v5218
        %v5274 = vsel %vm5267, %v5220, %v5222
        %v5275 = vsel %vm5267, %v5222, %v5224
        %v5276 = vsel %vm5267, %v5224, %v5226
        %v5277 = vsel %vm5267, %v5228, %v5230
        %v5278 = vsel %vm5267, %v5230, %v5232
        %v5279 = vsel %vm5267, %v5232, %v5234
        %v5280 = vsel %vm5267, %v5236, %v5238
        %v5281 = vsel %vm5267, %v5238, %v5240
        %v5282 = vsel %vm5267, %v5240, %v5242
        %v5283 = vsel %vm5267, %v5244, %v5246
        %v5284 = vsel %vm5267, %v5246, %v5248
        %v5285 = vsel %vm5267, %v5248, %v5250
        %v5286 = vsel %vm5267, %v5252, %v5254
        %v5287 = vsel %vm5267, %v5254, %v5256
        %v5288 = vsel %vm5267, %v5256, %v5258
        %v5289 = vsel %vm5267, %v5260, %v5262
        %v5290 = vsel %vm5267, %v5262, %v5264
        %v5291 = vsel %vm5267, %v5264, %v5266
        %v5316 = vadd.f32 %v5083, %v5268
        %v5317 = vadd.f32 %v5084, %v5269
        %v5318 = vadd.f32 %v5085, %v5270
        %v5319 = vadd.f32 %v5086, %v5271
        %v5320 = vadd.f32 %v5087, %v5272
        %v5321 = vadd.f32 %v5088, %v5273
        %v5322 = vadd.f32 %v5089, %v5274
        %v5323 = vadd.f32 %v5090, %v5275
        %v5324 = vadd.f32 %v5091, %v5276
        %v5325 = vadd.f32 %v5092, %v5277
        %v5326 = vadd.f32 %v5093, %v5278
        %v5327 = vadd.f32 %v5094, %v5279
        %v5328 = vadd.f32 %v5095, %v5280
        %v5329 = vadd.f32 %v5096, %v5281
        %v5330 = vadd.f32 %v5097, %v5282
        %v5331 = vadd.f32 %v5098, %v5283
        %v5332 = vadd.f32 %v5099, %v5284
        %v5333 = vadd.f32 %v5100, %v5285
        %v5334 = vadd.f32 %v5101, %v5286
        %v5335 = vadd.f32 %v5102, %v5287
        %v5336 = vadd.f32 %v5103, %v5288
        %v5337 = vadd.f32 %v5104, %v5289
        %v5338 = vadd.f32 %v5105, %v5290
        %v5339 = vadd.f32 %v5106, %v5291
        %v5340 = vld [vmem:[%s3] sm:$0xff]
        %v5341 = vld [vmem:[%s3 + $0x8] sm:$0xff]
        %v5342 = vld [vmem:[%s3 + $0x10] sm:$0xff]
        %v5343 = vld [vmem:[%s3 + $0x18] sm:$0xff]
        %v5344 = vld [vmem:[%s3 + $0x20] sm:$0xff]
        %v5345 = vld [vmem:[%s3 + $0x28] sm:$0xff]
        %v5346 = vld [vmem:[%s3 + $0x30] sm:$0xff]
        %v5347 = vld [vmem:[%s3 + $0x38] sm:$0xff]
        %5349 = vset.pattern.permute.xlu0 0
        %5350 = vperm.xlu0 %5349, %v5340
        %v5351 = vpop.permute.xlu0 %5350
        %5354 = vset.pattern.permute.xlu0 0
        %5355 = vperm.xlu0 %5354, %v5341
        %v5356 = vpop.permute.xlu0 %5355
        %5359 = vset.pattern.permute.xlu0 0
        %5360 = vperm.xlu0 %5359, %v5342
        %v5361 = vpop.permute.xlu0 %5360
        %5364 = vset.pattern.permute.xlu0 0
        %5365 = vperm.xlu0 %5364, %v5343
        %v5366 = vpop.permute.xlu0 %5365
        %5369 = vset.pattern.permute.xlu0 0
        %5370 = vperm.xlu0 %5369, %v5344
        %v5371 = vpop.permute.xlu0 %5370
        %5374 = vset.pattern.permute.xlu0 0
        %5375 = vperm.xlu0 %5374, %v5345
        %v5376 = vpop.permute.xlu0 %5375
        %5379 = vset.pattern.permute.xlu0 0
        %5380 = vperm.xlu0 %5379, %v5346
        %v5381 = vpop.permute.xlu0 %5380
        %5384 = vset.pattern.permute.xlu0 0
        %5385 = vperm.xlu0 %5384, %v5347
        %v5386 = vpop.permute.xlu0 %5385
        %v5388 = vadd.f32 %v5316, %v5351
        %v5389 = vadd.f32 %v5317, %v5351
        %v5390 = vadd.f32 %v5318, %v5351
        %v5391 = vadd.f32 %v5319, %v5356
        %v5392 = vadd.f32 %v5320, %v5356
        %v5393 = vadd.f32 %v5321, %v5356
        %v5394 = vadd.f32 %v5322, %v5361
        %v5395 = vadd.f32 %v5323, %v5361
        %v5396 = vadd.f32 %v5324, %v5361
        %v5397 = vadd.f32 %v5325, %v5366
        %v5398 = vadd.f32 %v5326, %v5366
        %v5399 = vadd.f32 %v5327, %v5366
        %v5400 = vadd.f32 %v5328, %v5371
        %v5401 = vadd.f32 %v5329, %v5371
        %v5402 = vadd.f32 %v5330, %v5371
        %v5403 = vadd.f32 %v5331, %v5376
        %v5404 = vadd.f32 %v5332, %v5376
        %v5405 = vadd.f32 %v5333, %v5376
        %v5406 = vadd.f32 %v5334, %v5381
        %v5407 = vadd.f32 %v5335, %v5381
        %v5408 = vadd.f32 %v5336, %v5381
        %v5409 = vadd.f32 %v5337, %v5386
        %v5410 = vadd.f32 %v5338, %v5386
        %v5411 = vadd.f32 %v5339, %v5386
        %v5412 = vmax.f32 %v5388, 0.0
        %v5413 = vmax.f32 %v5389, 0.0
        %v5414 = vmax.f32 %v5390, 0.0
        %v5415 = vmax.f32 %v5391, 0.0
        %v5416 = vmax.f32 %v5392, 0.0
        %v5417 = vmax.f32 %v5393, 0.0
        %v5418 = vmax.f32 %v5394, 0.0
        %v5419 = vmax.f32 %v5395, 0.0
        %v5420 = vmax.f32 %v5396, 0.0
        %v5421 = vmax.f32 %v5397, 0.0
        %v5422 = vmax.f32 %v5398, 0.0
        %v5423 = vmax.f32 %v5399, 0.0
        %v5424 = vmax.f32 %v5400, 0.0
        %v5425 = vmax.f32 %v5401, 0.0
        %v5426 = vmax.f32 %v5402, 0.0
        %v5427 = vmax.f32 %v5403, 0.0
        %v5428 = vmax.f32 %v5404, 0.0
        %v5429 = vmax.f32 %v5405, 0.0
        %v5430 = vmax.f32 %v5406, 0.0
        %v5431 = vmax.f32 %v5407, 0.0
        %v5432 = vmax.f32 %v5408, 0.0
        %v5433 = vmax.f32 %v5409, 0.0
        %v5434 = vmax.f32 %v5410, 0.0
        %v5435 = vmax.f32 %v5411, 0.0
        %v5436 = vld [vmem:[%s1] sm:$0x7]
        %v5438 = vlaneseq
        %v5439 = vshrl.u32 %v5438, 7
        %v5440 = vsub.s32 0, %v5439
        %v5441 = vrot.slane %v5436, %v5440
        %v5442 = vlaneseq
        %v5443 = vshrl.u32 %v5442, 7
        %v5444 = vsub.s32 1, %v5443
        %v5445 = vrot.slane %v5436, %v5444
        %v5446 = vlaneseq
        %v5447 = vshrl.u32 %v5446, 7
        %v5448 = vsub.s32 2, %v5447
        %v5449 = vrot.slane %v5436, %v5448
        %v5453 = vmul.f32 %v5412, %v5441
        %v5454 = vmul.f32 %v5413, %v5445
        %v5455 = vmul.f32 %v5414, %v5449
        %v5456 = vmul.f32 %v5415, %v5441
        %v5457 = vmul.f32 %v5416, %v5445
        %v5458 = vmul.f32 %v5417, %v5449
        %v5459 = vmul.f32 %v5418, %v5441
        %v5460 = vmul.f32 %v5419, %v5445
        %v5461 = vmul.f32 %v5420, %v5449
        %v5462 = vmul.f32 %v5421, %v5441
        %v5463 = vmul.f32 %v5422, %v5445
        %v5464 = vmul.f32 %v5423, %v5449
        %v5465 = vmul.f32 %v5424, %v5441
        %v5466 = vmul.f32 %v5425, %v5445
        %v5467 = vmul.f32 %v5426, %v5449
        %v5468 = vmul.f32 %v5427, %v5441
        %v5469 = vmul.f32 %v5428, %v5445
        %v5470 = vmul.f32 %v5429, %v5449
        %v5471 = vmul.f32 %v5430, %v5441
        %v5472 = vmul.f32 %v5431, %v5445
        %v5473 = vmul.f32 %v5432, %v5449
        %v5474 = vmul.f32 %v5433, %v5441
        %v5475 = vmul.f32 %v5434, %v5445
        %v5476 = vmul.f32 %v5435, %v5449
        %vm5477 = vcmask 343040
        %5478 = vst.msk [vmem:[#allocation2] sm:$0xff] %vm5477, 0
        %5479 = vst.msk [vmem:[#allocation2 + $0x20] sm:$0xff] %vm5477, 0
        %5480 = vst.msk [vmem:[#allocation2 + $0x40] sm:$0xff] %vm5477, 0
        %5481 = vst.msk [vmem:[#allocation2 + $0x60] sm:$0xff] %vm5477, 0
        %vm5482 = vcmask 1048400
        %5483 = vst.msk [vmem:[#allocation2 + $0x10] sm:$0xff] %vm5482, 0
        %vm5484 = vcmask 293888
        %5485 = vst.msk [vmem:[#allocation2 + $0x18] sm:$0xff] %vm5484, 0
        %5486 = vst.msk [vmem:[#allocation2 + $0x30] sm:$0xff] %vm5482, 0
        %5487 = vst.msk [vmem:[#allocation2 + $0x38] sm:$0xff] %vm5484, 0
        %5488 = vst.msk [vmem:[#allocation2 + $0x50] sm:$0xff] %vm5482, 0
        %5489 = vst.msk [vmem:[#allocation2 + $0x58] sm:$0xff] %vm5484, 0
        %5490 = vst.msk [vmem:[#allocation2 + $0x70] sm:$0xff] %vm5482, 0
        %5491 = vst.msk [vmem:[#allocation2 + $0x78] sm:$0xff] %vm5484, 0
        %v5492 = vpack.c.bf16 %v5456, %v5453
        %v5493 = vpack.c.bf16 %v5457, %v5454
        %v5494 = vpack.c.bf16 %v5458, %v5455
        %v5495 = vpack.c.bf16 %v5462, %v5459
        %v5496 = vpack.c.bf16 %v5463, %v5460
        %v5497 = vpack.c.bf16 %v5464, %v5461
        %v5498 = vpack.c.bf16 %v5468, %v5465
        %v5499 = vpack.c.bf16 %v5469, %v5466
        %v5500 = vpack.c.bf16 %v5470, %v5467
        %v5501 = vpack.c.bf16 %v5474, %v5471
        %v5502 = vpack.c.bf16 %v5475, %v5472
        %v5503 = vpack.c.bf16 %v5476, %v5473
        %5516 = vrot.lane.b32.xlu0 %v5492, 42
        %v5517 = vpop.permute.xlu0 %5516
        %5518 = vrot.lane.b32.xlu0 %v5493, 42
        %v5519 = vpop.permute.xlu0 %5518
        %5520 = vrot.lane.b32.xlu0 %v5494, 42
        %v5521 = vpop.permute.xlu0 %5520
        %5522 = vrot.lane.b32.xlu0 %v5495, 42
        %v5523 = vpop.permute.xlu0 %5522
        %5524 = vrot.lane.b32.xlu0 %v5496, 42
        %v5525 = vpop.permute.xlu0 %5524
        %5526 = vrot.lane.b32.xlu0 %v5497, 42
        %v5527 = vpop.permute.xlu0 %5526
        %5528 = vrot.lane.b32.xlu0 %v5498, 42
        %v5529 = vpop.permute.xlu0 %5528
        %5530 = vrot.lane.b32.xlu0 %v5499, 42
        %v5531 = vpop.permute.xlu0 %5530
        %5532 = vrot.lane.b32.xlu0 %v5500, 42
        %v5533 = vpop.permute.xlu0 %5532
        %5534 = vrot.lane.b32.xlu0 %v5501, 42
        %v5535 = vpop.permute.xlu0 %5534
        %5536 = vrot.lane.b32.xlu0 %v5502, 42
        %v5537 = vpop.permute.xlu0 %5536
        %5538 = vrot.lane.b32.xlu0 %v5503, 42
        %v5539 = vpop.permute.xlu0 %5538
        %vm5540 = vcmask 343040
        %v5541 = vsel %vm5540, %v5517, %v5519
        %v5542 = vsel %vm5540, %v5519, %v5521
        %v5543 = vsel %vm5540, %v5523, %v5525
        %v5544 = vsel %vm5540, %v5525, %v5527
        %v5545 = vsel %vm5540, %v5529, %v5531
        %v5546 = vsel %vm5540, %v5531, %v5533
        %v5547 = vsel %vm5540, %v5535, %v5537
        %v5548 = vsel %vm5540, %v5537, %v5539
        %vm5561 = vcmask 1047888
        %5562 = vst.msk [vmem:[#allocation2] sm:$0xff] %vm5561, %v5517
        %5563 = vst [vmem:[#allocation2 + $0x8] sm:$0xff] %v5541
        %5564 = vst.msk [vmem:[#allocation2 + $0x10] sm:$0xff] %vm1772, %v5542
        %5565 = vst.msk [vmem:[#allocation2 + $0x20] sm:$0xff] %vm5561, %v5523
        %5566 = vst [vmem:[#allocation2 + $0x28] sm:$0xff] %v5543
        %5567 = vst.msk [vmem:[#allocation2 + $0x30] sm:$0xff] %vm1772, %v5544
        %5568 = vst.msk [vmem:[#allocation2 + $0x40] sm:$0xff] %vm5561, %v5529
        %5569 = vst [vmem:[#allocation2 + $0x48] sm:$0xff] %v5545
        %5570 = vst.msk [vmem:[#allocation2 + $0x50] sm:$0xff] %vm1772, %v5546
        %5571 = vst.msk [vmem:[#allocation2 + $0x60] sm:$0xff] %vm5561, %v5535
        %5572 = vst [vmem:[#allocation2 + $0x68] sm:$0xff] %v5547
        %5573 = vst.msk [vmem:[#allocation2 + $0x70] sm:$0xff] %vm1772, %v5548
        %v5574 = vld [vmem:[#allocation2] sm:$0xff]
        %v5575 = vld [vmem:[#allocation2 + $0x8] sm:$0xff]
        %v5576 = vld [vmem:[#allocation2 + $0x10] sm:$0xff]
        %v5577 = vld [vmem:[#allocation2 + $0x20] sm:$0xff]
        %v5578 = vld [vmem:[#allocation2 + $0x28] sm:$0xff]
        %v5579 = vld [vmem:[#allocation2 + $0x30] sm:$0xff]
        %v5580 = vld [vmem:[#allocation2 + $0x40] sm:$0xff]
        %v5581 = vld [vmem:[#allocation2 + $0x48] sm:$0xff]
        %v5582 = vld [vmem:[#allocation2 + $0x50] sm:$0xff]
        %v5583 = vld [vmem:[#allocation2 + $0x60] sm:$0xff]
        %v5584 = vld [vmem:[#allocation2 + $0x68] sm:$0xff]
        %v5585 = vld [vmem:[#allocation2 + $0x70] sm:$0xff]
        %v5586 = vld [vmem:[%s4] sm:$0xf]
        %v5587 = vld [vmem:[%s4 + $0x4] sm:$0xf]
        %v5588 = vld [vmem:[%s4 + $0x8] sm:$0xf]
        %v5589 = vld [vmem:[%s4 + $0xc] sm:$0xf]
        %v5590 = vld [vmem:[%s4 + $0x10] sm:$0xf]
        %v5591 = vld [vmem:[%s4 + $0x14] sm:$0xf]
        %v5592 = vld [vmem:[%s4 + $0x18] sm:$0xf]
        %v5593 = vld [vmem:[%s4 + $0x1c] sm:$0xf]
        %s5594 = scalar_lea.vmem %s4, 32
        %v5595 = vld [vmem:[%s5594] sm:$0xf]
        %v5596 = vld [vmem:[%s5594 + $0x4] sm:$0xf]
        %v5597 = vld [vmem:[%s5594 + $0x8] sm:$0xf]
        %v5598 = vld [vmem:[%s5594 + $0xc] sm:$0xf]
        %v5599 = vld [vmem:[%s5594 + $0x10] sm:$0xf]
        %v5600 = vld [vmem:[%s5594 + $0x14] sm:$0xf]
        %v5601 = vld [vmem:[%s5594 + $0x18] sm:$0xf]
        %v5602 = vld [vmem:[%s5594 + $0x1c] sm:$0xf]
        %v5611 = vunpack.c.l.b16 %v5595
        %v5612 = vunpack.c.l.b16 %v5596
        %v5613 = vunpack.c.l.b16 %v5597
        %v5614 = vunpack.c.l.b16 %v5598
        %v5615 = vunpack.c.l.b16 %v5599
        %v5616 = vunpack.c.l.b16 %v5600
        %v5617 = vunpack.c.l.b16 %v5601
        %v5618 = vunpack.c.l.b16 %v5602
        %v5619 = vpack.c.b16 %v5612, %v5611
        %v5620 = vpack.c.b16 %v5614, %v5613
        %v5621 = vpack.c.b16 %v5616, %v5615
        %v5622 = vpack.c.b16 %v5618, %v5617
        %5635 = vrot.lane.b32.xlu0 %v5574, 106
        %v5636 = vpop.permute.xlu0 %5635
        %5637 = vrot.lane.b32.xlu0 %v5575, 106
        %v5638 = vpop.permute.xlu0 %5637
        %5639 = vrot.lane.b32.xlu0 %v5576, 106
        %v5640 = vpop.permute.xlu0 %5639
        %5641 = vrot.lane.b32.xlu0 %v5577, 106
        %v5642 = vpop.permute.xlu0 %5641
        %5643 = vrot.lane.b32.xlu0 %v5578, 106
        %v5644 = vpop.permute.xlu0 %5643
        %5645 = vrot.lane.b32.xlu0 %v5579, 106
        %v5646 = vpop.permute.xlu0 %5645
        %5647 = vrot.lane.b32.xlu0 %v5580, 106
        %v5648 = vpop.permute.xlu0 %5647
        %5649 = vrot.lane.b32.xlu0 %v5581, 106
        %v5650 = vpop.permute.xlu0 %5649
        %5651 = vrot.lane.b32.xlu0 %v5582, 106
        %v5652 = vpop.permute.xlu0 %5651
        %5653 = vrot.lane.b32.xlu0 %v5583, 106
        %v5654 = vpop.permute.xlu0 %5653
        %5655 = vrot.lane.b32.xlu0 %v5584, 106
        %v5656 = vpop.permute.xlu0 %5655
        %5657 = vrot.lane.b32.xlu0 %v5585, 106
        %v5658 = vpop.permute.xlu0 %5657
        %vm5659 = vcmask 867328
        %v5660 = vsel %vm5659, %v5636, %v5638
        %v5661 = vsel %vm5659, %v5638, %v5640
        %v5662 = vsel %vm5659, %v5642, %v5644
        %v5663 = vsel %vm5659, %v5644, %v5646
        %v5664 = vsel %vm5659, %v5648, %v5650
        %v5665 = vsel %vm5659, %v5650, %v5652
        %v5666 = vsel %vm5659, %v5654, %v5656
        %v5667 = vsel %vm5659, %v5656, %v5658
        %v5681 = vsel %vm4088, %v5619, 0
        %v5684 = vsel %vm4088, %v5620, 0
        %v5687 = vsel %vm4088, %v5621, 0
        %v5690 = vsel %vm4088, %v5622, 0
        %5692 = vmatprep.subr.bf16.mxu0 %v5661
        %5693 = vmatpush1.bf16.msra.mxu0 %v5660
        %5694 = vmatprep.subr.bf16.mxu0 %v5663
        %5695 = vmatpush1.bf16.msra.mxu0 %v5662
        %5696 = vmatprep.subr.bf16.mxu0 %v5665
        %5697 = vmatpush1.bf16.msra.mxu0 %v5664
        %5698 = vmatprep.subr.bf16.mxu0 %v5667
        %5699 = vmatpush1.bf16.msra.mxu0 %v5666
        %5700 = vmatprep.subr.bf16.mxu0 0
        %5701 = vmatpush1.bf16.msra.mxu0 0
        %5702 = vmatprep.subr.bf16.mxu0 0
        %5703 = vmatpush1.bf16.msra.mxu0 0
        %5704 = vmatprep.subr.bf16.mxu0 0
        %5705 = vmatpush1.bf16.msra.mxu0 0
        %5706 = vmatprep.subr.bf16.mxu0 0
        %5707 = vmatpush1.bf16.msra.mxu0 0
        %5708 = vmatprep.subr.bf16.mxu0 0
        %5709 = vmatpush1.bf16.msra.mxu0 0
        %5710 = vmatprep.subr.bf16.mxu0 0
        %5711 = vmatpush1.bf16.msra.mxu0 0
        %5712 = vmatprep.subr.bf16.mxu0 0
        %5713 = vmatpush1.bf16.msra.mxu0 0
        %5714 = vmatprep.subr.bf16.mxu0 0
        %5715 = vmatpush1.bf16.msra.mxu0 0
        %5716 = vmatprep.subr.bf16.mxu0 0
        %5717 = vmatpush1.bf16.msra.mxu0 0
        %5718 = vmatprep.subr.bf16.mxu0 0
        %5719 = vmatpush1.bf16.msra.mxu0 0
        %5720 = vmatprep.subr.bf16.mxu0 0
        %5721 = vmatpush1.bf16.msra.mxu0 0
        %5722 = vmatprep.subr.bf16.mxu0 0
        %5723 = vmatpush1.bf16.msra.mxu0 0
        %5724 = vmatprep.mubr.bf16.mxu0 0
        %5725 = vmatmul.mubr.bf16.gmra.mrb[0].mxu0 %v5681
        %v5726 = vpop.f32.mrb[0].mxu0
        %v5727 = vadd.f32 0.0, %v5726
        %v5728 = vpop.f32.mrb[0].mxu0
        %v5729 = vadd.f32 0.0, %v5728
        %v5730 = vpop.f32.mrb[0].mxu0
        %v5731 = vadd.f32 0.0, %v5730
        %v5732 = vpop.f32.mrb[0].mxu0
        %v5733 = vadd.f32 0.0, %v5732
        %5734 = vmatprep.mubr.bf16.mxu0 0
        %5735 = vmatmul.mubr.bf16.gmra.mrb[0].mxu0 %v5684
        %v5736 = vpop.f32.mrb[0].mxu0
        %v5737 = vadd.f32 0.0, %v5736
        %v5738 = vpop.f32.mrb[0].mxu0
        %v5739 = vadd.f32 0.0, %v5738
        %v5740 = vpop.f32.mrb[0].mxu0
        %v5741 = vadd.f32 0.0, %v5740
        %v5742 = vpop.f32.mrb[0].mxu0
        %v5743 = vadd.f32 0.0, %v5742
        %5744 = vmatprep.mubr.bf16.mxu0 0
        %5745 = vmatmul.mubr.bf16.gmra.mrb[0].mxu0 %v5687
        %v5746 = vpop.f32.mrb[0].mxu0
        %v5747 = vadd.f32 0.0, %v5746
        %v5748 = vpop.f32.mrb[0].mxu0
        %v5749 = vadd.f32 0.0, %v5748
        %v5750 = vpop.f32.mrb[0].mxu0
        %v5751 = vadd.f32 0.0, %v5750
        %v5752 = vpop.f32.mrb[0].mxu0
        %v5753 = vadd.f32 0.0, %v5752
        %5754 = vmatprep.mubr.bf16.mxu0 0
        %5755 = vmatmul.mubr.bf16.gmra.mrb[0].mxu0 %v5690
        %v5756 = vpop.f32.mrb[0].mxu0
        %v5757 = vadd.f32 0.0, %v5756
        %v5758 = vpop.f32.mrb[0].mxu0
        %v5759 = vadd.f32 0.0, %v5758
        %v5760 = vpop.f32.mrb[0].mxu0
        %v5761 = vadd.f32 0.0, %v5760
        %v5762 = vpop.f32.mrb[0].mxu0
        %v5763 = vadd.f32 0.0, %v5762
        %5764 = vdwg.mxu0
        %5765 = vmatprep.subr.bf16.mxu0 0
        %5766 = vmatpush1.bf16.msra.mxu0 %v5640
        %5767 = vmatprep.subr.bf16.mxu0 0
        %5768 = vmatpush1.bf16.msra.mxu0 %v5646
        %5769 = vmatprep.subr.bf16.mxu0 0
        %5770 = vmatpush1.bf16.msra.mxu0 %v5652
        %5771 = vmatprep.subr.bf16.mxu0 0
        %5772 = vmatpush1.bf16.msra.mxu0 %v5658
        %5773 = vmatprep.subr.bf16.mxu0 0
        %5774 = vmatpush1.bf16.msra.mxu0 0
        %5775 = vmatprep.subr.bf16.mxu0 0
        %5776 = vmatpush1.bf16.msra.mxu0 0
        %5777 = vmatprep.subr.bf16.mxu0 0
        %5778 = vmatpush1.bf16.msra.mxu0 0
        %5779 = vmatprep.subr.bf16.mxu0 0
        %5780 = vmatpush1.bf16.msra.mxu0 0
        %5781 = vmatprep.subr.bf16.mxu0 0
        %5782 = vmatpush1.bf16.msra.mxu0 0
        %5783 = vmatprep.subr.bf16.mxu0 0
        %5784 = vmatpush1.bf16.msra.mxu0 0
        %5785 = vmatprep.subr.bf16.mxu0 0
        %5786 = vmatpush1.bf16.msra.mxu0 0
        %5787 = vmatprep.subr.bf16.mxu0 0
        %5788 = vmatpush1.bf16.msra.mxu0 0
        %5789 = vmatprep.subr.bf16.mxu0 0
        %5790 = vmatpush1.bf16.msra.mxu0 0
        %5791 = vmatprep.subr.bf16.mxu0 0
        %5792 = vmatpush1.bf16.msra.mxu0 0
        %5793 = vmatprep.subr.bf16.mxu0 0
        %5794 = vmatpush1.bf16.msra.mxu0 0
        %5795 = vmatprep.subr.bf16.mxu0 0
        %5796 = vmatpush1.bf16.msra.mxu0 0
        %5797 = vmatprep.mubr.bf16.mxu0 0
        %5798 = vmatmul.mubr.bf16.gmra.mrb[0].mxu0 %v5681
        %v5799 = vpop.f32.mrb[0].mxu0
        %v5800 = vadd.f32 0.0, %v5799
        %v5801 = vpop.f32.mrb[0].mxu0
        %v5802 = vpop.f32.mrb[0].mxu0
        %v5803 = vadd.f32 0.0, %v5802
        %v5804 = vpop.f32.mrb[0].mxu0
        %5805 = vmatprep.mubr.bf16.mxu0 0
        %5806 = vmatmul.mubr.bf16.gmra.mrb[0].mxu0 %v5684
        %v5807 = vpop.f32.mrb[0].mxu0
        %v5808 = vadd.f32 0.0, %v5807
        %v5809 = vpop.f32.mrb[0].mxu0
        %v5810 = vpop.f32.mrb[0].mxu0
        %v5811 = vadd.f32 0.0, %v5810
        %v5812 = vpop.f32.mrb[0].mxu0
        %5813 = vmatprep.mubr.bf16.mxu0 0
        %5814 = vmatmul.mubr.bf16.gmra.mrb[0].mxu0 %v5687
        %v5815 = vpop.f32.mrb[0].mxu0
        %v5816 = vadd.f32 0.0, %v5815
        %v5817 = vpop.f32.mrb[0].mxu0
        %v5818 = vpop.f32.mrb[0].mxu0
        %v5819 = vadd.f32 0.0, %v5818
        %v5820 = vpop.f32.mrb[0].mxu0
        %5821 = vmatprep.mubr.bf16.mxu0 0
        %5822 = vmatmul.mubr.bf16.gmra.mrb[0].mxu0 %v5690
        %v5823 = vpop.f32.mrb[0].mxu0
        %v5824 = vadd.f32 0.0, %v5823
        %v5825 = vpop.f32.mrb[0].mxu0
        %v5826 = vpop.f32.mrb[0].mxu0
        %v5827 = vadd.f32 0.0, %v5826
        %v5828 = vpop.f32.mrb[0].mxu0
        %5829 = vdwg.mxu0
        %v5838 = vunpack.c.l.b16 %v5586
        %v5839 = vunpack.c.l.b16 %v5587
        %v5840 = vunpack.c.l.b16 %v5588
        %v5841 = vunpack.c.l.b16 %v5589
        %v5842 = vunpack.c.l.b16 %v5590
        %v5843 = vunpack.c.l.b16 %v5591
        %v5844 = vunpack.c.l.b16 %v5592
        %v5845 = vunpack.c.l.b16 %v5593
        %v5846 = vpack.c.b16 %v5839, %v5838
        %v5847 = vpack.c.b16 %v5841, %v5840
        %v5848 = vpack.c.b16 %v5843, %v5842
        %v5849 = vpack.c.b16 %v5845, %v5844
        %5850 = vrot.lane.b32.xlu0 %v5574, 107
        %v5851 = vpop.permute.xlu0 %5850
        %5852 = vrot.lane.b32.xlu0 %v5575, 107
        %v5853 = vpop.permute.xlu0 %5852
        %5854 = vrot.lane.b32.xlu0 %v5576, 107
        %v5855 = vpop.permute.xlu0 %5854
        %5856 = vrot.lane.b32.xlu0 %v5577, 107
        %v5857 = vpop.permute.xlu0 %5856
        %5858 = vrot.lane.b32.xlu0 %v5578, 107
        %v5859 = vpop.permute.xlu0 %5858
        %5860 = vrot.lane.b32.xlu0 %v5579, 107
        %v5861 = vpop.permute.xlu0 %5860
        %5862 = vrot.lane.b32.xlu0 %v5580, 107
        %v5863 = vpop.permute.xlu0 %5862
        %5864 = vrot.lane.b32.xlu0 %v5581, 107
        %v5865 = vpop.permute.xlu0 %5864
        %5866 = vrot.lane.b32.xlu0 %v5582, 107
        %v5867 = vpop.permute.xlu0 %5866
        %5868 = vrot.lane.b32.xlu0 %v5583, 107
        %v5869 = vpop.permute.xlu0 %5868
        %5870 = vrot.lane.b32.xlu0 %v5584, 107
        %v5871 = vpop.permute.xlu0 %5870
        %5872 = vrot.lane.b32.xlu0 %v5585, 107
        %v5873 = vpop.permute.xlu0 %5872
        %vm5874 = vcmask 875520
        %v5875 = vsel %vm5874, %v5851, %v5853
        %v5876 = vsel %vm5874, %v5853, %v5855
        %v5877 = vsel %vm5874, %v5857, %v5859
        %v5878 = vsel %vm5874, %v5859, %v5861
        %v5879 = vsel %vm5874, %v5863, %v5865
        %v5880 = vsel %vm5874, %v5865, %v5867
        %v5881 = vsel %vm5874, %v5869, %v5871
        %v5882 = vsel %vm5874, %v5871, %v5873
        %v5896 = vsel %vm4088, %v5846, 0
        %v5899 = vsel %vm4088, %v5847, 0
        %v5902 = vsel %vm4088, %v5848, 0
        %v5905 = vsel %vm4088, %v5849, 0
        %5907 = vmatprep.subr.bf16.mxu0 %v5876
        %5908 = vmatpush1.bf16.msra.mxu0 %v5875
        %5909 = vmatprep.subr.bf16.mxu0 %v5878
        %5910 = vmatpush1.bf16.msra.mxu0 %v5877
        %5911 = vmatprep.subr.bf16.mxu0 %v5880
        %5912 = vmatpush1.bf16.msra.mxu0 %v5879
        %5913 = vmatprep.subr.bf16.mxu0 %v5882
        %5914 = vmatpush1.bf16.msra.mxu0 %v5881
        %5915 = vmatprep.subr.bf16.mxu0 0
        %5916 = vmatpush1.bf16.msra.mxu0 0
        %5917 = vmatprep.subr.bf16.mxu0 0
        %5918 = vmatpush1.bf16.msra.mxu0 0
        %5919 = vmatprep.subr.bf16.mxu0 0
        %5920 = vmatpush1.bf16.msra.mxu0 0
        %5921 = vmatprep.subr.bf16.mxu0 0
        %5922 = vmatpush1.bf16.msra.mxu0 0
        %5923 = vmatprep.subr.bf16.mxu0 0
        %5924 = vmatpush1.bf16.msra.mxu0 0
        %5925 = vmatprep.subr.bf16.mxu0 0
        %5926 = vmatpush1.bf16.msra.mxu0 0
        %5927 = vmatprep.subr.bf16.mxu0 0
        %5928 = vmatpush1.bf16.msra.mxu0 0
        %5929 = vmatprep.subr.bf16.mxu0 0
        %5930 = vmatpush1.bf16.msra.mxu0 0
        %5931 = vmatprep.subr.bf16.mxu0 0
        %5932 = vmatpush1.bf16.msra.mxu0 0
        %5933 = vmatprep.subr.bf16.mxu0 0
        %5934 = vmatpush1.bf16.msra.mxu0 0
        %5935 = vmatprep.subr.bf16.mxu0 0
        %5936 = vmatpush1.bf16.msra.mxu0 0
        %5937 = vmatprep.subr.bf16.mxu0 0
        %5938 = vmatpush1.bf16.msra.mxu0 0
        %5939 = vmatprep.mubr.bf16.mxu0 0
        %5940 = vmatmul.mubr.bf16.gmra.mrb[0].mxu0 %v5896
        %v5941 = vpop.f32.mrb[0].mxu0
        %v5942 = vadd.f32 %v5727, %v5941
        %v5943 = vpop.f32.mrb[0].mxu0
        %v5944 = vadd.f32 %v5729, %v5943
        %v5945 = vpop.f32.mrb[0].mxu0
        %v5946 = vadd.f32 %v5731, %v5945
        %v5947 = vpop.f32.mrb[0].mxu0
        %v5948 = vadd.f32 %v5733, %v5947
        %5949 = vmatprep.mubr.bf16.mxu0 0
        %5950 = vmatmul.mubr.bf16.gmra.mrb[0].mxu0 %v5899
        %v5951 = vpop.f32.mrb[0].mxu0
        %v5952 = vadd.f32 %v5737, %v5951
        %v5953 = vpop.f32.mrb[0].mxu0
        %v5954 = vadd.f32 %v5739, %v5953
        %v5955 = vpop.f32.mrb[0].mxu0
        %v5956 = vadd.f32 %v5741, %v5955
        %v5957 = vpop.f32.mrb[0].mxu0
        %v5958 = vadd.f32 %v5743, %v5957
        %5959 = vmatprep.mubr.bf16.mxu0 0
        %5960 = vmatmul.mubr.bf16.gmra.mrb[0].mxu0 %v5902
        %v5961 = vpop.f32.mrb[0].mxu0
        %v5962 = vadd.f32 %v5747, %v5961
        %v5963 = vpop.f32.mrb[0].mxu0
        %v5964 = vadd.f32 %v5749, %v5963
        %v5965 = vpop.f32.mrb[0].mxu0
        %v5966 = vadd.f32 %v5751, %v5965
        %v5967 = vpop.f32.mrb[0].mxu0
        %v5968 = vadd.f32 %v5753, %v5967
        %5969 = vmatprep.mubr.bf16.mxu0 0
        %5970 = vmatmul.mubr.bf16.gmra.mrb[0].mxu0 %v5905
        %v5971 = vpop.f32.mrb[0].mxu0
        %v5972 = vadd.f32 %v5757, %v5971
        %v5973 = vpop.f32.mrb[0].mxu0
        %v5974 = vadd.f32 %v5759, %v5973
        %v5975 = vpop.f32.mrb[0].mxu0
        %v5976 = vadd.f32 %v5761, %v5975
        %v5977 = vpop.f32.mrb[0].mxu0
        %v5978 = vadd.f32 %v5763, %v5977
        %5979 = vdwg.mxu0
        %5980 = vmatprep.subr.bf16.mxu0 0
        %5981 = vmatpush1.bf16.msra.mxu0 %v5855
        %5982 = vmatprep.subr.bf16.mxu0 0
        %5983 = vmatpush1.bf16.msra.mxu0 %v5861
        %5984 = vmatprep.subr.bf16.mxu0 0
        %5985 = vmatpush1.bf16.msra.mxu0 %v5867
        %5986 = vmatprep.subr.bf16.mxu0 0
        %5987 = vmatpush1.bf16.msra.mxu0 %v5873
        %5988 = vmatprep.subr.bf16.mxu0 0
        %5989 = vmatpush1.bf16.msra.mxu0 0
        %5990 = vmatprep.subr.bf16.mxu0 0
        %5991 = vmatpush1.bf16.msra.mxu0 0
        %5992 = vmatprep.subr.bf16.mxu0 0
        %5993 = vmatpush1.bf16.msra.mxu0 0
        %5994 = vmatprep.subr.bf16.mxu0 0
        %5995 = vmatpush1.bf16.msra.mxu0 0
        %5996 = vmatprep.subr.bf16.mxu0 0
        %5997 = vmatpush1.bf16.msra.mxu0 0
        %5998 = vmatprep.subr.bf16.mxu0 0
        %5999 = vmatpush1.bf16.msra.mxu0 0
        %6000 = vmatprep.subr.bf16.mxu0 0
        %6001 = vmatpush1.bf16.msra.mxu0 0
        %6002 = vmatprep.subr.bf16.mxu0 0
        %6003 = vmatpush1.bf16.msra.mxu0 0
        %6004 = vmatprep.subr.bf16.mxu0 0
        %6005 = vmatpush1.bf16.msra.mxu0 0
        %6006 = vmatprep.subr.bf16.mxu0 0
        %6007 = vmatpush1.bf16.msra.mxu0 0
        %6008 = vmatprep.subr.bf16.mxu0 0
        %6009 = vmatpush1.bf16.msra.mxu0 0
        %6010 = vmatprep.subr.bf16.mxu0 0
        %6011 = vmatpush1.bf16.msra.mxu0 0
        %6012 = vmatprep.mubr.bf16.mxu0 0
        %6013 = vmatmul.mubr.bf16.gmra.mrb[0].mxu0 %v5896
        %v6014 = vpop.f32.mrb[0].mxu0
        %v6015 = vadd.f32 %v5800, %v6014
        %v6016 = vpop.f32.mrb[0].mxu0
        %v6017 = vpop.f32.mrb[0].mxu0
        %v6018 = vadd.f32 %v5803, %v6017
        %v6019 = vpop.f32.mrb[0].mxu0
        %6020 = vmatprep.mubr.bf16.mxu0 0
        %6021 = vmatmul.mubr.bf16.gmra.mrb[0].mxu0 %v5899
        %v6022 = vpop.f32.mrb[0].mxu0
        %v6023 = vadd.f32 %v5808, %v6022
        %v6024 = vpop.f32.mrb[0].mxu0
        %v6025 = vpop.f32.mrb[0].mxu0
        %v6026 = vadd.f32 %v5811, %v6025
        %v6027 = vpop.f32.mrb[0].mxu0
        %6028 = vmatprep.mubr.bf16.mxu0 0
        %6029 = vmatmul.mubr.bf16.gmra.mrb[0].mxu0 %v5902
        %v6030 = vpop.f32.mrb[0].mxu0
        %v6031 = vadd.f32 %v5816, %v6030
        %v6032 = vpop.f32.mrb[0].mxu0
        %v6033 = vpop.f32.mrb[0].mxu0
        %v6034 = vadd.f32 %v5819, %v6033
        %v6035 = vpop.f32.mrb[0].mxu0
        %6036 = vmatprep.mubr.bf16.mxu0 0
        %6037 = vmatmul.mubr.bf16.gmra.mrb[0].mxu0 %v5905
        %v6038 = vpop.f32.mrb[0].mxu0
        %v6039 = vadd.f32 %v5824, %v6038
        %v6040 = vpop.f32.mrb[0].mxu0
        %v6041 = vpop.f32.mrb[0].mxu0
        %v6042 = vadd.f32 %v5827, %v6041
        %v6043 = vpop.f32.mrb[0].mxu0
        %6044 = vdwg.mxu0
        %s6045 = scalar_lea.vmem %s4, 64
        %v6046 = vld [vmem:[%s6045] sm:$0xf]
        %v6047 = vld [vmem:[%s6045 + $0x4] sm:$0xf]
        %v6048 = vld [vmem:[%s6045 + $0x8] sm:$0xf]
        %v6049 = vld [vmem:[%s6045 + $0xc] sm:$0xf]
        %v6050 = vld [vmem:[%s6045 + $0x10] sm:$0xf]
        %v6051 = vld [vmem:[%s6045 + $0x14] sm:$0xf]
        %v6052 = vld [vmem:[%s6045 + $0x18] sm:$0xf]
        %v6053 = vld [vmem:[%s6045 + $0x1c] sm:$0xf]
        %v6062 = vunpack.c.l.b16 %v6046
        %v6063 = vunpack.c.l.b16 %v6047
        %v6064 = vunpack.c.l.b16 %v6048
        %v6065 = vunpack.c.l.b16 %v6049
        %v6066 = vunpack.c.l.b16 %v6050
        %v6067 = vunpack.c.l.b16 %v6051
        %v6068 = vunpack.c.l.b16 %v6052
        %v6069 = vunpack.c.l.b16 %v6053
        %v6070 = vpack.c.b16 %v6063, %v6062
        %v6071 = vpack.c.b16 %v6065, %v6064
        %v6072 = vpack.c.b16 %v6067, %v6066
        %v6073 = vpack.c.b16 %v6069, %v6068
        %6074 = vrot.lane.b32.xlu0 %v5574, 105
        %v6075 = vpop.permute.xlu0 %6074
        %6076 = vrot.lane.b32.xlu0 %v5575, 105
        %v6077 = vpop.permute.xlu0 %6076
        %6078 = vrot.lane.b32.xlu0 %v5576, 105
        %v6079 = vpop.permute.xlu0 %6078
        %6080 = vrot.lane.b32.xlu0 %v5577, 105
        %v6081 = vpop.permute.xlu0 %6080
        %6082 = vrot.lane.b32.xlu0 %v5578, 105
        %v6083 = vpop.permute.xlu0 %6082
        %6084 = vrot.lane.b32.xlu0 %v5579, 105
        %v6085 = vpop.permute.xlu0 %6084
        %6086 = vrot.lane.b32.xlu0 %v5580, 105
        %v6087 = vpop.permute.xlu0 %6086
        %6088 = vrot.lane.b32.xlu0 %v5581, 105
        %v6089 = vpop.permute.xlu0 %6088
        %6090 = vrot.lane.b32.xlu0 %v5582, 105
        %v6091 = vpop.permute.xlu0 %6090
        %6092 = vrot.lane.b32.xlu0 %v5583, 105
        %v6093 = vpop.permute.xlu0 %6092
        %6094 = vrot.lane.b32.xlu0 %v5584, 105
        %v6095 = vpop.permute.xlu0 %6094
        %6096 = vrot.lane.b32.xlu0 %v5585, 105
        %v6097 = vpop.permute.xlu0 %6096
        %vm6098 = vcmask 859136
        %v6099 = vsel %vm6098, %v6075, %v6077
        %v6100 = vsel %vm6098, %v6077, %v6079
        %v6101 = vsel %vm6098, %v6081, %v6083
        %v6102 = vsel %vm6098, %v6083, %v6085
        %v6103 = vsel %vm6098, %v6087, %v6089
        %v6104 = vsel %vm6098, %v6089, %v6091
        %v6105 = vsel %vm6098, %v6093, %v6095
        %v6106 = vsel %vm6098, %v6095, %v6097
        %v6120 = vsel %vm4088, %v6070, 0
        %v6123 = vsel %vm4088, %v6071, 0
        %v6126 = vsel %vm4088, %v6072, 0
        %v6129 = vsel %vm4088, %v6073, 0
        %6131 = vmatprep.subr.bf16.mxu0 %v6100
        %6132 = vmatpush1.bf16.msra.mxu0 %v6099
        %6133 = vmatprep.subr.bf16.mxu0 %v6102
        %6134 = vmatpush1.bf16.msra.mxu0 %v6101
        %6135 = vmatprep.subr.bf16.mxu0 %v6104
        %6136 = vmatpush1.bf16.msra.mxu0 %v6103
        %6137 = vmatprep.subr.bf16.mxu0 %v6106
        %6138 = vmatpush1.bf16.msra.mxu0 %v6105
        %6139 = vmatprep.subr.bf16.mxu0 0
        %6140 = vmatpush1.bf16.msra.mxu0 0
        %6141 = vmatprep.subr.bf16.mxu0 0
        %6142 = vmatpush1.bf16.msra.mxu0 0
        %6143 = vmatprep.subr.bf16.mxu0 0
        %6144 = vmatpush1.bf16.msra.mxu0 0
        %6145 = vmatprep.subr.bf16.mxu0 0
        %6146 = vmatpush1.bf16.msra.mxu0 0
        %6147 = vmatprep.subr.bf16.mxu0 0
        %6148 = vmatpush1.bf16.msra.mxu0 0
        %6149 = vmatprep.subr.bf16.mxu0 0
        %6150 = vmatpush1.bf16.msra.mxu0 0
        %6151 = vmatprep.subr.bf16.mxu0 0
        %6152 = vmatpush1.bf16.msra.mxu0 0
        %6153 = vmatprep.subr.bf16.mxu0 0
        %6154 = vmatpush1.bf16.msra.mxu0 0
        %6155 = vmatprep.subr.bf16.mxu0 0
        %6156 = vmatpush1.bf16.msra.mxu0 0
        %6157 = vmatprep.subr.bf16.mxu0 0
        %6158 = vmatpush1.bf16.msra.mxu0 0
        %6159 = vmatprep.subr.bf16.mxu0 0
        %6160 = vmatpush1.bf16.msra.mxu0 0
        %6161 = vmatprep.subr.bf16.mxu0 0
        %6162 = vmatpush1.bf16.msra.mxu0 0
        %6163 = vmatprep.mubr.bf16.mxu0 0
        %6164 = vmatmul.mubr.bf16.gmra.mrb[0].mxu0 %v6120
        %v6165 = vpop.f32.mrb[0].mxu0
        %v6166 = vadd.f32 0.0, %v6165
        %v6167 = vpop.f32.mrb[0].mxu0
        %v6168 = vadd.f32 0.0, %v6167
        %v6169 = vpop.f32.mrb[0].mxu0
        %v6170 = vadd.f32 0.0, %v6169
        %v6171 = vpop.f32.mrb[0].mxu0
        %v6172 = vadd.f32 0.0, %v6171
        %6173 = vmatprep.mubr.bf16.mxu0 0
        %6174 = vmatmul.mubr.bf16.gmra.mrb[0].mxu0 %v6123
        %v6175 = vpop.f32.mrb[0].mxu0
        %v6176 = vadd.f32 0.0, %v6175
        %v6177 = vpop.f32.mrb[0].mxu0
        %v6178 = vadd.f32 0.0, %v6177
        %v6179 = vpop.f32.mrb[0].mxu0
        %v6180 = vadd.f32 0.0, %v6179
        %v6181 = vpop.f32.mrb[0].mxu0
        %v6182 = vadd.f32 0.0, %v6181
        %6183 = vmatprep.mubr.bf16.mxu0 0
        %6184 = vmatmul.mubr.bf16.gmra.mrb[0].mxu0 %v6126
        %v6185 = vpop.f32.mrb[0].mxu0
        %v6186 = vadd.f32 0.0, %v6185
        %v6187 = vpop.f32.mrb[0].mxu0
        %v6188 = vadd.f32 0.0, %v6187
        %v6189 = vpop.f32.mrb[0].mxu0
        %v6190 = vadd.f32 0.0, %v6189
        %v6191 = vpop.f32.mrb[0].mxu0
        %v6192 = vadd.f32 0.0, %v6191
        %6193 = vmatprep.mubr.bf16.mxu0 0
        %6194 = vmatmul.mubr.bf16.gmra.mrb[0].mxu0 %v6129
        %v6195 = vpop.f32.mrb[0].mxu0
        %v6196 = vadd.f32 0.0, %v6195
        %v6197 = vpop.f32.mrb[0].mxu0
        %v6198 = vadd.f32 0.0, %v6197
        %v6199 = vpop.f32.mrb[0].mxu0
        %v6200 = vadd.f32 0.0, %v6199
        %v6201 = vpop.f32.mrb[0].mxu0
        %v6202 = vadd.f32 0.0, %v6201
        %6203 = vdwg.mxu0
        %6204 = vmatprep.subr.bf16.mxu0 0
        %6205 = vmatpush1.bf16.msra.mxu0 %v6079
        %6206 = vmatprep.subr.bf16.mxu0 0
        %6207 = vmatpush1.bf16.msra.mxu0 %v6085
        %6208 = vmatprep.subr.bf16.mxu0 0
        %6209 = vmatpush1.bf16.msra.mxu0 %v6091
        %6210 = vmatprep.subr.bf16.mxu0 0
        %6211 = vmatpush1.bf16.msra.mxu0 %v6097
        %6212 = vmatprep.subr.bf16.mxu0 0
        %6213 = vmatpush1.bf16.msra.mxu0 0
        %6214 = vmatprep.subr.bf16.mxu0 0
        %6215 = vmatpush1.bf16.msra.mxu0 0
        %6216 = vmatprep.subr.bf16.mxu0 0
        %6217 = vmatpush1.bf16.msra.mxu0 0
        %6218 = vmatprep.subr.bf16.mxu0 0
        %6219 = vmatpush1.bf16.msra.mxu0 0
        %6220 = vmatprep.subr.bf16.mxu0 0
        %6221 = vmatpush1.bf16.msra.mxu0 0
        %6222 = vmatprep.subr.bf16.mxu0 0
        %6223 = vmatpush1.bf16.msra.mxu0 0
        %6224 = vmatprep.subr.bf16.mxu0 0
        %6225 = vmatpush1.bf16.msra.mxu0 0
        %6226 = vmatprep.subr.bf16.mxu0 0
        %6227 = vmatpush1.bf16.msra.mxu0 0
        %6228 = vmatprep.subr.bf16.mxu0 0
        %6229 = vmatpush1.bf16.msra.mxu0 0
        %6230 = vmatprep.subr.bf16.mxu0 0
        %6231 = vmatpush1.bf16.msra.mxu0 0
        %6232 = vmatprep.subr.bf16.mxu0 0
        %6233 = vmatpush1.bf16.msra.mxu0 0
        %6234 = vmatprep.subr.bf16.mxu0 0
        %6235 = vmatpush1.bf16.msra.mxu0 0
        %6236 = vmatprep.mubr.bf16.mxu0 0
        %6237 = vmatmul.mubr.bf16.gmra.mrb[0].mxu0 %v6120
        %v6238 = vpop.f32.mrb[0].mxu0
        %v6239 = vadd.f32 0.0, %v6238
        %v6240 = vpop.f32.mrb[0].mxu0
        %v6241 = vpop.f32.mrb[0].mxu0
        %v6242 = vadd.f32 0.0, %v6241
        %v6243 = vpop.f32.mrb[0].mxu0
        %6244 = vmatprep.mubr.bf16.mxu0 0
        %6245 = vmatmul.mubr.bf16.gmra.mrb[0].mxu0 %v6123
        %v6246 = vpop.f32.mrb[0].mxu0
        %v6247 = vadd.f32 0.0, %v6246
        %v6248 = vpop.f32.mrb[0].mxu0
        %v6249 = vpop.f32.mrb[0].mxu0
        %v6250 = vadd.f32 0.0, %v6249
        %v6251 = vpop.f32.mrb[0].mxu0
        %6252 = vmatprep.mubr.bf16.mxu0 0
        %6253 = vmatmul.mubr.bf16.gmra.mrb[0].mxu0 %v6126
        %v6254 = vpop.f32.mrb[0].mxu0
        %v6255 = vadd.f32 0.0, %v6254
        %v6256 = vpop.f32.mrb[0].mxu0
        %v6257 = vpop.f32.mrb[0].mxu0
        %v6258 = vadd.f32 0.0, %v6257
        %v6259 = vpop.f32.mrb[0].mxu0
        %6260 = vmatprep.mubr.bf16.mxu0 0
        %6261 = vmatmul.mubr.bf16.gmra.mrb[0].mxu0 %v6129
        %v6262 = vpop.f32.mrb[0].mxu0
        %v6263 = vadd.f32 0.0, %v6262
        %v6264 = vpop.f32.mrb[0].mxu0
        %v6265 = vpop.f32.mrb[0].mxu0
        %v6266 = vadd.f32 0.0, %v6265
        %v6267 = vpop.f32.mrb[0].mxu0
        %6268 = vdwg.mxu0
        %v6269 = vadd.f32 %v5942, %v6166
        %v6270 = vadd.f32 %v5944, %v6168
        %v6271 = vadd.f32 %v6015, %v6239
        %v6272 = vadd.f32 %v5946, %v6170
        %v6273 = vadd.f32 %v5948, %v6172
        %v6274 = vadd.f32 %v6018, %v6242
        %v6275 = vadd.f32 %v5952, %v6176
        %v6276 = vadd.f32 %v5954, %v6178
        %v6277 = vadd.f32 %v6023, %v6247
        %v6278 = vadd.f32 %v5956, %v6180
        %v6279 = vadd.f32 %v5958, %v6182
        %v6280 = vadd.f32 %v6026, %v6250
        %v6281 = vadd.f32 %v5962, %v6186
        %v6282 = vadd.f32 %v5964, %v6188
        %v6283 = vadd.f32 %v6031, %v6255
        %v6284 = vadd.f32 %v5966, %v6190
        %v6285 = vadd.f32 %v5968, %v6192
        %v6286 = vadd.f32 %v6034, %v6258
        %v6287 = vadd.f32 %v5972, %v6196
        %v6288 = vadd.f32 %v5974, %v6198
        %v6289 = vadd.f32 %v6039, %v6263
        %v6290 = vadd.f32 %v5976, %v6200
        %v6291 = vadd.f32 %v5978, %v6202
        %v6292 = vadd.f32 %v6042, %v6266
        %s6293 = scalar_lea.vmem %s4, 96
        %v6294 = vld [vmem:[%s6293] sm:$0xf]
        %v6295 = vld [vmem:[%s6293 + $0x4] sm:$0xf]
        %v6296 = vld [vmem:[%s6293 + $0x8] sm:$0xf]
        %v6297 = vld [vmem:[%s6293 + $0xc] sm:$0xf]
        %v6298 = vld [vmem:[%s6293 + $0x10] sm:$0xf]
        %v6299 = vld [vmem:[%s6293 + $0x14] sm:$0xf]
        %v6300 = vld [vmem:[%s6293 + $0x18] sm:$0xf]
        %v6301 = vld [vmem:[%s6293 + $0x1c] sm:$0xf]
        %v6310 = vunpack.c.l.b16 %v6294
        %v6311 = vunpack.c.l.b16 %v6295
        %v6312 = vunpack.c.l.b16 %v6296
        %v6313 = vunpack.c.l.b16 %v6297
        %v6314 = vunpack.c.l.b16 %v6298
        %v6315 = vunpack.c.l.b16 %v6299
        %v6316 = vunpack.c.l.b16 %v6300
        %v6317 = vunpack.c.l.b16 %v6301
        %v6318 = vpack.c.b16 %v6311, %v6310
        %v6319 = vpack.c.b16 %v6313, %v6312
        %v6320 = vpack.c.b16 %v6315, %v6314
        %v6321 = vpack.c.b16 %v6317, %v6316
        %6322 = vrot.lane.b32.xlu0 %v5574, 87
        %v6323 = vpop.permute.xlu0 %6322
        %6324 = vrot.lane.b32.xlu0 %v5575, 87
        %v6325 = vpop.permute.xlu0 %6324
        %6326 = vrot.lane.b32.xlu0 %v5576, 87
        %v6327 = vpop.permute.xlu0 %6326
        %6328 = vrot.lane.b32.xlu0 %v5577, 87
        %v6329 = vpop.permute.xlu0 %6328
        %6330 = vrot.lane.b32.xlu0 %v5578, 87
        %v6331 = vpop.permute.xlu0 %6330
        %6332 = vrot.lane.b32.xlu0 %v5579, 87
        %v6333 = vpop.permute.xlu0 %6332
        %6334 = vrot.lane.b32.xlu0 %v5580, 87
        %v6335 = vpop.permute.xlu0 %6334
        %6336 = vrot.lane.b32.xlu0 %v5581, 87
        %v6337 = vpop.permute.xlu0 %6336
        %6338 = vrot.lane.b32.xlu0 %v5582, 87
        %v6339 = vpop.permute.xlu0 %6338
        %6340 = vrot.lane.b32.xlu0 %v5583, 87
        %v6341 = vpop.permute.xlu0 %6340
        %6342 = vrot.lane.b32.xlu0 %v5584, 87
        %v6343 = vpop.permute.xlu0 %6342
        %6344 = vrot.lane.b32.xlu0 %v5585, 87
        %v6345 = vpop.permute.xlu0 %6344
        %vm6346 = vcmask 711680
        %v6347 = vsel %vm6346, %v6323, %v6325
        %v6348 = vsel %vm6346, %v6325, %v6327
        %v6349 = vsel %vm6346, %v6329, %v6331
        %v6350 = vsel %vm6346, %v6331, %v6333
        %v6351 = vsel %vm6346, %v6335, %v6337
        %v6352 = vsel %vm6346, %v6337, %v6339
        %v6353 = vsel %vm6346, %v6341, %v6343
        %v6354 = vsel %vm6346, %v6343, %v6345
        %v6368 = vsel %vm4088, %v6318, 0
        %v6371 = vsel %vm4088, %v6319, 0
        %v6374 = vsel %vm4088, %v6320, 0
        %v6377 = vsel %vm4088, %v6321, 0
        %6379 = vmatprep.subr.bf16.mxu0 %v6348
        %6380 = vmatpush1.bf16.msra.mxu0 %v6347
        %6381 = vmatprep.subr.bf16.mxu0 %v6350
        %6382 = vmatpush1.bf16.msra.mxu0 %v6349
        %6383 = vmatprep.subr.bf16.mxu0 %v6352
        %6384 = vmatpush1.bf16.msra.mxu0 %v6351
        %6385 = vmatprep.subr.bf16.mxu0 %v6354
        %6386 = vmatpush1.bf16.msra.mxu0 %v6353
        %6387 = vmatprep.subr.bf16.mxu0 0
        %6388 = vmatpush1.bf16.msra.mxu0 0
        %6389 = vmatprep.subr.bf16.mxu0 0
        %6390 = vmatpush1.bf16.msra.mxu0 0
        %6391 = vmatprep.subr.bf16.mxu0 0
        %6392 = vmatpush1.bf16.msra.mxu0 0
        %6393 = vmatprep.subr.bf16.mxu0 0
        %6394 = vmatpush1.bf16.msra.mxu0 0
        %6395 = vmatprep.subr.bf16.mxu0 0
        %6396 = vmatpush1.bf16.msra.mxu0 0
        %6397 = vmatprep.subr.bf16.mxu0 0
        %6398 = vmatpush1.bf16.msra.mxu0 0
        %6399 = vmatprep.subr.bf16.mxu0 0
        %6400 = vmatpush1.bf16.msra.mxu0 0
        %6401 = vmatprep.subr.bf16.mxu0 0
        %6402 = vmatpush1.bf16.msra.mxu0 0
        %6403 = vmatprep.subr.bf16.mxu0 0
        %6404 = vmatpush1.bf16.msra.mxu0 0
        %6405 = vmatprep.subr.bf16.mxu0 0
        %6406 = vmatpush1.bf16.msra.mxu0 0
        %6407 = vmatprep.subr.bf16.mxu0 0
        %6408 = vmatpush1.bf16.msra.mxu0 0
        %6409 = vmatprep.subr.bf16.mxu0 0
        %6410 = vmatpush1.bf16.msra.mxu0 0
        %6411 = vmatprep.mubr.bf16.mxu0 0
        %6412 = vmatmul.mubr.bf16.gmra.mrb[0].mxu0 %v6368
        %v6413 = vpop.f32.mrb[0].mxu0
        %v6414 = vadd.f32 0.0, %v6413
        %v6415 = vpop.f32.mrb[0].mxu0
        %v6416 = vadd.f32 0.0, %v6415
        %v6417 = vpop.f32.mrb[0].mxu0
        %v6418 = vadd.f32 0.0, %v6417
        %v6419 = vpop.f32.mrb[0].mxu0
        %v6420 = vadd.f32 0.0, %v6419
        %6421 = vmatprep.mubr.bf16.mxu0 0
        %6422 = vmatmul.mubr.bf16.gmra.mrb[0].mxu0 %v6371
        %v6423 = vpop.f32.mrb[0].mxu0
        %v6424 = vadd.f32 0.0, %v6423
        %v6425 = vpop.f32.mrb[0].mxu0
        %v6426 = vadd.f32 0.0, %v6425
        %v6427 = vpop.f32.mrb[0].mxu0
        %v6428 = vadd.f32 0.0, %v6427
        %v6429 = vpop.f32.mrb[0].mxu0
        %v6430 = vadd.f32 0.0, %v6429
        %6431 = vmatprep.mubr.bf16.mxu0 0
        %6432 = vmatmul.mubr.bf16.gmra.mrb[0].mxu0 %v6374
        %v6433 = vpop.f32.mrb[0].mxu0
        %v6434 = vadd.f32 0.0, %v6433
        %v6435 = vpop.f32.mrb[0].mxu0
        %v6436 = vadd.f32 0.0, %v6435
        %v6437 = vpop.f32.mrb[0].mxu0
        %v6438 = vadd.f32 0.0, %v6437
        %v6439 = vpop.f32.mrb[0].mxu0
        %v6440 = vadd.f32 0.0, %v6439
        %6441 = vmatprep.mubr.bf16.mxu0 0
        %6442 = vmatmul.mubr.bf16.gmra.mrb[0].mxu0 %v6377
        %v6443 = vpop.f32.mrb[0].mxu0
        %v6444 = vadd.f32 0.0, %v6443
        %v6445 = vpop.f32.mrb[0].mxu0
        %v6446 = vadd.f32 0.0, %v6445
        %v6447 = vpop.f32.mrb[0].mxu0
        %v6448 = vadd.f32 0.0, %v6447
        %v6449 = vpop.f32.mrb[0].mxu0
        %v6450 = vadd.f32 0.0, %v6449
        %6451 = vdwg.mxu0
        %6452 = vmatprep.subr.bf16.mxu0 0
        %6453 = vmatpush1.bf16.msra.mxu0 %v6327
        %6454 = vmatprep.subr.bf16.mxu0 0
        %6455 = vmatpush1.bf16.msra.mxu0 %v6333
        %6456 = vmatprep.subr.bf16.mxu0 0
        %6457 = vmatpush1.bf16.msra.mxu0 %v6339
        %6458 = vmatprep.subr.bf16.mxu0 0
        %6459 = vmatpush1.bf16.msra.mxu0 %v6345
        %6460 = vmatprep.subr.bf16.mxu0 0
        %6461 = vmatpush1.bf16.msra.mxu0 0
        %6462 = vmatprep.subr.bf16.mxu0 0
        %6463 = vmatpush1.bf16.msra.mxu0 0
        %6464 = vmatprep.subr.bf16.mxu0 0
        %6465 = vmatpush1.bf16.msra.mxu0 0
        %6466 = vmatprep.subr.bf16.mxu0 0
        %6467 = vmatpush1.bf16.msra.mxu0 0
        %6468 = vmatprep.subr.bf16.mxu0 0
        %6469 = vmatpush1.bf16.msra.mxu0 0
        %6470 = vmatprep.subr.bf16.mxu0 0
        %6471 = vmatpush1.bf16.msra.mxu0 0
        %6472 = vmatprep.subr.bf16.mxu0 0
        %6473 = vmatpush1.bf16.msra.mxu0 0
        %6474 = vmatprep.subr.bf16.mxu0 0
        %6475 = vmatpush1.bf16.msra.mxu0 0
        %6476 = vmatprep.subr.bf16.mxu0 0
        %6477 = vmatpush1.bf16.msra.mxu0 0
        %6478 = vmatprep.subr.bf16.mxu0 0
        %6479 = vmatpush1.bf16.msra.mxu0 0
        %6480 = vmatprep.subr.bf16.mxu0 0
        %6481 = vmatpush1.bf16.msra.mxu0 0
        %6482 = vmatprep.subr.bf16.mxu0 0
        %6483 = vmatpush1.bf16.msra.mxu0 0
        %6484 = vmatprep.mubr.bf16.mxu0 0
        %6485 = vmatmul.mubr.bf16.gmra.mrb[0].mxu0 %v6368
        %v6486 = vpop.f32.mrb[0].mxu0
        %v6487 = vadd.f32 0.0, %v6486
        %v6488 = vpop.f32.mrb[0].mxu0
        %v6489 = vpop.f32.mrb[0].mxu0
        %v6490 = vadd.f32 0.0, %v6489
        %v6491 = vpop.f32.mrb[0].mxu0
        %6492 = vmatprep.mubr.bf16.mxu0 0
        %6493 = vmatmul.mubr.bf16.gmra.mrb[0].mxu0 %v6371
        %v6494 = vpop.f32.mrb[0].mxu0
        %v6495 = vadd.f32 0.0, %v6494
        %v6496 = vpop.f32.mrb[0].mxu0
        %v6497 = vpop.f32.mrb[0].mxu0
        %v6498 = vadd.f32 0.0, %v6497
        %v6499 = vpop.f32.mrb[0].mxu0
        %6500 = vmatprep.mubr.bf16.mxu0 0
        %6501 = vmatmul.mubr.bf16.gmra.mrb[0].mxu0 %v6374
        %v6502 = vpop.f32.mrb[0].mxu0
        %v6503 = vadd.f32 0.0, %v6502
        %v6504 = vpop.f32.mrb[0].mxu0
        %v6505 = vpop.f32.mrb[0].mxu0
        %v6506 = vadd.f32 0.0, %v6505
        %v6507 = vpop.f32.mrb[0].mxu0
        %6508 = vmatprep.mubr.bf16.mxu0 0
        %6509 = vmatmul.mubr.bf16.gmra.mrb[0].mxu0 %v6377
        %v6510 = vpop.f32.mrb[0].mxu0
        %v6511 = vadd.f32 0.0, %v6510
        %v6512 = vpop.f32.mrb[0].mxu0
        %v6513 = vpop.f32.mrb[0].mxu0
        %v6514 = vadd.f32 0.0, %v6513
        %v6515 = vpop.f32.mrb[0].mxu0
        %6516 = vdwg.mxu0
        %v6517 = vadd.f32 %v6269, %v6414
        %v6518 = vadd.f32 %v6270, %v6416
        %v6519 = vadd.f32 %v6271, %v6487
        %v6520 = vadd.f32 %v6272, %v6418
        %v6521 = vadd.f32 %v6273, %v6420
        %v6522 = vadd.f32 %v6274, %v6490
        %v6523 = vadd.f32 %v6275, %v6424
        %v6524 = vadd.f32 %v6276, %v6426
        %v6525 = vadd.f32 %v6277, %v6495
        %v6526 = vadd.f32 %v6278, %v6428
        %v6527 = vadd.f32 %v6279, %v6430
        %v6528 = vadd.f32 %v6280, %v6498
        %v6529 = vadd.f32 %v6281, %v6434
        %v6530 = vadd.f32 %v6282, %v6436
        %v6531 = vadd.f32 %v6283, %v6503
        %v6532 = vadd.f32 %v6284, %v6438
        %v6533 = vadd.f32 %v6285, %v6440
        %v6534 = vadd.f32 %v6286, %v6506
        %v6535 = vadd.f32 %v6287, %v6444
        %v6536 = vadd.f32 %v6288, %v6446
        %v6537 = vadd.f32 %v6289, %v6511
        %v6538 = vadd.f32 %v6290, %v6448
        %v6539 = vadd.f32 %v6291, %v6450
        %v6540 = vadd.f32 %v6292, %v6514
        %s6541 = scalar_lea.vmem %s4, 128
        %v6542 = vld [vmem:[%s6541] sm:$0xf]
        %v6543 = vld [vmem:[%s6541 + $0x4] sm:$0xf]
        %v6544 = vld [vmem:[%s6541 + $0x8] sm:$0xf]
        %v6545 = vld [vmem:[%s6541 + $0xc] sm:$0xf]
        %v6546 = vld [vmem:[%s6541 + $0x10] sm:$0xf]
        %v6547 = vld [vmem:[%s6541 + $0x14] sm:$0xf]
        %v6548 = vld [vmem:[%s6541 + $0x18] sm:$0xf]
        %v6549 = vld [vmem:[%s6541 + $0x1c] sm:$0xf]
        %v6558 = vunpack.c.l.b16 %v6542
        %v6559 = vunpack.c.l.b16 %v6543
        %v6560 = vunpack.c.l.b16 %v6544
        %v6561 = vunpack.c.l.b16 %v6545
        %v6562 = vunpack.c.l.b16 %v6546
        %v6563 = vunpack.c.l.b16 %v6547
        %v6564 = vunpack.c.l.b16 %v6548
        %v6565 = vunpack.c.l.b16 %v6549
        %v6566 = vpack.c.b16 %v6559, %v6558
        %v6567 = vpack.c.b16 %v6561, %v6560
        %v6568 = vpack.c.b16 %v6563, %v6562
        %v6569 = vpack.c.b16 %v6565, %v6564
        %6570 = vrot.lane.b32.xlu0 %v5574, 86
        %v6571 = vpop.permute.xlu0 %6570
        %6572 = vrot.lane.b32.xlu0 %v5575, 86
        %v6573 = vpop.permute.xlu0 %6572
        %6574 = vrot.lane.b32.xlu0 %v5576, 86
        %v6575 = vpop.permute.xlu0 %6574
        %6576 = vrot.lane.b32.xlu0 %v5577, 86
        %v6577 = vpop.permute.xlu0 %6576
        %6578 = vrot.lane.b32.xlu0 %v5578, 86
        %v6579 = vpop.permute.xlu0 %6578
        %6580 = vrot.lane.b32.xlu0 %v5579, 86
        %v6581 = vpop.permute.xlu0 %6580
        %6582 = vrot.lane.b32.xlu0 %v5580, 86
        %v6583 = vpop.permute.xlu0 %6582
        %6584 = vrot.lane.b32.xlu0 %v5581, 86
        %v6585 = vpop.permute.xlu0 %6584
        %6586 = vrot.lane.b32.xlu0 %v5582, 86
        %v6587 = vpop.permute.xlu0 %6586
        %6588 = vrot.lane.b32.xlu0 %v5583, 86
        %v6589 = vpop.permute.xlu0 %6588
        %6590 = vrot.lane.b32.xlu0 %v5584, 86
        %v6591 = vpop.permute.xlu0 %6590
        %6592 = vrot.lane.b32.xlu0 %v5585, 86
        %v6593 = vpop.permute.xlu0 %6592
        %vm6594 = vcmask 703488
        %v6595 = vsel %vm6594, %v6571, %v6573
        %v6596 = vsel %vm6594, %v6573, %v6575
        %v6597 = vsel %vm6594, %v6577, %v6579
        %v6598 = vsel %vm6594, %v6579, %v6581
        %v6599 = vsel %vm6594, %v6583, %v6585
        %v6600 = vsel %vm6594, %v6585, %v6587
        %v6601 = vsel %vm6594, %v6589, %v6591
        %v6602 = vsel %vm6594, %v6591, %v6593
        %v6616 = vsel %vm4088, %v6566, 0
        %v6619 = vsel %vm4088, %v6567, 0
        %v6622 = vsel %vm4088, %v6568, 0
        %v6625 = vsel %vm4088, %v6569, 0
        %6627 = vmatprep.subr.bf16.mxu0 %v6596
        %6628 = vmatpush1.bf16.msra.mxu0 %v6595
        %6629 = vmatprep.subr.bf16.mxu0 %v6598
        %6630 = vmatpush1.bf16.msra.mxu0 %v6597
        %6631 = vmatprep.subr.bf16.mxu0 %v6600
        %6632 = vmatpush1.bf16.msra.mxu0 %v6599
        %6633 = vmatprep.subr.bf16.mxu0 %v6602
        %6634 = vmatpush1.bf16.msra.mxu0 %v6601
        %6635 = vmatprep.subr.bf16.mxu0 0
        %6636 = vmatpush1.bf16.msra.mxu0 0
        %6637 = vmatprep.subr.bf16.mxu0 0
        %6638 = vmatpush1.bf16.msra.mxu0 0
        %6639 = vmatprep.subr.bf16.mxu0 0
        %6640 = vmatpush1.bf16.msra.mxu0 0
        %6641 = vmatprep.subr.bf16.mxu0 0
        %6642 = vmatpush1.bf16.msra.mxu0 0
        %6643 = vmatprep.subr.bf16.mxu0 0
        %6644 = vmatpush1.bf16.msra.mxu0 0
        %6645 = vmatprep.subr.bf16.mxu0 0
        %6646 = vmatpush1.bf16.msra.mxu0 0
        %6647 = vmatprep.subr.bf16.mxu0 0
        %6648 = vmatpush1.bf16.msra.mxu0 0
        %6649 = vmatprep.subr.bf16.mxu0 0
        %6650 = vmatpush1.bf16.msra.mxu0 0
        %6651 = vmatprep.subr.bf16.mxu0 0
        %6652 = vmatpush1.bf16.msra.mxu0 0
        %6653 = vmatprep.subr.bf16.mxu0 0
        %6654 = vmatpush1.bf16.msra.mxu0 0
        %6655 = vmatprep.subr.bf16.mxu0 0
        %6656 = vmatpush1.bf16.msra.mxu0 0
        %6657 = vmatprep.subr.bf16.mxu0 0
        %6658 = vmatpush1.bf16.msra.mxu0 0
        %6659 = vmatprep.mubr.bf16.mxu0 0
        %6660 = vmatmul.mubr.bf16.gmra.mrb[0].mxu0 %v6616
        %v6661 = vpop.f32.mrb[0].mxu0
        %v6662 = vadd.f32 0.0, %v6661
        %v6663 = vpop.f32.mrb[0].mxu0
        %v6664 = vadd.f32 0.0, %v6663
        %v6665 = vpop.f32.mrb[0].mxu0
        %v6666 = vadd.f32 0.0, %v6665
        %v6667 = vpop.f32.mrb[0].mxu0
        %v6668 = vadd.f32 0.0, %v6667
        %6669 = vmatprep.mubr.bf16.mxu0 0
        %6670 = vmatmul.mubr.bf16.gmra.mrb[0].mxu0 %v6619
        %v6671 = vpop.f32.mrb[0].mxu0
        %v6672 = vadd.f32 0.0, %v6671
        %v6673 = vpop.f32.mrb[0].mxu0
        %v6674 = vadd.f32 0.0, %v6673
        %v6675 = vpop.f32.mrb[0].mxu0
        %v6676 = vadd.f32 0.0, %v6675
        %v6677 = vpop.f32.mrb[0].mxu0
        %v6678 = vadd.f32 0.0, %v6677
        %6679 = vmatprep.mubr.bf16.mxu0 0
        %6680 = vmatmul.mubr.bf16.gmra.mrb[0].mxu0 %v6622
        %v6681 = vpop.f32.mrb[0].mxu0
        %v6682 = vadd.f32 0.0, %v6681
        %v6683 = vpop.f32.mrb[0].mxu0
        %v6684 = vadd.f32 0.0, %v6683
        %v6685 = vpop.f32.mrb[0].mxu0
        %v6686 = vadd.f32 0.0, %v6685
        %v6687 = vpop.f32.mrb[0].mxu0
        %v6688 = vadd.f32 0.0, %v6687
        %6689 = vmatprep.mubr.bf16.mxu0 0
        %6690 = vmatmul.mubr.bf16.gmra.mrb[0].mxu0 %v6625
        %v6691 = vpop.f32.mrb[0].mxu0
        %v6692 = vadd.f32 0.0, %v6691
        %v6693 = vpop.f32.mrb[0].mxu0
        %v6694 = vadd.f32 0.0, %v6693
        %v6695 = vpop.f32.mrb[0].mxu0
        %v6696 = vadd.f32 0.0, %v6695
        %v6697 = vpop.f32.mrb[0].mxu0
        %v6698 = vadd.f32 0.0, %v6697
        %6699 = vdwg.mxu0
        %6700 = vmatprep.subr.bf16.mxu0 0
        %6701 = vmatpush1.bf16.msra.mxu0 %v6575
        %6702 = vmatprep.subr.bf16.mxu0 0
        %6703 = vmatpush1.bf16.msra.mxu0 %v6581
        %6704 = vmatprep.subr.bf16.mxu0 0
        %6705 = vmatpush1.bf16.msra.mxu0 %v6587
        %6706 = vmatprep.subr.bf16.mxu0 0
        %6707 = vmatpush1.bf16.msra.mxu0 %v6593
        %6708 = vmatprep.subr.bf16.mxu0 0
        %6709 = vmatpush1.bf16.msra.mxu0 0
        %6710 = vmatprep.subr.bf16.mxu0 0
        %6711 = vmatpush1.bf16.msra.mxu0 0
        %6712 = vmatprep.subr.bf16.mxu0 0
        %6713 = vmatpush1.bf16.msra.mxu0 0
        %6714 = vmatprep.subr.bf16.mxu0 0
        %6715 = vmatpush1.bf16.msra.mxu0 0
        %6716 = vmatprep.subr.bf16.mxu0 0
        %6717 = vmatpush1.bf16.msra.mxu0 0
        %6718 = vmatprep.subr.bf16.mxu0 0
        %6719 = vmatpush1.bf16.msra.mxu0 0
        %6720 = vmatprep.subr.bf16.mxu0 0
        %6721 = vmatpush1.bf16.msra.mxu0 0
        %6722 = vmatprep.subr.bf16.mxu0 0
        %6723 = vmatpush1.bf16.msra.mxu0 0
        %6724 = vmatprep.subr.bf16.mxu0 0
        %6725 = vmatpush1.bf16.msra.mxu0 0
        %6726 = vmatprep.subr.bf16.mxu0 0
        %6727 = vmatpush1.bf16.msra.mxu0 0
        %6728 = vmatprep.subr.bf16.mxu0 0
        %6729 = vmatpush1.bf16.msra.mxu0 0
        %6730 = vmatprep.subr.bf16.mxu0 0
        %6731 = vmatpush1.bf16.msra.mxu0 0
        %6732 = vmatprep.mubr.bf16.mxu0 0
        %6733 = vmatmul.mubr.bf16.gmra.mrb[0].mxu0 %v6616
        %v6734 = vpop.f32.mrb[0].mxu0
        %v6735 = vadd.f32 0.0, %v6734
        %v6736 = vpop.f32.mrb[0].mxu0
        %v6737 = vpop.f32.mrb[0].mxu0
        %v6738 = vadd.f32 0.0, %v6737
        %v6739 = vpop.f32.mrb[0].mxu0
        %6740 = vmatprep.mubr.bf16.mxu0 0
        %6741 = vmatmul.mubr.bf16.gmra.mrb[0].mxu0 %v6619
        %v6742 = vpop.f32.mrb[0].mxu0
        %v6743 = vadd.f32 0.0, %v6742
        %v6744 = vpop.f32.mrb[0].mxu0
        %v6745 = vpop.f32.mrb[0].mxu0
        %v6746 = vadd.f32 0.0, %v6745
        %v6747 = vpop.f32.mrb[0].mxu0
        %6748 = vmatprep.mubr.bf16.mxu0 0
        %6749 = vmatmul.mubr.bf16.gmra.mrb[0].mxu0 %v6622
        %v6750 = vpop.f32.mrb[0].mxu0
        %v6751 = vadd.f32 0.0, %v6750
        %v6752 = vpop.f32.mrb[0].mxu0
        %v6753 = vpop.f32.mrb[0].mxu0
        %v6754 = vadd.f32 0.0, %v6753
        %v6755 = vpop.f32.mrb[0].mxu0
        %6756 = vmatprep.mubr.bf16.mxu0 0
        %6757 = vmatmul.mubr.bf16.gmra.mrb[0].mxu0 %v6625
        %v6758 = vpop.f32.mrb[0].mxu0
        %v6759 = vadd.f32 0.0, %v6758
        %v6760 = vpop.f32.mrb[0].mxu0
        %v6761 = vpop.f32.mrb[0].mxu0
        %v6762 = vadd.f32 0.0, %v6761
        %v6763 = vpop.f32.mrb[0].mxu0
        %6764 = vdwg.mxu0
        %v6765 = vadd.f32 %v6517, %v6662
        %v6766 = vadd.f32 %v6518, %v6664
        %v6767 = vadd.f32 %v6519, %v6735
        %v6768 = vadd.f32 %v6520, %v6666
        %v6769 = vadd.f32 %v6521, %v6668
        %v6770 = vadd.f32 %v6522, %v6738
        %v6771 = vadd.f32 %v6523, %v6672
        %v6772 = vadd.f32 %v6524, %v6674
        %v6773 = vadd.f32 %v6525, %v6743
        %v6774 = vadd.f32 %v6526, %v6676
        %v6775 = vadd.f32 %v6527, %v6678
        %v6776 = vadd.f32 %v6528, %v6746
        %v6777 = vadd.f32 %v6529, %v6682
        %v6778 = vadd.f32 %v6530, %v6684
        %v6779 = vadd.f32 %v6531, %v6751
        %v6780 = vadd.f32 %v6532, %v6686
        %v6781 = vadd.f32 %v6533, %v6688
        %v6782 = vadd.f32 %v6534, %v6754
        %v6783 = vadd.f32 %v6535, %v6692
        %v6784 = vadd.f32 %v6536, %v6694
        %v6785 = vadd.f32 %v6537, %v6759
        %v6786 = vadd.f32 %v6538, %v6696
        %v6787 = vadd.f32 %v6539, %v6698
        %v6788 = vadd.f32 %v6540, %v6762
        %s6789 = scalar_lea.vmem %s4, 160
        %v6790 = vld [vmem:[%s6789] sm:$0xf]
        %v6791 = vld [vmem:[%s6789 + $0x4] sm:$0xf]
        %v6792 = vld [vmem:[%s6789 + $0x8] sm:$0xf]
        %v6793 = vld [vmem:[%s6789 + $0xc] sm:$0xf]
        %v6794 = vld [vmem:[%s6789 + $0x10] sm:$0xf]
        %v6795 = vld [vmem:[%s6789 + $0x14] sm:$0xf]
        %v6796 = vld [vmem:[%s6789 + $0x18] sm:$0xf]
        %v6797 = vld [vmem:[%s6789 + $0x1c] sm:$0xf]
        %v6806 = vunpack.c.l.b16 %v6790
        %v6807 = vunpack.c.l.b16 %v6791
        %v6808 = vunpack.c.l.b16 %v6792
        %v6809 = vunpack.c.l.b16 %v6793
        %v6810 = vunpack.c.l.b16 %v6794
        %v6811 = vunpack.c.l.b16 %v6795
        %v6812 = vunpack.c.l.b16 %v6796
        %v6813 = vunpack.c.l.b16 %v6797
        %v6814 = vpack.c.b16 %v6807, %v6806
        %v6815 = vpack.c.b16 %v6809, %v6808
        %v6816 = vpack.c.b16 %v6811, %v6810
        %v6817 = vpack.c.b16 %v6813, %v6812
        %6818 = vrot.lane.b32.xlu0 %v5574, 85
        %v6819 = vpop.permute.xlu0 %6818
        %6820 = vrot.lane.b32.xlu0 %v5575, 85
        %v6821 = vpop.permute.xlu0 %6820
        %6822 = vrot.lane.b32.xlu0 %v5576, 85
        %v6823 = vpop.permute.xlu0 %6822
        %6824 = vrot.lane.b32.xlu0 %v5577, 85
        %v6825 = vpop.permute.xlu0 %6824
        %6826 = vrot.lane.b32.xlu0 %v5578, 85
        %v6827 = vpop.permute.xlu0 %6826
        %6828 = vrot.lane.b32.xlu0 %v5579, 85
        %v6829 = vpop.permute.xlu0 %6828
        %6830 = vrot.lane.b32.xlu0 %v5580, 85
        %v6831 = vpop.permute.xlu0 %6830
        %6832 = vrot.lane.b32.xlu0 %v5581, 85
        %v6833 = vpop.permute.xlu0 %6832
        %6834 = vrot.lane.b32.xlu0 %v5582, 85
        %v6835 = vpop.permute.xlu0 %6834
        %6836 = vrot.lane.b32.xlu0 %v5583, 85
        %v6837 = vpop.permute.xlu0 %6836
        %6838 = vrot.lane.b32.xlu0 %v5584, 85
        %v6839 = vpop.permute.xlu0 %6838
        %6840 = vrot.lane.b32.xlu0 %v5585, 85
        %v6841 = vpop.permute.xlu0 %6840
        %vm6842 = vcmask 695296
        %v6843 = vsel %vm6842, %v6819, %v6821
        %v6844 = vsel %vm6842, %v6821, %v6823
        %v6845 = vsel %vm6842, %v6825, %v6827
        %v6846 = vsel %vm6842, %v6827, %v6829
        %v6847 = vsel %vm6842, %v6831, %v6833
        %v6848 = vsel %vm6842, %v6833, %v6835
        %v6849 = vsel %vm6842, %v6837, %v6839
        %v6850 = vsel %vm6842, %v6839, %v6841
        %v6864 = vsel %vm4088, %v6814, 0
        %v6867 = vsel %vm4088, %v6815, 0
        %v6870 = vsel %vm4088, %v6816, 0
        %v6873 = vsel %vm4088, %v6817, 0
        %6875 = vmatprep.subr.bf16.mxu0 %v6844
        %6876 = vmatpush1.bf16.msra.mxu0 %v6843
        %6877 = vmatprep.subr.bf16.mxu0 %v6846
        %6878 = vmatpush1.bf16.msra.mxu0 %v6845
        %6879 = vmatprep.subr.bf16.mxu0 %v6848
        %6880 = vmatpush1.bf16.msra.mxu0 %v6847
        %6881 = vmatprep.subr.bf16.mxu0 %v6850
        %6882 = vmatpush1.bf16.msra.mxu0 %v6849
        %6883 = vmatprep.subr.bf16.mxu0 0
        %6884 = vmatpush1.bf16.msra.mxu0 0
        %6885 = vmatprep.subr.bf16.mxu0 0
        %6886 = vmatpush1.bf16.msra.mxu0 0
        %6887 = vmatprep.subr.bf16.mxu0 0
        %6888 = vmatpush1.bf16.msra.mxu0 0
        %6889 = vmatprep.subr.bf16.mxu0 0
        %6890 = vmatpush1.bf16.msra.mxu0 0
        %6891 = vmatprep.subr.bf16.mxu0 0
        %6892 = vmatpush1.bf16.msra.mxu0 0
        %6893 = vmatprep.subr.bf16.mxu0 0
        %6894 = vmatpush1.bf16.msra.mxu0 0
        %6895 = vmatprep.subr.bf16.mxu0 0
        %6896 = vmatpush1.bf16.msra.mxu0 0
        %6897 = vmatprep.subr.bf16.mxu0 0
        %6898 = vmatpush1.bf16.msra.mxu0 0
        %6899 = vmatprep.subr.bf16.mxu0 0
        %6900 = vmatpush1.bf16.msra.mxu0 0
        %6901 = vmatprep.subr.bf16.mxu0 0
        %6902 = vmatpush1.bf16.msra.mxu0 0
        %6903 = vmatprep.subr.bf16.mxu0 0
        %6904 = vmatpush1.bf16.msra.mxu0 0
        %6905 = vmatprep.subr.bf16.mxu0 0
        %6906 = vmatpush1.bf16.msra.mxu0 0
        %6907 = vmatprep.mubr.bf16.mxu0 0
        %6908 = vmatmul.mubr.bf16.gmra.mrb[0].mxu0 %v6864
        %v6909 = vpop.f32.mrb[0].mxu0
        %v6910 = vadd.f32 0.0, %v6909
        %v6911 = vpop.f32.mrb[0].mxu0
        %v6912 = vadd.f32 0.0, %v6911
        %v6913 = vpop.f32.mrb[0].mxu0
        %v6914 = vadd.f32 0.0, %v6913
        %v6915 = vpop.f32.mrb[0].mxu0
        %v6916 = vadd.f32 0.0, %v6915
        %6917 = vmatprep.mubr.bf16.mxu0 0
        %6918 = vmatmul.mubr.bf16.gmra.mrb[0].mxu0 %v6867
        %v6919 = vpop.f32.mrb[0].mxu0
        %v6920 = vadd.f32 0.0, %v6919
        %v6921 = vpop.f32.mrb[0].mxu0
        %v6922 = vadd.f32 0.0, %v6921
        %v6923 = vpop.f32.mrb[0].mxu0
        %v6924 = vadd.f32 0.0, %v6923
        %v6925 = vpop.f32.mrb[0].mxu0
        %v6926 = vadd.f32 0.0, %v6925
        %6927 = vmatprep.mubr.bf16.mxu0 0
        %6928 = vmatmul.mubr.bf16.gmra.mrb[0].mxu0 %v6870
        %v6929 = vpop.f32.mrb[0].mxu0
        %v6930 = vadd.f32 0.0, %v6929
        %v6931 = vpop.f32.mrb[0].mxu0
        %v6932 = vadd.f32 0.0, %v6931
        %v6933 = vpop.f32.mrb[0].mxu0
        %v6934 = vadd.f32 0.0, %v6933
        %v6935 = vpop.f32.mrb[0].mxu0
        %v6936 = vadd.f32 0.0, %v6935
        %6937 = vmatprep.mubr.bf16.mxu0 0
        %6938 = vmatmul.mubr.bf16.gmra.mrb[0].mxu0 %v6873
        %v6939 = vpop.f32.mrb[0].mxu0
        %v6940 = vadd.f32 0.0, %v6939
        %v6941 = vpop.f32.mrb[0].mxu0
        %v6942 = vadd.f32 0.0, %v6941
        %v6943 = vpop.f32.mrb[0].mxu0
        %v6944 = vadd.f32 0.0, %v6943
        %v6945 = vpop.f32.mrb[0].mxu0
        %v6946 = vadd.f32 0.0, %v6945
        %6947 = vdwg.mxu0
        %6948 = vmatprep.subr.bf16.mxu0 0
        %6949 = vmatpush1.bf16.msra.mxu0 %v6823
        %6950 = vmatprep.subr.bf16.mxu0 0
        %6951 = vmatpush1.bf16.msra.mxu0 %v6829
        %6952 = vmatprep.subr.bf16.mxu0 0
        %6953 = vmatpush1.bf16.msra.mxu0 %v6835
        %6954 = vmatprep.subr.bf16.mxu0 0
        %6955 = vmatpush1.bf16.msra.mxu0 %v6841
        %6956 = vmatprep.subr.bf16.mxu0 0
        %6957 = vmatpush1.bf16.msra.mxu0 0
        %6958 = vmatprep.subr.bf16.mxu0 0
        %6959 = vmatpush1.bf16.msra.mxu0 0
        %6960 = vmatprep.subr.bf16.mxu0 0
        %6961 = vmatpush1.bf16.msra.mxu0 0
        %6962 = vmatprep.subr.bf16.mxu0 0
        %6963 = vmatpush1.bf16.msra.mxu0 0
        %6964 = vmatprep.subr.bf16.mxu0 0
        %6965 = vmatpush1.bf16.msra.mxu0 0
        %6966 = vmatprep.subr.bf16.mxu0 0
        %6967 = vmatpush1.bf16.msra.mxu0 0
        %6968 = vmatprep.subr.bf16.mxu0 0
        %6969 = vmatpush1.bf16.msra.mxu0 0
        %6970 = vmatprep.subr.bf16.mxu0 0
        %6971 = vmatpush1.bf16.msra.mxu0 0
        %6972 = vmatprep.subr.bf16.mxu0 0
        %6973 = vmatpush1.bf16.msra.mxu0 0
        %6974 = vmatprep.subr.bf16.mxu0 0
        %6975 = vmatpush1.bf16.msra.mxu0 0
        %6976 = vmatprep.subr.bf16.mxu0 0
        %6977 = vmatpush1.bf16.msra.mxu0 0
        %6978 = vmatprep.subr.bf16.mxu0 0
        %6979 = vmatpush1.bf16.msra.mxu0 0
        %6980 = vmatprep.mubr.bf16.mxu0 0
        %6981 = vmatmul.mubr.bf16.gmra.mrb[0].mxu0 %v6864
        %v6982 = vpop.f32.mrb[0].mxu0
        %v6983 = vadd.f32 0.0, %v6982
        %v6984 = vpop.f32.mrb[0].mxu0
        %v6985 = vpop.f32.mrb[0].mxu0
        %v6986 = vadd.f32 0.0, %v6985
        %v6987 = vpop.f32.mrb[0].mxu0
        %6988 = vmatprep.mubr.bf16.mxu0 0
        %6989 = vmatmul.mubr.bf16.gmra.mrb[0].mxu0 %v6867
        %v6990 = vpop.f32.mrb[0].mxu0
        %v6991 = vadd.f32 0.0, %v6990
        %v6992 = vpop.f32.mrb[0].mxu0
        %v6993 = vpop.f32.mrb[0].mxu0
        %v6994 = vadd.f32 0.0, %v6993
        %v6995 = vpop.f32.mrb[0].mxu0
        %6996 = vmatprep.mubr.bf16.mxu0 0
        %6997 = vmatmul.mubr.bf16.gmra.mrb[0].mxu0 %v6870
        %v6998 = vpop.f32.mrb[0].mxu0
        %v6999 = vadd.f32 0.0, %v6998
        %v7000 = vpop.f32.mrb[0].mxu0
        %v7001 = vpop.f32.mrb[0].mxu0
        %v7002 = vadd.f32 0.0, %v7001
        %v7003 = vpop.f32.mrb[0].mxu0
        %7004 = vmatprep.mubr.bf16.mxu0 0
        %7005 = vmatmul.mubr.bf16.gmra.mrb[0].mxu0 %v6873
        %v7006 = vpop.f32.mrb[0].mxu0
        %v7007 = vadd.f32 0.0, %v7006
        %v7008 = vpop.f32.mrb[0].mxu0
        %v7009 = vpop.f32.mrb[0].mxu0
        %v7010 = vadd.f32 0.0, %v7009
        %v7011 = vpop.f32.mrb[0].mxu0
        %7012 = vdwg.mxu0
        %v7013 = vadd.f32 %v6765, %v6910
        %v7014 = vadd.f32 %v6766, %v6912
        %v7015 = vadd.f32 %v6767, %v6983
        %v7016 = vadd.f32 %v6768, %v6914
        %v7017 = vadd.f32 %v6769, %v6916
        %v7018 = vadd.f32 %v6770, %v6986
        %v7019 = vadd.f32 %v6771, %v6920
        %v7020 = vadd.f32 %v6772, %v6922
        %v7021 = vadd.f32 %v6773, %v6991
        %v7022 = vadd.f32 %v6774, %v6924
        %v7023 = vadd.f32 %v6775, %v6926
        %v7024 = vadd.f32 %v6776, %v6994
        %v7025 = vadd.f32 %v6777, %v6930
        %v7026 = vadd.f32 %v6778, %v6932
        %v7027 = vadd.f32 %v6779, %v6999
        %v7028 = vadd.f32 %v6780, %v6934
        %v7029 = vadd.f32 %v6781, %v6936
        %v7030 = vadd.f32 %v6782, %v7002
        %v7031 = vadd.f32 %v6783, %v6940
        %v7032 = vadd.f32 %v6784, %v6942
        %v7033 = vadd.f32 %v6785, %v7007
        %v7034 = vadd.f32 %v6786, %v6944
        %v7035 = vadd.f32 %v6787, %v6946
        %v7036 = vadd.f32 %v6788, %v7010
        %s7037 = scalar_lea.vmem %s4, 192
        %v7038 = vld [vmem:[%s7037] sm:$0xf]
        %v7039 = vld [vmem:[%s7037 + $0x4] sm:$0xf]
        %v7040 = vld [vmem:[%s7037 + $0x8] sm:$0xf]
        %v7041 = vld [vmem:[%s7037 + $0xc] sm:$0xf]
        %v7042 = vld [vmem:[%s7037 + $0x10] sm:$0xf]
        %v7043 = vld [vmem:[%s7037 + $0x14] sm:$0xf]
        %v7044 = vld [vmem:[%s7037 + $0x18] sm:$0xf]
        %v7045 = vld [vmem:[%s7037 + $0x1c] sm:$0xf]
        %v7054 = vunpack.c.l.b16 %v7038
        %v7055 = vunpack.c.l.b16 %v7039
        %v7056 = vunpack.c.l.b16 %v7040
        %v7057 = vunpack.c.l.b16 %v7041
        %v7058 = vunpack.c.l.b16 %v7042
        %v7059 = vunpack.c.l.b16 %v7043
        %v7060 = vunpack.c.l.b16 %v7044
        %v7061 = vunpack.c.l.b16 %v7045
        %v7062 = vpack.c.b16 %v7055, %v7054
        %v7063 = vpack.c.b16 %v7057, %v7056
        %v7064 = vpack.c.b16 %v7059, %v7058
        %v7065 = vpack.c.b16 %v7061, %v7060
        %7066 = vrot.lane.b32.xlu0 %v5574, 67
        %v7067 = vpop.permute.xlu0 %7066
        %7068 = vrot.lane.b32.xlu0 %v5575, 67
        %v7069 = vpop.permute.xlu0 %7068
        %7070 = vrot.lane.b32.xlu0 %v5576, 67
        %v7071 = vpop.permute.xlu0 %7070
        %7072 = vrot.lane.b32.xlu0 %v5577, 67
        %v7073 = vpop.permute.xlu0 %7072
        %7074 = vrot.lane.b32.xlu0 %v5578, 67
        %v7075 = vpop.permute.xlu0 %7074
        %7076 = vrot.lane.b32.xlu0 %v5579, 67
        %v7077 = vpop.permute.xlu0 %7076
        %7078 = vrot.lane.b32.xlu0 %v5580, 67
        %v7079 = vpop.permute.xlu0 %7078
        %7080 = vrot.lane.b32.xlu0 %v5581, 67
        %v7081 = vpop.permute.xlu0 %7080
        %7082 = vrot.lane.b32.xlu0 %v5582, 67
        %v7083 = vpop.permute.xlu0 %7082
        %7084 = vrot.lane.b32.xlu0 %v5583, 67
        %v7085 = vpop.permute.xlu0 %7084
        %7086 = vrot.lane.b32.xlu0 %v5584, 67
        %v7087 = vpop.permute.xlu0 %7086
        %7088 = vrot.lane.b32.xlu0 %v5585, 67
        %v7089 = vpop.permute.xlu0 %7088
        %vm7090 = vcmask 547840
        %v7091 = vsel %vm7090, %v7067, %v7069
        %v7092 = vsel %vm7090, %v7069, %v7071
        %v7093 = vsel %vm7090, %v7073, %v7075
        %v7094 = vsel %vm7090, %v7075, %v7077
        %v7095 = vsel %vm7090, %v7079, %v7081
        %v7096 = vsel %vm7090, %v7081, %v7083
        %v7097 = vsel %vm7090, %v7085, %v7087
        %v7098 = vsel %vm7090, %v7087, %v7089
        %v7112 = vsel %vm4088, %v7062, 0
        %v7115 = vsel %vm4088, %v7063, 0
        %v7118 = vsel %vm4088, %v7064, 0
        %v7121 = vsel %vm4088, %v7065, 0
        %7123 = vmatprep.subr.bf16.mxu0 %v7092
        %7124 = vmatpush1.bf16.msra.mxu0 %v7091
        %7125 = vmatprep.subr.bf16.mxu0 %v7094
        %7126 = vmatpush1.bf16.msra.mxu0 %v7093
        %7127 = vmatprep.subr.bf16.mxu0 %v7096
        %7128 = vmatpush1.bf16.msra.mxu0 %v7095
        %7129 = vmatprep.subr.bf16.mxu0 %v7098
        %7130 = vmatpush1.bf16.msra.mxu0 %v7097
        %7131 = vmatprep.subr.bf16.mxu0 0
        %7132 = vmatpush1.bf16.msra.mxu0 0
        %7133 = vmatprep.subr.bf16.mxu0 0
        %7134 = vmatpush1.bf16.msra.mxu0 0
        %7135 = vmatprep.subr.bf16.mxu0 0
        %7136 = vmatpush1.bf16.msra.mxu0 0
        %7137 = vmatprep.subr.bf16.mxu0 0
        %7138 = vmatpush1.bf16.msra.mxu0 0
        %7139 = vmatprep.subr.bf16.mxu0 0
        %7140 = vmatpush1.bf16.msra.mxu0 0
        %7141 = vmatprep.subr.bf16.mxu0 0
        %7142 = vmatpush1.bf16.msra.mxu0 0
        %7143 = vmatprep.subr.bf16.mxu0 0
        %7144 = vmatpush1.bf16.msra.mxu0 0
        %7145 = vmatprep.subr.bf16.mxu0 0
        %7146 = vmatpush1.bf16.msra.mxu0 0
        %7147 = vmatprep.subr.bf16.mxu0 0
        %7148 = vmatpush1.bf16.msra.mxu0 0
        %7149 = vmatprep.subr.bf16.mxu0 0
        %7150 = vmatpush1.bf16.msra.mxu0 0
        %7151 = vmatprep.subr.bf16.mxu0 0
        %7152 = vmatpush1.bf16.msra.mxu0 0
        %7153 = vmatprep.subr.bf16.mxu0 0
        %7154 = vmatpush1.bf16.msra.mxu0 0
        %7155 = vmatprep.mubr.bf16.mxu0 0
        %7156 = vmatmul.mubr.bf16.gmra.mrb[0].mxu0 %v7112
        %v7157 = vpop.f32.mrb[0].mxu0
        %v7158 = vadd.f32 0.0, %v7157
        %v7159 = vpop.f32.mrb[0].mxu0
        %v7160 = vadd.f32 0.0, %v7159
        %v7161 = vpop.f32.mrb[0].mxu0
        %v7162 = vadd.f32 0.0, %v7161
        %v7163 = vpop.f32.mrb[0].mxu0
        %v7164 = vadd.f32 0.0, %v7163
        %7165 = vmatprep.mubr.bf16.mxu0 0
        %7166 = vmatmul.mubr.bf16.gmra.mrb[0].mxu0 %v7115
        %v7167 = vpop.f32.mrb[0].mxu0
        %v7168 = vadd.f32 0.0, %v7167
        %v7169 = vpop.f32.mrb[0].mxu0
        %v7170 = vadd.f32 0.0, %v7169
        %v7171 = vpop.f32.mrb[0].mxu0
        %v7172 = vadd.f32 0.0, %v7171
        %v7173 = vpop.f32.mrb[0].mxu0
        %v7174 = vadd.f32 0.0, %v7173
        %7175 = vmatprep.mubr.bf16.mxu0 0
        %7176 = vmatmul.mubr.bf16.gmra.mrb[0].mxu0 %v7118
        %v7177 = vpop.f32.mrb[0].mxu0
        %v7178 = vadd.f32 0.0, %v7177
        %v7179 = vpop.f32.mrb[0].mxu0
        %v7180 = vadd.f32 0.0, %v7179
        %v7181 = vpop.f32.mrb[0].mxu0
        %v7182 = vadd.f32 0.0, %v7181
        %v7183 = vpop.f32.mrb[0].mxu0
        %v7184 = vadd.f32 0.0, %v7183
        %7185 = vmatprep.mubr.bf16.mxu0 0
        %7186 = vmatmul.mubr.bf16.gmra.mrb[0].mxu0 %v7121
        %v7187 = vpop.f32.mrb[0].mxu0
        %v7188 = vadd.f32 0.0, %v7187
        %v7189 = vpop.f32.mrb[0].mxu0
        %v7190 = vadd.f32 0.0, %v7189
        %v7191 = vpop.f32.mrb[0].mxu0
        %v7192 = vadd.f32 0.0, %v7191
        %v7193 = vpop.f32.mrb[0].mxu0
        %v7194 = vadd.f32 0.0, %v7193
        %7195 = vdwg.mxu0
        %7196 = vmatprep.subr.bf16.mxu0 0
        %7197 = vmatpush1.bf16.msra.mxu0 %v7071
        %7198 = vmatprep.subr.bf16.mxu0 0
        %7199 = vmatpush1.bf16.msra.mxu0 %v7077
        %7200 = vmatprep.subr.bf16.mxu0 0
        %7201 = vmatpush1.bf16.msra.mxu0 %v7083
        %7202 = vmatprep.subr.bf16.mxu0 0
        %7203 = vmatpush1.bf16.msra.mxu0 %v7089
        %7204 = vmatprep.subr.bf16.mxu0 0
        %7205 = vmatpush1.bf16.msra.mxu0 0
        %7206 = vmatprep.subr.bf16.mxu0 0
        %7207 = vmatpush1.bf16.msra.mxu0 0
        %7208 = vmatprep.subr.bf16.mxu0 0
        %7209 = vmatpush1.bf16.msra.mxu0 0
        %7210 = vmatprep.subr.bf16.mxu0 0
        %7211 = vmatpush1.bf16.msra.mxu0 0
        %7212 = vmatprep.subr.bf16.mxu0 0
        %7213 = vmatpush1.bf16.msra.mxu0 0
        %7214 = vmatprep.subr.bf16.mxu0 0
        %7215 = vmatpush1.bf16.msra.mxu0 0
        %7216 = vmatprep.subr.bf16.mxu0 0
        %7217 = vmatpush1.bf16.msra.mxu0 0
        %7218 = vmatprep.subr.bf16.mxu0 0
        %7219 = vmatpush1.bf16.msra.mxu0 0
        %7220 = vmatprep.subr.bf16.mxu0 0
        %7221 = vmatpush1.bf16.msra.mxu0 0
        %7222 = vmatprep.subr.bf16.mxu0 0
        %7223 = vmatpush1.bf16.msra.mxu0 0
        %7224 = vmatprep.subr.bf16.mxu0 0
        %7225 = vmatpush1.bf16.msra.mxu0 0
        %7226 = vmatprep.subr.bf16.mxu0 0
        %7227 = vmatpush1.bf16.msra.mxu0 0
        %7228 = vmatprep.mubr.bf16.mxu0 0
        %7229 = vmatmul.mubr.bf16.gmra.mrb[0].mxu0 %v7112
        %v7230 = vpop.f32.mrb[0].mxu0
        %v7231 = vadd.f32 0.0, %v7230
        %v7232 = vpop.f32.mrb[0].mxu0
        %v7233 = vpop.f32.mrb[0].mxu0
        %v7234 = vadd.f32 0.0, %v7233
        %v7235 = vpop.f32.mrb[0].mxu0
        %7236 = vmatprep.mubr.bf16.mxu0 0
        %7237 = vmatmul.mubr.bf16.gmra.mrb[0].mxu0 %v7115
        %v7238 = vpop.f32.mrb[0].mxu0
        %v7239 = vadd.f32 0.0, %v7238
        %v7240 = vpop.f32.mrb[0].mxu0
        %v7241 = vpop.f32.mrb[0].mxu0
        %v7242 = vadd.f32 0.0, %v7241
        %v7243 = vpop.f32.mrb[0].mxu0
        %7244 = vmatprep.mubr.bf16.mxu0 0
        %7245 = vmatmul.mubr.bf16.gmra.mrb[0].mxu0 %v7118
        %v7246 = vpop.f32.mrb[0].mxu0
        %v7247 = vadd.f32 0.0, %v7246
        %v7248 = vpop.f32.mrb[0].mxu0
        %v7249 = vpop.f32.mrb[0].mxu0
        %v7250 = vadd.f32 0.0, %v7249
        %v7251 = vpop.f32.mrb[0].mxu0
        %7252 = vmatprep.mubr.bf16.mxu0 0
        %7253 = vmatmul.mubr.bf16.gmra.mrb[0].mxu0 %v7121
        %v7254 = vpop.f32.mrb[0].mxu0
        %v7255 = vadd.f32 0.0, %v7254
        %v7256 = vpop.f32.mrb[0].mxu0
        %v7257 = vpop.f32.mrb[0].mxu0
        %v7258 = vadd.f32 0.0, %v7257
        %v7259 = vpop.f32.mrb[0].mxu0
        %7260 = vdwg.mxu0
        %v7261 = vadd.f32 %v7013, %v7158
        %v7262 = vadd.f32 %v7014, %v7160
        %v7263 = vadd.f32 %v7015, %v7231
        %v7264 = vadd.f32 %v7016, %v7162
        %v7265 = vadd.f32 %v7017, %v7164
        %v7266 = vadd.f32 %v7018, %v7234
        %v7267 = vadd.f32 %v7019, %v7168
        %v7268 = vadd.f32 %v7020, %v7170
        %v7269 = vadd.f32 %v7021, %v7239
        %v7270 = vadd.f32 %v7022, %v7172
        %v7271 = vadd.f32 %v7023, %v7174
        %v7272 = vadd.f32 %v7024, %v7242
        %v7273 = vadd.f32 %v7025, %v7178
        %v7274 = vadd.f32 %v7026, %v7180
        %v7275 = vadd.f32 %v7027, %v7247
        %v7276 = vadd.f32 %v7028, %v7182
        %v7277 = vadd.f32 %v7029, %v7184
        %v7278 = vadd.f32 %v7030, %v7250
        %v7279 = vadd.f32 %v7031, %v7188
        %v7280 = vadd.f32 %v7032, %v7190
        %v7281 = vadd.f32 %v7033, %v7255
        %v7282 = vadd.f32 %v7034, %v7192
        %v7283 = vadd.f32 %v7035, %v7194
        %v7284 = vadd.f32 %v7036, %v7258
        %s7285 = scalar_lea.vmem %s4, 224
        %v7286 = vld [vmem:[%s7285] sm:$0xf]
        %v7287 = vld [vmem:[%s7285 + $0x4] sm:$0xf]
        %v7288 = vld [vmem:[%s7285 + $0x8] sm:$0xf]
        %v7289 = vld [vmem:[%s7285 + $0xc] sm:$0xf]
        %v7290 = vld [vmem:[%s7285 + $0x10] sm:$0xf]
        %v7291 = vld [vmem:[%s7285 + $0x14] sm:$0xf]
        %v7292 = vld [vmem:[%s7285 + $0x18] sm:$0xf]
        %v7293 = vld [vmem:[%s7285 + $0x1c] sm:$0xf]
        %v7302 = vunpack.c.l.b16 %v7286
        %v7303 = vunpack.c.l.b16 %v7287
        %v7304 = vunpack.c.l.b16 %v7288
        %v7305 = vunpack.c.l.b16 %v7289
        %v7306 = vunpack.c.l.b16 %v7290
        %v7307 = vunpack.c.l.b16 %v7291
        %v7308 = vunpack.c.l.b16 %v7292
        %v7309 = vunpack.c.l.b16 %v7293
        %v7310 = vpack.c.b16 %v7303, %v7302
        %v7311 = vpack.c.b16 %v7305, %v7304
        %v7312 = vpack.c.b16 %v7307, %v7306
        %v7313 = vpack.c.b16 %v7309, %v7308
        %7314 = vrot.lane.b32.xlu0 %v5574, 66
        %v7315 = vpop.permute.xlu0 %7314
        %7316 = vrot.lane.b32.xlu0 %v5575, 66
        %v7317 = vpop.permute.xlu0 %7316
        %7318 = vrot.lane.b32.xlu0 %v5576, 66
        %v7319 = vpop.permute.xlu0 %7318
        %7320 = vrot.lane.b32.xlu0 %v5577, 66
        %v7321 = vpop.permute.xlu0 %7320
        %7322 = vrot.lane.b32.xlu0 %v5578, 66
        %v7323 = vpop.permute.xlu0 %7322
        %7324 = vrot.lane.b32.xlu0 %v5579, 66
        %v7325 = vpop.permute.xlu0 %7324
        %7326 = vrot.lane.b32.xlu0 %v5580, 66
        %v7327 = vpop.permute.xlu0 %7326
        %7328 = vrot.lane.b32.xlu0 %v5581, 66
        %v7329 = vpop.permute.xlu0 %7328
        %7330 = vrot.lane.b32.xlu0 %v5582, 66
        %v7331 = vpop.permute.xlu0 %7330
        %7332 = vrot.lane.b32.xlu0 %v5583, 66
        %v7333 = vpop.permute.xlu0 %7332
        %7334 = vrot.lane.b32.xlu0 %v5584, 66
        %v7335 = vpop.permute.xlu0 %7334
        %7336 = vrot.lane.b32.xlu0 %v5585, 66
        %v7337 = vpop.permute.xlu0 %7336
        %vm7338 = vcmask 539648
        %v7339 = vsel %vm7338, %v7315, %v7317
        %v7340 = vsel %vm7338, %v7317, %v7319
        %v7341 = vsel %vm7338, %v7321, %v7323
        %v7342 = vsel %vm7338, %v7323, %v7325
        %v7343 = vsel %vm7338, %v7327, %v7329
        %v7344 = vsel %vm7338, %v7329, %v7331
        %v7345 = vsel %vm7338, %v7333, %v7335
        %v7346 = vsel %vm7338, %v7335, %v7337
        %v7360 = vsel %vm4088, %v7310, 0
        %v7363 = vsel %vm4088, %v7311, 0
        %v7366 = vsel %vm4088, %v7312, 0
        %v7369 = vsel %vm4088, %v7313, 0
        %7371 = vmatprep.subr.bf16.mxu0 %v7340
        %7372 = vmatpush1.bf16.msra.mxu0 %v7339
        %7373 = vmatprep.subr.bf16.mxu0 %v7342
        %7374 = vmatpush1.bf16.msra.mxu0 %v7341
        %7375 = vmatprep.subr.bf16.mxu0 %v7344
        %7376 = vmatpush1.bf16.msra.mxu0 %v7343
        %7377 = vmatprep.subr.bf16.mxu0 %v7346
        %7378 = vmatpush1.bf16.msra.mxu0 %v7345
        %7379 = vmatprep.subr.bf16.mxu0 0
        %7380 = vmatpush1.bf16.msra.mxu0 0
        %7381 = vmatprep.subr.bf16.mxu0 0
        %7382 = vmatpush1.bf16.msra.mxu0 0
        %7383 = vmatprep.subr.bf16.mxu0 0
        %7384 = vmatpush1.bf16.msra.mxu0 0
        %7385 = vmatprep.subr.bf16.mxu0 0
        %7386 = vmatpush1.bf16.msra.mxu0 0
        %7387 = vmatprep.subr.bf16.mxu0 0
        %7388 = vmatpush1.bf16.msra.mxu0 0
        %7389 = vmatprep.subr.bf16.mxu0 0
        %7390 = vmatpush1.bf16.msra.mxu0 0
        %7391 = vmatprep.subr.bf16.mxu0 0
        %7392 = vmatpush1.bf16.msra.mxu0 0
        %7393 = vmatprep.subr.bf16.mxu0 0
        %7394 = vmatpush1.bf16.msra.mxu0 0
        %7395 = vmatprep.subr.bf16.mxu0 0
        %7396 = vmatpush1.bf16.msra.mxu0 0
        %7397 = vmatprep.subr.bf16.mxu0 0
        %7398 = vmatpush1.bf16.msra.mxu0 0
        %7399 = vmatprep.subr.bf16.mxu0 0
        %7400 = vmatpush1.bf16.msra.mxu0 0
        %7401 = vmatprep.subr.bf16.mxu0 0
        %7402 = vmatpush1.bf16.msra.mxu0 0
        %7403 = vmatprep.mubr.bf16.mxu0 0
        %7404 = vmatmul.mubr.bf16.gmra.mrb[0].mxu0 %v7360
        %v7405 = vpop.f32.mrb[0].mxu0
        %v7406 = vadd.f32 0.0, %v7405
        %v7407 = vpop.f32.mrb[0].mxu0
        %v7408 = vadd.f32 0.0, %v7407
        %v7409 = vpop.f32.mrb[0].mxu0
        %v7410 = vadd.f32 0.0, %v7409
        %v7411 = vpop.f32.mrb[0].mxu0
        %v7412 = vadd.f32 0.0, %v7411
        %7413 = vmatprep.mubr.bf16.mxu0 0
        %7414 = vmatmul.mubr.bf16.gmra.mrb[0].mxu0 %v7363
        %v7415 = vpop.f32.mrb[0].mxu0
        %v7416 = vadd.f32 0.0, %v7415
        %v7417 = vpop.f32.mrb[0].mxu0
        %v7418 = vadd.f32 0.0, %v7417
        %v7419 = vpop.f32.mrb[0].mxu0
        %v7420 = vadd.f32 0.0, %v7419
        %v7421 = vpop.f32.mrb[0].mxu0
        %v7422 = vadd.f32 0.0, %v7421
        %7423 = vmatprep.mubr.bf16.mxu0 0
        %7424 = vmatmul.mubr.bf16.gmra.mrb[0].mxu0 %v7366
        %v7425 = vpop.f32.mrb[0].mxu0
        %v7426 = vadd.f32 0.0, %v7425
        %v7427 = vpop.f32.mrb[0].mxu0
        %v7428 = vadd.f32 0.0, %v7427
        %v7429 = vpop.f32.mrb[0].mxu0
        %v7430 = vadd.f32 0.0, %v7429
        %v7431 = vpop.f32.mrb[0].mxu0
        %v7432 = vadd.f32 0.0, %v7431
        %7433 = vmatprep.mubr.bf16.mxu0 0
        %7434 = vmatmul.mubr.bf16.gmra.mrb[0].mxu0 %v7369
        %v7435 = vpop.f32.mrb[0].mxu0
        %v7436 = vadd.f32 0.0, %v7435
        %v7437 = vpop.f32.mrb[0].mxu0
        %v7438 = vadd.f32 0.0, %v7437
        %v7439 = vpop.f32.mrb[0].mxu0
        %v7440 = vadd.f32 0.0, %v7439
        %v7441 = vpop.f32.mrb[0].mxu0
        %v7442 = vadd.f32 0.0, %v7441
        %7443 = vdwg.mxu0
        %7444 = vmatprep.subr.bf16.mxu0 0
        %7445 = vmatpush1.bf16.msra.mxu0 %v7319
        %7446 = vmatprep.subr.bf16.mxu0 0
        %7447 = vmatpush1.bf16.msra.mxu0 %v7325
        %7448 = vmatprep.subr.bf16.mxu0 0
        %7449 = vmatpush1.bf16.msra.mxu0 %v7331
        %7450 = vmatprep.subr.bf16.mxu0 0
        %7451 = vmatpush1.bf16.msra.mxu0 %v7337
        %7452 = vmatprep.subr.bf16.mxu0 0
        %7453 = vmatpush1.bf16.msra.mxu0 0
        %7454 = vmatprep.subr.bf16.mxu0 0
        %7455 = vmatpush1.bf16.msra.mxu0 0
        %7456 = vmatprep.subr.bf16.mxu0 0
        %7457 = vmatpush1.bf16.msra.mxu0 0
        %7458 = vmatprep.subr.bf16.mxu0 0
        %7459 = vmatpush1.bf16.msra.mxu0 0
        %7460 = vmatprep.subr.bf16.mxu0 0
        %7461 = vmatpush1.bf16.msra.mxu0 0
        %7462 = vmatprep.subr.bf16.mxu0 0
        %7463 = vmatpush1.bf16.msra.mxu0 0
        %7464 = vmatprep.subr.bf16.mxu0 0
        %7465 = vmatpush1.bf16.msra.mxu0 0
        %7466 = vmatprep.subr.bf16.mxu0 0
        %7467 = vmatpush1.bf16.msra.mxu0 0
        %7468 = vmatprep.subr.bf16.mxu0 0
        %7469 = vmatpush1.bf16.msra.mxu0 0
        %7470 = vmatprep.subr.bf16.mxu0 0
        %7471 = vmatpush1.bf16.msra.mxu0 0
        %7472 = vmatprep.subr.bf16.mxu0 0
        %7473 = vmatpush1.bf16.msra.mxu0 0
        %7474 = vmatprep.subr.bf16.mxu0 0
        %7475 = vmatpush1.bf16.msra.mxu0 0
        %7476 = vmatprep.mubr.bf16.mxu0 0
        %7477 = vmatmul.mubr.bf16.gmra.mrb[0].mxu0 %v7360
        %v7478 = vpop.f32.mrb[0].mxu0
        %v7479 = vadd.f32 0.0, %v7478
        %v7480 = vpop.f32.mrb[0].mxu0
        %v7481 = vpop.f32.mrb[0].mxu0
        %v7482 = vadd.f32 0.0, %v7481
        %v7483 = vpop.f32.mrb[0].mxu0
        %7484 = vmatprep.mubr.bf16.mxu0 0
        %7485 = vmatmul.mubr.bf16.gmra.mrb[0].mxu0 %v7363
        %v7486 = vpop.f32.mrb[0].mxu0
        %v7487 = vadd.f32 0.0, %v7486
        %v7488 = vpop.f32.mrb[0].mxu0
        %v7489 = vpop.f32.mrb[0].mxu0
        %v7490 = vadd.f32 0.0, %v7489
        %v7491 = vpop.f32.mrb[0].mxu0
        %7492 = vmatprep.mubr.bf16.mxu0 0
        %7493 = vmatmul.mubr.bf16.gmra.mrb[0].mxu0 %v7366
        %v7494 = vpop.f32.mrb[0].mxu0
        %v7495 = vadd.f32 0.0, %v7494
        %v7496 = vpop.f32.mrb[0].mxu0
        %v7497 = vpop.f32.mrb[0].mxu0
        %v7498 = vadd.f32 0.0, %v7497
        %v7499 = vpop.f32.mrb[0].mxu0
        %7500 = vmatprep.mubr.bf16.mxu0 0
        %7501 = vmatmul.mubr.bf16.gmra.mrb[0].mxu0 %v7369
        %v7502 = vpop.f32.mrb[0].mxu0
        %v7503 = vadd.f32 0.0, %v7502
        %v7504 = vpop.f32.mrb[0].mxu0
        %v7505 = vpop.f32.mrb[0].mxu0
        %v7506 = vadd.f32 0.0, %v7505
        %v7507 = vpop.f32.mrb[0].mxu0
        %7508 = vdwg.mxu0
        %v7509 = vadd.f32 %v7261, %v7406
        %v7510 = vadd.f32 %v7262, %v7408
        %v7511 = vadd.f32 %v7263, %v7479
        %v7512 = vadd.f32 %v7264, %v7410
        %v7513 = vadd.f32 %v7265, %v7412
        %v7514 = vadd.f32 %v7266, %v7482
        %v7515 = vadd.f32 %v7267, %v7416
        %v7516 = vadd.f32 %v7268, %v7418
        %v7517 = vadd.f32 %v7269, %v7487
        %v7518 = vadd.f32 %v7270, %v7420
        %v7519 = vadd.f32 %v7271, %v7422
        %v7520 = vadd.f32 %v7272, %v7490
        %v7521 = vadd.f32 %v7273, %v7426
        %v7522 = vadd.f32 %v7274, %v7428
        %v7523 = vadd.f32 %v7275, %v7495
        %v7524 = vadd.f32 %v7276, %v7430
        %v7525 = vadd.f32 %v7277, %v7432
        %v7526 = vadd.f32 %v7278, %v7498
        %v7527 = vadd.f32 %v7279, %v7436
        %v7528 = vadd.f32 %v7280, %v7438
        %v7529 = vadd.f32 %v7281, %v7503
        %v7530 = vadd.f32 %v7282, %v7440
        %v7531 = vadd.f32 %v7283, %v7442
        %v7532 = vadd.f32 %v7284, %v7506
        %s7533 = scalar_lea.vmem %s4, 256
        %v7534 = vld [vmem:[%s7533] sm:$0xf]
        %v7535 = vld [vmem:[%s7533 + $0x4] sm:$0xf]
        %v7536 = vld [vmem:[%s7533 + $0x8] sm:$0xf]
        %v7537 = vld [vmem:[%s7533 + $0xc] sm:$0xf]
        %v7538 = vld [vmem:[%s7533 + $0x10] sm:$0xf]
        %v7539 = vld [vmem:[%s7533 + $0x14] sm:$0xf]
        %v7540 = vld [vmem:[%s7533 + $0x18] sm:$0xf]
        %v7541 = vld [vmem:[%s7533 + $0x1c] sm:$0xf]
        %v7550 = vunpack.c.l.b16 %v7534
        %v7551 = vunpack.c.l.b16 %v7535
        %v7552 = vunpack.c.l.b16 %v7536
        %v7553 = vunpack.c.l.b16 %v7537
        %v7554 = vunpack.c.l.b16 %v7538
        %v7555 = vunpack.c.l.b16 %v7539
        %v7556 = vunpack.c.l.b16 %v7540
        %v7557 = vunpack.c.l.b16 %v7541
        %v7558 = vpack.c.b16 %v7551, %v7550
        %v7559 = vpack.c.b16 %v7553, %v7552
        %v7560 = vpack.c.b16 %v7555, %v7554
        %v7561 = vpack.c.b16 %v7557, %v7556
        %7562 = vrot.lane.b32.xlu0 %v5574, 65
        %v7563 = vpop.permute.xlu0 %7562
        %7564 = vrot.lane.b32.xlu0 %v5575, 65
        %v7565 = vpop.permute.xlu0 %7564
        %7566 = vrot.lane.b32.xlu0 %v5576, 65
        %v7567 = vpop.permute.xlu0 %7566
        %7568 = vrot.lane.b32.xlu0 %v5577, 65
        %v7569 = vpop.permute.xlu0 %7568
        %7570 = vrot.lane.b32.xlu0 %v5578, 65
        %v7571 = vpop.permute.xlu0 %7570
        %7572 = vrot.lane.b32.xlu0 %v5579, 65
        %v7573 = vpop.permute.xlu0 %7572
        %7574 = vrot.lane.b32.xlu0 %v5580, 65
        %v7575 = vpop.permute.xlu0 %7574
        %7576 = vrot.lane.b32.xlu0 %v5581, 65
        %v7577 = vpop.permute.xlu0 %7576
        %7578 = vrot.lane.b32.xlu0 %v5582, 65
        %v7579 = vpop.permute.xlu0 %7578
        %7580 = vrot.lane.b32.xlu0 %v5583, 65
        %v7581 = vpop.permute.xlu0 %7580
        %7582 = vrot.lane.b32.xlu0 %v5584, 65
        %v7583 = vpop.permute.xlu0 %7582
        %7584 = vrot.lane.b32.xlu0 %v5585, 65
        %v7585 = vpop.permute.xlu0 %7584
        %vm7586 = vcmask 531456
        %v7587 = vsel %vm7586, %v7563, %v7565
        %v7588 = vsel %vm7586, %v7565, %v7567
        %v7589 = vsel %vm7586, %v7569, %v7571
        %v7590 = vsel %vm7586, %v7571, %v7573
        %v7591 = vsel %vm7586, %v7575, %v7577
        %v7592 = vsel %vm7586, %v7577, %v7579
        %v7593 = vsel %vm7586, %v7581, %v7583
        %v7594 = vsel %vm7586, %v7583, %v7585
        %v7608 = vsel %vm4088, %v7558, 0
        %v7611 = vsel %vm4088, %v7559, 0
        %v7614 = vsel %vm4088, %v7560, 0
        %v7617 = vsel %vm4088, %v7561, 0
        %7619 = vmatprep.subr.bf16.mxu0 %v7588
        %7620 = vmatpush1.bf16.msra.mxu0 %v7587
        %7621 = vmatprep.subr.bf16.mxu0 %v7590
        %7622 = vmatpush1.bf16.msra.mxu0 %v7589
        %7623 = vmatprep.subr.bf16.mxu0 %v7592
        %7624 = vmatpush1.bf16.msra.mxu0 %v7591
        %7625 = vmatprep.subr.bf16.mxu0 %v7594
        %7626 = vmatpush1.bf16.msra.mxu0 %v7593
        %7627 = vmatprep.subr.bf16.mxu0 0
        %7628 = vmatpush1.bf16.msra.mxu0 0
        %7629 = vmatprep.subr.bf16.mxu0 0
        %7630 = vmatpush1.bf16.msra.mxu0 0
        %7631 = vmatprep.subr.bf16.mxu0 0
        %7632 = vmatpush1.bf16.msra.mxu0 0
        %7633 = vmatprep.subr.bf16.mxu0 0
        %7634 = vmatpush1.bf16.msra.mxu0 0
        %7635 = vmatprep.subr.bf16.mxu0 0
        %7636 = vmatpush1.bf16.msra.mxu0 0
        %7637 = vmatprep.subr.bf16.mxu0 0
        %7638 = vmatpush1.bf16.msra.mxu0 0
        %7639 = vmatprep.subr.bf16.mxu0 0
        %7640 = vmatpush1.bf16.msra.mxu0 0
        %7641 = vmatprep.subr.bf16.mxu0 0
        %7642 = vmatpush1.bf16.msra.mxu0 0
        %7643 = vmatprep.subr.bf16.mxu0 0
        %7644 = vmatpush1.bf16.msra.mxu0 0
        %7645 = vmatprep.subr.bf16.mxu0 0
        %7646 = vmatpush1.bf16.msra.mxu0 0
        %7647 = vmatprep.subr.bf16.mxu0 0
        %7648 = vmatpush1.bf16.msra.mxu0 0
        %7649 = vmatprep.subr.bf16.mxu0 0
        %7650 = vmatpush1.bf16.msra.mxu0 0
        %7651 = vmatprep.mubr.bf16.mxu0 0
        %7652 = vmatmul.mubr.bf16.gmra.mrb[0].mxu0 %v7608
        %v7653 = vpop.f32.mrb[0].mxu0
        %v7654 = vadd.f32 0.0, %v7653
        %v7655 = vpop.f32.mrb[0].mxu0
        %v7656 = vadd.f32 0.0, %v7655
        %v7657 = vpop.f32.mrb[0].mxu0
        %v7658 = vadd.f32 0.0, %v7657
        %v7659 = vpop.f32.mrb[0].mxu0
        %v7660 = vadd.f32 0.0, %v7659
        %7661 = vmatprep.mubr.bf16.mxu0 0
        %7662 = vmatmul.mubr.bf16.gmra.mrb[0].mxu0 %v7611
        %v7663 = vpop.f32.mrb[0].mxu0
        %v7664 = vadd.f32 0.0, %v7663
        %v7665 = vpop.f32.mrb[0].mxu0
        %v7666 = vadd.f32 0.0, %v7665
        %v7667 = vpop.f32.mrb[0].mxu0
        %v7668 = vadd.f32 0.0, %v7667
        %v7669 = vpop.f32.mrb[0].mxu0
        %v7670 = vadd.f32 0.0, %v7669
        %7671 = vmatprep.mubr.bf16.mxu0 0
        %7672 = vmatmul.mubr.bf16.gmra.mrb[0].mxu0 %v7614
        %v7673 = vpop.f32.mrb[0].mxu0
        %v7674 = vadd.f32 0.0, %v7673
        %v7675 = vpop.f32.mrb[0].mxu0
        %v7676 = vadd.f32 0.0, %v7675
        %v7677 = vpop.f32.mrb[0].mxu0
        %v7678 = vadd.f32 0.0, %v7677
        %v7679 = vpop.f32.mrb[0].mxu0
        %v7680 = vadd.f32 0.0, %v7679
        %7681 = vmatprep.mubr.bf16.mxu0 0
        %7682 = vmatmul.mubr.bf16.gmra.mrb[0].mxu0 %v7617
        %v7683 = vpop.f32.mrb[0].mxu0
        %v7684 = vadd.f32 0.0, %v7683
        %v7685 = vpop.f32.mrb[0].mxu0
        %v7686 = vadd.f32 0.0, %v7685
        %v7687 = vpop.f32.mrb[0].mxu0
        %v7688 = vadd.f32 0.0, %v7687
        %v7689 = vpop.f32.mrb[0].mxu0
        %v7690 = vadd.f32 0.0, %v7689
        %7691 = vdwg.mxu0
        %7692 = vmatprep.subr.bf16.mxu0 0
        %7693 = vmatpush1.bf16.msra.mxu0 %v7567
        %7694 = vmatprep.subr.bf16.mxu0 0
        %7695 = vmatpush1.bf16.msra.mxu0 %v7573
        %7696 = vmatprep.subr.bf16.mxu0 0
        %7697 = vmatpush1.bf16.msra.mxu0 %v7579
        %7698 = vmatprep.subr.bf16.mxu0 0
        %7699 = vmatpush1.bf16.msra.mxu0 %v7585
        %7700 = vmatprep.subr.bf16.mxu0 0
        %7701 = vmatpush1.bf16.msra.mxu0 0
        %7702 = vmatprep.subr.bf16.mxu0 0
        %7703 = vmatpush1.bf16.msra.mxu0 0
        %7704 = vmatprep.subr.bf16.mxu0 0
        %7705 = vmatpush1.bf16.msra.mxu0 0
        %7706 = vmatprep.subr.bf16.mxu0 0
        %7707 = vmatpush1.bf16.msra.mxu0 0
        %7708 = vmatprep.subr.bf16.mxu0 0
        %7709 = vmatpush1.bf16.msra.mxu0 0
        %7710 = vmatprep.subr.bf16.mxu0 0
        %7711 = vmatpush1.bf16.msra.mxu0 0
        %7712 = vmatprep.subr.bf16.mxu0 0
        %7713 = vmatpush1.bf16.msra.mxu0 0
        %7714 = vmatprep.subr.bf16.mxu0 0
        %7715 = vmatpush1.bf16.msra.mxu0 0
        %7716 = vmatprep.subr.bf16.mxu0 0
        %7717 = vmatpush1.bf16.msra.mxu0 0
        %7718 = vmatprep.subr.bf16.mxu0 0
        %7719 = vmatpush1.bf16.msra.mxu0 0
        %7720 = vmatprep.subr.bf16.mxu0 0
        %7721 = vmatpush1.bf16.msra.mxu0 0
        %7722 = vmatprep.subr.bf16.mxu0 0
        %7723 = vmatpush1.bf16.msra.mxu0 0
        %7724 = vmatprep.mubr.bf16.mxu0 0
        %7725 = vmatmul.mubr.bf16.gmra.mrb[0].mxu0 %v7608
        %v7726 = vpop.f32.mrb[0].mxu0
        %v7727 = vadd.f32 0.0, %v7726
        %v7728 = vpop.f32.mrb[0].mxu0
        %v7729 = vpop.f32.mrb[0].mxu0
        %v7730 = vadd.f32 0.0, %v7729
        %v7731 = vpop.f32.mrb[0].mxu0
        %7732 = vmatprep.mubr.bf16.mxu0 0
        %7733 = vmatmul.mubr.bf16.gmra.mrb[0].mxu0 %v7611
        %v7734 = vpop.f32.mrb[0].mxu0
        %v7735 = vadd.f32 0.0, %v7734
        %v7736 = vpop.f32.mrb[0].mxu0
        %v7737 = vpop.f32.mrb[0].mxu0
        %v7738 = vadd.f32 0.0, %v7737
        %v7739 = vpop.f32.mrb[0].mxu0
        %7740 = vmatprep.mubr.bf16.mxu0 0
        %7741 = vmatmul.mubr.bf16.gmra.mrb[0].mxu0 %v7614
        %v7742 = vpop.f32.mrb[0].mxu0
        %v7743 = vadd.f32 0.0, %v7742
        %v7744 = vpop.f32.mrb[0].mxu0
        %v7745 = vpop.f32.mrb[0].mxu0
        %v7746 = vadd.f32 0.0, %v7745
        %v7747 = vpop.f32.mrb[0].mxu0
        %7748 = vmatprep.mubr.bf16.mxu0 0
        %7749 = vmatmul.mubr.bf16.gmra.mrb[0].mxu0 %v7617
        %v7750 = vpop.f32.mrb[0].mxu0
        %v7751 = vadd.f32 0.0, %v7750
        %v7752 = vpop.f32.mrb[0].mxu0
        %v7753 = vpop.f32.mrb[0].mxu0
        %v7754 = vadd.f32 0.0, %v7753
        %v7755 = vpop.f32.mrb[0].mxu0
        %7756 = vdwg.mxu0
        %v7757 = vadd.f32 %v7509, %v7654
        %v7758 = vadd.f32 %v7510, %v7656
        %v7759 = vadd.f32 %v7511, %v7727
        %v7760 = vadd.f32 %v7512, %v7658
        %v7761 = vadd.f32 %v7513, %v7660
        %v7762 = vadd.f32 %v7514, %v7730
        %v7763 = vadd.f32 %v7515, %v7664
        %v7764 = vadd.f32 %v7516, %v7666
        %v7765 = vadd.f32 %v7517, %v7735
        %v7766 = vadd.f32 %v7518, %v7668
        %v7767 = vadd.f32 %v7519, %v7670
        %v7768 = vadd.f32 %v7520, %v7738
        %v7769 = vadd.f32 %v7521, %v7674
        %v7770 = vadd.f32 %v7522, %v7676
        %v7771 = vadd.f32 %v7523, %v7743
        %v7772 = vadd.f32 %v7524, %v7678
        %v7773 = vadd.f32 %v7525, %v7680
        %v7774 = vadd.f32 %v7526, %v7746
        %v7775 = vadd.f32 %v7527, %v7684
        %v7776 = vadd.f32 %v7528, %v7686
        %v7777 = vadd.f32 %v7529, %v7751
        %v7778 = vadd.f32 %v7530, %v7688
        %v7779 = vadd.f32 %v7531, %v7690
        %v7780 = vadd.f32 %v7532, %v7754
        %v7781 = vld [vmem:[%s5] sm:$0xff]
        %v7782 = vld [vmem:[%s5 + $0x8] sm:$0xff]
        %v7783 = vld [vmem:[%s5 + $0x10] sm:$0xff]
        %v7784 = vld [vmem:[%s5 + $0x18] sm:$0xff]
        %v7785 = vld [vmem:[%s5 + $0x20] sm:$0xff]
        %v7786 = vld [vmem:[%s5 + $0x28] sm:$0xff]
        %v7787 = vld [vmem:[%s5 + $0x30] sm:$0xff]
        %v7788 = vld [vmem:[%s5 + $0x38] sm:$0xff]
        %7790 = vset.pattern.permute.xlu0 0
        %7791 = vperm.xlu0 %7790, %v7781
        %v7792 = vpop.permute.xlu0 %7791
        %7795 = vset.pattern.permute.xlu0 0
        %7796 = vperm.xlu0 %7795, %v7782
        %v7797 = vpop.permute.xlu0 %7796
        %7800 = vset.pattern.permute.xlu0 0
        %7801 = vperm.xlu0 %7800, %v7783
        %v7802 = vpop.permute.xlu0 %7801
        %7805 = vset.pattern.permute.xlu0 0
        %7806 = vperm.xlu0 %7805, %v7784
        %v7807 = vpop.permute.xlu0 %7806
        %7810 = vset.pattern.permute.xlu0 0
        %7811 = vperm.xlu0 %7810, %v7785
        %v7812 = vpop.permute.xlu0 %7811
        %7815 = vset.pattern.permute.xlu0 0
        %7816 = vperm.xlu0 %7815, %v7786
        %v7817 = vpop.permute.xlu0 %7816
        %7820 = vset.pattern.permute.xlu0 0
        %7821 = vperm.xlu0 %7820, %v7787
        %v7822 = vpop.permute.xlu0 %7821
        %7825 = vset.pattern.permute.xlu0 0
        %7826 = vperm.xlu0 %7825, %v7788
        %v7827 = vpop.permute.xlu0 %7826
        %v7829 = vadd.f32 %v7757, %v7792
        %v7830 = vadd.f32 %v7758, %v7792
        %v7831 = vadd.f32 %v7759, %v7792
        %v7832 = vadd.f32 %v7760, %v7797
        %v7833 = vadd.f32 %v7761, %v7797
        %v7834 = vadd.f32 %v7762, %v7797
        %v7835 = vadd.f32 %v7763, %v7802
        %v7836 = vadd.f32 %v7764, %v7802
        %v7837 = vadd.f32 %v7765, %v7802
        %v7838 = vadd.f32 %v7766, %v7807
        %v7839 = vadd.f32 %v7767, %v7807
        %v7840 = vadd.f32 %v7768, %v7807
        %v7841 = vadd.f32 %v7769, %v7812
        %v7842 = vadd.f32 %v7770, %v7812
        %v7843 = vadd.f32 %v7771, %v7812
        %v7844 = vadd.f32 %v7772, %v7817
        %v7845 = vadd.f32 %v7773, %v7817
        %v7846 = vadd.f32 %v7774, %v7817
        %v7847 = vadd.f32 %v7775, %v7822
        %v7848 = vadd.f32 %v7776, %v7822
        %v7849 = vadd.f32 %v7777, %v7822
        %v7850 = vadd.f32 %v7778, %v7827
        %v7851 = vadd.f32 %v7779, %v7827
        %v7852 = vadd.f32 %v7780, %v7827
        %v7853 = vmax.f32 %v7829, 0.0
        %v7854 = vmax.f32 %v7830, 0.0
        %v7855 = vmax.f32 %v7831, 0.0
        %v7856 = vmax.f32 %v7832, 0.0
        %v7857 = vmax.f32 %v7833, 0.0
        %v7858 = vmax.f32 %v7834, 0.0
        %v7859 = vmax.f32 %v7835, 0.0
        %v7860 = vmax.f32 %v7836, 0.0
        %v7861 = vmax.f32 %v7837, 0.0
        %v7862 = vmax.f32 %v7838, 0.0
        %v7863 = vmax.f32 %v7839, 0.0
        %v7864 = vmax.f32 %v7840, 0.0
        %v7865 = vmax.f32 %v7841, 0.0
        %v7866 = vmax.f32 %v7842, 0.0
        %v7867 = vmax.f32 %v7843, 0.0
        %v7868 = vmax.f32 %v7844, 0.0
        %v7869 = vmax.f32 %v7845, 0.0
        %v7870 = vmax.f32 %v7846, 0.0
        %v7871 = vmax.f32 %v7847, 0.0
        %v7872 = vmax.f32 %v7848, 0.0
        %v7873 = vmax.f32 %v7849, 0.0
        %v7874 = vmax.f32 %v7850, 0.0
        %v7875 = vmax.f32 %v7851, 0.0
        %v7876 = vmax.f32 %v7852, 0.0
        %v7877 = vld [vmem:[%s1] sm:$0x7]
        %v7879 = vlaneseq
        %v7880 = vshrl.u32 %v7879, 7
        %v7881 = vsub.s32 0, %v7880
        %v7882 = vrot.slane %v7877, %v7881
        %v7883 = vlaneseq
        %v7884 = vshrl.u32 %v7883, 7
        %v7885 = vsub.s32 1, %v7884
        %v7886 = vrot.slane %v7877, %v7885
        %v7887 = vlaneseq
        %v7888 = vshrl.u32 %v7887, 7
        %v7889 = vsub.s32 2, %v7888
        %v7890 = vrot.slane %v7877, %v7889
        %v7894 = vmul.f32 %v7853, %v7882
        %v7895 = vmul.f32 %v7854, %v7886
        %v7896 = vmul.f32 %v7855, %v7890
        %v7897 = vmul.f32 %v7856, %v7882
        %v7898 = vmul.f32 %v7857, %v7886
        %v7899 = vmul.f32 %v7858, %v7890
        %v7900 = vmul.f32 %v7859, %v7882
        %v7901 = vmul.f32 %v7860, %v7886
        %v7902 = vmul.f32 %v7861, %v7890
        %v7903 = vmul.f32 %v7862, %v7882
        %v7904 = vmul.f32 %v7863, %v7886
        %v7905 = vmul.f32 %v7864, %v7890
        %v7906 = vmul.f32 %v7865, %v7882
        %v7907 = vmul.f32 %v7866, %v7886
        %v7908 = vmul.f32 %v7867, %v7890
        %v7909 = vmul.f32 %v7868, %v7882
        %v7910 = vmul.f32 %v7869, %v7886
        %v7911 = vmul.f32 %v7870, %v7890
        %v7912 = vmul.f32 %v7871, %v7882
        %v7913 = vmul.f32 %v7872, %v7886
        %v7914 = vmul.f32 %v7873, %v7890
        %v7915 = vmul.f32 %v7874, %v7882
        %v7916 = vmul.f32 %v7875, %v7886
        %v7917 = vmul.f32 %v7876, %v7890
        %7918 = vst.msk [vmem:[#allocation3] sm:$0xff] %vm5477, 0
        %7919 = vst.msk [vmem:[#allocation3 + $0x20] sm:$0xff] %vm5477, 0
        %7920 = vst.msk [vmem:[#allocation3 + $0x40] sm:$0xff] %vm5477, 0
        %7921 = vst.msk [vmem:[#allocation3 + $0x60] sm:$0xff] %vm5477, 0
        %7922 = vst.msk [vmem:[#allocation3 + $0x10] sm:$0xff] %vm5482, 0
        %7923 = vst.msk [vmem:[#allocation3 + $0x18] sm:$0xff] %vm5484, 0
        %7924 = vst.msk [vmem:[#allocation3 + $0x30] sm:$0xff] %vm5482, 0
        %7925 = vst.msk [vmem:[#allocation3 + $0x38] sm:$0xff] %vm5484, 0
        %7926 = vst.msk [vmem:[#allocation3 + $0x50] sm:$0xff] %vm5482, 0
        %7927 = vst.msk [vmem:[#allocation3 + $0x58] sm:$0xff] %vm5484, 0
        %7928 = vst.msk [vmem:[#allocation3 + $0x70] sm:$0xff] %vm5482, 0
        %7929 = vst.msk [vmem:[#allocation3 + $0x78] sm:$0xff] %vm5484, 0
        %v7930 = vpack.c.bf16 %v7897, %v7894
        %v7931 = vpack.c.bf16 %v7898, %v7895
        %v7932 = vpack.c.bf16 %v7899, %v7896
        %v7933 = vpack.c.bf16 %v7903, %v7900
        %v7934 = vpack.c.bf16 %v7904, %v7901
        %v7935 = vpack.c.bf16 %v7905, %v7902
        %v7936 = vpack.c.bf16 %v7909, %v7906
        %v7937 = vpack.c.bf16 %v7910, %v7907
        %v7938 = vpack.c.bf16 %v7911, %v7908
        %v7939 = vpack.c.bf16 %v7915, %v7912
        %v7940 = vpack.c.bf16 %v7916, %v7913
        %v7941 = vpack.c.bf16 %v7917, %v7914
        %7954 = vrot.lane.b32.xlu0 %v7930, 42
        %v7955 = vpop.permute.xlu0 %7954
        %7956 = vrot.lane.b32.xlu0 %v7931, 42
        %v7957 = vpop.permute.xlu0 %7956
        %7958 = vrot.lane.b32.xlu0 %v7932, 42
        %v7959 = vpop.permute.xlu0 %7958
        %7960 = vrot.lane.b32.xlu0 %v7933, 42
        %v7961 = vpop.permute.xlu0 %7960
        %7962 = vrot.lane.b32.xlu0 %v7934, 42
        %v7963 = vpop.permute.xlu0 %7962
        %7964 = vrot.lane.b32.xlu0 %v7935, 42
        %v7965 = vpop.permute.xlu0 %7964
        %7966 = vrot.lane.b32.xlu0 %v7936, 42
        %v7967 = vpop.permute.xlu0 %7966
        %7968 = vrot.lane.b32.xlu0 %v7937, 42
        %v7969 = vpop.permute.xlu0 %7968
        %7970 = vrot.lane.b32.xlu0 %v7938, 42
        %v7971 = vpop.permute.xlu0 %7970
        %7972 = vrot.lane.b32.xlu0 %v7939, 42
        %v7973 = vpop.permute.xlu0 %7972
        %7974 = vrot.lane.b32.xlu0 %v7940, 42
        %v7975 = vpop.permute.xlu0 %7974
        %7976 = vrot.lane.b32.xlu0 %v7941, 42
        %v7977 = vpop.permute.xlu0 %7976
        %v7978 = vsel %vm5540, %v7955, %v7957
        %v7979 = vsel %vm5540, %v7957, %v7959
        %v7980 = vsel %vm5540, %v7961, %v7963
        %v7981 = vsel %vm5540, %v7963, %v7965
        %v7982 = vsel %vm5540, %v7967, %v7969
        %v7983 = vsel %vm5540, %v7969, %v7971
        %v7984 = vsel %vm5540, %v7973, %v7975
        %v7985 = vsel %vm5540, %v7975, %v7977
        %7998 = vst.msk [vmem:[#allocation3] sm:$0xff] %vm5561, %v7955
        %7999 = vst [vmem:[#allocation3 + $0x8] sm:$0xff] %v7978
        %8000 = vst.msk [vmem:[#allocation3 + $0x10] sm:$0xff] %vm1772, %v7979
        %8001 = vst.msk [vmem:[#allocation3 + $0x20] sm:$0xff] %vm5561, %v7961
        %8002 = vst [vmem:[#allocation3 + $0x28] sm:$0xff] %v7980
        %8003 = vst.msk [vmem:[#allocation3 + $0x30] sm:$0xff] %vm1772, %v7981
        %8004 = vst.msk [vmem:[#allocation3 + $0x40] sm:$0xff] %vm5561, %v7967
        %8005 = vst [vmem:[#allocation3 + $0x48] sm:$0xff] %v7982
        %8006 = vst.msk [vmem:[#allocation3 + $0x50] sm:$0xff] %vm1772, %v7983
        %8007 = vst.msk [vmem:[#allocation3 + $0x60] sm:$0xff] %vm5561, %v7973
        %8008 = vst [vmem:[#allocation3 + $0x68] sm:$0xff] %v7984
        %8009 = vst.msk [vmem:[#allocation3 + $0x70] sm:$0xff] %vm1772, %v7985
        %v8010 = vld [vmem:[#allocation3] sm:$0xff]
        %v8011 = vld [vmem:[#allocation3 + $0x8] sm:$0xff]
        %v8012 = vld [vmem:[#allocation3 + $0x10] sm:$0xff]
        %v8013 = vld [vmem:[#allocation3 + $0x20] sm:$0xff]
        %v8014 = vld [vmem:[#allocation3 + $0x28] sm:$0xff]
        %v8015 = vld [vmem:[#allocation3 + $0x30] sm:$0xff]
        %v8016 = vld [vmem:[#allocation3 + $0x40] sm:$0xff]
        %v8017 = vld [vmem:[#allocation3 + $0x48] sm:$0xff]
        %v8018 = vld [vmem:[#allocation3 + $0x50] sm:$0xff]
        %v8019 = vld [vmem:[#allocation3 + $0x60] sm:$0xff]
        %v8020 = vld [vmem:[#allocation3 + $0x68] sm:$0xff]
        %v8021 = vld [vmem:[#allocation3 + $0x70] sm:$0xff]
        %v8022 = vld [vmem:[%s6] sm:$0xf]
        %v8023 = vld [vmem:[%s6 + $0x4] sm:$0xf]
        %v8024 = vld [vmem:[%s6 + $0x8] sm:$0xf]
        %v8025 = vld [vmem:[%s6 + $0xc] sm:$0xf]
        %s8026 = scalar_lea.vmem %s6, 16
        %v8027 = vld [vmem:[%s8026] sm:$0xf]
        %v8028 = vld [vmem:[%s8026 + $0x4] sm:$0xf]
        %v8029 = vld [vmem:[%s8026 + $0x8] sm:$0xf]
        %v8030 = vld [vmem:[%s8026 + $0xc] sm:$0xf]
        %v8035 = vunpack.c.l.b16 %v8027
        %v8036 = vunpack.c.l.b16 %v8028
        %v8037 = vunpack.c.l.b16 %v8029
        %v8038 = vunpack.c.l.b16 %v8030
        %v8039 = vpack.c.b16 %v8036, %v8035
        %v8040 = vpack.c.b16 %v8038, %v8037
        %8053 = vrot.lane.b32.xlu0 %v8010, 106
        %v8054 = vpop.permute.xlu0 %8053
        %8055 = vrot.lane.b32.xlu0 %v8011, 106
        %v8056 = vpop.permute.xlu0 %8055
        %8057 = vrot.lane.b32.xlu0 %v8012, 106
        %v8058 = vpop.permute.xlu0 %8057
        %8059 = vrot.lane.b32.xlu0 %v8013, 106
        %v8060 = vpop.permute.xlu0 %8059
        %8061 = vrot.lane.b32.xlu0 %v8014, 106
        %v8062 = vpop.permute.xlu0 %8061
        %8063 = vrot.lane.b32.xlu0 %v8015, 106
        %v8064 = vpop.permute.xlu0 %8063
        %8065 = vrot.lane.b32.xlu0 %v8016, 106
        %v8066 = vpop.permute.xlu0 %8065
        %8067 = vrot.lane.b32.xlu0 %v8017, 106
        %v8068 = vpop.permute.xlu0 %8067
        %8069 = vrot.lane.b32.xlu0 %v8018, 106
        %v8070 = vpop.permute.xlu0 %8069
        %8071 = vrot.lane.b32.xlu0 %v8019, 106
        %v8072 = vpop.permute.xlu0 %8071
        %8073 = vrot.lane.b32.xlu0 %v8020, 106
        %v8074 = vpop.permute.xlu0 %8073
        %8075 = vrot.lane.b32.xlu0 %v8021, 106
        %v8076 = vpop.permute.xlu0 %8075
        %v8077 = vsel %vm5659, %v8054, %v8056
        %v8078 = vsel %vm5659, %v8056, %v8058
        %v8079 = vsel %vm5659, %v8060, %v8062
        %v8080 = vsel %vm5659, %v8062, %v8064
        %v8081 = vsel %vm5659, %v8066, %v8068
        %v8082 = vsel %vm5659, %v8068, %v8070
        %v8083 = vsel %vm5659, %v8072, %v8074
        %v8084 = vsel %vm5659, %v8074, %v8076
        %v8098 = vsel %vm4088, %v8039, 0
        %v8101 = vsel %vm4088, %v8040, 0
        %8103 = vmatprep.subr.bf16.mxu0 %v8078
        %8104 = vmatpush1.bf16.msra.mxu0 %v8077
        %8105 = vmatprep.subr.bf16.mxu0 %v8080
        %8106 = vmatpush1.bf16.msra.mxu0 %v8079
        %8107 = vmatprep.subr.bf16.mxu0 %v8082
        %8108 = vmatpush1.bf16.msra.mxu0 %v8081
        %8109 = vmatprep.subr.bf16.mxu0 %v8084
        %8110 = vmatpush1.bf16.msra.mxu0 %v8083
        %8111 = vmatprep.subr.bf16.mxu0 0
        %8112 = vmatpush1.bf16.msra.mxu0 0
        %8113 = vmatprep.subr.bf16.mxu0 0
        %8114 = vmatpush1.bf16.msra.mxu0 0
        %8115 = vmatprep.subr.bf16.mxu0 0
        %8116 = vmatpush1.bf16.msra.mxu0 0
        %8117 = vmatprep.subr.bf16.mxu0 0
        %8118 = vmatpush1.bf16.msra.mxu0 0
        %8119 = vmatprep.subr.bf16.mxu0 0
        %8120 = vmatpush1.bf16.msra.mxu0 0
        %8121 = vmatprep.subr.bf16.mxu0 0
        %8122 = vmatpush1.bf16.msra.mxu0 0
        %8123 = vmatprep.subr.bf16.mxu0 0
        %8124 = vmatpush1.bf16.msra.mxu0 0
        %8125 = vmatprep.subr.bf16.mxu0 0
        %8126 = vmatpush1.bf16.msra.mxu0 0
        %8127 = vmatprep.subr.bf16.mxu0 0
        %8128 = vmatpush1.bf16.msra.mxu0 0
        %8129 = vmatprep.subr.bf16.mxu0 0
        %8130 = vmatpush1.bf16.msra.mxu0 0
        %8131 = vmatprep.subr.bf16.mxu0 0
        %8132 = vmatpush1.bf16.msra.mxu0 0
        %8133 = vmatprep.subr.bf16.mxu0 0
        %8134 = vmatpush1.bf16.msra.mxu0 0
        %8135 = vmatprep.mubr.bf16.mxu0 0
        %8136 = vmatmul.mubr.bf16.gmra.mrb[0].mxu0 %v8098
        %v8137 = vpop.f32.mrb[0].mxu0
        %v8138 = vadd.f32 0.0, %v8137
        %v8139 = vpop.f32.mrb[0].mxu0
        %v8140 = vadd.f32 0.0, %v8139
        %v8141 = vpop.f32.mrb[0].mxu0
        %v8142 = vadd.f32 0.0, %v8141
        %v8143 = vpop.f32.mrb[0].mxu0
        %v8144 = vadd.f32 0.0, %v8143
        %8145 = vmatprep.mubr.bf16.mxu0 0
        %8146 = vmatmul.mubr.bf16.gmra.mrb[0].mxu0 %v8101
        %v8147 = vpop.f32.mrb[0].mxu0
        %v8148 = vadd.f32 0.0, %v8147
        %v8149 = vpop.f32.mrb[0].mxu0
        %v8150 = vadd.f32 0.0, %v8149
        %v8151 = vpop.f32.mrb[0].mxu0
        %v8152 = vadd.f32 0.0, %v8151
        %v8153 = vpop.f32.mrb[0].mxu0
        %v8154 = vadd.f32 0.0, %v8153
        %8155 = vdwg.mxu0
        %8156 = vmatprep.subr.bf16.mxu0 0
        %8157 = vmatpush1.bf16.msra.mxu0 %v8058
        %8158 = vmatprep.subr.bf16.mxu0 0
        %8159 = vmatpush1.bf16.msra.mxu0 %v8064
        %8160 = vmatprep.subr.bf16.mxu0 0
        %8161 = vmatpush1.bf16.msra.mxu0 %v8070
        %8162 = vmatprep.subr.bf16.mxu0 0
        %8163 = vmatpush1.bf16.msra.mxu0 %v8076
        %8164 = vmatprep.subr.bf16.mxu0 0
        %8165 = vmatpush1.bf16.msra.mxu0 0
        %8166 = vmatprep.subr.bf16.mxu0 0
        %8167 = vmatpush1.bf16.msra.mxu0 0
        %8168 = vmatprep.subr.bf16.mxu0 0
        %8169 = vmatpush1.bf16.msra.mxu0 0
        %8170 = vmatprep.subr.bf16.mxu0 0
        %8171 = vmatpush1.bf16.msra.mxu0 0
        %8172 = vmatprep.subr.bf16.mxu0 0
        %8173 = vmatpush1.bf16.msra.mxu0 0
        %8174 = vmatprep.subr.bf16.mxu0 0
        %8175 = vmatpush1.bf16.msra.mxu0 0
        %8176 = vmatprep.subr.bf16.mxu0 0
        %8177 = vmatpush1.bf16.msra.mxu0 0
        %8178 = vmatprep.subr.bf16.mxu0 0
        %8179 = vmatpush1.bf16.msra.mxu0 0
        %8180 = vmatprep.subr.bf16.mxu0 0
        %8181 = vmatpush1.bf16.msra.mxu0 0
        %8182 = vmatprep.subr.bf16.mxu0 0
        %8183 = vmatpush1.bf16.msra.mxu0 0
        %8184 = vmatprep.subr.bf16.mxu0 0
        %8185 = vmatpush1.bf16.msra.mxu0 0
        %8186 = vmatprep.subr.bf16.mxu0 0
        %8187 = vmatpush1.bf16.msra.mxu0 0
        %8188 = vmatprep.mubr.bf16.mxu0 0
        %8189 = vmatmul.mubr.bf16.gmra.mrb[0].mxu0 %v8098
        %v8190 = vpop.f32.mrb[0].mxu0
        %v8191 = vadd.f32 0.0, %v8190
        %v8192 = vpop.f32.mrb[0].mxu0
        %v8193 = vpop.f32.mrb[0].mxu0
        %v8194 = vadd.f32 0.0, %v8193
        %v8195 = vpop.f32.mrb[0].mxu0
        %8196 = vmatprep.mubr.bf16.mxu0 0
        %8197 = vmatmul.mubr.bf16.gmra.mrb[0].mxu0 %v8101
        %v8198 = vpop.f32.mrb[0].mxu0
        %v8199 = vadd.f32 0.0, %v8198
        %v8200 = vpop.f32.mrb[0].mxu0
        %v8201 = vpop.f32.mrb[0].mxu0
        %v8202 = vadd.f32 0.0, %v8201
        %v8203 = vpop.f32.mrb[0].mxu0
        %8204 = vdwg.mxu0
        %v8209 = vunpack.c.l.b16 %v8022
        %v8210 = vunpack.c.l.b16 %v8023
        %v8211 = vunpack.c.l.b16 %v8024
        %v8212 = vunpack.c.l.b16 %v8025
        %v8213 = vpack.c.b16 %v8210, %v8209
        %v8214 = vpack.c.b16 %v8212, %v8211
        %8215 = vrot.lane.b32.xlu0 %v8010, 107
        %v8216 = vpop.permute.xlu0 %8215
        %8217 = vrot.lane.b32.xlu0 %v8011, 107
        %v8218 = vpop.permute.xlu0 %8217
        %8219 = vrot.lane.b32.xlu0 %v8012, 107
        %v8220 = vpop.permute.xlu0 %8219
        %8221 = vrot.lane.b32.xlu0 %v8013, 107
        %v8222 = vpop.permute.xlu0 %8221
        %8223 = vrot.lane.b32.xlu0 %v8014, 107
        %v8224 = vpop.permute.xlu0 %8223
        %8225 = vrot.lane.b32.xlu0 %v8015, 107
        %v8226 = vpop.permute.xlu0 %8225
        %8227 = vrot.lane.b32.xlu0 %v8016, 107
        %v8228 = vpop.permute.xlu0 %8227
        %8229 = vrot.lane.b32.xlu0 %v8017, 107
        %v8230 = vpop.permute.xlu0 %8229
        %8231 = vrot.lane.b32.xlu0 %v8018, 107
        %v8232 = vpop.permute.xlu0 %8231
        %8233 = vrot.lane.b32.xlu0 %v8019, 107
        %v8234 = vpop.permute.xlu0 %8233
        %8235 = vrot.lane.b32.xlu0 %v8020, 107
        %v8236 = vpop.permute.xlu0 %8235
        %8237 = vrot.lane.b32.xlu0 %v8021, 107
        %v8238 = vpop.permute.xlu0 %8237
        %v8239 = vsel %vm5874, %v8216, %v8218
        %v8240 = vsel %vm5874, %v8218, %v8220
        %v8241 = vsel %vm5874, %v8222, %v8224
        %v8242 = vsel %vm5874, %v8224, %v8226
        %v8243 = vsel %vm5874, %v8228, %v8230
        %v8244 = vsel %vm5874, %v8230, %v8232
        %v8245 = vsel %vm5874, %v8234, %v8236
        %v8246 = vsel %vm5874, %v8236, %v8238
        %v8260 = vsel %vm4088, %v8213, 0
        %v8263 = vsel %vm4088, %v8214, 0
        %8265 = vmatprep.subr.bf16.mxu0 %v8240
        %8266 = vmatpush1.bf16.msra.mxu0 %v8239
        %8267 = vmatprep.subr.bf16.mxu0 %v8242
        %8268 = vmatpush1.bf16.msra.mxu0 %v8241
        %8269 = vmatprep.subr.bf16.mxu0 %v8244
        %8270 = vmatpush1.bf16.msra.mxu0 %v8243
        %8271 = vmatprep.subr.bf16.mxu0 %v8246
        %8272 = vmatpush1.bf16.msra.mxu0 %v8245
        %8273 = vmatprep.subr.bf16.mxu0 0
        %8274 = vmatpush1.bf16.msra.mxu0 0
        %8275 = vmatprep.subr.bf16.mxu0 0
        %8276 = vmatpush1.bf16.msra.mxu0 0
        %8277 = vmatprep.subr.bf16.mxu0 0
        %8278 = vmatpush1.bf16.msra.mxu0 0
        %8279 = vmatprep.subr.bf16.mxu0 0
        %8280 = vmatpush1.bf16.msra.mxu0 0
        %8281 = vmatprep.subr.bf16.mxu0 0
        %8282 = vmatpush1.bf16.msra.mxu0 0
        %8283 = vmatprep.subr.bf16.mxu0 0
        %8284 = vmatpush1.bf16.msra.mxu0 0
        %8285 = vmatprep.subr.bf16.mxu0 0
        %8286 = vmatpush1.bf16.msra.mxu0 0
        %8287 = vmatprep.subr.bf16.mxu0 0
        %8288 = vmatpush1.bf16.msra.mxu0 0
        %8289 = vmatprep.subr.bf16.mxu0 0
        %8290 = vmatpush1.bf16.msra.mxu0 0
        %8291 = vmatprep.subr.bf16.mxu0 0
        %8292 = vmatpush1.bf16.msra.mxu0 0
        %8293 = vmatprep.subr.bf16.mxu0 0
        %8294 = vmatpush1.bf16.msra.mxu0 0
        %8295 = vmatprep.subr.bf16.mxu0 0
        %8296 = vmatpush1.bf16.msra.mxu0 0
        %8297 = vmatprep.mubr.bf16.mxu0 0
        %8298 = vmatmul.mubr.bf16.gmra.mrb[0].mxu0 %v8260
        %v8299 = vpop.f32.mrb[0].mxu0
        %v8300 = vadd.f32 %v8138, %v8299
        %v8301 = vpop.f32.mrb[0].mxu0
        %v8302 = vadd.f32 %v8140, %v8301
        %v8303 = vpop.f32.mrb[0].mxu0
        %v8304 = vadd.f32 %v8142, %v8303
        %v8305 = vpop.f32.mrb[0].mxu0
        %v8306 = vadd.f32 %v8144, %v8305
        %8307 = vmatprep.mubr.bf16.mxu0 0
        %8308 = vmatmul.mubr.bf16.gmra.mrb[0].mxu0 %v8263
        %v8309 = vpop.f32.mrb[0].mxu0
        %v8310 = vadd.f32 %v8148, %v8309
        %v8311 = vpop.f32.mrb[0].mxu0
        %v8312 = vadd.f32 %v8150, %v8311
        %v8313 = vpop.f32.mrb[0].mxu0
        %v8314 = vadd.f32 %v8152, %v8313
        %v8315 = vpop.f32.mrb[0].mxu0
        %v8316 = vadd.f32 %v8154, %v8315
        %8317 = vdwg.mxu0
        %8318 = vmatprep.subr.bf16.mxu0 0
        %8319 = vmatpush1.bf16.msra.mxu0 %v8220
        %8320 = vmatprep.subr.bf16.mxu0 0
        %8321 = vmatpush1.bf16.msra.mxu0 %v8226
        %8322 = vmatprep.subr.bf16.mxu0 0
        %8323 = vmatpush1.bf16.msra.mxu0 %v8232
        %8324 = vmatprep.subr.bf16.mxu0 0
        %8325 = vmatpush1.bf16.msra.mxu0 %v8238
        %8326 = vmatprep.subr.bf16.mxu0 0
        %8327 = vmatpush1.bf16.msra.mxu0 0
        %8328 = vmatprep.subr.bf16.mxu0 0
        %8329 = vmatpush1.bf16.msra.mxu0 0
        %8330 = vmatprep.subr.bf16.mxu0 0
        %8331 = vmatpush1.bf16.msra.mxu0 0
        %8332 = vmatprep.subr.bf16.mxu0 0
        %8333 = vmatpush1.bf16.msra.mxu0 0
        %8334 = vmatprep.subr.bf16.mxu0 0
        %8335 = vmatpush1.bf16.msra.mxu0 0
        %8336 = vmatprep.subr.bf16.mxu0 0
        %8337 = vmatpush1.bf16.msra.mxu0 0
        %8338 = vmatprep.subr.bf16.mxu0 0
        %8339 = vmatpush1.bf16.msra.mxu0 0
        %8340 = vmatprep.subr.bf16.mxu0 0
        %8341 = vmatpush1.bf16.msra.mxu0 0
        %8342 = vmatprep.subr.bf16.mxu0 0
        %8343 = vmatpush1.bf16.msra.mxu0 0
        %8344 = vmatprep.subr.bf16.mxu0 0
        %8345 = vmatpush1.bf16.msra.mxu0 0
        %8346 = vmatprep.subr.bf16.mxu0 0
        %8347 = vmatpush1.bf16.msra.mxu0 0
        %8348 = vmatprep.subr.bf16.mxu0 0
        %8349 = vmatpush1.bf16.msra.mxu0 0
        %8350 = vmatprep.mubr.bf16.mxu0 0
        %8351 = vmatmul.mubr.bf16.gmra.mrb[0].mxu0 %v8260
        %v8352 = vpop.f32.mrb[0].mxu0
        %v8353 = vadd.f32 %v8191, %v8352
        %v8354 = vpop.f32.mrb[0].mxu0
        %v8355 = vpop.f32.mrb[0].mxu0
        %v8356 = vadd.f32 %v8194, %v8355
        %v8357 = vpop.f32.mrb[0].mxu0
        %8358 = vmatprep.mubr.bf16.mxu0 0
        %8359 = vmatmul.mubr.bf16.gmra.mrb[0].mxu0 %v8263
        %v8360 = vpop.f32.mrb[0].mxu0
        %v8361 = vadd.f32 %v8199, %v8360
        %v8362 = vpop.f32.mrb[0].mxu0
        %v8363 = vpop.f32.mrb[0].mxu0
        %v8364 = vadd.f32 %v8202, %v8363
        %v8365 = vpop.f32.mrb[0].mxu0
        %8366 = vdwg.mxu0
        %s8367 = scalar_lea.vmem %s6, 32
        %v8368 = vld [vmem:[%s8367] sm:$0xf]
        %v8369 = vld [vmem:[%s8367 + $0x4] sm:$0xf]
        %v8370 = vld [vmem:[%s8367 + $0x8] sm:$0xf]
        %v8371 = vld [vmem:[%s8367 + $0xc] sm:$0xf]
        %v8376 = vunpack.c.l.b16 %v8368
        %v8377 = vunpack.c.l.b16 %v8369
        %v8378 = vunpack.c.l.b16 %v8370
        %v8379 = vunpack.c.l.b16 %v8371
        %v8380 = vpack.c.b16 %v8377, %v8376
        %v8381 = vpack.c.b16 %v8379, %v8378
        %8382 = vrot.lane.b32.xlu0 %v8010, 105
        %v8383 = vpop.permute.xlu0 %8382
        %8384 = vrot.lane.b32.xlu0 %v8011, 105
        %v8385 = vpop.permute.xlu0 %8384
        %8386 = vrot.lane.b32.xlu0 %v8012, 105
        %v8387 = vpop.permute.xlu0 %8386
        %8388 = vrot.lane.b32.xlu0 %v8013, 105
        %v8389 = vpop.permute.xlu0 %8388
        %8390 = vrot.lane.b32.xlu0 %v8014, 105
        %v8391 = vpop.permute.xlu0 %8390
        %8392 = vrot.lane.b32.xlu0 %v8015, 105
        %v8393 = vpop.permute.xlu0 %8392
        %8394 = vrot.lane.b32.xlu0 %v8016, 105
        %v8395 = vpop.permute.xlu0 %8394
        %8396 = vrot.lane.b32.xlu0 %v8017, 105
        %v8397 = vpop.permute.xlu0 %8396
        %8398 = vrot.lane.b32.xlu0 %v8018, 105
        %v8399 = vpop.permute.xlu0 %8398
        %8400 = vrot.lane.b32.xlu0 %v8019, 105
        %v8401 = vpop.permute.xlu0 %8400
        %8402 = vrot.lane.b32.xlu0 %v8020, 105
        %v8403 = vpop.permute.xlu0 %8402
        %8404 = vrot.lane.b32.xlu0 %v8021, 105
        %v8405 = vpop.permute.xlu0 %8404
        %v8406 = vsel %vm6098, %v8383, %v8385
        %v8407 = vsel %vm6098, %v8385, %v8387
        %v8408 = vsel %vm6098, %v8389, %v8391
        %v8409 = vsel %vm6098, %v8391, %v8393
        %v8410 = vsel %vm6098, %v8395, %v8397
        %v8411 = vsel %vm6098, %v8397, %v8399
        %v8412 = vsel %vm6098, %v8401, %v8403
        %v8413 = vsel %vm6098, %v8403, %v8405
        %v8427 = vsel %vm4088, %v8380, 0
        %v8430 = vsel %vm4088, %v8381, 0
        %8432 = vmatprep.subr.bf16.mxu0 %v8407
        %8433 = vmatpush1.bf16.msra.mxu0 %v8406
        %8434 = vmatprep.subr.bf16.mxu0 %v8409
        %8435 = vmatpush1.bf16.msra.mxu0 %v8408
        %8436 = vmatprep.subr.bf16.mxu0 %v8411
        %8437 = vmatpush1.bf16.msra.mxu0 %v8410
        %8438 = vmatprep.subr.bf16.mxu0 %v8413
        %8439 = vmatpush1.bf16.msra.mxu0 %v8412
        %8440 = vmatprep.subr.bf16.mxu0 0
        %8441 = vmatpush1.bf16.msra.mxu0 0
        %8442 = vmatprep.subr.bf16.mxu0 0
        %8443 = vmatpush1.bf16.msra.mxu0 0
        %8444 = vmatprep.subr.bf16.mxu0 0
        %8445 = vmatpush1.bf16.msra.mxu0 0
        %8446 = vmatprep.subr.bf16.mxu0 0
        %8447 = vmatpush1.bf16.msra.mxu0 0
        %8448 = vmatprep.subr.bf16.mxu0 0
        %8449 = vmatpush1.bf16.msra.mxu0 0
        %8450 = vmatprep.subr.bf16.mxu0 0
        %8451 = vmatpush1.bf16.msra.mxu0 0
        %8452 = vmatprep.subr.bf16.mxu0 0
        %8453 = vmatpush1.bf16.msra.mxu0 0
        %8454 = vmatprep.subr.bf16.mxu0 0
        %8455 = vmatpush1.bf16.msra.mxu0 0
        %8456 = vmatprep.subr.bf16.mxu0 0
        %8457 = vmatpush1.bf16.msra.mxu0 0
        %8458 = vmatprep.subr.bf16.mxu0 0
        %8459 = vmatpush1.bf16.msra.mxu0 0
        %8460 = vmatprep.subr.bf16.mxu0 0
        %8461 = vmatpush1.bf16.msra.mxu0 0
        %8462 = vmatprep.subr.bf16.mxu0 0
        %8463 = vmatpush1.bf16.msra.mxu0 0
        %8464 = vmatprep.mubr.bf16.mxu0 0
        %8465 = vmatmul.mubr.bf16.gmra.mrb[0].mxu0 %v8427
        %v8466 = vpop.f32.mrb[0].mxu0
        %v8467 = vadd.f32 0.0, %v8466
        %v8468 = vpop.f32.mrb[0].mxu0
        %v8469 = vadd.f32 0.0, %v8468
        %v8470 = vpop.f32.mrb[0].mxu0
        %v8471 = vadd.f32 0.0, %v8470
        %v8472 = vpop.f32.mrb[0].mxu0
        %v8473 = vadd.f32 0.0, %v8472
        %8474 = vmatprep.mubr.bf16.mxu0 0
        %8475 = vmatmul.mubr.bf16.gmra.mrb[0].mxu0 %v8430
        %v8476 = vpop.f32.mrb[0].mxu0
        %v8477 = vadd.f32 0.0, %v8476
        %v8478 = vpop.f32.mrb[0].mxu0
        %v8479 = vadd.f32 0.0, %v8478
        %v8480 = vpop.f32.mrb[0].mxu0
        %v8481 = vadd.f32 0.0, %v8480
        %v8482 = vpop.f32.mrb[0].mxu0
        %v8483 = vadd.f32 0.0, %v8482
        %8484 = vdwg.mxu0
        %8485 = vmatprep.subr.bf16.mxu0 0
        %8486 = vmatpush1.bf16.msra.mxu0 %v8387
        %8487 = vmatprep.subr.bf16.mxu0 0
        %8488 = vmatpush1.bf16.msra.mxu0 %v8393
        %8489 = vmatprep.subr.bf16.mxu0 0
        %8490 = vmatpush1.bf16.msra.mxu0 %v8399
        %8491 = vmatprep.subr.bf16.mxu0 0
        %8492 = vmatpush1.bf16.msra.mxu0 %v8405
        %8493 = vmatprep.subr.bf16.mxu0 0
        %8494 = vmatpush1.bf16.msra.mxu0 0
        %8495 = vmatprep.subr.bf16.mxu0 0
        %8496 = vmatpush1.bf16.msra.mxu0 0
        %8497 = vmatprep.subr.bf16.mxu0 0
        %8498 = vmatpush1.bf16.msra.mxu0 0
        %8499 = vmatprep.subr.bf16.mxu0 0
        %8500 = vmatpush1.bf16.msra.mxu0 0
        %8501 = vmatprep.subr.bf16.mxu0 0
        %8502 = vmatpush1.bf16.msra.mxu0 0
        %8503 = vmatprep.subr.bf16.mxu0 0
        %8504 = vmatpush1.bf16.msra.mxu0 0
        %8505 = vmatprep.subr.bf16.mxu0 0
        %8506 = vmatpush1.bf16.msra.mxu0 0
        %8507 = vmatprep.subr.bf16.mxu0 0
        %8508 = vmatpush1.bf16.msra.mxu0 0
        %8509 = vmatprep.subr.bf16.mxu0 0
        %8510 = vmatpush1.bf16.msra.mxu0 0
        %8511 = vmatprep.subr.bf16.mxu0 0
        %8512 = vmatpush1.bf16.msra.mxu0 0
        %8513 = vmatprep.subr.bf16.mxu0 0
        %8514 = vmatpush1.bf16.msra.mxu0 0
        %8515 = vmatprep.subr.bf16.mxu0 0
        %8516 = vmatpush1.bf16.msra.mxu0 0
        %8517 = vmatprep.mubr.bf16.mxu0 0
        %8518 = vmatmul.mubr.bf16.gmra.mrb[0].mxu0 %v8427
        %v8519 = vpop.f32.mrb[0].mxu0
        %v8520 = vadd.f32 0.0, %v8519
        %v8521 = vpop.f32.mrb[0].mxu0
        %v8522 = vpop.f32.mrb[0].mxu0
        %v8523 = vadd.f32 0.0, %v8522
        %v8524 = vpop.f32.mrb[0].mxu0
        %8525 = vmatprep.mubr.bf16.mxu0 0
        %8526 = vmatmul.mubr.bf16.gmra.mrb[0].mxu0 %v8430
        %v8527 = vpop.f32.mrb[0].mxu0
        %v8528 = vadd.f32 0.0, %v8527
        %v8529 = vpop.f32.mrb[0].mxu0
        %v8530 = vpop.f32.mrb[0].mxu0
        %v8531 = vadd.f32 0.0, %v8530
        %v8532 = vpop.f32.mrb[0].mxu0
        %8533 = vdwg.mxu0
        %v8534 = vadd.f32 %v8300, %v8467
        %v8535 = vadd.f32 %v8302, %v8469
        %v8536 = vadd.f32 %v8353, %v8520
        %v8537 = vadd.f32 %v8304, %v8471
        %v8538 = vadd.f32 %v8306, %v8473
        %v8539 = vadd.f32 %v8356, %v8523
        %v8540 = vadd.f32 %v8310, %v8477
        %v8541 = vadd.f32 %v8312, %v8479
        %v8542 = vadd.f32 %v8361, %v8528
        %v8543 = vadd.f32 %v8314, %v8481
        %v8544 = vadd.f32 %v8316, %v8483
        %v8545 = vadd.f32 %v8364, %v8531
        %s8546 = scalar_lea.vmem %s6, 48
        %v8547 = vld [vmem:[%s8546] sm:$0xf]
        %v8548 = vld [vmem:[%s8546 + $0x4] sm:$0xf]
        %v8549 = vld [vmem:[%s8546 + $0x8] sm:$0xf]
        %v8550 = vld [vmem:[%s8546 + $0xc] sm:$0xf]
        %v8555 = vunpack.c.l.b16 %v8547
        %v8556 = vunpack.c.l.b16 %v8548
        %v8557 = vunpack.c.l.b16 %v8549
        %v8558 = vunpack.c.l.b16 %v8550
        %v8559 = vpack.c.b16 %v8556, %v8555
        %v8560 = vpack.c.b16 %v8558, %v8557
        %8561 = vrot.lane.b32.xlu0 %v8010, 87
        %v8562 = vpop.permute.xlu0 %8561
        %8563 = vrot.lane.b32.xlu0 %v8011, 87
        %v8564 = vpop.permute.xlu0 %8563
        %8565 = vrot.lane.b32.xlu0 %v8012, 87
        %v8566 = vpop.permute.xlu0 %8565
        %8567 = vrot.lane.b32.xlu0 %v8013, 87
        %v8568 = vpop.permute.xlu0 %8567
        %8569 = vrot.lane.b32.xlu0 %v8014, 87
        %v8570 = vpop.permute.xlu0 %8569
        %8571 = vrot.lane.b32.xlu0 %v8015, 87
        %v8572 = vpop.permute.xlu0 %8571
        %8573 = vrot.lane.b32.xlu0 %v8016, 87
        %v8574 = vpop.permute.xlu0 %8573
        %8575 = vrot.lane.b32.xlu0 %v8017, 87
        %v8576 = vpop.permute.xlu0 %8575
        %8577 = vrot.lane.b32.xlu0 %v8018, 87
        %v8578 = vpop.permute.xlu0 %8577
        %8579 = vrot.lane.b32.xlu0 %v8019, 87
        %v8580 = vpop.permute.xlu0 %8579
        %8581 = vrot.lane.b32.xlu0 %v8020, 87
        %v8582 = vpop.permute.xlu0 %8581
        %8583 = vrot.lane.b32.xlu0 %v8021, 87
        %v8584 = vpop.permute.xlu0 %8583
        %v8585 = vsel %vm6346, %v8562, %v8564
        %v8586 = vsel %vm6346, %v8564, %v8566
        %v8587 = vsel %vm6346, %v8568, %v8570
        %v8588 = vsel %vm6346, %v8570, %v8572
        %v8589 = vsel %vm6346, %v8574, %v8576
        %v8590 = vsel %vm6346, %v8576, %v8578
        %v8591 = vsel %vm6346, %v8580, %v8582
        %v8592 = vsel %vm6346, %v8582, %v8584
        %v8606 = vsel %vm4088, %v8559, 0
        %v8609 = vsel %vm4088, %v8560, 0
        %8611 = vmatprep.subr.bf16.mxu0 %v8586
        %8612 = vmatpush1.bf16.msra.mxu0 %v8585
        %8613 = vmatprep.subr.bf16.mxu0 %v8588
        %8614 = vmatpush1.bf16.msra.mxu0 %v8587
        %8615 = vmatprep.subr.bf16.mxu0 %v8590
        %8616 = vmatpush1.bf16.msra.mxu0 %v8589
        %8617 = vmatprep.subr.bf16.mxu0 %v8592
        %8618 = vmatpush1.bf16.msra.mxu0 %v8591
        %8619 = vmatprep.subr.bf16.mxu0 0
        %8620 = vmatpush1.bf16.msra.mxu0 0
        %8621 = vmatprep.subr.bf16.mxu0 0
        %8622 = vmatpush1.bf16.msra.mxu0 0
        %8623 = vmatprep.subr.bf16.mxu0 0
        %8624 = vmatpush1.bf16.msra.mxu0 0
        %8625 = vmatprep.subr.bf16.mxu0 0
        %8626 = vmatpush1.bf16.msra.mxu0 0
        %8627 = vmatprep.subr.bf16.mxu0 0
        %8628 = vmatpush1.bf16.msra.mxu0 0
        %8629 = vmatprep.subr.bf16.mxu0 0
        %8630 = vmatpush1.bf16.msra.mxu0 0
        %8631 = vmatprep.subr.bf16.mxu0 0
        %8632 = vmatpush1.bf16.msra.mxu0 0
        %8633 = vmatprep.subr.bf16.mxu0 0
        %8634 = vmatpush1.bf16.msra.mxu0 0
        %8635 = vmatprep.subr.bf16.mxu0 0
        %8636 = vmatpush1.bf16.msra.mxu0 0
        %8637 = vmatprep.subr.bf16.mxu0 0
        %8638 = vmatpush1.bf16.msra.mxu0 0
        %8639 = vmatprep.subr.bf16.mxu0 0
        %8640 = vmatpush1.bf16.msra.mxu0 0
        %8641 = vmatprep.subr.bf16.mxu0 0
        %8642 = vmatpush1.bf16.msra.mxu0 0
        %8643 = vmatprep.mubr.bf16.mxu0 0
        %8644 = vmatmul.mubr.bf16.gmra.mrb[0].mxu0 %v8606
        %v8645 = vpop.f32.mrb[0].mxu0
        %v8646 = vadd.f32 0.0, %v8645
        %v8647 = vpop.f32.mrb[0].mxu0
        %v8648 = vadd.f32 0.0, %v8647
        %v8649 = vpop.f32.mrb[0].mxu0
        %v8650 = vadd.f32 0.0, %v8649
        %v8651 = vpop.f32.mrb[0].mxu0
        %v8652 = vadd.f32 0.0, %v8651
        %8653 = vmatprep.mubr.bf16.mxu0 0
        %8654 = vmatmul.mubr.bf16.gmra.mrb[0].mxu0 %v8609
        %v8655 = vpop.f32.mrb[0].mxu0
        %v8656 = vadd.f32 0.0, %v8655
        %v8657 = vpop.f32.mrb[0].mxu0
        %v8658 = vadd.f32 0.0, %v8657
        %v8659 = vpop.f32.mrb[0].mxu0
        %v8660 = vadd.f32 0.0, %v8659
        %v8661 = vpop.f32.mrb[0].mxu0
        %v8662 = vadd.f32 0.0, %v8661
        %8663 = vdwg.mxu0
        %8664 = vmatprep.subr.bf16.mxu0 0
        %8665 = vmatpush1.bf16.msra.mxu0 %v8566
        %8666 = vmatprep.subr.bf16.mxu0 0
        %8667 = vmatpush1.bf16.msra.mxu0 %v8572
        %8668 = vmatprep.subr.bf16.mxu0 0
        %8669 = vmatpush1.bf16.msra.mxu0 %v8578
        %8670 = vmatprep.subr.bf16.mxu0 0
        %8671 = vmatpush1.bf16.msra.mxu0 %v8584
        %8672 = vmatprep.subr.bf16.mxu0 0
        %8673 = vmatpush1.bf16.msra.mxu0 0
        %8674 = vmatprep.subr.bf16.mxu0 0
        %8675 = vmatpush1.bf16.msra.mxu0 0
        %8676 = vmatprep.subr.bf16.mxu0 0
        %8677 = vmatpush1.bf16.msra.mxu0 0
        %8678 = vmatprep.subr.bf16.mxu0 0
        %8679 = vmatpush1.bf16.msra.mxu0 0
        %8680 = vmatprep.subr.bf16.mxu0 0
        %8681 = vmatpush1.bf16.msra.mxu0 0
        %8682 = vmatprep.subr.bf16.mxu0 0
        %8683 = vmatpush1.bf16.msra.mxu0 0
        %8684 = vmatprep.subr.bf16.mxu0 0
        %8685 = vmatpush1.bf16.msra.mxu0 0
        %8686 = vmatprep.subr.bf16.mxu0 0
        %8687 = vmatpush1.bf16.msra.mxu0 0
        %8688 = vmatprep.subr.bf16.mxu0 0
        %8689 = vmatpush1.bf16.msra.mxu0 0
        %8690 = vmatprep.subr.bf16.mxu0 0
        %8691 = vmatpush1.bf16.msra.mxu0 0
        %8692 = vmatprep.subr.bf16.mxu0 0
        %8693 = vmatpush1.bf16.msra.mxu0 0
        %8694 = vmatprep.subr.bf16.mxu0 0
        %8695 = vmatpush1.bf16.msra.mxu0 0
        %8696 = vmatprep.mubr.bf16.mxu0 0
        %8697 = vmatmul.mubr.bf16.gmra.mrb[0].mxu0 %v8606
        %v8698 = vpop.f32.mrb[0].mxu0
        %v8699 = vadd.f32 0.0, %v8698
        %v8700 = vpop.f32.mrb[0].mxu0
        %v8701 = vpop.f32.mrb[0].mxu0
        %v8702 = vadd.f32 0.0, %v8701
        %v8703 = vpop.f32.mrb[0].mxu0
        %8704 = vmatprep.mubr.bf16.mxu0 0
        %8705 = vmatmul.mubr.bf16.gmra.mrb[0].mxu0 %v8609
        %v8706 = vpop.f32.mrb[0].mxu0
        %v8707 = vadd.f32 0.0, %v8706
        %v8708 = vpop.f32.mrb[0].mxu0
        %v8709 = vpop.f32.mrb[0].mxu0
        %v8710 = vadd.f32 0.0, %v8709
        %v8711 = vpop.f32.mrb[0].mxu0
        %8712 = vdwg.mxu0
        %v8713 = vadd.f32 %v8534, %v8646
        %v8714 = vadd.f32 %v8535, %v8648
        %v8715 = vadd.f32 %v8536, %v8699
        %v8716 = vadd.f32 %v8537, %v8650
        %v8717 = vadd.f32 %v8538, %v8652
        %v8718 = vadd.f32 %v8539, %v8702
        %v8719 = vadd.f32 %v8540, %v8656
        %v8720 = vadd.f32 %v8541, %v8658
        %v8721 = vadd.f32 %v8542, %v8707
        %v8722 = vadd.f32 %v8543, %v8660
        %v8723 = vadd.f32 %v8544, %v8662
        %v8724 = vadd.f32 %v8545, %v8710
        %s8725 = scalar_lea.vmem %s6, 64
        %v8726 = vld [vmem:[%s8725] sm:$0xf]
        %v8727 = vld [vmem:[%s8725 + $0x4] sm:$0xf]
        %v8728 = vld [vmem:[%s8725 + $0x8] sm:$0xf]
        %v8729 = vld [vmem:[%s8725 + $0xc] sm:$0xf]
        %v8734 = vunpack.c.l.b16 %v8726
        %v8735 = vunpack.c.l.b16 %v8727
        %v8736 = vunpack.c.l.b16 %v8728
        %v8737 = vunpack.c.l.b16 %v8729
        %v8738 = vpack.c.b16 %v8735, %v8734
        %v8739 = vpack.c.b16 %v8737, %v8736
        %8740 = vrot.lane.b32.xlu0 %v8010, 86
        %v8741 = vpop.permute.xlu0 %8740
        %8742 = vrot.lane.b32.xlu0 %v8011, 86
        %v8743 = vpop.permute.xlu0 %8742
        %8744 = vrot.lane.b32.xlu0 %v8012, 86
        %v8745 = vpop.permute.xlu0 %8744
        %8746 = vrot.lane.b32.xlu0 %v8013, 86
        %v8747 = vpop.permute.xlu0 %8746
        %8748 = vrot.lane.b32.xlu0 %v8014, 86
        %v8749 = vpop.permute.xlu0 %8748
        %8750 = vrot.lane.b32.xlu0 %v8015, 86
        %v8751 = vpop.permute.xlu0 %8750
        %8752 = vrot.lane.b32.xlu0 %v8016, 86
        %v8753 = vpop.permute.xlu0 %8752
        %8754 = vrot.lane.b32.xlu0 %v8017, 86
        %v8755 = vpop.permute.xlu0 %8754
        %8756 = vrot.lane.b32.xlu0 %v8018, 86
        %v8757 = vpop.permute.xlu0 %8756
        %8758 = vrot.lane.b32.xlu0 %v8019, 86
        %v8759 = vpop.permute.xlu0 %8758
        %8760 = vrot.lane.b32.xlu0 %v8020, 86
        %v8761 = vpop.permute.xlu0 %8760
        %8762 = vrot.lane.b32.xlu0 %v8021, 86
        %v8763 = vpop.permute.xlu0 %8762
        %v8764 = vsel %vm6594, %v8741, %v8743
        %v8765 = vsel %vm6594, %v8743, %v8745
        %v8766 = vsel %vm6594, %v8747, %v8749
        %v8767 = vsel %vm6594, %v8749, %v8751
        %v8768 = vsel %vm6594, %v8753, %v8755
        %v8769 = vsel %vm6594, %v8755, %v8757
        %v8770 = vsel %vm6594, %v8759, %v8761
        %v8771 = vsel %vm6594, %v8761, %v8763
        %v8785 = vsel %vm4088, %v8738, 0
        %v8788 = vsel %vm4088, %v8739, 0
        %8790 = vmatprep.subr.bf16.mxu0 %v8765
        %8791 = vmatpush1.bf16.msra.mxu0 %v8764
        %8792 = vmatprep.subr.bf16.mxu0 %v8767
        %8793 = vmatpush1.bf16.msra.mxu0 %v8766
        %8794 = vmatprep.subr.bf16.mxu0 %v8769
        %8795 = vmatpush1.bf16.msra.mxu0 %v8768
        %8796 = vmatprep.subr.bf16.mxu0 %v8771
        %8797 = vmatpush1.bf16.msra.mxu0 %v8770
        %8798 = vmatprep.subr.bf16.mxu0 0
        %8799 = vmatpush1.bf16.msra.mxu0 0
        %8800 = vmatprep.subr.bf16.mxu0 0
        %8801 = vmatpush1.bf16.msra.mxu0 0
        %8802 = vmatprep.subr.bf16.mxu0 0
        %8803 = vmatpush1.bf16.msra.mxu0 0
        %8804 = vmatprep.subr.bf16.mxu0 0
        %8805 = vmatpush1.bf16.msra.mxu0 0
        %8806 = vmatprep.subr.bf16.mxu0 0
        %8807 = vmatpush1.bf16.msra.mxu0 0
        %8808 = vmatprep.subr.bf16.mxu0 0
        %8809 = vmatpush1.bf16.msra.mxu0 0
        %8810 = vmatprep.subr.bf16.mxu0 0
        %8811 = vmatpush1.bf16.msra.mxu0 0
        %8812 = vmatprep.subr.bf16.mxu0 0
        %8813 = vmatpush1.bf16.msra.mxu0 0
        %8814 = vmatprep.subr.bf16.mxu0 0
        %8815 = vmatpush1.bf16.msra.mxu0 0
        %8816 = vmatprep.subr.bf16.mxu0 0
        %8817 = vmatpush1.bf16.msra.mxu0 0
        %8818 = vmatprep.subr.bf16.mxu0 0
        %8819 = vmatpush1.bf16.msra.mxu0 0
        %8820 = vmatprep.subr.bf16.mxu0 0
        %8821 = vmatpush1.bf16.msra.mxu0 0
        %8822 = vmatprep.mubr.bf16.mxu0 0
        %8823 = vmatmul.mubr.bf16.gmra.mrb[0].mxu0 %v8785
        %v8824 = vpop.f32.mrb[0].mxu0
        %v8825 = vadd.f32 0.0, %v8824
        %v8826 = vpop.f32.mrb[0].mxu0
        %v8827 = vadd.f32 0.0, %v8826
        %v8828 = vpop.f32.mrb[0].mxu0
        %v8829 = vadd.f32 0.0, %v8828
        %v8830 = vpop.f32.mrb[0].mxu0
        %v8831 = vadd.f32 0.0, %v8830
        %8832 = vmatprep.mubr.bf16.mxu0 0
        %8833 = vmatmul.mubr.bf16.gmra.mrb[0].mxu0 %v8788
        %v8834 = vpop.f32.mrb[0].mxu0
        %v8835 = vadd.f32 0.0, %v8834
        %v8836 = vpop.f32.mrb[0].mxu0
        %v8837 = vadd.f32 0.0, %v8836
        %v8838 = vpop.f32.mrb[0].mxu0
        %v8839 = vadd.f32 0.0, %v8838
        %v8840 = vpop.f32.mrb[0].mxu0
        %v8841 = vadd.f32 0.0, %v8840
        %8842 = vdwg.mxu0
        %8843 = vmatprep.subr.bf16.mxu0 0
        %8844 = vmatpush1.bf16.msra.mxu0 %v8745
        %8845 = vmatprep.subr.bf16.mxu0 0
        %8846 = vmatpush1.bf16.msra.mxu0 %v8751
        %8847 = vmatprep.subr.bf16.mxu0 0
        %8848 = vmatpush1.bf16.msra.mxu0 %v8757
        %8849 = vmatprep.subr.bf16.mxu0 0
        %8850 = vmatpush1.bf16.msra.mxu0 %v8763
        %8851 = vmatprep.subr.bf16.mxu0 0
        %8852 = vmatpush1.bf16.msra.mxu0 0
        %8853 = vmatprep.subr.bf16.mxu0 0
        %8854 = vmatpush1.bf16.msra.mxu0 0
        %8855 = vmatprep.subr.bf16.mxu0 0
        %8856 = vmatpush1.bf16.msra.mxu0 0
        %8857 = vmatprep.subr.bf16.mxu0 0
        %8858 = vmatpush1.bf16.msra.mxu0 0
        %8859 = vmatprep.subr.bf16.mxu0 0
        %8860 = vmatpush1.bf16.msra.mxu0 0
        %8861 = vmatprep.subr.bf16.mxu0 0
        %8862 = vmatpush1.bf16.msra.mxu0 0
        %8863 = vmatprep.subr.bf16.mxu0 0
        %8864 = vmatpush1.bf16.msra.mxu0 0
        %8865 = vmatprep.subr.bf16.mxu0 0
        %8866 = vmatpush1.bf16.msra.mxu0 0
        %8867 = vmatprep.subr.bf16.mxu0 0
        %8868 = vmatpush1.bf16.msra.mxu0 0
        %8869 = vmatprep.subr.bf16.mxu0 0
        %8870 = vmatpush1.bf16.msra.mxu0 0
        %8871 = vmatprep.subr.bf16.mxu0 0
        %8872 = vmatpush1.bf16.msra.mxu0 0
        %8873 = vmatprep.subr.bf16.mxu0 0
        %8874 = vmatpush1.bf16.msra.mxu0 0
        %8875 = vmatprep.mubr.bf16.mxu0 0
        %8876 = vmatmul.mubr.bf16.gmra.mrb[0].mxu0 %v8785
        %v8877 = vpop.f32.mrb[0].mxu0
        %v8878 = vadd.f32 0.0, %v8877
        %v8879 = vpop.f32.mrb[0].mxu0
        %v8880 = vpop.f32.mrb[0].mxu0
        %v8881 = vadd.f32 0.0, %v8880
        %v8882 = vpop.f32.mrb[0].mxu0
        %8883 = vmatprep.mubr.bf16.mxu0 0
        %8884 = vmatmul.mubr.bf16.gmra.mrb[0].mxu0 %v8788
        %v8885 = vpop.f32.mrb[0].mxu0
        %v8886 = vadd.f32 0.0, %v8885
        %v8887 = vpop.f32.mrb[0].mxu0
        %v8888 = vpop.f32.mrb[0].mxu0
        %v8889 = vadd.f32 0.0, %v8888
        %v8890 = vpop.f32.mrb[0].mxu0
        %8891 = vdwg.mxu0
        %v8892 = vadd.f32 %v8713, %v8825
        %v8893 = vadd.f32 %v8714, %v8827
        %v8894 = vadd.f32 %v8715, %v8878
        %v8895 = vadd.f32 %v8716, %v8829
        %v8896 = vadd.f32 %v8717, %v8831
        %v8897 = vadd.f32 %v8718, %v8881
        %v8898 = vadd.f32 %v8719, %v8835
        %v8899 = vadd.f32 %v8720, %v8837
        %v8900 = vadd.f32 %v8721, %v8886
        %v8901 = vadd.f32 %v8722, %v8839
        %v8902 = vadd.f32 %v8723, %v8841
        %v8903 = vadd.f32 %v8724, %v8889
        %s8904 = scalar_lea.vmem %s6, 80
        %v8905 = vld [vmem:[%s8904] sm:$0xf]
        %v8906 = vld [vmem:[%s8904 + $0x4] sm:$0xf]
        %v8907 = vld [vmem:[%s8904 + $0x8] sm:$0xf]
        %v8908 = vld [vmem:[%s8904 + $0xc] sm:$0xf]
        %v8913 = vunpack.c.l.b16 %v8905
        %v8914 = vunpack.c.l.b16 %v8906
        %v8915 = vunpack.c.l.b16 %v8907
        %v8916 = vunpack.c.l.b16 %v8908
        %v8917 = vpack.c.b16 %v8914, %v8913
        %v8918 = vpack.c.b16 %v8916, %v8915
        %8919 = vrot.lane.b32.xlu0 %v8010, 85
        %v8920 = vpop.permute.xlu0 %8919
        %8921 = vrot.lane.b32.xlu0 %v8011, 85
        %v8922 = vpop.permute.xlu0 %8921
        %8923 = vrot.lane.b32.xlu0 %v8012, 85
        %v8924 = vpop.permute.xlu0 %8923
        %8925 = vrot.lane.b32.xlu0 %v8013, 85
        %v8926 = vpop.permute.xlu0 %8925
        %8927 = vrot.lane.b32.xlu0 %v8014, 85
        %v8928 = vpop.permute.xlu0 %8927
        %8929 = vrot.lane.b32.xlu0 %v8015, 85
        %v8930 = vpop.permute.xlu0 %8929
        %8931 = vrot.lane.b32.xlu0 %v8016, 85
        %v8932 = vpop.permute.xlu0 %8931
        %8933 = vrot.lane.b32.xlu0 %v8017, 85
        %v8934 = vpop.permute.xlu0 %8933
        %8935 = vrot.lane.b32.xlu0 %v8018, 85
        %v8936 = vpop.permute.xlu0 %8935
        %8937 = vrot.lane.b32.xlu0 %v8019, 85
        %v8938 = vpop.permute.xlu0 %8937
        %8939 = vrot.lane.b32.xlu0 %v8020, 85
        %v8940 = vpop.permute.xlu0 %8939
        %8941 = vrot.lane.b32.xlu0 %v8021, 85
        %v8942 = vpop.permute.xlu0 %8941
        %v8943 = vsel %vm6842, %v8920, %v8922
        %v8944 = vsel %vm6842, %v8922, %v8924
        %v8945 = vsel %vm6842, %v8926, %v8928
        %v8946 = vsel %vm6842, %v8928, %v8930
        %v8947 = vsel %vm6842, %v8932, %v8934
        %v8948 = vsel %vm6842, %v8934, %v8936
        %v8949 = vsel %vm6842, %v8938, %v8940
        %v8950 = vsel %vm6842, %v8940, %v8942
        %v8964 = vsel %vm4088, %v8917, 0
        %v8967 = vsel %vm4088, %v8918, 0
        %8969 = vmatprep.subr.bf16.mxu0 %v8944
        %8970 = vmatpush1.bf16.msra.mxu0 %v8943
        %8971 = vmatprep.subr.bf16.mxu0 %v8946
        %8972 = vmatpush1.bf16.msra.mxu0 %v8945
        %8973 = vmatprep.subr.bf16.mxu0 %v8948
        %8974 = vmatpush1.bf16.msra.mxu0 %v8947
        %8975 = vmatprep.subr.bf16.mxu0 %v8950
        %8976 = vmatpush1.bf16.msra.mxu0 %v8949
        %8977 = vmatprep.subr.bf16.mxu0 0
        %8978 = vmatpush1.bf16.msra.mxu0 0
        %8979 = vmatprep.subr.bf16.mxu0 0
        %8980 = vmatpush1.bf16.msra.mxu0 0
        %8981 = vmatprep.subr.bf16.mxu0 0
        %8982 = vmatpush1.bf16.msra.mxu0 0
        %8983 = vmatprep.subr.bf16.mxu0 0
        %8984 = vmatpush1.bf16.msra.mxu0 0
        %8985 = vmatprep.subr.bf16.mxu0 0
        %8986 = vmatpush1.bf16.msra.mxu0 0
        %8987 = vmatprep.subr.bf16.mxu0 0
        %8988 = vmatpush1.bf16.msra.mxu0 0
        %8989 = vmatprep.subr.bf16.mxu0 0
        %8990 = vmatpush1.bf16.msra.mxu0 0
        %8991 = vmatprep.subr.bf16.mxu0 0
        %8992 = vmatpush1.bf16.msra.mxu0 0
        %8993 = vmatprep.subr.bf16.mxu0 0
        %8994 = vmatpush1.bf16.msra.mxu0 0
        %8995 = vmatprep.subr.bf16.mxu0 0
        %8996 = vmatpush1.bf16.msra.mxu0 0
        %8997 = vmatprep.subr.bf16.mxu0 0
        %8998 = vmatpush1.bf16.msra.mxu0 0
        %8999 = vmatprep.subr.bf16.mxu0 0
        %9000 = vmatpush1.bf16.msra.mxu0 0
        %9001 = vmatprep.mubr.bf16.mxu0 0
        %9002 = vmatmul.mubr.bf16.gmra.mrb[0].mxu0 %v8964
        %v9003 = vpop.f32.mrb[0].mxu0
        %v9004 = vadd.f32 0.0, %v9003
        %v9005 = vpop.f32.mrb[0].mxu0
        %v9006 = vadd.f32 0.0, %v9005
        %v9007 = vpop.f32.mrb[0].mxu0
        %v9008 = vadd.f32 0.0, %v9007
        %v9009 = vpop.f32.mrb[0].mxu0
        %v9010 = vadd.f32 0.0, %v9009
        %9011 = vmatprep.mubr.bf16.mxu0 0
        %9012 = vmatmul.mubr.bf16.gmra.mrb[0].mxu0 %v8967
        %v9013 = vpop.f32.mrb[0].mxu0
        %v9014 = vadd.f32 0.0, %v9013
        %v9015 = vpop.f32.mrb[0].mxu0
        %v9016 = vadd.f32 0.0, %v9015
        %v9017 = vpop.f32.mrb[0].mxu0
        %v9018 = vadd.f32 0.0, %v9017
        %v9019 = vpop.f32.mrb[0].mxu0
        %v9020 = vadd.f32 0.0, %v9019
        %9021 = vdwg.mxu0
        %9022 = vmatprep.subr.bf16.mxu0 0
        %9023 = vmatpush1.bf16.msra.mxu0 %v8924
        %9024 = vmatprep.subr.bf16.mxu0 0
        %9025 = vmatpush1.bf16.msra.mxu0 %v8930
        %9026 = vmatprep.subr.bf16.mxu0 0
        %9027 = vmatpush1.bf16.msra.mxu0 %v8936
        %9028 = vmatprep.subr.bf16.mxu0 0
        %9029 = vmatpush1.bf16.msra.mxu0 %v8942
        %9030 = vmatprep.subr.bf16.mxu0 0
        %9031 = vmatpush1.bf16.msra.mxu0 0
        %9032 = vmatprep.subr.bf16.mxu0 0
        %9033 = vmatpush1.bf16.msra.mxu0 0
        %9034 = vmatprep.subr.bf16.mxu0 0
        %9035 = vmatpush1.bf16.msra.mxu0 0
        %9036 = vmatprep.subr.bf16.mxu0 0
        %9037 = vmatpush1.bf16.msra.mxu0 0
        %9038 = vmatprep.subr.bf16.mxu0 0
        %9039 = vmatpush1.bf16.msra.mxu0 0
        %9040 = vmatprep.subr.bf16.mxu0 0
        %9041 = vmatpush1.bf16.msra.mxu0 0
        %9042 = vmatprep.subr.bf16.mxu0 0
        %9043 = vmatpush1.bf16.msra.mxu0 0
        %9044 = vmatprep.subr.bf16.mxu0 0
        %9045 = vmatpush1.bf16.msra.mxu0 0
        %9046 = vmatprep.subr.bf16.mxu0 0
        %9047 = vmatpush1.bf16.msra.mxu0 0
        %9048 = vmatprep.subr.bf16.mxu0 0
        %9049 = vmatpush1.bf16.msra.mxu0 0
        %9050 = vmatprep.subr.bf16.mxu0 0
        %9051 = vmatpush1.bf16.msra.mxu0 0
        %9052 = vmatprep.subr.bf16.mxu0 0
        %9053 = vmatpush1.bf16.msra.mxu0 0
        %9054 = vmatprep.mubr.bf16.mxu0 0
        %9055 = vmatmul.mubr.bf16.gmra.mrb[0].mxu0 %v8964
        %v9056 = vpop.f32.mrb[0].mxu0
        %v9057 = vadd.f32 0.0, %v9056
        %v9058 = vpop.f32.mrb[0].mxu0
        %v9059 = vpop.f32.mrb[0].mxu0
        %v9060 = vadd.f32 0.0, %v9059
        %v9061 = vpop.f32.mrb[0].mxu0
        %9062 = vmatprep.mubr.bf16.mxu0 0
        %9063 = vmatmul.mubr.bf16.gmra.mrb[0].mxu0 %v8967
        %v9064 = vpop.f32.mrb[0].mxu0
        %v9065 = vadd.f32 0.0, %v9064
        %v9066 = vpop.f32.mrb[0].mxu0
        %v9067 = vpop.f32.mrb[0].mxu0
        %v9068 = vadd.f32 0.0, %v9067
        %v9069 = vpop.f32.mrb[0].mxu0
        %9070 = vdwg.mxu0
        %v9071 = vadd.f32 %v8892, %v9004
        %v9072 = vadd.f32 %v8893, %v9006
        %v9073 = vadd.f32 %v8894, %v9057
        %v9074 = vadd.f32 %v8895, %v9008
        %v9075 = vadd.f32 %v8896, %v9010
        %v9076 = vadd.f32 %v8897, %v9060
        %v9077 = vadd.f32 %v8898, %v9014
        %v9078 = vadd.f32 %v8899, %v9016
        %v9079 = vadd.f32 %v8900, %v9065
        %v9080 = vadd.f32 %v8901, %v9018
        %v9081 = vadd.f32 %v8902, %v9020
        %v9082 = vadd.f32 %v8903, %v9068
        %s9083 = scalar_lea.vmem %s6, 96
        %v9084 = vld [vmem:[%s9083] sm:$0xf]
        %v9085 = vld [vmem:[%s9083 + $0x4] sm:$0xf]
        %v9086 = vld [vmem:[%s9083 + $0x8] sm:$0xf]
        %v9087 = vld [vmem:[%s9083 + $0xc] sm:$0xf]
        %v9092 = vunpack.c.l.b16 %v9084
        %v9093 = vunpack.c.l.b16 %v9085
        %v9094 = vunpack.c.l.b16 %v9086
        %v9095 = vunpack.c.l.b16 %v9087
        %v9096 = vpack.c.b16 %v9093, %v9092
        %v9097 = vpack.c.b16 %v9095, %v9094
        %9098 = vrot.lane.b32.xlu0 %v8010, 67
        %v9099 = vpop.permute.xlu0 %9098
        %9100 = vrot.lane.b32.xlu0 %v8011, 67
        %v9101 = vpop.permute.xlu0 %9100
        %9102 = vrot.lane.b32.xlu0 %v8012, 67
        %v9103 = vpop.permute.xlu0 %9102
        %9104 = vrot.lane.b32.xlu0 %v8013, 67
        %v9105 = vpop.permute.xlu0 %9104
        %9106 = vrot.lane.b32.xlu0 %v8014, 67
        %v9107 = vpop.permute.xlu0 %9106
        %9108 = vrot.lane.b32.xlu0 %v8015, 67
        %v9109 = vpop.permute.xlu0 %9108
        %9110 = vrot.lane.b32.xlu0 %v8016, 67
        %v9111 = vpop.permute.xlu0 %9110
        %9112 = vrot.lane.b32.xlu0 %v8017, 67
        %v9113 = vpop.permute.xlu0 %9112
        %9114 = vrot.lane.b32.xlu0 %v8018, 67
        %v9115 = vpop.permute.xlu0 %9114
        %9116 = vrot.lane.b32.xlu0 %v8019, 67
        %v9117 = vpop.permute.xlu0 %9116
        %9118 = vrot.lane.b32.xlu0 %v8020, 67
        %v9119 = vpop.permute.xlu0 %9118
        %9120 = vrot.lane.b32.xlu0 %v8021, 67
        %v9121 = vpop.permute.xlu0 %9120
        %v9122 = vsel %vm7090, %v9099, %v9101
        %v9123 = vsel %vm7090, %v9101, %v9103
        %v9124 = vsel %vm7090, %v9105, %v9107
        %v9125 = vsel %vm7090, %v9107, %v9109
        %v9126 = vsel %vm7090, %v9111, %v9113
        %v9127 = vsel %vm7090, %v9113, %v9115
        %v9128 = vsel %vm7090, %v9117, %v9119
        %v9129 = vsel %vm7090, %v9119, %v9121
        %v9143 = vsel %vm4088, %v9096, 0
        %v9146 = vsel %vm4088, %v9097, 0
        %9148 = vmatprep.subr.bf16.mxu0 %v9123
        %9149 = vmatpush1.bf16.msra.mxu0 %v9122
        %9150 = vmatprep.subr.bf16.mxu0 %v9125
        %9151 = vmatpush1.bf16.msra.mxu0 %v9124
        %9152 = vmatprep.subr.bf16.mxu0 %v9127
        %9153 = vmatpush1.bf16.msra.mxu0 %v9126
        %9154 = vmatprep.subr.bf16.mxu0 %v9129
        %9155 = vmatpush1.bf16.msra.mxu0 %v9128
        %9156 = vmatprep.subr.bf16.mxu0 0
        %9157 = vmatpush1.bf16.msra.mxu0 0
        %9158 = vmatprep.subr.bf16.mxu0 0
        %9159 = vmatpush1.bf16.msra.mxu0 0
        %9160 = vmatprep.subr.bf16.mxu0 0
        %9161 = vmatpush1.bf16.msra.mxu0 0
        %9162 = vmatprep.subr.bf16.mxu0 0
        %9163 = vmatpush1.bf16.msra.mxu0 0
        %9164 = vmatprep.subr.bf16.mxu0 0
        %9165 = vmatpush1.bf16.msra.mxu0 0
        %9166 = vmatprep.subr.bf16.mxu0 0
        %9167 = vmatpush1.bf16.msra.mxu0 0
        %9168 = vmatprep.subr.bf16.mxu0 0
        %9169 = vmatpush1.bf16.msra.mxu0 0
        %9170 = vmatprep.subr.bf16.mxu0 0
        %9171 = vmatpush1.bf16.msra.mxu0 0
        %9172 = vmatprep.subr.bf16.mxu0 0
        %9173 = vmatpush1.bf16.msra.mxu0 0
        %9174 = vmatprep.subr.bf16.mxu0 0
        %9175 = vmatpush1.bf16.msra.mxu0 0
        %9176 = vmatprep.subr.bf16.mxu0 0
        %9177 = vmatpush1.bf16.msra.mxu0 0
        %9178 = vmatprep.subr.bf16.mxu0 0
        %9179 = vmatpush1.bf16.msra.mxu0 0
        %9180 = vmatprep.mubr.bf16.mxu0 0
        %9181 = vmatmul.mubr.bf16.gmra.mrb[0].mxu0 %v9143
        %v9182 = vpop.f32.mrb[0].mxu0
        %v9183 = vadd.f32 0.0, %v9182
        %v9184 = vpop.f32.mrb[0].mxu0
        %v9185 = vadd.f32 0.0, %v9184
        %v9186 = vpop.f32.mrb[0].mxu0
        %v9187 = vadd.f32 0.0, %v9186
        %v9188 = vpop.f32.mrb[0].mxu0
        %v9189 = vadd.f32 0.0, %v9188
        %9190 = vmatprep.mubr.bf16.mxu0 0
        %9191 = vmatmul.mubr.bf16.gmra.mrb[0].mxu0 %v9146
        %v9192 = vpop.f32.mrb[0].mxu0
        %v9193 = vadd.f32 0.0, %v9192
        %v9194 = vpop.f32.mrb[0].mxu0
        %v9195 = vadd.f32 0.0, %v9194
        %v9196 = vpop.f32.mrb[0].mxu0
        %v9197 = vadd.f32 0.0, %v9196
        %v9198 = vpop.f32.mrb[0].mxu0
        %v9199 = vadd.f32 0.0, %v9198
        %9200 = vdwg.mxu0
        %9201 = vmatprep.subr.bf16.mxu0 0
        %9202 = vmatpush1.bf16.msra.mxu0 %v9103
        %9203 = vmatprep.subr.bf16.mxu0 0
        %9204 = vmatpush1.bf16.msra.mxu0 %v9109
        %9205 = vmatprep.subr.bf16.mxu0 0
        %9206 = vmatpush1.bf16.msra.mxu0 %v9115
        %9207 = vmatprep.subr.bf16.mxu0 0
        %9208 = vmatpush1.bf16.msra.mxu0 %v9121
        %9209 = vmatprep.subr.bf16.mxu0 0
        %9210 = vmatpush1.bf16.msra.mxu0 0
        %9211 = vmatprep.subr.bf16.mxu0 0
        %9212 = vmatpush1.bf16.msra.mxu0 0
        %9213 = vmatprep.subr.bf16.mxu0 0
        %9214 = vmatpush1.bf16.msra.mxu0 0
        %9215 = vmatprep.subr.bf16.mxu0 0
        %9216 = vmatpush1.bf16.msra.mxu0 0
        %9217 = vmatprep.subr.bf16.mxu0 0
        %9218 = vmatpush1.bf16.msra.mxu0 0
        %9219 = vmatprep.subr.bf16.mxu0 0
        %9220 = vmatpush1.bf16.msra.mxu0 0
        %9221 = vmatprep.subr.bf16.mxu0 0
        %9222 = vmatpush1.bf16.msra.mxu0 0
        %9223 = vmatprep.subr.bf16.mxu0 0
        %9224 = vmatpush1.bf16.msra.mxu0 0
        %9225 = vmatprep.subr.bf16.mxu0 0
        %9226 = vmatpush1.bf16.msra.mxu0 0
        %9227 = vmatprep.subr.bf16.mxu0 0
        %9228 = vmatpush1.bf16.msra.mxu0 0
        %9229 = vmatprep.subr.bf16.mxu0 0
        %9230 = vmatpush1.bf16.msra.mxu0 0
        %9231 = vmatprep.subr.bf16.mxu0 0
        %9232 = vmatpush1.bf16.msra.mxu0 0
        %9233 = vmatprep.mubr.bf16.mxu0 0
        %9234 = vmatmul.mubr.bf16.gmra.mrb[0].mxu0 %v9143
        %v9235 = vpop.f32.mrb[0].mxu0
        %v9236 = vadd.f32 0.0, %v9235
        %v9237 = vpop.f32.mrb[0].mxu0
        %v9238 = vpop.f32.mrb[0].mxu0
        %v9239 = vadd.f32 0.0, %v9238
        %v9240 = vpop.f32.mrb[0].mxu0
        %9241 = vmatprep.mubr.bf16.mxu0 0
        %9242 = vmatmul.mubr.bf16.gmra.mrb[0].mxu0 %v9146
        %v9243 = vpop.f32.mrb[0].mxu0
        %v9244 = vadd.f32 0.0, %v9243
        %v9245 = vpop.f32.mrb[0].mxu0
        %v9246 = vpop.f32.mrb[0].mxu0
        %v9247 = vadd.f32 0.0, %v9246
        %v9248 = vpop.f32.mrb[0].mxu0
        %9249 = vdwg.mxu0
        %v9250 = vadd.f32 %v9071, %v9183
        %v9251 = vadd.f32 %v9072, %v9185
        %v9252 = vadd.f32 %v9073, %v9236
        %v9253 = vadd.f32 %v9074, %v9187
        %v9254 = vadd.f32 %v9075, %v9189
        %v9255 = vadd.f32 %v9076, %v9239
        %v9256 = vadd.f32 %v9077, %v9193
        %v9257 = vadd.f32 %v9078, %v9195
        %v9258 = vadd.f32 %v9079, %v9244
        %v9259 = vadd.f32 %v9080, %v9197
        %v9260 = vadd.f32 %v9081, %v9199
        %v9261 = vadd.f32 %v9082, %v9247
        %s9262 = scalar_lea.vmem %s6, 112
        %v9263 = vld [vmem:[%s9262] sm:$0xf]
        %v9264 = vld [vmem:[%s9262 + $0x4] sm:$0xf]
        %v9265 = vld [vmem:[%s9262 + $0x8] sm:$0xf]
        %v9266 = vld [vmem:[%s9262 + $0xc] sm:$0xf]
        %v9271 = vunpack.c.l.b16 %v9263
        %v9272 = vunpack.c.l.b16 %v9264
        %v9273 = vunpack.c.l.b16 %v9265
        %v9274 = vunpack.c.l.b16 %v9266
        %v9275 = vpack.c.b16 %v9272, %v9271
        %v9276 = vpack.c.b16 %v9274, %v9273
        %9277 = vrot.lane.b32.xlu0 %v8010, 66
        %v9278 = vpop.permute.xlu0 %9277
        %9279 = vrot.lane.b32.xlu0 %v8011, 66
        %v9280 = vpop.permute.xlu0 %9279
        %9281 = vrot.lane.b32.xlu0 %v8012, 66
        %v9282 = vpop.permute.xlu0 %9281
        %9283 = vrot.lane.b32.xlu0 %v8013, 66
        %v9284 = vpop.permute.xlu0 %9283
        %9285 = vrot.lane.b32.xlu0 %v8014, 66
        %v9286 = vpop.permute.xlu0 %9285
        %9287 = vrot.lane.b32.xlu0 %v8015, 66
        %v9288 = vpop.permute.xlu0 %9287
        %9289 = vrot.lane.b32.xlu0 %v8016, 66
        %v9290 = vpop.permute.xlu0 %9289
        %9291 = vrot.lane.b32.xlu0 %v8017, 66
        %v9292 = vpop.permute.xlu0 %9291
        %9293 = vrot.lane.b32.xlu0 %v8018, 66
        %v9294 = vpop.permute.xlu0 %9293
        %9295 = vrot.lane.b32.xlu0 %v8019, 66
        %v9296 = vpop.permute.xlu0 %9295
        %9297 = vrot.lane.b32.xlu0 %v8020, 66
        %v9298 = vpop.permute.xlu0 %9297
        %9299 = vrot.lane.b32.xlu0 %v8021, 66
        %v9300 = vpop.permute.xlu0 %9299
        %v9301 = vsel %vm7338, %v9278, %v9280
        %v9302 = vsel %vm7338, %v9280, %v9282
        %v9303 = vsel %vm7338, %v9284, %v9286
        %v9304 = vsel %vm7338, %v9286, %v9288
        %v9305 = vsel %vm7338, %v9290, %v9292
        %v9306 = vsel %vm7338, %v9292, %v9294
        %v9307 = vsel %vm7338, %v9296, %v9298
        %v9308 = vsel %vm7338, %v9298, %v9300
        %v9322 = vsel %vm4088, %v9275, 0
        %v9325 = vsel %vm4088, %v9276, 0
        %9327 = vmatprep.subr.bf16.mxu0 %v9302
        %9328 = vmatpush1.bf16.msra.mxu0 %v9301
        %9329 = vmatprep.subr.bf16.mxu0 %v9304
        %9330 = vmatpush1.bf16.msra.mxu0 %v9303
        %9331 = vmatprep.subr.bf16.mxu0 %v9306
        %9332 = vmatpush1.bf16.msra.mxu0 %v9305
        %9333 = vmatprep.subr.bf16.mxu0 %v9308
        %9334 = vmatpush1.bf16.msra.mxu0 %v9307
        %9335 = vmatprep.subr.bf16.mxu0 0
        %9336 = vmatpush1.bf16.msra.mxu0 0
        %9337 = vmatprep.subr.bf16.mxu0 0
        %9338 = vmatpush1.bf16.msra.mxu0 0
        %9339 = vmatprep.subr.bf16.mxu0 0
        %9340 = vmatpush1.bf16.msra.mxu0 0
        %9341 = vmatprep.subr.bf16.mxu0 0
        %9342 = vmatpush1.bf16.msra.mxu0 0
        %9343 = vmatprep.subr.bf16.mxu0 0
        %9344 = vmatpush1.bf16.msra.mxu0 0
        %9345 = vmatprep.subr.bf16.mxu0 0
        %9346 = vmatpush1.bf16.msra.mxu0 0
        %9347 = vmatprep.subr.bf16.mxu0 0
        %9348 = vmatpush1.bf16.msra.mxu0 0
        %9349 = vmatprep.subr.bf16.mxu0 0
        %9350 = vmatpush1.bf16.msra.mxu0 0
        %9351 = vmatprep.subr.bf16.mxu0 0
        %9352 = vmatpush1.bf16.msra.mxu0 0
        %9353 = vmatprep.subr.bf16.mxu0 0
        %9354 = vmatpush1.bf16.msra.mxu0 0
        %9355 = vmatprep.subr.bf16.mxu0 0
        %9356 = vmatpush1.bf16.msra.mxu0 0
        %9357 = vmatprep.subr.bf16.mxu0 0
        %9358 = vmatpush1.bf16.msra.mxu0 0
        %9359 = vmatprep.mubr.bf16.mxu0 0
        %9360 = vmatmul.mubr.bf16.gmra.mrb[0].mxu0 %v9322
        %v9361 = vpop.f32.mrb[0].mxu0
        %v9362 = vadd.f32 0.0, %v9361
        %v9363 = vpop.f32.mrb[0].mxu0
        %v9364 = vadd.f32 0.0, %v9363
        %v9365 = vpop.f32.mrb[0].mxu0
        %v9366 = vadd.f32 0.0, %v9365
        %v9367 = vpop.f32.mrb[0].mxu0
        %v9368 = vadd.f32 0.0, %v9367
        %9369 = vmatprep.mubr.bf16.mxu0 0
        %9370 = vmatmul.mubr.bf16.gmra.mrb[0].mxu0 %v9325
        %v9371 = vpop.f32.mrb[0].mxu0
        %v9372 = vadd.f32 0.0, %v9371
        %v9373 = vpop.f32.mrb[0].mxu0
        %v9374 = vadd.f32 0.0, %v9373
        %v9375 = vpop.f32.mrb[0].mxu0
        %v9376 = vadd.f32 0.0, %v9375
        %v9377 = vpop.f32.mrb[0].mxu0
        %v9378 = vadd.f32 0.0, %v9377
        %9379 = vdwg.mxu0
        %9380 = vmatprep.subr.bf16.mxu0 0
        %9381 = vmatpush1.bf16.msra.mxu0 %v9282
        %9382 = vmatprep.subr.bf16.mxu0 0
        %9383 = vmatpush1.bf16.msra.mxu0 %v9288
        %9384 = vmatprep.subr.bf16.mxu0 0
        %9385 = vmatpush1.bf16.msra.mxu0 %v9294
        %9386 = vmatprep.subr.bf16.mxu0 0
        %9387 = vmatpush1.bf16.msra.mxu0 %v9300
        %9388 = vmatprep.subr.bf16.mxu0 0
        %9389 = vmatpush1.bf16.msra.mxu0 0
        %9390 = vmatprep.subr.bf16.mxu0 0
        %9391 = vmatpush1.bf16.msra.mxu0 0
        %9392 = vmatprep.subr.bf16.mxu0 0
        %9393 = vmatpush1.bf16.msra.mxu0 0
        %9394 = vmatprep.subr.bf16.mxu0 0
        %9395 = vmatpush1.bf16.msra.mxu0 0
        %9396 = vmatprep.subr.bf16.mxu0 0
        %9397 = vmatpush1.bf16.msra.mxu0 0
        %9398 = vmatprep.subr.bf16.mxu0 0
        %9399 = vmatpush1.bf16.msra.mxu0 0
        %9400 = vmatprep.subr.bf16.mxu0 0
        %9401 = vmatpush1.bf16.msra.mxu0 0
        %9402 = vmatprep.subr.bf16.mxu0 0
        %9403 = vmatpush1.bf16.msra.mxu0 0
        %9404 = vmatprep.subr.bf16.mxu0 0
        %9405 = vmatpush1.bf16.msra.mxu0 0
        %9406 = vmatprep.subr.bf16.mxu0 0
        %9407 = vmatpush1.bf16.msra.mxu0 0
        %9408 = vmatprep.subr.bf16.mxu0 0
        %9409 = vmatpush1.bf16.msra.mxu0 0
        %9410 = vmatprep.subr.bf16.mxu0 0
        %9411 = vmatpush1.bf16.msra.mxu0 0
        %9412 = vmatprep.mubr.bf16.mxu0 0
        %9413 = vmatmul.mubr.bf16.gmra.mrb[0].mxu0 %v9322
        %v9414 = vpop.f32.mrb[0].mxu0
        %v9415 = vadd.f32 0.0, %v9414
        %v9416 = vpop.f32.mrb[0].mxu0
        %v9417 = vpop.f32.mrb[0].mxu0
        %v9418 = vadd.f32 0.0, %v9417
        %v9419 = vpop.f32.mrb[0].mxu0
        %9420 = vmatprep.mubr.bf16.mxu0 0
        %9421 = vmatmul.mubr.bf16.gmra.mrb[0].mxu0 %v9325
        %v9422 = vpop.f32.mrb[0].mxu0
        %v9423 = vadd.f32 0.0, %v9422
        %v9424 = vpop.f32.mrb[0].mxu0
        %v9425 = vpop.f32.mrb[0].mxu0
        %v9426 = vadd.f32 0.0, %v9425
        %v9427 = vpop.f32.mrb[0].mxu0
        %9428 = vdwg.mxu0
        %v9429 = vadd.f32 %v9250, %v9362
        %v9430 = vadd.f32 %v9251, %v9364
        %v9431 = vadd.f32 %v9252, %v9415
        %v9432 = vadd.f32 %v9253, %v9366
        %v9433 = vadd.f32 %v9254, %v9368
        %v9434 = vadd.f32 %v9255, %v9418
        %v9435 = vadd.f32 %v9256, %v9372
        %v9436 = vadd.f32 %v9257, %v9374
        %v9437 = vadd.f32 %v9258, %v9423
        %v9438 = vadd.f32 %v9259, %v9376
        %v9439 = vadd.f32 %v9260, %v9378
        %v9440 = vadd.f32 %v9261, %v9426
        %s9441 = scalar_lea.vmem %s6, 128
        %v9442 = vld [vmem:[%s9441] sm:$0xf]
        %v9443 = vld [vmem:[%s9441 + $0x4] sm:$0xf]
        %v9444 = vld [vmem:[%s9441 + $0x8] sm:$0xf]
        %v9445 = vld [vmem:[%s9441 + $0xc] sm:$0xf]
        %v9450 = vunpack.c.l.b16 %v9442
        %v9451 = vunpack.c.l.b16 %v9443
        %v9452 = vunpack.c.l.b16 %v9444
        %v9453 = vunpack.c.l.b16 %v9445
        %v9454 = vpack.c.b16 %v9451, %v9450
        %v9455 = vpack.c.b16 %v9453, %v9452
        %9456 = vrot.lane.b32.xlu0 %v8010, 65
        %v9457 = vpop.permute.xlu0 %9456
        %9458 = vrot.lane.b32.xlu0 %v8011, 65
        %v9459 = vpop.permute.xlu0 %9458
        %9460 = vrot.lane.b32.xlu0 %v8012, 65
        %v9461 = vpop.permute.xlu0 %9460
        %9462 = vrot.lane.b32.xlu0 %v8013, 65
        %v9463 = vpop.permute.xlu0 %9462
        %9464 = vrot.lane.b32.xlu0 %v8014, 65
        %v9465 = vpop.permute.xlu0 %9464
        %9466 = vrot.lane.b32.xlu0 %v8015, 65
        %v9467 = vpop.permute.xlu0 %9466
        %9468 = vrot.lane.b32.xlu0 %v8016, 65
        %v9469 = vpop.permute.xlu0 %9468
        %9470 = vrot.lane.b32.xlu0 %v8017, 65
        %v9471 = vpop.permute.xlu0 %9470
        %9472 = vrot.lane.b32.xlu0 %v8018, 65
        %v9473 = vpop.permute.xlu0 %9472
        %9474 = vrot.lane.b32.xlu0 %v8019, 65
        %v9475 = vpop.permute.xlu0 %9474
        %9476 = vrot.lane.b32.xlu0 %v8020, 65
        %v9477 = vpop.permute.xlu0 %9476
        %9478 = vrot.lane.b32.xlu0 %v8021, 65
        %v9479 = vpop.permute.xlu0 %9478
        %v9480 = vsel %vm7586, %v9457, %v9459
        %v9481 = vsel %vm7586, %v9459, %v9461
        %v9482 = vsel %vm7586, %v9463, %v9465
        %v9483 = vsel %vm7586, %v9465, %v9467
        %v9484 = vsel %vm7586, %v9469, %v9471
        %v9485 = vsel %vm7586, %v9471, %v9473
        %v9486 = vsel %vm7586, %v9475, %v9477
        %v9487 = vsel %vm7586, %v9477, %v9479
        %v9501 = vsel %vm4088, %v9454, 0
        %v9504 = vsel %vm4088, %v9455, 0
        %9506 = vmatprep.subr.bf16.mxu0 %v9481
        %9507 = vmatpush1.bf16.msra.mxu0 %v9480
        %9508 = vmatprep.subr.bf16.mxu0 %v9483
        %9509 = vmatpush1.bf16.msra.mxu0 %v9482
        %9510 = vmatprep.subr.bf16.mxu0 %v9485
        %9511 = vmatpush1.bf16.msra.mxu0 %v9484
        %9512 = vmatprep.subr.bf16.mxu0 %v9487
        %9513 = vmatpush1.bf16.msra.mxu0 %v9486
        %9514 = vmatprep.subr.bf16.mxu0 0
        %9515 = vmatpush1.bf16.msra.mxu0 0
        %9516 = vmatprep.subr.bf16.mxu0 0
        %9517 = vmatpush1.bf16.msra.mxu0 0
        %9518 = vmatprep.subr.bf16.mxu0 0
        %9519 = vmatpush1.bf16.msra.mxu0 0
        %9520 = vmatprep.subr.bf16.mxu0 0
        %9521 = vmatpush1.bf16.msra.mxu0 0
        %9522 = vmatprep.subr.bf16.mxu0 0
        %9523 = vmatpush1.bf16.msra.mxu0 0
        %9524 = vmatprep.subr.bf16.mxu0 0
        %9525 = vmatpush1.bf16.msra.mxu0 0
        %9526 = vmatprep.subr.bf16.mxu0 0
        %9527 = vmatpush1.bf16.msra.mxu0 0
        %9528 = vmatprep.subr.bf16.mxu0 0
        %9529 = vmatpush1.bf16.msra.mxu0 0
        %9530 = vmatprep.subr.bf16.mxu0 0
        %9531 = vmatpush1.bf16.msra.mxu0 0
        %9532 = vmatprep.subr.bf16.mxu0 0
        %9533 = vmatpush1.bf16.msra.mxu0 0
        %9534 = vmatprep.subr.bf16.mxu0 0
        %9535 = vmatpush1.bf16.msra.mxu0 0
        %9536 = vmatprep.subr.bf16.mxu0 0
        %9537 = vmatpush1.bf16.msra.mxu0 0
        %9538 = vmatprep.mubr.bf16.mxu0 0
        %9539 = vmatmul.mubr.bf16.gmra.mrb[0].mxu0 %v9501
        %v9540 = vpop.f32.mrb[0].mxu0
        %v9541 = vadd.f32 0.0, %v9540
        %v9542 = vpop.f32.mrb[0].mxu0
        %v9543 = vadd.f32 0.0, %v9542
        %v9544 = vpop.f32.mrb[0].mxu0
        %v9545 = vadd.f32 0.0, %v9544
        %v9546 = vpop.f32.mrb[0].mxu0
        %v9547 = vadd.f32 0.0, %v9546
        %9548 = vmatprep.mubr.bf16.mxu0 0
        %9549 = vmatmul.mubr.bf16.gmra.mrb[0].mxu0 %v9504
        %v9550 = vpop.f32.mrb[0].mxu0
        %v9551 = vadd.f32 0.0, %v9550
        %v9552 = vpop.f32.mrb[0].mxu0
        %v9553 = vadd.f32 0.0, %v9552
        %v9554 = vpop.f32.mrb[0].mxu0
        %v9555 = vadd.f32 0.0, %v9554
        %v9556 = vpop.f32.mrb[0].mxu0
        %v9557 = vadd.f32 0.0, %v9556
        %9558 = vdwg.mxu0
        %9559 = vmatprep.subr.bf16.mxu0 0
        %9560 = vmatpush1.bf16.msra.mxu0 %v9461
        %9561 = vmatprep.subr.bf16.mxu0 0
        %9562 = vmatpush1.bf16.msra.mxu0 %v9467
        %9563 = vmatprep.subr.bf16.mxu0 0
        %9564 = vmatpush1.bf16.msra.mxu0 %v9473
        %9565 = vmatprep.subr.bf16.mxu0 0
        %9566 = vmatpush1.bf16.msra.mxu0 %v9479
        %9567 = vmatprep.subr.bf16.mxu0 0
        %9568 = vmatpush1.bf16.msra.mxu0 0
        %9569 = vmatprep.subr.bf16.mxu0 0
        %9570 = vmatpush1.bf16.msra.mxu0 0
        %9571 = vmatprep.subr.bf16.mxu0 0
        %9572 = vmatpush1.bf16.msra.mxu0 0
        %9573 = vmatprep.subr.bf16.mxu0 0
        %9574 = vmatpush1.bf16.msra.mxu0 0
        %9575 = vmatprep.subr.bf16.mxu0 0
        %9576 = vmatpush1.bf16.msra.mxu0 0
        %9577 = vmatprep.subr.bf16.mxu0 0
        %9578 = vmatpush1.bf16.msra.mxu0 0
        %9579 = vmatprep.subr.bf16.mxu0 0
        %9580 = vmatpush1.bf16.msra.mxu0 0
        %9581 = vmatprep.subr.bf16.mxu0 0
        %9582 = vmatpush1.bf16.msra.mxu0 0
        %9583 = vmatprep.subr.bf16.mxu0 0
        %9584 = vmatpush1.bf16.msra.mxu0 0
        %9585 = vmatprep.subr.bf16.mxu0 0
        %9586 = vmatpush1.bf16.msra.mxu0 0
        %9587 = vmatprep.subr.bf16.mxu0 0
        %9588 = vmatpush1.bf16.msra.mxu0 0
        %9589 = vmatprep.subr.bf16.mxu0 0
        %9590 = vmatpush1.bf16.msra.mxu0 0
        %9591 = vmatprep.mubr.bf16.mxu0 0
        %9592 = vmatmul.mubr.bf16.gmra.mrb[0].mxu0 %v9501
        %v9593 = vpop.f32.mrb[0].mxu0
        %v9594 = vadd.f32 0.0, %v9593
        %v9595 = vpop.f32.mrb[0].mxu0
        %v9596 = vpop.f32.mrb[0].mxu0
        %v9597 = vadd.f32 0.0, %v9596
        %v9598 = vpop.f32.mrb[0].mxu0
        %9599 = vmatprep.mubr.bf16.mxu0 0
        %9600 = vmatmul.mubr.bf16.gmra.mrb[0].mxu0 %v9504
        %v9601 = vpop.f32.mrb[0].mxu0
        %v9602 = vadd.f32 0.0, %v9601
        %v9603 = vpop.f32.mrb[0].mxu0
        %v9604 = vpop.f32.mrb[0].mxu0
        %v9605 = vadd.f32 0.0, %v9604
        %v9606 = vpop.f32.mrb[0].mxu0
        %9607 = vdwg.mxu0
        %v9608 = vadd.f32 %v9429, %v9541
        %v9609 = vadd.f32 %v9430, %v9543
        %v9610 = vadd.f32 %v9431, %v9594
        %v9611 = vadd.f32 %v9432, %v9545
        %v9612 = vadd.f32 %v9433, %v9547
        %v9613 = vadd.f32 %v9434, %v9597
        %v9614 = vadd.f32 %v9435, %v9551
        %v9615 = vadd.f32 %v9436, %v9553
        %v9616 = vadd.f32 %v9437, %v9602
        %v9617 = vadd.f32 %v9438, %v9555
        %v9618 = vadd.f32 %v9439, %v9557
        %v9619 = vadd.f32 %v9440, %v9605
        %v9620 = vld [vmem:[%s7] sm:$0xff]
        %v9621 = vld [vmem:[%s7 + $0x8] sm:$0xff]
        %v9622 = vld [vmem:[%s7 + $0x10] sm:$0xff]
        %v9623 = vld [vmem:[%s7 + $0x18] sm:$0xff]
        %9625 = vset.pattern.permute.xlu0 0
        %9626 = vperm.xlu0 %9625, %v9620
        %v9627 = vpop.permute.xlu0 %9626
        %9630 = vset.pattern.permute.xlu0 0
        %9631 = vperm.xlu0 %9630, %v9621
        %v9632 = vpop.permute.xlu0 %9631
        %9635 = vset.pattern.permute.xlu0 0
        %9636 = vperm.xlu0 %9635, %v9622
        %v9637 = vpop.permute.xlu0 %9636
        %9640 = vset.pattern.permute.xlu0 0
        %9641 = vperm.xlu0 %9640, %v9623
        %v9642 = vpop.permute.xlu0 %9641
        %v9644 = vadd.f32 %v9608, %v9627
        %v9645 = vadd.f32 %v9609, %v9627
        %v9646 = vadd.f32 %v9610, %v9627
        %v9647 = vadd.f32 %v9611, %v9632
        %v9648 = vadd.f32 %v9612, %v9632
        %v9649 = vadd.f32 %v9613, %v9632
        %v9650 = vadd.f32 %v9614, %v9637
        %v9651 = vadd.f32 %v9615, %v9637
        %v9652 = vadd.f32 %v9616, %v9637
        %v9653 = vadd.f32 %v9617, %v9642
        %v9654 = vadd.f32 %v9618, %v9642
        %v9655 = vadd.f32 %v9619, %v9642
        %v9656 = vmax.f32 %v9644, 0.0
        %v9657 = vmax.f32 %v9645, 0.0
        %v9658 = vmax.f32 %v9646, 0.0
        %v9659 = vmax.f32 %v9647, 0.0
        %v9660 = vmax.f32 %v9648, 0.0
        %v9661 = vmax.f32 %v9649, 0.0
        %v9662 = vmax.f32 %v9650, 0.0
        %v9663 = vmax.f32 %v9651, 0.0
        %v9664 = vmax.f32 %v9652, 0.0
        %v9665 = vmax.f32 %v9653, 0.0
        %v9666 = vmax.f32 %v9654, 0.0
        %v9667 = vmax.f32 %v9655, 0.0
        %v9668 = vld [vmem:[%s1] sm:$0x7]
        %v9670 = vlaneseq
        %v9671 = vshrl.u32 %v9670, 7
        %v9672 = vsub.s32 0, %v9671
        %v9673 = vrot.slane %v9668, %v9672
        %v9674 = vlaneseq
        %v9675 = vshrl.u32 %v9674, 7
        %v9676 = vsub.s32 1, %v9675
        %v9677 = vrot.slane %v9668, %v9676
        %v9678 = vlaneseq
        %v9679 = vshrl.u32 %v9678, 7
        %v9680 = vsub.s32 2, %v9679
        %v9681 = vrot.slane %v9668, %v9680
        %v9685 = vmul.f32 %v9656, %v9673
        %v9686 = vmul.f32 %v9657, %v9677
        %v9687 = vmul.f32 %v9658, %v9681
        %v9688 = vmul.f32 %v9659, %v9673
        %v9689 = vmul.f32 %v9660, %v9677
        %v9690 = vmul.f32 %v9661, %v9681
        %v9691 = vmul.f32 %v9662, %v9673
        %v9692 = vmul.f32 %v9663, %v9677
        %v9693 = vmul.f32 %v9664, %v9681
        %v9694 = vmul.f32 %v9665, %v9673
        %v9695 = vmul.f32 %v9666, %v9677
        %v9696 = vmul.f32 %v9667, %v9681
        %9697 = vst.msk [vmem:[#allocation4] sm:$0xff] %vm5477, 0
        %9698 = vst.msk [vmem:[#allocation4 + $0x20] sm:$0xff] %vm5477, 0
        %9699 = vst.msk [vmem:[#allocation4 + $0x10] sm:$0xff] %vm5482, 0
        %9700 = vst.msk [vmem:[#allocation4 + $0x18] sm:$0xff] %vm5484, 0
        %9701 = vst.msk [vmem:[#allocation4 + $0x30] sm:$0xff] %vm5482, 0
        %9702 = vst.msk [vmem:[#allocation4 + $0x38] sm:$0xff] %vm5484, 0
        %v9703 = vpack.c.bf16 %v9688, %v9685
        %v9704 = vpack.c.bf16 %v9689, %v9686
        %v9705 = vpack.c.bf16 %v9690, %v9687
        %v9706 = vpack.c.bf16 %v9694, %v9691
        %v9707 = vpack.c.bf16 %v9695, %v9692
        %v9708 = vpack.c.bf16 %v9696, %v9693
        %9715 = vrot.lane.b32.xlu0 %v9703, 42
        %v9716 = vpop.permute.xlu0 %9715
        %9717 = vrot.lane.b32.xlu0 %v9704, 42
        %v9718 = vpop.permute.xlu0 %9717
        %9719 = vrot.lane.b32.xlu0 %v9705, 42
        %v9720 = vpop.permute.xlu0 %9719
        %9721 = vrot.lane.b32.xlu0 %v9706, 42
        %v9722 = vpop.permute.xlu0 %9721
        %9723 = vrot.lane.b32.xlu0 %v9707, 42
        %v9724 = vpop.permute.xlu0 %9723
        %9725 = vrot.lane.b32.xlu0 %v9708, 42
        %v9726 = vpop.permute.xlu0 %9725
        %v9727 = vsel %vm5540, %v9716, %v9718
        %v9728 = vsel %vm5540, %v9718, %v9720
        %v9729 = vsel %vm5540, %v9722, %v9724
        %v9730 = vsel %vm5540, %v9724, %v9726
        %9737 = vst.msk [vmem:[#allocation4] sm:$0xff] %vm5561, %v9716
        %9738 = vst [vmem:[#allocation4 + $0x8] sm:$0xff] %v9727
        %9739 = vst.msk [vmem:[#allocation4 + $0x10] sm:$0xff] %vm1772, %v9728
        %9740 = vst.msk [vmem:[#allocation4 + $0x20] sm:$0xff] %vm5561, %v9722
        %9741 = vst [vmem:[#allocation4 + $0x28] sm:$0xff] %v9729
        %9742 = vst.msk [vmem:[#allocation4 + $0x30] sm:$0xff] %vm1772, %v9730
        %v9743 = vld [vmem:[#allocation4] sm:$0xff]
        %v9744 = vld [vmem:[#allocation4 + $0x8] sm:$0xff]
        %v9745 = vld [vmem:[#allocation4 + $0x10] sm:$0xff]
        %v9746 = vld [vmem:[#allocation4 + $0x20] sm:$0xff]
        %v9747 = vld [vmem:[#allocation4 + $0x28] sm:$0xff]
        %v9748 = vld [vmem:[#allocation4 + $0x30] sm:$0xff]
        %v9749 = vld [vmem:[#allocation5] sm:$0xf]
        %v9750 = vld [vmem:[#allocation5 + $0x4] sm:$0x1]
        %s9751 = scalar_lea.vmem [#allocation5], 8
        %v9752 = vld [vmem:[%s9751] sm:$0xf]
        %v9753 = vld [vmem:[%s9751 + $0x4] sm:$0x1]
        %v9756 = vunpack.c.l.b16 %v9752
        %v9757 = vunpack.c.l.b16 %v9753
        %v9758 = vpack.c.b16 %v9757, %v9756
        %9765 = vrot.lane.b32.xlu0 %v9743, 106
        %v9766 = vpop.permute.xlu0 %9765
        %9767 = vrot.lane.b32.xlu0 %v9744, 106
        %v9768 = vpop.permute.xlu0 %9767
        %9769 = vrot.lane.b32.xlu0 %v9745, 106
        %v9770 = vpop.permute.xlu0 %9769
        %9771 = vrot.lane.b32.xlu0 %v9746, 106
        %v9772 = vpop.permute.xlu0 %9771
        %9773 = vrot.lane.b32.xlu0 %v9747, 106
        %v9774 = vpop.permute.xlu0 %9773
        %9775 = vrot.lane.b32.xlu0 %v9748, 106
        %v9776 = vpop.permute.xlu0 %9775
        %v9777 = vsel %vm5659, %v9766, %v9768
        %v9778 = vsel %vm5659, %v9768, %v9770
        %v9779 = vsel %vm5659, %v9772, %v9774
        %v9780 = vsel %vm5659, %v9774, %v9776
        %vm9787 = vcmask 261120
        %v9789 = vsel %vm9787, %v9758, 0
        %9791 = vmatprep.subr.bf16.mxu0 %v9778
        %9792 = vmatpush1.bf16.msra.mxu0 %v9777
        %9793 = vmatprep.subr.bf16.mxu0 %v9780
        %9794 = vmatpush1.bf16.msra.mxu0 %v9779
        %9795 = vmatprep.subr.bf16.mxu0 0
        %9796 = vmatpush1.bf16.msra.mxu0 0
        %9797 = vmatprep.subr.bf16.mxu0 0
        %9798 = vmatpush1.bf16.msra.mxu0 0
        %9799 = vmatprep.subr.bf16.mxu0 0
        %9800 = vmatpush1.bf16.msra.mxu0 0
        %9801 = vmatprep.subr.bf16.mxu0 0
        %9802 = vmatpush1.bf16.msra.mxu0 0
        %9803 = vmatprep.subr.bf16.mxu0 0
        %9804 = vmatpush1.bf16.msra.mxu0 0
        %9805 = vmatprep.subr.bf16.mxu0 0
        %9806 = vmatpush1.bf16.msra.mxu0 0
        %9807 = vmatprep.subr.bf16.mxu0 0
        %9808 = vmatpush1.bf16.msra.mxu0 0
        %9809 = vmatprep.subr.bf16.mxu0 0
        %9810 = vmatpush1.bf16.msra.mxu0 0
        %9811 = vmatprep.subr.bf16.mxu0 0
        %9812 = vmatpush1.bf16.msra.mxu0 0
        %9813 = vmatprep.subr.bf16.mxu0 0
        %9814 = vmatpush1.bf16.msra.mxu0 0
        %9815 = vmatprep.subr.bf16.mxu0 0
        %9816 = vmatpush1.bf16.msra.mxu0 0
        %9817 = vmatprep.subr.bf16.mxu0 0
        %9818 = vmatpush1.bf16.msra.mxu0 0
        %9819 = vmatprep.subr.bf16.mxu0 0
        %9820 = vmatpush1.bf16.msra.mxu0 0
        %9821 = vmatprep.subr.bf16.mxu0 0
        %9822 = vmatpush1.bf16.msra.mxu0 0
        %9823 = vmatprep.mubr.bf16.mxu0 0
        %9824 = vmatmul.mubr.bf16.gmra.mrb[0].mxu0 %v9789
        %v9825 = vpop.f32.mrb[0].mxu0
        %v9826 = vadd.f32 0.0, %v9825
        %v9827 = vpop.f32.mrb[0].mxu0
        %v9828 = vadd.f32 0.0, %v9827
        %v9829 = vpop.f32.mrb[0].mxu0
        %v9830 = vadd.f32 0.0, %v9829
        %v9831 = vpop.f32.mrb[0].mxu0
        %v9832 = vadd.f32 0.0, %v9831
        %9833 = vdwg.mxu0
        %9834 = vmatprep.subr.bf16.mxu0 0
        %9835 = vmatpush1.bf16.msra.mxu0 %v9770
        %9836 = vmatprep.subr.bf16.mxu0 0
        %9837 = vmatpush1.bf16.msra.mxu0 %v9776
        %9838 = vmatprep.subr.bf16.mxu0 0
        %9839 = vmatpush1.bf16.msra.mxu0 0
        %9840 = vmatprep.subr.bf16.mxu0 0
        %9841 = vmatpush1.bf16.msra.mxu0 0
        %9842 = vmatprep.subr.bf16.mxu0 0
        %9843 = vmatpush1.bf16.msra.mxu0 0
        %9844 = vmatprep.subr.bf16.mxu0 0
        %9845 = vmatpush1.bf16.msra.mxu0 0
        %9846 = vmatprep.subr.bf16.mxu0 0
        %9847 = vmatpush1.bf16.msra.mxu0 0
        %9848 = vmatprep.subr.bf16.mxu0 0
        %9849 = vmatpush1.bf16.msra.mxu0 0
        %9850 = vmatprep.subr.bf16.mxu0 0
        %9851 = vmatpush1.bf16.msra.mxu0 0
        %9852 = vmatprep.subr.bf16.mxu0 0
        %9853 = vmatpush1.bf16.msra.mxu0 0
        %9854 = vmatprep.subr.bf16.mxu0 0
        %9855 = vmatpush1.bf16.msra.mxu0 0
        %9856 = vmatprep.subr.bf16.mxu0 0
        %9857 = vmatpush1.bf16.msra.mxu0 0
        %9858 = vmatprep.subr.bf16.mxu0 0
        %9859 = vmatpush1.bf16.msra.mxu0 0
        %9860 = vmatprep.subr.bf16.mxu0 0
        %9861 = vmatpush1.bf16.msra.mxu0 0
        %9862 = vmatprep.subr.bf16.mxu0 0
        %9863 = vmatpush1.bf16.msra.mxu0 0
        %9864 = vmatprep.subr.bf16.mxu0 0
        %9865 = vmatpush1.bf16.msra.mxu0 0
        %9866 = vmatprep.mubr.bf16.mxu0 0
        %9867 = vmatmul.mubr.bf16.gmra.mrb[0].mxu0 %v9789
        %v9868 = vpop.f32.mrb[0].mxu0
        %v9869 = vadd.f32 0.0, %v9868
        %v9870 = vpop.f32.mrb[0].mxu0
        %v9871 = vpop.f32.mrb[0].mxu0
        %v9872 = vadd.f32 0.0, %v9871
        %v9873 = vpop.f32.mrb[0].mxu0
        %9874 = vdwg.mxu0
        %v9877 = vunpack.c.l.b16 %v9749
        %v9878 = vunpack.c.l.b16 %v9750
        %v9879 = vpack.c.b16 %v9878, %v9877
        %9880 = vrot.lane.b32.xlu0 %v9743, 107
        %v9881 = vpop.permute.xlu0 %9880
        %9882 = vrot.lane.b32.xlu0 %v9744, 107
        %v9883 = vpop.permute.xlu0 %9882
        %9884 = vrot.lane.b32.xlu0 %v9745, 107
        %v9885 = vpop.permute.xlu0 %9884
        %9886 = vrot.lane.b32.xlu0 %v9746, 107
        %v9887 = vpop.permute.xlu0 %9886
        %9888 = vrot.lane.b32.xlu0 %v9747, 107
        %v9889 = vpop.permute.xlu0 %9888
        %9890 = vrot.lane.b32.xlu0 %v9748, 107
        %v9891 = vpop.permute.xlu0 %9890
        %v9892 = vsel %vm5874, %v9881, %v9883
        %v9893 = vsel %vm5874, %v9883, %v9885
        %v9894 = vsel %vm5874, %v9887, %v9889
        %v9895 = vsel %vm5874, %v9889, %v9891
        %v9903 = vsel %vm9787, %v9879, 0
        %9905 = vmatprep.subr.bf16.mxu0 %v9893
        %9906 = vmatpush1.bf16.msra.mxu0 %v9892
        %9907 = vmatprep.subr.bf16.mxu0 %v9895
        %9908 = vmatpush1.bf16.msra.mxu0 %v9894
        %9909 = vmatprep.subr.bf16.mxu0 0
        %9910 = vmatpush1.bf16.msra.mxu0 0
        %9911 = vmatprep.subr.bf16.mxu0 0
        %9912 = vmatpush1.bf16.msra.mxu0 0
        %9913 = vmatprep.subr.bf16.mxu0 0
        %9914 = vmatpush1.bf16.msra.mxu0 0
        %9915 = vmatprep.subr.bf16.mxu0 0
        %9916 = vmatpush1.bf16.msra.mxu0 0
        %9917 = vmatprep.subr.bf16.mxu0 0
        %9918 = vmatpush1.bf16.msra.mxu0 0
        %9919 = vmatprep.subr.bf16.mxu0 0
        %9920 = vmatpush1.bf16.msra.mxu0 0
        %9921 = vmatprep.subr.bf16.mxu0 0
        %9922 = vmatpush1.bf16.msra.mxu0 0
        %9923 = vmatprep.subr.bf16.mxu0 0
        %9924 = vmatpush1.bf16.msra.mxu0 0
        %9925 = vmatprep.subr.bf16.mxu0 0
        %9926 = vmatpush1.bf16.msra.mxu0 0
        %9927 = vmatprep.subr.bf16.mxu0 0
        %9928 = vmatpush1.bf16.msra.mxu0 0
        %9929 = vmatprep.subr.bf16.mxu0 0
        %9930 = vmatpush1.bf16.msra.mxu0 0
        %9931 = vmatprep.subr.bf16.mxu0 0
        %9932 = vmatpush1.bf16.msra.mxu0 0
        %9933 = vmatprep.subr.bf16.mxu0 0
        %9934 = vmatpush1.bf16.msra.mxu0 0
        %9935 = vmatprep.subr.bf16.mxu0 0
        %9936 = vmatpush1.bf16.msra.mxu0 0
        %9937 = vmatprep.mubr.bf16.mxu0 0
        %9938 = vmatmul.mubr.bf16.gmra.mrb[0].mxu0 %v9903
        %v9939 = vpop.f32.mrb[0].mxu0
        %v9940 = vadd.f32 %v9826, %v9939
        %v9941 = vpop.f32.mrb[0].mxu0
        %v9942 = vadd.f32 %v9828, %v9941
        %v9943 = vpop.f32.mrb[0].mxu0
        %v9944 = vadd.f32 %v9830, %v9943
        %v9945 = vpop.f32.mrb[0].mxu0
        %v9946 = vadd.f32 %v9832, %v9945
        %9947 = vdwg.mxu0
        %9948 = vmatprep.subr.bf16.mxu0 0
        %9949 = vmatpush1.bf16.msra.mxu0 %v9885
        %9950 = vmatprep.subr.bf16.mxu0 0
        %9951 = vmatpush1.bf16.msra.mxu0 %v9891
        %9952 = vmatprep.subr.bf16.mxu0 0
        %9953 = vmatpush1.bf16.msra.mxu0 0
        %9954 = vmatprep.subr.bf16.mxu0 0
        %9955 = vmatpush1.bf16.msra.mxu0 0
        %9956 = vmatprep.subr.bf16.mxu0 0
        %9957 = vmatpush1.bf16.msra.mxu0 0
        %9958 = vmatprep.subr.bf16.mxu0 0
        %9959 = vmatpush1.bf16.msra.mxu0 0
        %9960 = vmatprep.subr.bf16.mxu0 0
        %9961 = vmatpush1.bf16.msra.mxu0 0
        %9962 = vmatprep.subr.bf16.mxu0 0
        %9963 = vmatpush1.bf16.msra.mxu0 0
        %9964 = vmatprep.subr.bf16.mxu0 0
        %9965 = vmatpush1.bf16.msra.mxu0 0
        %9966 = vmatprep.subr.bf16.mxu0 0
        %9967 = vmatpush1.bf16.msra.mxu0 0
        %9968 = vmatprep.subr.bf16.mxu0 0
        %9969 = vmatpush1.bf16.msra.mxu0 0
        %9970 = vmatprep.subr.bf16.mxu0 0
        %9971 = vmatpush1.bf16.msra.mxu0 0
        %9972 = vmatprep.subr.bf16.mxu0 0
        %9973 = vmatpush1.bf16.msra.mxu0 0
        %9974 = vmatprep.subr.bf16.mxu0 0
        %9975 = vmatpush1.bf16.msra.mxu0 0
        %9976 = vmatprep.subr.bf16.mxu0 0
        %9977 = vmatpush1.bf16.msra.mxu0 0
        %9978 = vmatprep.subr.bf16.mxu0 0
        %9979 = vmatpush1.bf16.msra.mxu0 0
        %9980 = vmatprep.mubr.bf16.mxu0 0
        %9981 = vmatmul.mubr.bf16.gmra.mrb[0].mxu0 %v9903
        %v9982 = vpop.f32.mrb[0].mxu0
        %v9983 = vadd.f32 %v9869, %v9982
        %v9984 = vpop.f32.mrb[0].mxu0
        %v9985 = vpop.f32.mrb[0].mxu0
        %v9986 = vadd.f32 %v9872, %v9985
        %v9987 = vpop.f32.mrb[0].mxu0
        %9988 = vdwg.mxu0
        %s9989 = scalar_lea.vmem [#allocation5], 16
        %v9990 = vld [vmem:[%s9989] sm:$0xf]
        %v9991 = vld [vmem:[%s9989 + $0x4] sm:$0x1]
        %v9994 = vunpack.c.l.b16 %v9990
        %v9995 = vunpack.c.l.b16 %v9991
        %v9996 = vpack.c.b16 %v9995, %v9994
        %9997 = vrot.lane.b32.xlu0 %v9743, 105
        %v9998 = vpop.permute.xlu0 %9997
        %9999 = vrot.lane.b32.xlu0 %v9744, 105
        %v10000 = vpop.permute.xlu0 %9999
        %10001 = vrot.lane.b32.xlu0 %v9745, 105
        %v10002 = vpop.permute.xlu0 %10001
        %10003 = vrot.lane.b32.xlu0 %v9746, 105
        %v10004 = vpop.permute.xlu0 %10003
        %10005 = vrot.lane.b32.xlu0 %v9747, 105
        %v10006 = vpop.permute.xlu0 %10005
        %10007 = vrot.lane.b32.xlu0 %v9748, 105
        %v10008 = vpop.permute.xlu0 %10007
        %v10009 = vsel %vm6098, %v9998, %v10000
        %v10010 = vsel %vm6098, %v10000, %v10002
        %v10011 = vsel %vm6098, %v10004, %v10006
        %v10012 = vsel %vm6098, %v10006, %v10008
        %v10020 = vsel %vm9787, %v9996, 0
        %10022 = vmatprep.subr.bf16.mxu0 %v10010
        %10023 = vmatpush1.bf16.msra.mxu0 %v10009
        %10024 = vmatprep.subr.bf16.mxu0 %v10012
        %10025 = vmatpush1.bf16.msra.mxu0 %v10011
        %10026 = vmatprep.subr.bf16.mxu0 0
        %10027 = vmatpush1.bf16.msra.mxu0 0
        %10028 = vmatprep.subr.bf16.mxu0 0
        %10029 = vmatpush1.bf16.msra.mxu0 0
        %10030 = vmatprep.subr.bf16.mxu0 0
        %10031 = vmatpush1.bf16.msra.mxu0 0
        %10032 = vmatprep.subr.bf16.mxu0 0
        %10033 = vmatpush1.bf16.msra.mxu0 0
        %10034 = vmatprep.subr.bf16.mxu0 0
        %10035 = vmatpush1.bf16.msra.mxu0 0
        %10036 = vmatprep.subr.bf16.mxu0 0
        %10037 = vmatpush1.bf16.msra.mxu0 0
        %10038 = vmatprep.subr.bf16.mxu0 0
        %10039 = vmatpush1.bf16.msra.mxu0 0
        %10040 = vmatprep.subr.bf16.mxu0 0
        %10041 = vmatpush1.bf16.msra.mxu0 0
        %10042 = vmatprep.subr.bf16.mxu0 0
        %10043 = vmatpush1.bf16.msra.mxu0 0
        %10044 = vmatprep.subr.bf16.mxu0 0
        %10045 = vmatpush1.bf16.msra.mxu0 0
        %10046 = vmatprep.subr.bf16.mxu0 0
        %10047 = vmatpush1.bf16.msra.mxu0 0
        %10048 = vmatprep.subr.bf16.mxu0 0
        %10049 = vmatpush1.bf16.msra.mxu0 0
        %10050 = vmatprep.subr.bf16.mxu0 0
        %10051 = vmatpush1.bf16.msra.mxu0 0
        %10052 = vmatprep.subr.bf16.mxu0 0
        %10053 = vmatpush1.bf16.msra.mxu0 0
        %10054 = vmatprep.mubr.bf16.mxu0 0
        %10055 = vmatmul.mubr.bf16.gmra.mrb[0].mxu0 %v10020
        %v10056 = vpop.f32.mrb[0].mxu0
        %v10057 = vadd.f32 0.0, %v10056
        %v10058 = vpop.f32.mrb[0].mxu0
        %v10059 = vadd.f32 0.0, %v10058
        %v10060 = vpop.f32.mrb[0].mxu0
        %v10061 = vadd.f32 0.0, %v10060
        %v10062 = vpop.f32.mrb[0].mxu0
        %v10063 = vadd.f32 0.0, %v10062
        %10064 = vdwg.mxu0
        %10065 = vmatprep.subr.bf16.mxu0 0
        %10066 = vmatpush1.bf16.msra.mxu0 %v10002
        %10067 = vmatprep.subr.bf16.mxu0 0
        %10068 = vmatpush1.bf16.msra.mxu0 %v10008
        %10069 = vmatprep.subr.bf16.mxu0 0
        %10070 = vmatpush1.bf16.msra.mxu0 0
        %10071 = vmatprep.subr.bf16.mxu0 0
        %10072 = vmatpush1.bf16.msra.mxu0 0
        %10073 = vmatprep.subr.bf16.mxu0 0
        %10074 = vmatpush1.bf16.msra.mxu0 0
        %10075 = vmatprep.subr.bf16.mxu0 0
        %10076 = vmatpush1.bf16.msra.mxu0 0
        %10077 = vmatprep.subr.bf16.mxu0 0
        %10078 = vmatpush1.bf16.msra.mxu0 0
        %10079 = vmatprep.subr.bf16.mxu0 0
        %10080 = vmatpush1.bf16.msra.mxu0 0
        %10081 = vmatprep.subr.bf16.mxu0 0
        %10082 = vmatpush1.bf16.msra.mxu0 0
        %10083 = vmatprep.subr.bf16.mxu0 0
        %10084 = vmatpush1.bf16.msra.mxu0 0
        %10085 = vmatprep.subr.bf16.mxu0 0
        %10086 = vmatpush1.bf16.msra.mxu0 0
        %10087 = vmatprep.subr.bf16.mxu0 0
        %10088 = vmatpush1.bf16.msra.mxu0 0
        %10089 = vmatprep.subr.bf16.mxu0 0
        %10090 = vmatpush1.bf16.msra.mxu0 0
        %10091 = vmatprep.subr.bf16.mxu0 0
        %10092 = vmatpush1.bf16.msra.mxu0 0
        %10093 = vmatprep.subr.bf16.mxu0 0
        %10094 = vmatpush1.bf16.msra.mxu0 0
        %10095 = vmatprep.subr.bf16.mxu0 0
        %10096 = vmatpush1.bf16.msra.mxu0 0
        %10097 = vmatprep.mubr.bf16.mxu0 0
        %10098 = vmatmul.mubr.bf16.gmra.mrb[0].mxu0 %v10020
        %v10099 = vpop.f32.mrb[0].mxu0
        %v10100 = vadd.f32 0.0, %v10099
        %v10101 = vpop.f32.mrb[0].mxu0
        %v10102 = vpop.f32.mrb[0].mxu0
        %v10103 = vadd.f32 0.0, %v10102
        %v10104 = vpop.f32.mrb[0].mxu0
        %10105 = vdwg.mxu0
        %v10106 = vadd.f32 %v9940, %v10057
        %v10107 = vadd.f32 %v9942, %v10059
        %v10108 = vadd.f32 %v9983, %v10100
        %v10109 = vadd.f32 %v9944, %v10061
        %v10110 = vadd.f32 %v9946, %v10063
        %v10111 = vadd.f32 %v9986, %v10103
        %s10112 = scalar_lea.vmem [#allocation5], 24
        %v10113 = vld [vmem:[%s10112] sm:$0xf]
        %v10114 = vld [vmem:[%s10112 + $0x4] sm:$0x1]
        %v10117 = vunpack.c.l.b16 %v10113
        %v10118 = vunpack.c.l.b16 %v10114
        %v10119 = vpack.c.b16 %v10118, %v10117
        %10120 = vrot.lane.b32.xlu0 %v9743, 87
        %v10121 = vpop.permute.xlu0 %10120
        %10122 = vrot.lane.b32.xlu0 %v9744, 87
        %v10123 = vpop.permute.xlu0 %10122
        %10124 = vrot.lane.b32.xlu0 %v9745, 87
        %v10125 = vpop.permute.xlu0 %10124
        %10126 = vrot.lane.b32.xlu0 %v9746, 87
        %v10127 = vpop.permute.xlu0 %10126
        %10128 = vrot.lane.b32.xlu0 %v9747, 87
        %v10129 = vpop.permute.xlu0 %10128
        %10130 = vrot.lane.b32.xlu0 %v9748, 87
        %v10131 = vpop.permute.xlu0 %10130
        %v10132 = vsel %vm6346, %v10121, %v10123
        %v10133 = vsel %vm6346, %v10123, %v10125
        %v10134 = vsel %vm6346, %v10127, %v10129
        %v10135 = vsel %vm6346, %v10129, %v10131
        %v10143 = vsel %vm9787, %v10119, 0
        %10145 = vmatprep.subr.bf16.mxu0 %v10133
        %10146 = vmatpush1.bf16.msra.mxu0 %v10132
        %10147 = vmatprep.subr.bf16.mxu0 %v10135
        %10148 = vmatpush1.bf16.msra.mxu0 %v10134
        %10149 = vmatprep.subr.bf16.mxu0 0
        %10150 = vmatpush1.bf16.msra.mxu0 0
        %10151 = vmatprep.subr.bf16.mxu0 0
        %10152 = vmatpush1.bf16.msra.mxu0 0
        %10153 = vmatprep.subr.bf16.mxu0 0
        %10154 = vmatpush1.bf16.msra.mxu0 0
        %10155 = vmatprep.subr.bf16.mxu0 0
        %10156 = vmatpush1.bf16.msra.mxu0 0
        %10157 = vmatprep.subr.bf16.mxu0 0
        %10158 = vmatpush1.bf16.msra.mxu0 0
        %10159 = vmatprep.subr.bf16.mxu0 0
        %10160 = vmatpush1.bf16.msra.mxu0 0
        %10161 = vmatprep.subr.bf16.mxu0 0
        %10162 = vmatpush1.bf16.msra.mxu0 0
        %10163 = vmatprep.subr.bf16.mxu0 0
        %10164 = vmatpush1.bf16.msra.mxu0 0
        %10165 = vmatprep.subr.bf16.mxu0 0
        %10166 = vmatpush1.bf16.msra.mxu0 0
        %10167 = vmatprep.subr.bf16.mxu0 0
        %10168 = vmatpush1.bf16.msra.mxu0 0
        %10169 = vmatprep.subr.bf16.mxu0 0
        %10170 = vmatpush1.bf16.msra.mxu0 0
        %10171 = vmatprep.subr.bf16.mxu0 0
        %10172 = vmatpush1.bf16.msra.mxu0 0
        %10173 = vmatprep.subr.bf16.mxu0 0
        %10174 = vmatpush1.bf16.msra.mxu0 0
        %10175 = vmatprep.subr.bf16.mxu0 0
        %10176 = vmatpush1.bf16.msra.mxu0 0
        %10177 = vmatprep.mubr.bf16.mxu0 0
        %10178 = vmatmul.mubr.bf16.gmra.mrb[0].mxu0 %v10143
        %v10179 = vpop.f32.mrb[0].mxu0
        %v10180 = vadd.f32 0.0, %v10179
        %v10181 = vpop.f32.mrb[0].mxu0
        %v10182 = vadd.f32 0.0, %v10181
        %v10183 = vpop.f32.mrb[0].mxu0
        %v10184 = vadd.f32 0.0, %v10183
        %v10185 = vpop.f32.mrb[0].mxu0
        %v10186 = vadd.f32 0.0, %v10185
        %10187 = vdwg.mxu0
        %10188 = vmatprep.subr.bf16.mxu0 0
        %10189 = vmatpush1.bf16.msra.mxu0 %v10125
        %10190 = vmatprep.subr.bf16.mxu0 0
        %10191 = vmatpush1.bf16.msra.mxu0 %v10131
        %10192 = vmatprep.subr.bf16.mxu0 0
        %10193 = vmatpush1.bf16.msra.mxu0 0
        %10194 = vmatprep.subr.bf16.mxu0 0
        %10195 = vmatpush1.bf16.msra.mxu0 0
        %10196 = vmatprep.subr.bf16.mxu0 0
        %10197 = vmatpush1.bf16.msra.mxu0 0
        %10198 = vmatprep.subr.bf16.mxu0 0
        %10199 = vmatpush1.bf16.msra.mxu0 0
        %10200 = vmatprep.subr.bf16.mxu0 0
        %10201 = vmatpush1.bf16.msra.mxu0 0
        %10202 = vmatprep.subr.bf16.mxu0 0
        %10203 = vmatpush1.bf16.msra.mxu0 0
        %10204 = vmatprep.subr.bf16.mxu0 0
        %10205 = vmatpush1.bf16.msra.mxu0 0
        %10206 = vmatprep.subr.bf16.mxu0 0
        %10207 = vmatpush1.bf16.msra.mxu0 0
        %10208 = vmatprep.subr.bf16.mxu0 0
        %10209 = vmatpush1.bf16.msra.mxu0 0
        %10210 = vmatprep.subr.bf16.mxu0 0
        %10211 = vmatpush1.bf16.msra.mxu0 0
        %10212 = vmatprep.subr.bf16.mxu0 0
        %10213 = vmatpush1.bf16.msra.mxu0 0
        %10214 = vmatprep.subr.bf16.mxu0 0
        %10215 = vmatpush1.bf16.msra.mxu0 0
        %10216 = vmatprep.subr.bf16.mxu0 0
        %10217 = vmatpush1.bf16.msra.mxu0 0
        %10218 = vmatprep.subr.bf16.mxu0 0
        %10219 = vmatpush1.bf16.msra.mxu0 0
        %10220 = vmatprep.mubr.bf16.mxu0 0
        %10221 = vmatmul.mubr.bf16.gmra.mrb[0].mxu0 %v10143
        %v10222 = vpop.f32.mrb[0].mxu0
        %v10223 = vadd.f32 0.0, %v10222
        %v10224 = vpop.f32.mrb[0].mxu0
        %v10225 = vpop.f32.mrb[0].mxu0
        %v10226 = vadd.f32 0.0, %v10225
        %v10227 = vpop.f32.mrb[0].mxu0
        %10228 = vdwg.mxu0
        %v10229 = vadd.f32 %v10106, %v10180
        %v10230 = vadd.f32 %v10107, %v10182
        %v10231 = vadd.f32 %v10108, %v10223
        %v10232 = vadd.f32 %v10109, %v10184
        %v10233 = vadd.f32 %v10110, %v10186
        %v10234 = vadd.f32 %v10111, %v10226
        %s10235 = scalar_lea.vmem [#allocation5], 32
        %v10236 = vld [vmem:[%s10235] sm:$0xf]
        %v10237 = vld [vmem:[%s10235 + $0x4] sm:$0x1]
        %v10240 = vunpack.c.l.b16 %v10236
        %v10241 = vunpack.c.l.b16 %v10237
        %v10242 = vpack.c.b16 %v10241, %v10240
        %10243 = vrot.lane.b32.xlu0 %v9743, 86
        %v10244 = vpop.permute.xlu0 %10243
        %10245 = vrot.lane.b32.xlu0 %v9744, 86
        %v10246 = vpop.permute.xlu0 %10245
        %10247 = vrot.lane.b32.xlu0 %v9745, 86
        %v10248 = vpop.permute.xlu0 %10247
        %10249 = vrot.lane.b32.xlu0 %v9746, 86
        %v10250 = vpop.permute.xlu0 %10249
        %10251 = vrot.lane.b32.xlu0 %v9747, 86
        %v10252 = vpop.permute.xlu0 %10251
        %10253 = vrot.lane.b32.xlu0 %v9748, 86
        %v10254 = vpop.permute.xlu0 %10253
        %v10255 = vsel %vm6594, %v10244, %v10246
        %v10256 = vsel %vm6594, %v10246, %v10248
        %v10257 = vsel %vm6594, %v10250, %v10252
        %v10258 = vsel %vm6594, %v10252, %v10254
        %v10266 = vsel %vm9787, %v10242, 0
        %10268 = vmatprep.subr.bf16.mxu0 %v10256
        %10269 = vmatpush1.bf16.msra.mxu0 %v10255
        %10270 = vmatprep.subr.bf16.mxu0 %v10258
        %10271 = vmatpush1.bf16.msra.mxu0 %v10257
        %10272 = vmatprep.subr.bf16.mxu0 0
        %10273 = vmatpush1.bf16.msra.mxu0 0
        %10274 = vmatprep.subr.bf16.mxu0 0
        %10275 = vmatpush1.bf16.msra.mxu0 0
        %10276 = vmatprep.subr.bf16.mxu0 0
        %10277 = vmatpush1.bf16.msra.mxu0 0
        %10278 = vmatprep.subr.bf16.mxu0 0
        %10279 = vmatpush1.bf16.msra.mxu0 0
        %10280 = vmatprep.subr.bf16.mxu0 0
        %10281 = vmatpush1.bf16.msra.mxu0 0
        %10282 = vmatprep.subr.bf16.mxu0 0
        %10283 = vmatpush1.bf16.msra.mxu0 0
        %10284 = vmatprep.subr.bf16.mxu0 0
        %10285 = vmatpush1.bf16.msra.mxu0 0
        %10286 = vmatprep.subr.bf16.mxu0 0
        %10287 = vmatpush1.bf16.msra.mxu0 0
        %10288 = vmatprep.subr.bf16.mxu0 0
        %10289 = vmatpush1.bf16.msra.mxu0 0
        %10290 = vmatprep.subr.bf16.mxu0 0
        %10291 = vmatpush1.bf16.msra.mxu0 0
        %10292 = vmatprep.subr.bf16.mxu0 0
        %10293 = vmatpush1.bf16.msra.mxu0 0
        %10294 = vmatprep.subr.bf16.mxu0 0
        %10295 = vmatpush1.bf16.msra.mxu0 0
        %10296 = vmatprep.subr.bf16.mxu0 0
        %10297 = vmatpush1.bf16.msra.mxu0 0
        %10298 = vmatprep.subr.bf16.mxu0 0
        %10299 = vmatpush1.bf16.msra.mxu0 0
        %10300 = vmatprep.mubr.bf16.mxu0 0
        %10301 = vmatmul.mubr.bf16.gmra.mrb[0].mxu0 %v10266
        %v10302 = vpop.f32.mrb[0].mxu0
        %v10303 = vadd.f32 0.0, %v10302
        %v10304 = vpop.f32.mrb[0].mxu0
        %v10305 = vadd.f32 0.0, %v10304
        %v10306 = vpop.f32.mrb[0].mxu0
        %v10307 = vadd.f32 0.0, %v10306
        %v10308 = vpop.f32.mrb[0].mxu0
        %v10309 = vadd.f32 0.0, %v10308
        %10310 = vdwg.mxu0
        %10311 = vmatprep.subr.bf16.mxu0 0
        %10312 = vmatpush1.bf16.msra.mxu0 %v10248
        %10313 = vmatprep.subr.bf16.mxu0 0
        %10314 = vmatpush1.bf16.msra.mxu0 %v10254
        %10315 = vmatprep.subr.bf16.mxu0 0
        %10316 = vmatpush1.bf16.msra.mxu0 0
        %10317 = vmatprep.subr.bf16.mxu0 0
        %10318 = vmatpush1.bf16.msra.mxu0 0
        %10319 = vmatprep.subr.bf16.mxu0 0
        %10320 = vmatpush1.bf16.msra.mxu0 0
        %10321 = vmatprep.subr.bf16.mxu0 0
        %10322 = vmatpush1.bf16.msra.mxu0 0
        %10323 = vmatprep.subr.bf16.mxu0 0
        %10324 = vmatpush1.bf16.msra.mxu0 0
        %10325 = vmatprep.subr.bf16.mxu0 0
        %10326 = vmatpush1.bf16.msra.mxu0 0
        %10327 = vmatprep.subr.bf16.mxu0 0
        %10328 = vmatpush1.bf16.msra.mxu0 0
        %10329 = vmatprep.subr.bf16.mxu0 0
        %10330 = vmatpush1.bf16.msra.mxu0 0
        %10331 = vmatprep.subr.bf16.mxu0 0
        %10332 = vmatpush1.bf16.msra.mxu0 0
        %10333 = vmatprep.subr.bf16.mxu0 0
        %10334 = vmatpush1.bf16.msra.mxu0 0
        %10335 = vmatprep.subr.bf16.mxu0 0
        %10336 = vmatpush1.bf16.msra.mxu0 0
        %10337 = vmatprep.subr.bf16.mxu0 0
        %10338 = vmatpush1.bf16.msra.mxu0 0
        %10339 = vmatprep.subr.bf16.mxu0 0
        %10340 = vmatpush1.bf16.msra.mxu0 0
        %10341 = vmatprep.subr.bf16.mxu0 0
        %10342 = vmatpush1.bf16.msra.mxu0 0
        %10343 = vmatprep.mubr.bf16.mxu0 0
        %10344 = vmatmul.mubr.bf16.gmra.mrb[0].mxu0 %v10266
        %v10345 = vpop.f32.mrb[0].mxu0
        %v10346 = vadd.f32 0.0, %v10345
        %v10347 = vpop.f32.mrb[0].mxu0
        %v10348 = vpop.f32.mrb[0].mxu0
        %v10349 = vadd.f32 0.0, %v10348
        %v10350 = vpop.f32.mrb[0].mxu0
        %10351 = vdwg.mxu0
        %v10352 = vadd.f32 %v10229, %v10303
        %v10353 = vadd.f32 %v10230, %v10305
        %v10354 = vadd.f32 %v10231, %v10346
        %v10355 = vadd.f32 %v10232, %v10307
        %v10356 = vadd.f32 %v10233, %v10309
        %v10357 = vadd.f32 %v10234, %v10349
        %s10358 = scalar_lea.vmem [#allocation5], 40
        %v10359 = vld [vmem:[%s10358] sm:$0xf]
        %v10360 = vld [vmem:[%s10358 + $0x4] sm:$0x1]
        %v10363 = vunpack.c.l.b16 %v10359
        %v10364 = vunpack.c.l.b16 %v10360
        %v10365 = vpack.c.b16 %v10364, %v10363
        %10366 = vrot.lane.b32.xlu0 %v9743, 85
        %v10367 = vpop.permute.xlu0 %10366
        %10368 = vrot.lane.b32.xlu0 %v9744, 85
        %v10369 = vpop.permute.xlu0 %10368
        %10370 = vrot.lane.b32.xlu0 %v9745, 85
        %v10371 = vpop.permute.xlu0 %10370
        %10372 = vrot.lane.b32.xlu0 %v9746, 85
        %v10373 = vpop.permute.xlu0 %10372
        %10374 = vrot.lane.b32.xlu0 %v9747, 85
        %v10375 = vpop.permute.xlu0 %10374
        %10376 = vrot.lane.b32.xlu0 %v9748, 85
        %v10377 = vpop.permute.xlu0 %10376
        %v10378 = vsel %vm6842, %v10367, %v10369
        %v10379 = vsel %vm6842, %v10369, %v10371
        %v10380 = vsel %vm6842, %v10373, %v10375
        %v10381 = vsel %vm6842, %v10375, %v10377
        %v10389 = vsel %vm9787, %v10365, 0
        %10391 = vmatprep.subr.bf16.mxu0 %v10379
        %10392 = vmatpush1.bf16.msra.mxu0 %v10378
        %10393 = vmatprep.subr.bf16.mxu0 %v10381
        %10394 = vmatpush1.bf16.msra.mxu0 %v10380
        %10395 = vmatprep.subr.bf16.mxu0 0
        %10396 = vmatpush1.bf16.msra.mxu0 0
        %10397 = vmatprep.subr.bf16.mxu0 0
        %10398 = vmatpush1.bf16.msra.mxu0 0
        %10399 = vmatprep.subr.bf16.mxu0 0
        %10400 = vmatpush1.bf16.msra.mxu0 0
        %10401 = vmatprep.subr.bf16.mxu0 0
        %10402 = vmatpush1.bf16.msra.mxu0 0
        %10403 = vmatprep.subr.bf16.mxu0 0
        %10404 = vmatpush1.bf16.msra.mxu0 0
        %10405 = vmatprep.subr.bf16.mxu0 0
        %10406 = vmatpush1.bf16.msra.mxu0 0
        %10407 = vmatprep.subr.bf16.mxu0 0
        %10408 = vmatpush1.bf16.msra.mxu0 0
        %10409 = vmatprep.subr.bf16.mxu0 0
        %10410 = vmatpush1.bf16.msra.mxu0 0
        %10411 = vmatprep.subr.bf16.mxu0 0
        %10412 = vmatpush1.bf16.msra.mxu0 0
        %10413 = vmatprep.subr.bf16.mxu0 0
        %10414 = vmatpush1.bf16.msra.mxu0 0
        %10415 = vmatprep.subr.bf16.mxu0 0
        %10416 = vmatpush1.bf16.msra.mxu0 0
        %10417 = vmatprep.subr.bf16.mxu0 0
        %10418 = vmatpush1.bf16.msra.mxu0 0
        %10419 = vmatprep.subr.bf16.mxu0 0
        %10420 = vmatpush1.bf16.msra.mxu0 0
        %10421 = vmatprep.subr.bf16.mxu0 0
        %10422 = vmatpush1.bf16.msra.mxu0 0
        %10423 = vmatprep.mubr.bf16.mxu0 0
        %10424 = vmatmul.mubr.bf16.gmra.mrb[0].mxu0 %v10389
        %v10425 = vpop.f32.mrb[0].mxu0
        %v10426 = vadd.f32 0.0, %v10425
        %v10427 = vpop.f32.mrb[0].mxu0
        %v10428 = vadd.f32 0.0, %v10427
        %v10429 = vpop.f32.mrb[0].mxu0
        %v10430 = vadd.f32 0.0, %v10429
        %v10431 = vpop.f32.mrb[0].mxu0
        %v10432 = vadd.f32 0.0, %v10431
        %10433 = vdwg.mxu0
        %10434 = vmatprep.subr.bf16.mxu0 0
        %10435 = vmatpush1.bf16.msra.mxu0 %v10371
        %10436 = vmatprep.subr.bf16.mxu0 0
        %10437 = vmatpush1.bf16.msra.mxu0 %v10377
        %10438 = vmatprep.subr.bf16.mxu0 0
        %10439 = vmatpush1.bf16.msra.mxu0 0
        %10440 = vmatprep.subr.bf16.mxu0 0
        %10441 = vmatpush1.bf16.msra.mxu0 0
        %10442 = vmatprep.subr.bf16.mxu0 0
        %10443 = vmatpush1.bf16.msra.mxu0 0
        %10444 = vmatprep.subr.bf16.mxu0 0
        %10445 = vmatpush1.bf16.msra.mxu0 0
        %10446 = vmatprep.subr.bf16.mxu0 0
        %10447 = vmatpush1.bf16.msra.mxu0 0
        %10448 = vmatprep.subr.bf16.mxu0 0
        %10449 = vmatpush1.bf16.msra.mxu0 0
        %10450 = vmatprep.subr.bf16.mxu0 0
        %10451 = vmatpush1.bf16.msra.mxu0 0
        %10452 = vmatprep.subr.bf16.mxu0 0
        %10453 = vmatpush1.bf16.msra.mxu0 0
        %10454 = vmatprep.subr.bf16.mxu0 0
        %10455 = vmatpush1.bf16.msra.mxu0 0
        %10456 = vmatprep.subr.bf16.mxu0 0
        %10457 = vmatpush1.bf16.msra.mxu0 0
        %10458 = vmatprep.subr.bf16.mxu0 0
        %10459 = vmatpush1.bf16.msra.mxu0 0
        %10460 = vmatprep.subr.bf16.mxu0 0
        %10461 = vmatpush1.bf16.msra.mxu0 0
        %10462 = vmatprep.subr.bf16.mxu0 0
        %10463 = vmatpush1.bf16.msra.mxu0 0
        %10464 = vmatprep.subr.bf16.mxu0 0
        %10465 = vmatpush1.bf16.msra.mxu0 0
        %10466 = vmatprep.mubr.bf16.mxu0 0
        %10467 = vmatmul.mubr.bf16.gmra.mrb[0].mxu0 %v10389
        %v10468 = vpop.f32.mrb[0].mxu0
        %v10469 = vadd.f32 0.0, %v10468
        %v10470 = vpop.f32.mrb[0].mxu0
        %v10471 = vpop.f32.mrb[0].mxu0
        %v10472 = vadd.f32 0.0, %v10471
        %v10473 = vpop.f32.mrb[0].mxu0
        %10474 = vdwg.mxu0
        %v10475 = vadd.f32 %v10352, %v10426
        %v10476 = vadd.f32 %v10353, %v10428
        %v10477 = vadd.f32 %v10354, %v10469
        %v10478 = vadd.f32 %v10355, %v10430
        %v10479 = vadd.f32 %v10356, %v10432
        %v10480 = vadd.f32 %v10357, %v10472
        %s10481 = scalar_lea.vmem [#allocation5], 48
        %v10482 = vld [vmem:[%s10481] sm:$0xf]
        %v10483 = vld [vmem:[%s10481 + $0x4] sm:$0x1]
        %v10486 = vunpack.c.l.b16 %v10482
        %v10487 = vunpack.c.l.b16 %v10483
        %v10488 = vpack.c.b16 %v10487, %v10486
        %10489 = vrot.lane.b32.xlu0 %v9743, 67
        %v10490 = vpop.permute.xlu0 %10489
        %10491 = vrot.lane.b32.xlu0 %v9744, 67
        %v10492 = vpop.permute.xlu0 %10491
        %10493 = vrot.lane.b32.xlu0 %v9745, 67
        %v10494 = vpop.permute.xlu0 %10493
        %10495 = vrot.lane.b32.xlu0 %v9746, 67
        %v10496 = vpop.permute.xlu0 %10495
        %10497 = vrot.lane.b32.xlu0 %v9747, 67
        %v10498 = vpop.permute.xlu0 %10497
        %10499 = vrot.lane.b32.xlu0 %v9748, 67
        %v10500 = vpop.permute.xlu0 %10499
        %v10501 = vsel %vm7090, %v10490, %v10492
        %v10502 = vsel %vm7090, %v10492, %v10494
        %v10503 = vsel %vm7090, %v10496, %v10498
        %v10504 = vsel %vm7090, %v10498, %v10500
        %v10512 = vsel %vm9787, %v10488, 0
        %10514 = vmatprep.subr.bf16.mxu0 %v10502
        %10515 = vmatpush1.bf16.msra.mxu0 %v10501
        %10516 = vmatprep.subr.bf16.mxu0 %v10504
        %10517 = vmatpush1.bf16.msra.mxu0 %v10503
        %10518 = vmatprep.subr.bf16.mxu0 0
        %10519 = vmatpush1.bf16.msra.mxu0 0
        %10520 = vmatprep.subr.bf16.mxu0 0
        %10521 = vmatpush1.bf16.msra.mxu0 0
        %10522 = vmatprep.subr.bf16.mxu0 0
        %10523 = vmatpush1.bf16.msra.mxu0 0
        %10524 = vmatprep.subr.bf16.mxu0 0
        %10525 = vmatpush1.bf16.msra.mxu0 0
        %10526 = vmatprep.subr.bf16.mxu0 0
        %10527 = vmatpush1.bf16.msra.mxu0 0
        %10528 = vmatprep.subr.bf16.mxu0 0
        %10529 = vmatpush1.bf16.msra.mxu0 0
        %10530 = vmatprep.subr.bf16.mxu0 0
        %10531 = vmatpush1.bf16.msra.mxu0 0
        %10532 = vmatprep.subr.bf16.mxu0 0
        %10533 = vmatpush1.bf16.msra.mxu0 0
        %10534 = vmatprep.subr.bf16.mxu0 0
        %10535 = vmatpush1.bf16.msra.mxu0 0
        %10536 = vmatprep.subr.bf16.mxu0 0
        %10537 = vmatpush1.bf16.msra.mxu0 0
        %10538 = vmatprep.subr.bf16.mxu0 0
        %10539 = vmatpush1.bf16.msra.mxu0 0
        %10540 = vmatprep.subr.bf16.mxu0 0
        %10541 = vmatpush1.bf16.msra.mxu0 0
        %10542 = vmatprep.subr.bf16.mxu0 0
        %10543 = vmatpush1.bf16.msra.mxu0 0
        %10544 = vmatprep.subr.bf16.mxu0 0
        %10545 = vmatpush1.bf16.msra.mxu0 0
        %10546 = vmatprep.mubr.bf16.mxu0 0
        %10547 = vmatmul.mubr.bf16.gmra.mrb[0].mxu0 %v10512
        %v10548 = vpop.f32.mrb[0].mxu0
        %v10549 = vadd.f32 0.0, %v10548
        %v10550 = vpop.f32.mrb[0].mxu0
        %v10551 = vadd.f32 0.0, %v10550
        %v10552 = vpop.f32.mrb[0].mxu0
        %v10553 = vadd.f32 0.0, %v10552
        %v10554 = vpop.f32.mrb[0].mxu0
        %v10555 = vadd.f32 0.0, %v10554
        %10556 = vdwg.mxu0
        %10557 = vmatprep.subr.bf16.mxu0 0
        %10558 = vmatpush1.bf16.msra.mxu0 %v10494
        %10559 = vmatprep.subr.bf16.mxu0 0
        %10560 = vmatpush1.bf16.msra.mxu0 %v10500
        %10561 = vmatprep.subr.bf16.mxu0 0
        %10562 = vmatpush1.bf16.msra.mxu0 0
        %10563 = vmatprep.subr.bf16.mxu0 0
        %10564 = vmatpush1.bf16.msra.mxu0 0
        %10565 = vmatprep.subr.bf16.mxu0 0
        %10566 = vmatpush1.bf16.msra.mxu0 0
        %10567 = vmatprep.subr.bf16.mxu0 0
        %10568 = vmatpush1.bf16.msra.mxu0 0
        %10569 = vmatprep.subr.bf16.mxu0 0
        %10570 = vmatpush1.bf16.msra.mxu0 0
        %10571 = vmatprep.subr.bf16.mxu0 0
        %10572 = vmatpush1.bf16.msra.mxu0 0
        %10573 = vmatprep.subr.bf16.mxu0 0
        %10574 = vmatpush1.bf16.msra.mxu0 0
        %10575 = vmatprep.subr.bf16.mxu0 0
        %10576 = vmatpush1.bf16.msra.mxu0 0
        %10577 = vmatprep.subr.bf16.mxu0 0
        %10578 = vmatpush1.bf16.msra.mxu0 0
        %10579 = vmatprep.subr.bf16.mxu0 0
        %10580 = vmatpush1.bf16.msra.mxu0 0
        %10581 = vmatprep.subr.bf16.mxu0 0
        %10582 = vmatpush1.bf16.msra.mxu0 0
        %10583 = vmatprep.subr.bf16.mxu0 0
        %10584 = vmatpush1.bf16.msra.mxu0 0
        %10585 = vmatprep.subr.bf16.mxu0 0
        %10586 = vmatpush1.bf16.msra.mxu0 0
        %10587 = vmatprep.subr.bf16.mxu0 0
        %10588 = vmatpush1.bf16.msra.mxu0 0
        %10589 = vmatprep.mubr.bf16.mxu0 0
        %10590 = vmatmul.mubr.bf16.gmra.mrb[0].mxu0 %v10512
        %v10591 = vpop.f32.mrb[0].mxu0
        %v10592 = vadd.f32 0.0, %v10591
        %v10593 = vpop.f32.mrb[0].mxu0
        %v10594 = vpop.f32.mrb[0].mxu0
        %v10595 = vadd.f32 0.0, %v10594
        %v10596 = vpop.f32.mrb[0].mxu0
        %10597 = vdwg.mxu0
        %v10598 = vadd.f32 %v10475, %v10549
        %v10599 = vadd.f32 %v10476, %v10551
        %v10600 = vadd.f32 %v10477, %v10592
        %v10601 = vadd.f32 %v10478, %v10553
        %v10602 = vadd.f32 %v10479, %v10555
        %v10603 = vadd.f32 %v10480, %v10595
        %s10604 = scalar_lea.vmem [#allocation5], 56
        %v10605 = vld [vmem:[%s10604] sm:$0xf]
        %v10606 = vld [vmem:[%s10604 + $0x4] sm:$0x1]
        %v10609 = vunpack.c.l.b16 %v10605
        %v10610 = vunpack.c.l.b16 %v10606
        %v10611 = vpack.c.b16 %v10610, %v10609
        %10612 = vrot.lane.b32.xlu0 %v9743, 66
        %v10613 = vpop.permute.xlu0 %10612
        %10614 = vrot.lane.b32.xlu0 %v9744, 66
        %v10615 = vpop.permute.xlu0 %10614
        %10616 = vrot.lane.b32.xlu0 %v9745, 66
        %v10617 = vpop.permute.xlu0 %10616
        %10618 = vrot.lane.b32.xlu0 %v9746, 66
        %v10619 = vpop.permute.xlu0 %10618
        %10620 = vrot.lane.b32.xlu0 %v9747, 66
        %v10621 = vpop.permute.xlu0 %10620
        %10622 = vrot.lane.b32.xlu0 %v9748, 66
        %v10623 = vpop.permute.xlu0 %10622
        %v10624 = vsel %vm7338, %v10613, %v10615
        %v10625 = vsel %vm7338, %v10615, %v10617
        %v10626 = vsel %vm7338, %v10619, %v10621
        %v10627 = vsel %vm7338, %v10621, %v10623
        %v10635 = vsel %vm9787, %v10611, 0
        %10637 = vmatprep.subr.bf16.mxu0 %v10625
        %10638 = vmatpush1.bf16.msra.mxu0 %v10624
        %10639 = vmatprep.subr.bf16.mxu0 %v10627
        %10640 = vmatpush1.bf16.msra.mxu0 %v10626
        %10641 = vmatprep.subr.bf16.mxu0 0
        %10642 = vmatpush1.bf16.msra.mxu0 0
        %10643 = vmatprep.subr.bf16.mxu0 0
        %10644 = vmatpush1.bf16.msra.mxu0 0
        %10645 = vmatprep.subr.bf16.mxu0 0
        %10646 = vmatpush1.bf16.msra.mxu0 0
        %10647 = vmatprep.subr.bf16.mxu0 0
        %10648 = vmatpush1.bf16.msra.mxu0 0
        %10649 = vmatprep.subr.bf16.mxu0 0
        %10650 = vmatpush1.bf16.msra.mxu0 0
        %10651 = vmatprep.subr.bf16.mxu0 0
        %10652 = vmatpush1.bf16.msra.mxu0 0
        %10653 = vmatprep.subr.bf16.mxu0 0
        %10654 = vmatpush1.bf16.msra.mxu0 0
        %10655 = vmatprep.subr.bf16.mxu0 0
        %10656 = vmatpush1.bf16.msra.mxu0 0
        %10657 = vmatprep.subr.bf16.mxu0 0
        %10658 = vmatpush1.bf16.msra.mxu0 0
        %10659 = vmatprep.subr.bf16.mxu0 0
        %10660 = vmatpush1.bf16.msra.mxu0 0
        %10661 = vmatprep.subr.bf16.mxu0 0
        %10662 = vmatpush1.bf16.msra.mxu0 0
        %10663 = vmatprep.subr.bf16.mxu0 0
        %10664 = vmatpush1.bf16.msra.mxu0 0
        %10665 = vmatprep.subr.bf16.mxu0 0
        %10666 = vmatpush1.bf16.msra.mxu0 0
        %10667 = vmatprep.subr.bf16.mxu0 0
        %10668 = vmatpush1.bf16.msra.mxu0 0
        %10669 = vmatprep.mubr.bf16.mxu0 0
        %10670 = vmatmul.mubr.bf16.gmra.mrb[0].mxu0 %v10635
        %v10671 = vpop.f32.mrb[0].mxu0
        %v10672 = vadd.f32 0.0, %v10671
        %v10673 = vpop.f32.mrb[0].mxu0
        %v10674 = vadd.f32 0.0, %v10673
        %v10675 = vpop.f32.mrb[0].mxu0
        %v10676 = vadd.f32 0.0, %v10675
        %v10677 = vpop.f32.mrb[0].mxu0
        %v10678 = vadd.f32 0.0, %v10677
        %10679 = vdwg.mxu0
        %10680 = vmatprep.subr.bf16.mxu0 0
        %10681 = vmatpush1.bf16.msra.mxu0 %v10617
        %10682 = vmatprep.subr.bf16.mxu0 0
        %10683 = vmatpush1.bf16.msra.mxu0 %v10623
        %10684 = vmatprep.subr.bf16.mxu0 0
        %10685 = vmatpush1.bf16.msra.mxu0 0
        %10686 = vmatprep.subr.bf16.mxu0 0
        %10687 = vmatpush1.bf16.msra.mxu0 0
        %10688 = vmatprep.subr.bf16.mxu0 0
        %10689 = vmatpush1.bf16.msra.mxu0 0
        %10690 = vmatprep.subr.bf16.mxu0 0
        %10691 = vmatpush1.bf16.msra.mxu0 0
        %10692 = vmatprep.subr.bf16.mxu0 0
        %10693 = vmatpush1.bf16.msra.mxu0 0
        %10694 = vmatprep.subr.bf16.mxu0 0
        %10695 = vmatpush1.bf16.msra.mxu0 0
        %10696 = vmatprep.subr.bf16.mxu0 0
        %10697 = vmatpush1.bf16.msra.mxu0 0
        %10698 = vmatprep.subr.bf16.mxu0 0
        %10699 = vmatpush1.bf16.msra.mxu0 0
        %10700 = vmatprep.subr.bf16.mxu0 0
        %10701 = vmatpush1.bf16.msra.mxu0 0
        %10702 = vmatprep.subr.bf16.mxu0 0
        %10703 = vmatpush1.bf16.msra.mxu0 0
        %10704 = vmatprep.subr.bf16.mxu0 0
        %10705 = vmatpush1.bf16.msra.mxu0 0
        %10706 = vmatprep.subr.bf16.mxu0 0
        %10707 = vmatpush1.bf16.msra.mxu0 0
        %10708 = vmatprep.subr.bf16.mxu0 0
        %10709 = vmatpush1.bf16.msra.mxu0 0
        %10710 = vmatprep.subr.bf16.mxu0 0
        %10711 = vmatpush1.bf16.msra.mxu0 0
        %10712 = vmatprep.mubr.bf16.mxu0 0
        %10713 = vmatmul.mubr.bf16.gmra.mrb[0].mxu0 %v10635
        %v10714 = vpop.f32.mrb[0].mxu0
        %v10715 = vadd.f32 0.0, %v10714
        %v10716 = vpop.f32.mrb[0].mxu0
        %v10717 = vpop.f32.mrb[0].mxu0
        %v10718 = vadd.f32 0.0, %v10717
        %v10719 = vpop.f32.mrb[0].mxu0
        %10720 = vdwg.mxu0
        %v10721 = vadd.f32 %v10598, %v10672
        %v10722 = vadd.f32 %v10599, %v10674
        %v10723 = vadd.f32 %v10600, %v10715
        %v10724 = vadd.f32 %v10601, %v10676
        %v10725 = vadd.f32 %v10602, %v10678
        %v10726 = vadd.f32 %v10603, %v10718
        %s10727 = scalar_lea.vmem [#allocation5], 64
        %v10728 = vld [vmem:[%s10727] sm:$0xf]
        %v10729 = vld [vmem:[%s10727 + $0x4] sm:$0x1]
        %v10732 = vunpack.c.l.b16 %v10728
        %v10733 = vunpack.c.l.b16 %v10729
        %v10734 = vpack.c.b16 %v10733, %v10732
        %10735 = vrot.lane.b32.xlu0 %v9743, 65
        %v10736 = vpop.permute.xlu0 %10735
        %10737 = vrot.lane.b32.xlu0 %v9744, 65
        %v10738 = vpop.permute.xlu0 %10737
        %10739 = vrot.lane.b32.xlu0 %v9745, 65
        %v10740 = vpop.permute.xlu0 %10739
        %10741 = vrot.lane.b32.xlu0 %v9746, 65
        %v10742 = vpop.permute.xlu0 %10741
        %10743 = vrot.lane.b32.xlu0 %v9747, 65
        %v10744 = vpop.permute.xlu0 %10743
        %10745 = vrot.lane.b32.xlu0 %v9748, 65
        %v10746 = vpop.permute.xlu0 %10745
        %v10747 = vsel %vm7586, %v10736, %v10738
        %v10748 = vsel %vm7586, %v10738, %v10740
        %v10749 = vsel %vm7586, %v10742, %v10744
        %v10750 = vsel %vm7586, %v10744, %v10746
        %v10758 = vsel %vm9787, %v10734, 0
        %10760 = vmatprep.subr.bf16.mxu0 %v10748
        %10761 = vmatpush1.bf16.msra.mxu0 %v10747
        %10762 = vmatprep.subr.bf16.mxu0 %v10750
        %10763 = vmatpush1.bf16.msra.mxu0 %v10749
        %10764 = vmatprep.subr.bf16.mxu0 0
        %10765 = vmatpush1.bf16.msra.mxu0 0
        %10766 = vmatprep.subr.bf16.mxu0 0
        %10767 = vmatpush1.bf16.msra.mxu0 0
        %10768 = vmatprep.subr.bf16.mxu0 0
        %10769 = vmatpush1.bf16.msra.mxu0 0
        %10770 = vmatprep.subr.bf16.mxu0 0
        %10771 = vmatpush1.bf16.msra.mxu0 0
        %10772 = vmatprep.subr.bf16.mxu0 0
        %10773 = vmatpush1.bf16.msra.mxu0 0
        %10774 = vmatprep.subr.bf16.mxu0 0
        %10775 = vmatpush1.bf16.msra.mxu0 0
        %10776 = vmatprep.subr.bf16.mxu0 0
        %10777 = vmatpush1.bf16.msra.mxu0 0
        %10778 = vmatprep.subr.bf16.mxu0 0
        %10779 = vmatpush1.bf16.msra.mxu0 0
        %10780 = vmatprep.subr.bf16.mxu0 0
        %10781 = vmatpush1.bf16.msra.mxu0 0
        %10782 = vmatprep.subr.bf16.mxu0 0
        %10783 = vmatpush1.bf16.msra.mxu0 0
        %10784 = vmatprep.subr.bf16.mxu0 0
        %10785 = vmatpush1.bf16.msra.mxu0 0
        %10786 = vmatprep.subr.bf16.mxu0 0
        %10787 = vmatpush1.bf16.msra.mxu0 0
        %10788 = vmatprep.subr.bf16.mxu0 0
        %10789 = vmatpush1.bf16.msra.mxu0 0
        %10790 = vmatprep.subr.bf16.mxu0 0
        %10791 = vmatpush1.bf16.msra.mxu0 0
        %10792 = vmatprep.mubr.bf16.mxu0 0
        %10793 = vmatmul.mubr.bf16.gmra.mrb[0].mxu0 %v10758
        %v10794 = vpop.f32.mrb[0].mxu0
        %v10795 = vadd.f32 0.0, %v10794
        %v10796 = vpop.f32.mrb[0].mxu0
        %v10797 = vadd.f32 0.0, %v10796
        %v10798 = vpop.f32.mrb[0].mxu0
        %v10799 = vadd.f32 0.0, %v10798
        %v10800 = vpop.f32.mrb[0].mxu0
        %v10801 = vadd.f32 0.0, %v10800
        %10802 = vdwg.mxu0
        %10803 = vmatprep.subr.bf16.mxu0 0
        %10804 = vmatpush1.bf16.msra.mxu0 %v10740
        %10805 = vmatprep.subr.bf16.mxu0 0
        %10806 = vmatpush1.bf16.msra.mxu0 %v10746
        %10807 = vmatprep.subr.bf16.mxu0 0
        %10808 = vmatpush1.bf16.msra.mxu0 0
        %10809 = vmatprep.subr.bf16.mxu0 0
        %10810 = vmatpush1.bf16.msra.mxu0 0
        %10811 = vmatprep.subr.bf16.mxu0 0
        %10812 = vmatpush1.bf16.msra.mxu0 0
        %10813 = vmatprep.subr.bf16.mxu0 0
        %10814 = vmatpush1.bf16.msra.mxu0 0
        %10815 = vmatprep.subr.bf16.mxu0 0
        %10816 = vmatpush1.bf16.msra.mxu0 0
        %10817 = vmatprep.subr.bf16.mxu0 0
        %10818 = vmatpush1.bf16.msra.mxu0 0
        %10819 = vmatprep.subr.bf16.mxu0 0
        %10820 = vmatpush1.bf16.msra.mxu0 0
        %10821 = vmatprep.subr.bf16.mxu0 0
        %10822 = vmatpush1.bf16.msra.mxu0 0
        %10823 = vmatprep.subr.bf16.mxu0 0
        %10824 = vmatpush1.bf16.msra.mxu0 0
        %10825 = vmatprep.subr.bf16.mxu0 0
        %10826 = vmatpush1.bf16.msra.mxu0 0
        %10827 = vmatprep.subr.bf16.mxu0 0
        %10828 = vmatpush1.bf16.msra.mxu0 0
        %10829 = vmatprep.subr.bf16.mxu0 0
        %10830 = vmatpush1.bf16.msra.mxu0 0
        %10831 = vmatprep.subr.bf16.mxu0 0
        %10832 = vmatpush1.bf16.msra.mxu0 0
        %10833 = vmatprep.subr.bf16.mxu0 0
        %10834 = vmatpush1.bf16.msra.mxu0 0
        %10835 = vmatprep.mubr.bf16.mxu0 0
        %10836 = vmatmul.mubr.bf16.gmra.mrb[0].mxu0 %v10758
        %v10837 = vpop.f32.mrb[0].mxu0
        %v10838 = vadd.f32 0.0, %v10837
        %v10839 = vpop.f32.mrb[0].mxu0
        %v10840 = vpop.f32.mrb[0].mxu0
        %v10841 = vadd.f32 0.0, %v10840
        %v10842 = vpop.f32.mrb[0].mxu0
        %10843 = vdwg.mxu0
        %v10844 = vadd.f32 %v10721, %v10795
        %v10845 = vadd.f32 %v10722, %v10797
        %v10846 = vadd.f32 %v10723, %v10838
        %v10847 = vadd.f32 %v10724, %v10799
        %v10848 = vadd.f32 %v10725, %v10801
        %v10849 = vadd.f32 %v10726, %v10841
        %v10850 = vld [vmem:[%s9] sm:$0xff]
        %v10851 = vld [vmem:[%s9 + $0x8] sm:$0x1]
        %10853 = vset.pattern.permute.xlu0 0
        %10854 = vperm.xlu0 %10853, %v10850
        %v10855 = vpop.permute.xlu0 %10854
        %10858 = vset.pattern.permute.xlu0 0
        %10859 = vperm.xlu0 %10858, %v10851
        %v10860 = vpop.permute.xlu0 %10859
        %v10862 = vadd.f32 %v10844, %v10855
        %v10863 = vadd.f32 %v10845, %v10855
        %v10864 = vadd.f32 %v10846, %v10855
        %v10865 = vadd.f32 %v10847, %v10860
        %v10866 = vadd.f32 %v10848, %v10860
        %v10867 = vadd.f32 %v10849, %v10860
        %10868 = vst [vmem:[%s371] sm:$0xff] %v10862
        %10869 = vst [vmem:[%s371 + $0x8] sm:$0xff] %v10863
        %10870 = vst.msk [vmem:[%s371 + $0x10] sm:$0xff] %vm4088, %v10864
        %10871 = vst [vmem:[%s371 + $0x18] sm:$0x1] %v10865
        %10872 = vst [vmem:[%s371 + $0x20] sm:$0x1] %v10866
        %vm10873 = vcmask 516096
        %10874 = vst.msk [vmem:[%s371 + $0x28] sm:$0x1] %vm10873, %v10867
        %p10875 = scmp.lt.s32.totalorder %s22, 1
        %s10876 = scalar_select %p10875, %s22, 1
        %s10877 = smul.addr %s10876, 6
        %s10878 = smul.addr %s10877, 8
        %s10879 = scalar_lea.vmem %s10, %s10878
        // Predicated region
        $region65: #{super_resolution_forward.1} parent=59 // pred_check
          %p10880 = pneg %p255
        $region66: #{super_resolution_forward.1} parent=59 // pred_check_branch
          %10882 = sbr.rel (%p10880) target = $region68
        $region67: #{super_resolution_forward.1} parent=59 // pred_region
          _
        $region68: #{super_resolution_forward.1} parent=59 // pred_fallthru
          _
      $region60: #{super_resolution_forward.1} parent=5 // pred_fallthru
        _
      %p10883 = scmp.le.s32.totalorder 2, %s17
      // Predicated region
      $region69: #{super_resolution_forward.1} parent=5 // pred_check
        %p10884 = pneg %p10883
      $region70: #{super_resolution_forward.1} parent=5 // pred_check_branch
        %10886 = sbr.rel (%p10884) target = $region72
      $region71: #{super_resolution_forward.1} parent=5 // pred_region
        %s10887 = ssub.s32 %s17, 2
        // Predicated region
        $region73: #{super_resolution_forward.1} parent=71 // pred_check
          %p10888 = pneg %p261
        $region74: #{super_resolution_forward.1} parent=71 // pred_check_branch
          %10890 = sbr.rel (%p10888) target = $region76
        $region75: #{super_resolution_forward.1} parent=71 // pred_region
          %p10891 = scmp.lt.s32.totalorder %s23, 1
          %s10892 = scalar_select %p10891, %s23, 1
          %s10893 = smul.addr %s10892, 6
          %s10894 = smul.addr %s10893, 8
          %s10895 = scalar_lea.vmem %s10, %s10894
        $region76: #{super_resolution_forward.1} parent=71 // pred_fallthru
          _
      $region72: #{super_resolution_forward.1} parent=5 // pred_fallthru
        _
    $region6: #{super_resolution_forward.1} parent=1 // loop_footer
      %s21 = sadd.s32 1, %s17
    $region7: #{super_resolution_forward.1} parent=1 // loop_footer_branch
      %16 = sbr.rel target = $region3
    $region8: #{super_resolution_forward.1} parent=1 // loop_exit
      _
    %10896 = vsyncpa [#allocation6], 1
    %s10897 = scalar_lea.sflag [#allocation6], 1
    %10898 = vsyncpa %s10897, 1

</llo_original>
